<compile_context>
chip_gen: v7x
topology: tpu7x:2x2x1
jax: 0.10.0
libtpu: 0.0.40
codegen_flags: <defaults>
</compile_context>

<pallas_src>
import functools

import jax
import jax.numpy as jnp
from jax import lax
from jax.experimental import pallas as pl
from jax.experimental.pallas import tpu as pltpu


# ----------------------------------------------------------------------------- kernel
def group_res4_kernel(x_ref, w1_ref, b1_ref, w2_ref, b2_ref, w3_ref, b3_ref,
                      out_ref, *, C, H, W):
    """One grid step == one batch element == the full 4-block forward."""
    HW = H * W

    # Column-validity masks for the +/-1 lane shifts (built once per grid step,
    # reused by all 12 convs of this batch element).
    col = lax.broadcasted_iota(jnp.int32, (1, HW), 1) % W
    mask_for_dw = {-1: col >= 1, 0: None, 1: col <= W - 2}

    def shift_flat(xf, s):
        # yf[p] = xf[p + s] with zero fill outside [0, HW); s is static.
        if s == 0:
            return xf
        z = jnp.zeros((C, abs(s)), jnp.float32)
        if s > 0:
            return jnp.concatenate([xf[:, s:], z], axis=1)
        return jnp.concatenate([z, xf[:, :HW + s]], axis=1)

    def im2col(xf):
        # (9*C, HW) slab; tap order t = kh*3 + kw, channels contiguous per tap.
        # Row-boundary validity comes for free from the flat zero fill; only the
        # +/-1 column shifts need masking.
        taps = []
        for kh in range(3):
            for kw in range(3):
                dh, dw = kh - 1, kw - 1
                t = shift_flat(xf, dh * W + dw)
                m = mask_for_dw[dw]
                if m is not None:
                    t = jnp.where(m, t, 0.0)
                taps.append(t)
        return jnp.concatenate(taps, axis=0)

    def conv3x3(xf, w_ref, b_ref):
        # (C, 9*C) @ (9*C, HW) on the MXU + (C, 1) bias broadcast.
        taps = im2col(xf)
        y = jnp.dot(w_ref[...], taps,
                    preferred_element_type=jnp.float32,
                    precision=lax.Precision.HIGHEST)
        return y + b_ref[...]

    def instance_norm(y):
        # per-channel mean / biased var over H*W, eps = 1e-5, no affine
        m = jnp.mean(y, axis=1, keepdims=True)
        v = jnp.mean((y - m) ** 2, axis=1, keepdims=True)
        return (y - m) * lax.rsqrt(v + 1e-5)

    cur = x_ref[0]                                       # (C, HW)
    results = []
    for _ in range(4):                                   # shared-weight blocks
        # --- se_block_conv ---
        y1 = jnp.maximum(instance_norm(conv3x3(cur, w1_ref, b1_ref)), 0.0)
        y2 = jnp.maximum(instance_norm(conv3x3(y1, w2_ref, b2_ref)) + cur, 0.0)
        # --- Block_res_NoA.conv2 + residual ---
        y3 = conv3x3(y2, w3_ref, b3_ref) + cur
        results.append(y3)
        cur = y3

    # Single aligned, lane-dense (4*C, HW) store.
    out_ref[0] = jnp.concatenate(results, axis=0)


# ----------------------------------------------------------------------------- wrapper
def group_res4_noa(x, w1, b1, w2, b2, w3, b3):
    N, C, H, W = x.shape
    HW = H * W

    # Lane-dense layouts: activations (N, C, H*W); weights (C, 9*C) with
    # column order (kh, kw, ci); biases (C, 1).
    x_flat = x.reshape(N, C, HW).astype(jnp.float32)

    def prep_w(w):   # (O, I, 3, 3) -> (O, 9*I), col index = (kh*3 + kw)*I + ci
        return jnp.transpose(w, (0, 2, 3, 1)).reshape(C, 9 * C).astype(jnp.float32)

    w1m, w2m, w3m = prep_w(w1), prep_w(w2), prep_w(w3)
    b1c, b2c, b3c = (b.reshape(C, 1).astype(jnp.float32) for b in (b1, b2, b3))

    kernel = functools.partial(group_res4_kernel, C=C, H=H, W=W)

    w_spec = pl.BlockSpec((C, 9 * C), lambda n: (0, 0))   # constant block -> fetched once
    b_spec = pl.BlockSpec((C, 1), lambda n: (0, 0))

    grid_spec = pltpu.PrefetchScalarGridSpec(
        num_scalar_prefetch=0,
        grid=(N,),
        in_specs=[
            pl.BlockSpec((1, C, HW), lambda n: (n, 0, 0)),   # one image per step
            w_spec, b_spec,                                  # conv1
            w_spec, b_spec,                                  # conv2
            w_spec, b_spec,                                  # conv3
        ],
        out_specs=pl.BlockSpec((1, 4 * C, HW), lambda n: (n, 0, 0)),
    )

    out_flat = pl.pallas_call(
        kernel,
        out_shape=jax.ShapeDtypeStruct((N, 4 * C, HW), jnp.float32),
        grid_spec=grid_spec,
        compiler_params=pltpu.CompilerParams(dimension_semantics=("parallel",)),
    )(x_flat, w1m, b1c, w2m, b2c, w3m, b3c)

    # TODO(synk): for large C/H/W add a spatial-tile grid axis with a 1-pixel halo
    # and set vmem_limit_bytes explicitly so the same kernel fits v7x's 64 MiB VMEM.
    return out_flat.reshape(N, 4 * C, H, W)


# ----------------------------------------------------------------------------- pure-JAX reference
def _ref_group_res4(x, w1, b1, w2, b2, w3, b3):
    def conv(h, w, b):
        y = lax.conv_general_dilated(h, w, (1, 1), ((1, 1), (1, 1)),
                                     dimension_numbers=("NCHW", "OIHW", "NCHW"),
                                     precision=lax.Precision.HIGHEST)
        return y + b[None, :, None, None]

    def inorm(y):
        m = jnp.mean(y, axis=(2, 3), keepdims=True)
        v = jnp.mean((y - m) ** 2, axis=(2, 3), keepdims=True)
        return (y - m) / jnp.sqrt(v + 1e-5)

    def block(h):
        r = jax.nn.relu(inorm(conv(h, w1, b1)))
        r = jax.nn.relu(inorm(conv(r, w2, b2)) + h)
        return conv(r, w3, b3) + h

    r1 = block(x); r2 = block(r1); r3 = block(r2); r4 = block(r3)
    return jnp.concatenate([r1, r2, r3, r4], axis=1)


# ----------------------------------------------------------------------------- main
if __name__ == "__main__":
    N, C, H, W = 2, 4, 16, 16   # batch=2, dim=4, spatial=16 (Group_res4_NoA(conv, 4, 3))

    key = jax.random.PRNGKey(0)
    kx, k1, k2, k3, k4, k5, k6 = jax.random.split(key, 7)

    x = jax.random.normal(kx, (N, C, H, W), jnp.float32)
    w1 = 0.1 * jax.random.normal(k1, (C, C, 3, 3), jnp.float32)   # se_block.conv1
    b1 = 0.05 * jax.random.normal(k2, (C,), jnp.float32)
    w2 = 0.1 * jax.random.normal(k3, (C, C, 3, 3), jnp.float32)   # se_block.conv2
    b2 = 0.05 * jax.random.normal(k4, (C,), jnp.float32)
    w3 = 0.1 * jax.random.normal(k5, (C, C, 3, 3), jnp.float32)   # Block_res_NoA.conv2
    b3 = 0.05 * jax.random.normal(k6, (C,), jnp.float32)

    out = group_res4_noa(x, w1, b1, w2, b2, w3, b3)
    out = jax.block_until_ready(out)

    ref = _ref_group_res4(x, w1, b1, w2, b2, w3, b3)
    assert out.shape == (N, 4 * C, H, W), out.shape
    max_err = float(jnp.max(jnp.abs(out - ref)))
    assert max_err < 2e-2, f"mismatch vs reference: max abs err = {max_err}"

    print("KERNEL_OK")
</pallas_src>

<mosaic_0001>
module attributes {stable_mosaic.version = 11 : i64} {
  func.func @group_res4_kernel(%arg0: i32, %arg1: memref<1x4x256xf32, #tpu.memory_space<vmem>>, %arg2: memref<4x36xf32, #tpu.memory_space<vmem>>, %arg3: memref<4x1xf32, #tpu.memory_space<vmem>>, %arg4: memref<4x36xf32, #tpu.memory_space<vmem>>, %arg5: memref<4x1xf32, #tpu.memory_space<vmem>>, %arg6: memref<4x36xf32, #tpu.memory_space<vmem>>, %arg7: memref<4x1xf32, #tpu.memory_space<vmem>>, %arg8: memref<1x16x256xf32, #tpu.memory_space<vmem>>) attributes {dimension_semantics = [#tpu.dimension_semantics<parallel>], iteration_bounds = array<i64: 2>, scalar_prefetch = 0 : i64, scratch_operands = 0 : i64, tpu.core_type = #tpu.core_type<tc>, window_params = [{transform_indices = @transform_0, window_bounds = array<i64: 1, 4, 256>}, {pipeline_mode = #tpu.pipeline_mode<synchronous>, transform_indices = @transform_1, window_bounds = array<i64: 4, 36>}, {pipeline_mode = #tpu.pipeline_mode<synchronous>, transform_indices = @transform_2, window_bounds = array<i64: 4, 1>}, {pipeline_mode = #tpu.pipeline_mode<synchronous>, transform_indices = @transform_3, window_bounds = array<i64: 4, 36>}, {pipeline_mode = #tpu.pipeline_mode<synchronous>, transform_indices = @transform_4, window_bounds = array<i64: 4, 1>}, {pipeline_mode = #tpu.pipeline_mode<synchronous>, transform_indices = @transform_5, window_bounds = array<i64: 4, 36>}, {pipeline_mode = #tpu.pipeline_mode<synchronous>, transform_indices = @transform_6, window_bounds = array<i64: 4, 1>}, {transform_indices = @transform_7, window_bounds = array<i64: 1, 16, 256>}]} {
    %0 = tpu.iota {dimensions = array<i32: 1>} : vector<1x256xi32>
    %c16_i32 = arith.constant 16 : i32
    %c0_i32 = arith.constant 0 : i32
    %1 = arith.cmpi eq, %c16_i32, %c0_i32 : i32
    %c1_i32 = arith.constant 1 : i32
    %2 = arith.select %1, %c1_i32, %c16_i32 : i32
    %3 = vector.broadcast %2 : i32 to vector<1x256xi32>
    %4 = arith.remsi %0, %3 : vector<1x256xi32>
    %c0_i32_0 = arith.constant 0 : i32
    %5 = vector.broadcast %c0_i32_0 : i32 to vector<1x256xi32>
    %6 = arith.cmpi ne, %4, %5 : vector<1x256xi32>
    %c0_i32_1 = arith.constant 0 : i32
    %7 = vector.broadcast %c0_i32_1 : i32 to vector<1x256xi32>
    %8 = arith.cmpi slt, %4, %7 : vector<1x256xi32>
    %c0_i32_2 = arith.constant 0 : i32
    %9 = arith.cmpi slt, %2, %c0_i32_2 : i32
    %10 = vector.broadcast %9 : i1 to vector<1x256xi1>
    %11 = vector.broadcast %10 : vector<1x256xi1> to vector<1x256xi1>
    %12 = arith.xori %8, %11 : vector<1x256xi1>
    %13 = arith.andi %12, %6 : vector<1x256xi1>
    %14 = vector.broadcast %2 : i32 to vector<1x256xi32>
    %15 = arith.addi %4, %14 : vector<1x256xi32>
    %16 = arith.select %13, %15, %4 : vector<1x256xi1>, vector<1x256xi32>
    %c1_i32_3 = arith.constant 1 : i32
    %17 = vector.broadcast %c1_i32_3 : i32 to vector<1x256xi32>
    %18 = arith.cmpi sge, %16, %17 : vector<1x256xi32>
    %c14_i32 = arith.constant 14 : i32
    %19 = vector.broadcast %c14_i32 : i32 to vector<1x256xi32>
    %20 = arith.cmpi sle, %16, %19 : vector<1x256xi32>
    %c0 = arith.constant 0 : index
    %c0_4 = arith.constant 0 : index
    %c0_5 = arith.constant 0 : index
    %21 = vector.load %arg1[%c0, %c0_4, %c0_5] : memref<1x4x256xf32, #tpu.memory_space<vmem>>, vector<1x4x256xf32>
    %22 = vector.shape_cast %21 : vector<1x4x256xf32> to vector<4x256xf32>
    %cst = arith.constant 0.000000e+00 : f32
    %23 = vector.broadcast %cst : f32 to vector<4x17xf32>
    %24 = vector.extract_strided_slice %22 {offsets = [0, 0], sizes = [4, 239], strides = [1, 1]} : vector<4x256xf32> to vector<4x239xf32>
    %25 = tpu.concatenate %23, %24 in 1 : vector<4x17xf32>, vector<4x239xf32> -> vector<4x256xf32>
    %cst_6 = arith.constant 0.000000e+00 : f32
    %26 = vector.shape_cast %18 : vector<1x256xi1> to vector<1x256xi1>
    %27 = vector.broadcast %26 : vector<1x256xi1> to vector<4x256xi1>
    %28 = vector.broadcast %cst_6 : f32 to vector<4x256xf32>
    %29 = arith.select %27, %25, %28 : vector<4x256xi1>, vector<4x256xf32>
    %cst_7 = arith.constant 0.000000e+00 : f32
    %30 = vector.broadcast %cst_7 : f32 to vector<4x16xf32>
    %31 = vector.extract_strided_slice %22 {offsets = [0, 0], sizes = [4, 240], strides = [1, 1]} : vector<4x256xf32> to vector<4x240xf32>
    %32 = tpu.concatenate %30, %31 in 1 : vector<4x16xf32>, vector<4x240xf32> -> vector<4x256xf32>
    %cst_8 = arith.constant 0.000000e+00 : f32
    %33 = vector.broadcast %cst_8 : f32 to vector<4x15xf32>
    %34 = vector.extract_strided_slice %22 {offsets = [0, 0], sizes = [4, 241], strides = [1, 1]} : vector<4x256xf32> to vector<4x241xf32>
    %35 = tpu.concatenate %33, %34 in 1 : vector<4x15xf32>, vector<4x241xf32> -> vector<4x256xf32>
    %cst_9 = arith.constant 0.000000e+00 : f32
    %36 = vector.shape_cast %20 : vector<1x256xi1> to vector<1x256xi1>
    %37 = vector.broadcast %36 : vector<1x256xi1> to vector<4x256xi1>
    %38 = vector.broadcast %cst_9 : f32 to vector<4x256xf32>
    %39 = arith.select %37, %35, %38 : vector<4x256xi1>, vector<4x256xf32>
    %cst_10 = arith.constant 0.000000e+00 : f32
    %40 = vector.broadcast %cst_10 : f32 to vector<4x1xf32>
    %41 = vector.extract_strided_slice %22 {offsets = [0, 0], sizes = [4, 255], strides = [1, 1]} : vector<4x256xf32> to vector<4x255xf32>
    %42 = tpu.concatenate %40, %41 in 1 : vector<4x1xf32>, vector<4x255xf32> -> vector<4x256xf32>
    %cst_11 = arith.constant 0.000000e+00 : f32
    %43 = vector.shape_cast %18 : vector<1x256xi1> to vector<1x256xi1>
    %44 = vector.broadcast %43 : vector<1x256xi1> to vector<4x256xi1>
    %45 = vector.broadcast %cst_11 : f32 to vector<4x256xf32>
    %46 = arith.select %44, %42, %45 : vector<4x256xi1>, vector<4x256xf32>
    %cst_12 = arith.constant 0.000000e+00 : f32
    %47 = vector.broadcast %cst_12 : f32 to vector<4x1xf32>
    %48 = vector.extract_strided_slice %22 {offsets = [0, 1], sizes = [4, 255], strides = [1, 1]} : vector<4x256xf32> to vector<4x255xf32>
    %49 = tpu.concatenate %48, %47 in 1 : vector<4x255xf32>, vector<4x1xf32> -> vector<4x256xf32>
    %cst_13 = arith.constant 0.000000e+00 : f32
    %50 = vector.shape_cast %20 : vector<1x256xi1> to vector<1x256xi1>
    %51 = vector.broadcast %50 : vector<1x256xi1> to vector<4x256xi1>
    %52 = vector.broadcast %cst_13 : f32 to vector<4x256xf32>
    %53 = arith.select %51, %49, %52 : vector<4x256xi1>, vector<4x256xf32>
    %cst_14 = arith.constant 0.000000e+00 : f32
    %54 = vector.broadcast %cst_14 : f32 to vector<4x15xf32>
    %55 = vector.extract_strided_slice %22 {offsets = [0, 15], sizes = [4, 241], strides = [1, 1]} : vector<4x256xf32> to vector<4x241xf32>
    %56 = tpu.concatenate %55, %54 in 1 : vector<4x241xf32>, vector<4x15xf32> -> vector<4x256xf32>
    %cst_15 = arith.constant 0.000000e+00 : f32
    %57 = vector.shape_cast %18 : vector<1x256xi1> to vector<1x256xi1>
    %58 = vector.broadcast %57 : vector<1x256xi1> to vector<4x256xi1>
    %59 = vector.broadcast %cst_15 : f32 to vector<4x256xf32>
    %60 = arith.select %58, %56, %59 : vector<4x256xi1>, vector<4x256xf32>
    %cst_16 = arith.constant 0.000000e+00 : f32
    %61 = vector.broadcast %cst_16 : f32 to vector<4x16xf32>
    %62 = vector.extract_strided_slice %22 {offsets = [0, 16], sizes = [4, 240], strides = [1, 1]} : vector<4x256xf32> to vector<4x240xf32>
    %63 = tpu.concatenate %62, %61 in 1 : vector<4x240xf32>, vector<4x16xf32> -> vector<4x256xf32>
    %cst_17 = arith.constant 0.000000e+00 : f32
    %64 = vector.broadcast %cst_17 : f32 to vector<4x17xf32>
    %65 = vector.extract_strided_slice %22 {offsets = [0, 17], sizes = [4, 239], strides = [1, 1]} : vector<4x256xf32> to vector<4x239xf32>
    %66 = tpu.concatenate %65, %64 in 1 : vector<4x239xf32>, vector<4x17xf32> -> vector<4x256xf32>
    %cst_18 = arith.constant 0.000000e+00 : f32
    %67 = vector.shape_cast %20 : vector<1x256xi1> to vector<1x256xi1>
    %68 = vector.broadcast %67 : vector<1x256xi1> to vector<4x256xi1>
    %69 = vector.broadcast %cst_18 : f32 to vector<4x256xf32>
    %70 = arith.select %68, %66, %69 : vector<4x256xi1>, vector<4x256xf32>
    %71 = tpu.concatenate %29, %32, %39, %46, %22, %53, %60, %63, %70 in 0 : vector<4x256xf32>, vector<4x256xf32>, vector<4x256xf32>, vector<4x256xf32>, vector<4x256xf32>, vector<4x256xf32>, vector<4x256xf32>, vector<4x256xf32>, vector<4x256xf32> -> vector<36x256xf32>
    %c0_19 = arith.constant 0 : index
    %c0_20 = arith.constant 0 : index
    %72 = vector.load %arg2[%c0_19, %c0_20] : memref<4x36xf32, #tpu.memory_space<vmem>>, vector<4x36xf32>
    %cst_21 = arith.constant dense<0.000000e+00> : vector<4x256xf32>
    %73 = tpu.matmul %72, %71, %cst_21 {dimension_numbers = #tpu.dot_dimension_numbers<[1], [0], [0], [1], [0, 0, 1, 1], [], []>, precision = #tpu.contract_precision<fp32>} : vector<4x36xf32>, vector<36x256xf32>, vector<4x256xf32> -> vector<4x256xf32>
    %c0_22 = arith.constant 0 : index
    %c0_23 = arith.constant 0 : index
    %74 = vector.load %arg3[%c0_22, %c0_23] : memref<4x1xf32, #tpu.memory_space<vmem>>, vector<4x1xf32>
    %75 = vector.broadcast %74 : vector<4x1xf32> to vector<4x256xf32>
    %76 = arith.addf %73, %75 : vector<4x256xf32>
    %cst_24 = arith.constant dense<0.000000e+00> : vector<4xf32>
    %77 = vector.multi_reduction <add>, %76, %cst_24 [1] : vector<4x256xf32> to vector<4xf32>
    %78 = vector.shape_cast %77 : vector<4xf32> to vector<4x1xf32>
    %cst_25 = arith.constant 2.560000e+02 : f32
    %79 = vector.broadcast %cst_25 : f32 to vector<4x1xf32>
    %80 = arith.divf %78, %79 : vector<4x1xf32>
    %81 = vector.broadcast %80 : vector<4x1xf32> to vector<4x256xf32>
    %82 = arith.subf %76, %81 : vector<4x256xf32>
    %83 = arith.mulf %82, %82 : vector<4x256xf32>
    %cst_26 = arith.constant dense<0.000000e+00> : vector<4xf32>
    %84 = vector.multi_reduction <add>, %83, %cst_26 [1] : vector<4x256xf32> to vector<4xf32>
    %85 = vector.shape_cast %84 : vector<4xf32> to vector<4x1xf32>
    %cst_27 = arith.constant 2.560000e+02 : f32
    %86 = vector.broadcast %cst_27 : f32 to vector<4x1xf32>
    %87 = arith.divf %85, %86 : vector<4x1xf32>
    %88 = vector.broadcast %80 : vector<4x1xf32> to vector<4x256xf32>
    %89 = arith.subf %76, %88 : vector<4x256xf32>
    %cst_28 = arith.constant 9.99999974E-6 : f32
    %90 = vector.broadcast %cst_28 : f32 to vector<4x1xf32>
    %91 = arith.addf %87, %90 : vector<4x1xf32>
    %92 = math.rsqrt %91 : vector<4x1xf32>
    %93 = vector.broadcast %92 : vector<4x1xf32> to vector<4x256xf32>
    %94 = arith.mulf %89, %93 : vector<4x256xf32>
    %cst_29 = arith.constant 0.000000e+00 : f32
    %95 = vector.broadcast %cst_29 : f32 to vector<4x256xf32>
    %96 = arith.maximumf %94, %95 : vector<4x256xf32>
    %cst_30 = arith.constant 0.000000e+00 : f32
    %97 = vector.broadcast %cst_30 : f32 to vector<4x17xf32>
    %98 = vector.extract_strided_slice %96 {offsets = [0, 0], sizes = [4, 239], strides = [1, 1]} : vector<4x256xf32> to vector<4x239xf32>
    %99 = tpu.concatenate %97, %98 in 1 : vector<4x17xf32>, vector<4x239xf32> -> vector<4x256xf32>
    %cst_31 = arith.constant 0.000000e+00 : f32
    %100 = vector.shape_cast %18 : vector<1x256xi1> to vector<1x256xi1>
    %101 = vector.broadcast %100 : vector<1x256xi1> to vector<4x256xi1>
    %102 = vector.broadcast %cst_31 : f32 to vector<4x256xf32>
    %103 = arith.select %101, %99, %102 : vector<4x256xi1>, vector<4x256xf32>
    %cst_32 = arith.constant 0.000000e+00 : f32
    %104 = vector.broadcast %cst_32 : f32 to vector<4x16xf32>
    %105 = vector.extract_strided_slice %96 {offsets = [0, 0], sizes = [4, 240], strides = [1, 1]} : vector<4x256xf32> to vector<4x240xf32>
    %106 = tpu.concatenate %104, %105 in 1 : vector<4x16xf32>, vector<4x240xf32> -> vector<4x256xf32>
    %cst_33 = arith.constant 0.000000e+00 : f32
    %107 = vector.broadcast %cst_33 : f32 to vector<4x15xf32>
    %108 = vector.extract_strided_slice %96 {offsets = [0, 0], sizes = [4, 241], strides = [1, 1]} : vector<4x256xf32> to vector<4x241xf32>
    %109 = tpu.concatenate %107, %108 in 1 : vector<4x15xf32>, vector<4x241xf32> -> vector<4x256xf32>
    %cst_34 = arith.constant 0.000000e+00 : f32
    %110 = vector.shape_cast %20 : vector<1x256xi1> to vector<1x256xi1>
    %111 = vector.broadcast %110 : vector<1x256xi1> to vector<4x256xi1>
    %112 = vector.broadcast %cst_34 : f32 to vector<4x256xf32>
    %113 = arith.select %111, %109, %112 : vector<4x256xi1>, vector<4x256xf32>
    %cst_35 = arith.constant 0.000000e+00 : f32
    %114 = vector.broadcast %cst_35 : f32 to vector<4x1xf32>
    %115 = vector.extract_strided_slice %96 {offsets = [0, 0], sizes = [4, 255], strides = [1, 1]} : vector<4x256xf32> to vector<4x255xf32>
    %116 = tpu.concatenate %114, %115 in 1 : vector<4x1xf32>, vector<4x255xf32> -> vector<4x256xf32>
    %cst_36 = arith.constant 0.000000e+00 : f32
    %117 = vector.shape_cast %18 : vector<1x256xi1> to vector<1x256xi1>
    %118 = vector.broadcast %117 : vector<1x256xi1> to vector<4x256xi1>
    %119 = vector.broadcast %cst_36 : f32 to vector<4x256xf32>
    %120 = arith.select %118, %116, %119 : vector<4x256xi1>, vector<4x256xf32>
    %cst_37 = arith.constant 0.000000e+00 : f32
    %121 = vector.broadcast %cst_37 : f32 to vector<4x1xf32>
    %122 = vector.extract_strided_slice %96 {offsets = [0, 1], sizes = [4, 255], strides = [1, 1]} : vector<4x256xf32> to vector<4x255xf32>
    %123 = tpu.concatenate %122, %121 in 1 : vector<4x255xf32>, vector<4x1xf32> -> vector<4x256xf32>
    %cst_38 = arith.constant 0.000000e+00 : f32
    %124 = vector.shape_cast %20 : vector<1x256xi1> to vector<1x256xi1>
    %125 = vector.broadcast %124 : vector<1x256xi1> to vector<4x256xi1>
    %126 = vector.broadcast %cst_38 : f32 to vector<4x256xf32>
    %127 = arith.select %125, %123, %126 : vector<4x256xi1>, vector<4x256xf32>
    %cst_39 = arith.constant 0.000000e+00 : f32
    %128 = vector.broadcast %cst_39 : f32 to vector<4x15xf32>
    %129 = vector.extract_strided_slice %96 {offsets = [0, 15], sizes = [4, 241], strides = [1, 1]} : vector<4x256xf32> to vector<4x241xf32>
    %130 = tpu.concatenate %129, %128 in 1 : vector<4x241xf32>, vector<4x15xf32> -> vector<4x256xf32>
    %cst_40 = arith.constant 0.000000e+00 : f32
    %131 = vector.shape_cast %18 : vector<1x256xi1> to vector<1x256xi1>
    %132 = vector.broadcast %131 : vector<1x256xi1> to vector<4x256xi1>
    %133 = vector.broadcast %cst_40 : f32 to vector<4x256xf32>
    %134 = arith.select %132, %130, %133 : vector<4x256xi1>, vector<4x256xf32>
    %cst_41 = arith.constant 0.000000e+00 : f32
    %135 = vector.broadcast %cst_41 : f32 to vector<4x16xf32>
    %136 = vector.extract_strided_slice %96 {offsets = [0, 16], sizes = [4, 240], strides = [1, 1]} : vector<4x256xf32> to vector<4x240xf32>
    %137 = tpu.concatenate %136, %135 in 1 : vector<4x240xf32>, vector<4x16xf32> -> vector<4x256xf32>
    %cst_42 = arith.constant 0.000000e+00 : f32
    %138 = vector.broadcast %cst_42 : f32 to vector<4x17xf32>
    %139 = vector.extract_strided_slice %96 {offsets = [0, 17], sizes = [4, 239], strides = [1, 1]} : vector<4x256xf32> to vector<4x239xf32>
    %140 = tpu.concatenate %139, %138 in 1 : vector<4x239xf32>, vector<4x17xf32> -> vector<4x256xf32>
    %cst_43 = arith.constant 0.000000e+00 : f32
    %141 = vector.shape_cast %20 : vector<1x256xi1> to vector<1x256xi1>
    %142 = vector.broadcast %141 : vector<1x256xi1> to vector<4x256xi1>
    %143 = vector.broadcast %cst_43 : f32 to vector<4x256xf32>
    %144 = arith.select %142, %140, %143 : vector<4x256xi1>, vector<4x256xf32>
    %145 = tpu.concatenate %103, %106, %113, %120, %96, %127, %134, %137, %144 in 0 : vector<4x256xf32>, vector<4x256xf32>, vector<4x256xf32>, vector<4x256xf32>, vector<4x256xf32>, vector<4x256xf32>, vector<4x256xf32>, vector<4x256xf32>, vector<4x256xf32> -> vector<36x256xf32>
    %c0_44 = arith.constant 0 : index
    %c0_45 = arith.constant 0 : index
    %146 = vector.load %arg4[%c0_44, %c0_45] : memref<4x36xf32, #tpu.memory_space<vmem>>, vector<4x36xf32>
    %cst_46 = arith.constant dense<0.000000e+00> : vector<4x256xf32>
    %147 = tpu.matmul %146, %145, %cst_46 {dimension_numbers = #tpu.dot_dimension_numbers<[1], [0], [0], [1], [0, 0, 1, 1], [], []>, precision = #tpu.contract_precision<fp32>} : vector<4x36xf32>, vector<36x256xf32>, vector<4x256xf32> -> vector<4x256xf32>
    %c0_47 = arith.constant 0 : index
    %c0_48 = arith.constant 0 : index
    %148 = vector.load %arg5[%c0_47, %c0_48] : memref<4x1xf32, #tpu.memory_space<vmem>>, vector<4x1xf32>
    %149 = vector.broadcast %148 : vector<4x1xf32> to vector<4x256xf32>
    %150 = arith.addf %147, %149 : vector<4x256xf32>
    %cst_49 = arith.constant dense<0.000000e+00> : vector<4xf32>
    %151 = vector.multi_reduction <add>, %150, %cst_49 [1] : vector<4x256xf32> to vector<4xf32>
    %152 = vector.shape_cast %151 : vector<4xf32> to vector<4x1xf32>
    %cst_50 = arith.constant 2.560000e+02 : f32
    %153 = vector.broadcast %cst_50 : f32 to vector<4x1xf32>
    %154 = arith.divf %152, %153 : vector<4x1xf32>
    %155 = vector.broadcast %154 : vector<4x1xf32> to vector<4x256xf32>
    %156 = arith.subf %150, %155 : vector<4x256xf32>
    %157 = arith.mulf %156, %156 : vector<4x256xf32>
    %cst_51 = arith.constant dense<0.000000e+00> : vector<4xf32>
    %158 = vector.multi_reduction <add>, %157, %cst_51 [1] : vector<4x256xf32> to vector<4xf32>
    %159 = vector.shape_cast %158 : vector<4xf32> to vector<4x1xf32>
    %cst_52 = arith.constant 2.560000e+02 : f32
    %160 = vector.broadcast %cst_52 : f32 to vector<4x1xf32>
    %161 = arith.divf %159, %160 : vector<4x1xf32>
    %162 = vector.broadcast %154 : vector<4x1xf32> to vector<4x256xf32>
    %163 = arith.subf %150, %162 : vector<4x256xf32>
    %cst_53 = arith.constant 9.99999974E-6 : f32
    %164 = vector.broadcast %cst_53 : f32 to vector<4x1xf32>
    %165 = arith.addf %161, %164 : vector<4x1xf32>
    %166 = math.rsqrt %165 : vector<4x1xf32>
    %167 = vector.broadcast %166 : vector<4x1xf32> to vector<4x256xf32>
    %168 = arith.mulf %163, %167 : vector<4x256xf32>
    %169 = arith.addf %168, %22 : vector<4x256xf32>
    %cst_54 = arith.constant 0.000000e+00 : f32
    %170 = vector.broadcast %cst_54 : f32 to vector<4x256xf32>
    %171 = arith.maximumf %169, %170 : vector<4x256xf32>
    %cst_55 = arith.constant 0.000000e+00 : f32
    %172 = vector.broadcast %cst_55 : f32 to vector<4x17xf32>
    %173 = vector.extract_strided_slice %171 {offsets = [0, 0], sizes = [4, 239], strides = [1, 1]} : vector<4x256xf32> to vector<4x239xf32>
    %174 = tpu.concatenate %172, %173 in 1 : vector<4x17xf32>, vector<4x239xf32> -> vector<4x256xf32>
    %cst_56 = arith.constant 0.000000e+00 : f32
    %175 = vector.shape_cast %18 : vector<1x256xi1> to vector<1x256xi1>
    %176 = vector.broadcast %175 : vector<1x256xi1> to vector<4x256xi1>
    %177 = vector.broadcast %cst_56 : f32 to vector<4x256xf32>
    %178 = arith.select %176, %174, %177 : vector<4x256xi1>, vector<4x256xf32>
    %cst_57 = arith.constant 0.000000e+00 : f32
    %179 = vector.broadcast %cst_57 : f32 to vector<4x16xf32>
    %180 = vector.extract_strided_slice %171 {offsets = [0, 0], sizes = [4, 240], strides = [1, 1]} : vector<4x256xf32> to vector<4x240xf32>
    %181 = tpu.concatenate %179, %180 in 1 : vector<4x16xf32>, vector<4x240xf32> -> vector<4x256xf32>
    %cst_58 = arith.constant 0.000000e+00 : f32
    %182 = vector.broadcast %cst_58 : f32 to vector<4x15xf32>
    %183 = vector.extract_strided_slice %171 {offsets = [0, 0], sizes = [4, 241], strides = [1, 1]} : vector<4x256xf32> to vector<4x241xf32>
    %184 = tpu.concatenate %182, %183 in 1 : vector<4x15xf32>, vector<4x241xf32> -> vector<4x256xf32>
    %cst_59 = arith.constant 0.000000e+00 : f32
    %185 = vector.shape_cast %20 : vector<1x256xi1> to vector<1x256xi1>
    %186 = vector.broadcast %185 : vector<1x256xi1> to vector<4x256xi1>
    %187 = vector.broadcast %cst_59 : f32 to vector<4x256xf32>
    %188 = arith.select %186, %184, %187 : vector<4x256xi1>, vector<4x256xf32>
    %cst_60 = arith.constant 0.000000e+00 : f32
    %189 = vector.broadcast %cst_60 : f32 to vector<4x1xf32>
    %190 = vector.extract_strided_slice %171 {offsets = [0, 0], sizes = [4, 255], strides = [1, 1]} : vector<4x256xf32> to vector<4x255xf32>
    %191 = tpu.concatenate %189, %190 in 1 : vector<4x1xf32>, vector<4x255xf32> -> vector<4x256xf32>
    %cst_61 = arith.constant 0.000000e+00 : f32
    %192 = vector.shape_cast %18 : vector<1x256xi1> to vector<1x256xi1>
    %193 = vector.broadcast %192 : vector<1x256xi1> to vector<4x256xi1>
    %194 = vector.broadcast %cst_61 : f32 to vector<4x256xf32>
    %195 = arith.select %193, %191, %194 : vector<4x256xi1>, vector<4x256xf32>
    %cst_62 = arith.constant 0.000000e+00 : f32
    %196 = vector.broadcast %cst_62 : f32 to vector<4x1xf32>
    %197 = vector.extract_strided_slice %171 {offsets = [0, 1], sizes = [4, 255], strides = [1, 1]} : vector<4x256xf32> to vector<4x255xf32>
    %198 = tpu.concatenate %197, %196 in 1 : vector<4x255xf32>, vector<4x1xf32> -> vector<4x256xf32>
    %cst_63 = arith.constant 0.000000e+00 : f32
    %199 = vector.shape_cast %20 : vector<1x256xi1> to vector<1x256xi1>
    %200 = vector.broadcast %199 : vector<1x256xi1> to vector<4x256xi1>
    %201 = vector.broadcast %cst_63 : f32 to vector<4x256xf32>
    %202 = arith.select %200, %198, %201 : vector<4x256xi1>, vector<4x256xf32>
    %cst_64 = arith.constant 0.000000e+00 : f32
    %203 = vector.broadcast %cst_64 : f32 to vector<4x15xf32>
    %204 = vector.extract_strided_slice %171 {offsets = [0, 15], sizes = [4, 241], strides = [1, 1]} : vector<4x256xf32> to vector<4x241xf32>
    %205 = tpu.concatenate %204, %203 in 1 : vector<4x241xf32>, vector<4x15xf32> -> vector<4x256xf32>
    %cst_65 = arith.constant 0.000000e+00 : f32
    %206 = vector.shape_cast %18 : vector<1x256xi1> to vector<1x256xi1>
    %207 = vector.broadcast %206 : vector<1x256xi1> to vector<4x256xi1>
    %208 = vector.broadcast %cst_65 : f32 to vector<4x256xf32>
    %209 = arith.select %207, %205, %208 : vector<4x256xi1>, vector<4x256xf32>
    %cst_66 = arith.constant 0.000000e+00 : f32
    %210 = vector.broadcast %cst_66 : f32 to vector<4x16xf32>
    %211 = vector.extract_strided_slice %171 {offsets = [0, 16], sizes = [4, 240], strides = [1, 1]} : vector<4x256xf32> to vector<4x240xf32>
    %212 = tpu.concatenate %211, %210 in 1 : vector<4x240xf32>, vector<4x16xf32> -> vector<4x256xf32>
    %cst_67 = arith.constant 0.000000e+00 : f32
    %213 = vector.broadcast %cst_67 : f32 to vector<4x17xf32>
    %214 = vector.extract_strided_slice %171 {offsets = [0, 17], sizes = [4, 239], strides = [1, 1]} : vector<4x256xf32> to vector<4x239xf32>
    %215 = tpu.concatenate %214, %213 in 1 : vector<4x239xf32>, vector<4x17xf32> -> vector<4x256xf32>
    %cst_68 = arith.constant 0.000000e+00 : f32
    %216 = vector.shape_cast %20 : vector<1x256xi1> to vector<1x256xi1>
    %217 = vector.broadcast %216 : vector<1x256xi1> to vector<4x256xi1>
    %218 = vector.broadcast %cst_68 : f32 to vector<4x256xf32>
    %219 = arith.select %217, %215, %218 : vector<4x256xi1>, vector<4x256xf32>
    %220 = tpu.concatenate %178, %181, %188, %195, %171, %202, %209, %212, %219 in 0 : vector<4x256xf32>, vector<4x256xf32>, vector<4x256xf32>, vector<4x256xf32>, vector<4x256xf32>, vector<4x256xf32>, vector<4x256xf32>, vector<4x256xf32>, vector<4x256xf32> -> vector<36x256xf32>
    %c0_69 = arith.constant 0 : index
    %c0_70 = arith.constant 0 : index
    %221 = vector.load %arg6[%c0_69, %c0_70] : memref<4x36xf32, #tpu.memory_space<vmem>>, vector<4x36xf32>
    %cst_71 = arith.constant dense<0.000000e+00> : vector<4x256xf32>
    %222 = tpu.matmul %221, %220, %cst_71 {dimension_numbers = #tpu.dot_dimension_numbers<[1], [0], [0], [1], [0, 0, 1, 1], [], []>, precision = #tpu.contract_precision<fp32>} : vector<4x36xf32>, vector<36x256xf32>, vector<4x256xf32> -> vector<4x256xf32>
    %c0_72 = arith.constant 0 : index
    %c0_73 = arith.constant 0 : index
    %223 = vector.load %arg7[%c0_72, %c0_73] : memref<4x1xf32, #tpu.memory_space<vmem>>, vector<4x1xf32>
    %224 = vector.broadcast %223 : vector<4x1xf32> to vector<4x256xf32>
    %225 = arith.addf %222, %224 : vector<4x256xf32>
    %226 = arith.addf %225, %22 : vector<4x256xf32>
    %cst_74 = arith.constant 0.000000e+00 : f32
    %227 = vector.broadcast %cst_74 : f32 to vector<4x17xf32>
    %228 = vector.extract_strided_slice %226 {offsets = [0, 0], sizes = [4, 239], strides = [1, 1]} : vector<4x256xf32> to vector<4x239xf32>
    %229 = tpu.concatenate %227, %228 in 1 : vector<4x17xf32>, vector<4x239xf32> -> vector<4x256xf32>
    %cst_75 = arith.constant 0.000000e+00 : f32
    %230 = vector.shape_cast %18 : vector<1x256xi1> to vector<1x256xi1>
    %231 = vector.broadcast %230 : vector<1x256xi1> to vector<4x256xi1>
    %232 = vector.broadcast %cst_75 : f32 to vector<4x256xf32>
    %233 = arith.select %231, %229, %232 : vector<4x256xi1>, vector<4x256xf32>
    %cst_76 = arith.constant 0.000000e+00 : f32
    %234 = vector.broadcast %cst_76 : f32 to vector<4x16xf32>
    %235 = vector.extract_strided_slice %226 {offsets = [0, 0], sizes = [4, 240], strides = [1, 1]} : vector<4x256xf32> to vector<4x240xf32>
    %236 = tpu.concatenate %234, %235 in 1 : vector<4x16xf32>, vector<4x240xf32> -> vector<4x256xf32>
    %cst_77 = arith.constant 0.000000e+00 : f32
    %237 = vector.broadcast %cst_77 : f32 to vector<4x15xf32>
    %238 = vector.extract_strided_slice %226 {offsets = [0, 0], sizes = [4, 241], strides = [1, 1]} : vector<4x256xf32> to vector<4x241xf32>
    %239 = tpu.concatenate %237, %238 in 1 : vector<4x15xf32>, vector<4x241xf32> -> vector<4x256xf32>
    %cst_78 = arith.constant 0.000000e+00 : f32
    %240 = vector.shape_cast %20 : vector<1x256xi1> to vector<1x256xi1>
    %241 = vector.broadcast %240 : vector<1x256xi1> to vector<4x256xi1>
    %242 = vector.broadcast %cst_78 : f32 to vector<4x256xf32>
    %243 = arith.select %241, %239, %242 : vector<4x256xi1>, vector<4x256xf32>
    %cst_79 = arith.constant 0.000000e+00 : f32
    %244 = vector.broadcast %cst_79 : f32 to vector<4x1xf32>
    %245 = vector.extract_strided_slice %226 {offsets = [0, 0], sizes = [4, 255], strides = [1, 1]} : vector<4x256xf32> to vector<4x255xf32>
    %246 = tpu.concatenate %244, %245 in 1 : vector<4x1xf32>, vector<4x255xf32> -> vector<4x256xf32>
    %cst_80 = arith.constant 0.000000e+00 : f32
    %247 = vector.shape_cast %18 : vector<1x256xi1> to vector<1x256xi1>
    %248 = vector.broadcast %247 : vector<1x256xi1> to vector<4x256xi1>
    %249 = vector.broadcast %cst_80 : f32 to vector<4x256xf32>
    %250 = arith.select %248, %246, %249 : vector<4x256xi1>, vector<4x256xf32>
    %cst_81 = arith.constant 0.000000e+00 : f32
    %251 = vector.broadcast %cst_81 : f32 to vector<4x1xf32>
    %252 = vector.extract_strided_slice %226 {offsets = [0, 1], sizes = [4, 255], strides = [1, 1]} : vector<4x256xf32> to vector<4x255xf32>
    %253 = tpu.concatenate %252, %251 in 1 : vector<4x255xf32>, vector<4x1xf32> -> vector<4x256xf32>
    %cst_82 = arith.constant 0.000000e+00 : f32
    %254 = vector.shape_cast %20 : vector<1x256xi1> to vector<1x256xi1>
    %255 = vector.broadcast %254 : vector<1x256xi1> to vector<4x256xi1>
    %256 = vector.broadcast %cst_82 : f32 to vector<4x256xf32>
    %257 = arith.select %255, %253, %256 : vector<4x256xi1>, vector<4x256xf32>
    %cst_83 = arith.constant 0.000000e+00 : f32
    %258 = vector.broadcast %cst_83 : f32 to vector<4x15xf32>
    %259 = vector.extract_strided_slice %226 {offsets = [0, 15], sizes = [4, 241], strides = [1, 1]} : vector<4x256xf32> to vector<4x241xf32>
    %260 = tpu.concatenate %259, %258 in 1 : vector<4x241xf32>, vector<4x15xf32> -> vector<4x256xf32>
    %cst_84 = arith.constant 0.000000e+00 : f32
    %261 = vector.shape_cast %18 : vector<1x256xi1> to vector<1x256xi1>
    %262 = vector.broadcast %261 : vector<1x256xi1> to vector<4x256xi1>
    %263 = vector.broadcast %cst_84 : f32 to vector<4x256xf32>
    %264 = arith.select %262, %260, %263 : vector<4x256xi1>, vector<4x256xf32>
    %cst_85 = arith.constant 0.000000e+00 : f32
    %265 = vector.broadcast %cst_85 : f32 to vector<4x16xf32>
    %266 = vector.extract_strided_slice %226 {offsets = [0, 16], sizes = [4, 240], strides = [1, 1]} : vector<4x256xf32> to vector<4x240xf32>
    %267 = tpu.concatenate %266, %265 in 1 : vector<4x240xf32>, vector<4x16xf32> -> vector<4x256xf32>
    %cst_86 = arith.constant 0.000000e+00 : f32
    %268 = vector.broadcast %cst_86 : f32 to vector<4x17xf32>
    %269 = vector.extract_strided_slice %226 {offsets = [0, 17], sizes = [4, 239], strides = [1, 1]} : vector<4x256xf32> to vector<4x239xf32>
    %270 = tpu.concatenate %269, %268 in 1 : vector<4x239xf32>, vector<4x17xf32> -> vector<4x256xf32>
    %cst_87 = arith.constant 0.000000e+00 : f32
    %271 = vector.shape_cast %20 : vector<1x256xi1> to vector<1x256xi1>
    %272 = vector.broadcast %271 : vector<1x256xi1> to vector<4x256xi1>
    %273 = vector.broadcast %cst_87 : f32 to vector<4x256xf32>
    %274 = arith.select %272, %270, %273 : vector<4x256xi1>, vector<4x256xf32>
    %275 = tpu.concatenate %233, %236, %243, %250, %226, %257, %264, %267, %274 in 0 : vector<4x256xf32>, vector<4x256xf32>, vector<4x256xf32>, vector<4x256xf32>, vector<4x256xf32>, vector<4x256xf32>, vector<4x256xf32>, vector<4x256xf32>, vector<4x256xf32> -> vector<36x256xf32>
    %c0_88 = arith.constant 0 : index
    %c0_89 = arith.constant 0 : index
    %276 = vector.load %arg2[%c0_88, %c0_89] : memref<4x36xf32, #tpu.memory_space<vmem>>, vector<4x36xf32>
    %cst_90 = arith.constant dense<0.000000e+00> : vector<4x256xf32>
    %277 = tpu.matmul %276, %275, %cst_90 {dimension_numbers = #tpu.dot_dimension_numbers<[1], [0], [0], [1], [0, 0, 1, 1], [], []>, precision = #tpu.contract_precision<fp32>} : vector<4x36xf32>, vector<36x256xf32>, vector<4x256xf32> -> vector<4x256xf32>
    %c0_91 = arith.constant 0 : index
    %c0_92 = arith.constant 0 : index
    %278 = vector.load %arg3[%c0_91, %c0_92] : memref<4x1xf32, #tpu.memory_space<vmem>>, vector<4x1xf32>
    %279 = vector.broadcast %278 : vector<4x1xf32> to vector<4x256xf32>
    %280 = arith.addf %277, %279 : vector<4x256xf32>
    %cst_93 = arith.constant dense<0.000000e+00> : vector<4xf32>
    %281 = vector.multi_reduction <add>, %280, %cst_93 [1] : vector<4x256xf32> to vector<4xf32>
    %282 = vector.shape_cast %281 : vector<4xf32> to vector<4x1xf32>
    %cst_94 = arith.constant 2.560000e+02 : f32
    %283 = vector.broadcast %cst_94 : f32 to vector<4x1xf32>
    %284 = arith.divf %282, %283 : vector<4x1xf32>
    %285 = vector.broadcast %284 : vector<4x1xf32> to vector<4x256xf32>
    %286 = arith.subf %280, %285 : vector<4x256xf32>
    %287 = arith.mulf %286, %286 : vector<4x256xf32>
    %cst_95 = arith.constant dense<0.000000e+00> : vector<4xf32>
    %288 = vector.multi_reduction <add>, %287, %cst_95 [1] : vector<4x256xf32> to vector<4xf32>
    %289 = vector.shape_cast %288 : vector<4xf32> to vector<4x1xf32>
    %cst_96 = arith.constant 2.560000e+02 : f32
    %290 = vector.broadcast %cst_96 : f32 to vector<4x1xf32>
    %291 = arith.divf %289, %290 : vector<4x1xf32>
    %292 = vector.broadcast %284 : vector<4x1xf32> to vector<4x256xf32>
    %293 = arith.subf %280, %292 : vector<4x256xf32>
    %cst_97 = arith.constant 9.99999974E-6 : f32
    %294 = vector.broadcast %cst_97 : f32 to vector<4x1xf32>
    %295 = arith.addf %291, %294 : vector<4x1xf32>
    %296 = math.rsqrt %295 : vector<4x1xf32>
    %297 = vector.broadcast %296 : vector<4x1xf32> to vector<4x256xf32>
    %298 = arith.mulf %293, %297 : vector<4x256xf32>
    %cst_98 = arith.constant 0.000000e+00 : f32
    %299 = vector.broadcast %cst_98 : f32 to vector<4x256xf32>
    %300 = arith.maximumf %298, %299 : vector<4x256xf32>
    %cst_99 = arith.constant 0.000000e+00 : f32
    %301 = vector.broadcast %cst_99 : f32 to vector<4x17xf32>
    %302 = vector.extract_strided_slice %300 {offsets = [0, 0], sizes = [4, 239], strides = [1, 1]} : vector<4x256xf32> to vector<4x239xf32>
    %303 = tpu.concatenate %301, %302 in 1 : vector<4x17xf32>, vector<4x239xf32> -> vector<4x256xf32>
    %cst_100 = arith.constant 0.000000e+00 : f32
    %304 = vector.shape_cast %18 : vector<1x256xi1> to vector<1x256xi1>
    %305 = vector.broadcast %304 : vector<1x256xi1> to vector<4x256xi1>
    %306 = vector.broadcast %cst_100 : f32 to vector<4x256xf32>
    %307 = arith.select %305, %303, %306 : vector<4x256xi1>, vector<4x256xf32>
    %cst_101 = arith.constant 0.000000e+00 : f32
    %308 = vector.broadcast %cst_101 : f32 to vector<4x16xf32>
    %309 = vector.extract_strided_slice %300 {offsets = [0, 0], sizes = [4, 240], strides = [1, 1]} : vector<4x256xf32> to vector<4x240xf32>
    %310 = tpu.concatenate %308, %309 in 1 : vector<4x16xf32>, vector<4x240xf32> -> vector<4x256xf32>
    %cst_102 = arith.constant 0.000000e+00 : f32
    %311 = vector.broadcast %cst_102 : f32 to vector<4x15xf32>
    %312 = vector.extract_strided_slice %300 {offsets = [0, 0], sizes = [4, 241], strides = [1, 1]} : vector<4x256xf32> to vector<4x241xf32>
    %313 = tpu.concatenate %311, %312 in 1 : vector<4x15xf32>, vector<4x241xf32> -> vector<4x256xf32>
    %cst_103 = arith.constant 0.000000e+00 : f32
    %314 = vector.shape_cast %20 : vector<1x256xi1> to vector<1x256xi1>
    %315 = vector.broadcast %314 : vector<1x256xi1> to vector<4x256xi1>
    %316 = vector.broadcast %cst_103 : f32 to vector<4x256xf32>
    %317 = arith.select %315, %313, %316 : vector<4x256xi1>, vector<4x256xf32>
    %cst_104 = arith.constant 0.000000e+00 : f32
    %318 = vector.broadcast %cst_104 : f32 to vector<4x1xf32>
    %319 = vector.extract_strided_slice %300 {offsets = [0, 0], sizes = [4, 255], strides = [1, 1]} : vector<4x256xf32> to vector<4x255xf32>
    %320 = tpu.concatenate %318, %319 in 1 : vector<4x1xf32>, vector<4x255xf32> -> vector<4x256xf32>
    %cst_105 = arith.constant 0.000000e+00 : f32
    %321 = vector.shape_cast %18 : vector<1x256xi1> to vector<1x256xi1>
    %322 = vector.broadcast %321 : vector<1x256xi1> to vector<4x256xi1>
    %323 = vector.broadcast %cst_105 : f32 to vector<4x256xf32>
    %324 = arith.select %322, %320, %323 : vector<4x256xi1>, vector<4x256xf32>
    %cst_106 = arith.constant 0.000000e+00 : f32
    %325 = vector.broadcast %cst_106 : f32 to vector<4x1xf32>
    %326 = vector.extract_strided_slice %300 {offsets = [0, 1], sizes = [4, 255], strides = [1, 1]} : vector<4x256xf32> to vector<4x255xf32>
    %327 = tpu.concatenate %326, %325 in 1 : vector<4x255xf32>, vector<4x1xf32> -> vector<4x256xf32>
    %cst_107 = arith.constant 0.000000e+00 : f32
    %328 = vector.shape_cast %20 : vector<1x256xi1> to vector<1x256xi1>
    %329 = vector.broadcast %328 : vector<1x256xi1> to vector<4x256xi1>
    %330 = vector.broadcast %cst_107 : f32 to vector<4x256xf32>
    %331 = arith.select %329, %327, %330 : vector<4x256xi1>, vector<4x256xf32>
    %cst_108 = arith.constant 0.000000e+00 : f32
    %332 = vector.broadcast %cst_108 : f32 to vector<4x15xf32>
    %333 = vector.extract_strided_slice %300 {offsets = [0, 15], sizes = [4, 241], strides = [1, 1]} : vector<4x256xf32> to vector<4x241xf32>
    %334 = tpu.concatenate %333, %332 in 1 : vector<4x241xf32>, vector<4x15xf32> -> vector<4x256xf32>
    %cst_109 = arith.constant 0.000000e+00 : f32
    %335 = vector.shape_cast %18 : vector<1x256xi1> to vector<1x256xi1>
    %336 = vector.broadcast %335 : vector<1x256xi1> to vector<4x256xi1>
    %337 = vector.broadcast %cst_109 : f32 to vector<4x256xf32>
    %338 = arith.select %336, %334, %337 : vector<4x256xi1>, vector<4x256xf32>
    %cst_110 = arith.constant 0.000000e+00 : f32
    %339 = vector.broadcast %cst_110 : f32 to vector<4x16xf32>
    %340 = vector.extract_strided_slice %300 {offsets = [0, 16], sizes = [4, 240], strides = [1, 1]} : vector<4x256xf32> to vector<4x240xf32>
    %341 = tpu.concatenate %340, %339 in 1 : vector<4x240xf32>, vector<4x16xf32> -> vector<4x256xf32>
    %cst_111 = arith.constant 0.000000e+00 : f32
    %342 = vector.broadcast %cst_111 : f32 to vector<4x17xf32>
    %343 = vector.extract_strided_slice %300 {offsets = [0, 17], sizes = [4, 239], strides = [1, 1]} : vector<4x256xf32> to vector<4x239xf32>
    %344 = tpu.concatenate %343, %342 in 1 : vector<4x239xf32>, vector<4x17xf32> -> vector<4x256xf32>
    %cst_112 = arith.constant 0.000000e+00 : f32
    %345 = vector.shape_cast %20 : vector<1x256xi1> to vector<1x256xi1>
    %346 = vector.broadcast %345 : vector<1x256xi1> to vector<4x256xi1>
    %347 = vector.broadcast %cst_112 : f32 to vector<4x256xf32>
    %348 = arith.select %346, %344, %347 : vector<4x256xi1>, vector<4x256xf32>
    %349 = tpu.concatenate %307, %310, %317, %324, %300, %331, %338, %341, %348 in 0 : vector<4x256xf32>, vector<4x256xf32>, vector<4x256xf32>, vector<4x256xf32>, vector<4x256xf32>, vector<4x256xf32>, vector<4x256xf32>, vector<4x256xf32>, vector<4x256xf32> -> vector<36x256xf32>
    %c0_113 = arith.constant 0 : index
    %c0_114 = arith.constant 0 : index
    %350 = vector.load %arg4[%c0_113, %c0_114] : memref<4x36xf32, #tpu.memory_space<vmem>>, vector<4x36xf32>
    %cst_115 = arith.constant dense<0.000000e+00> : vector<4x256xf32>
    %351 = tpu.matmul %350, %349, %cst_115 {dimension_numbers = #tpu.dot_dimension_numbers<[1], [0], [0], [1], [0, 0, 1, 1], [], []>, precision = #tpu.contract_precision<fp32>} : vector<4x36xf32>, vector<36x256xf32>, vector<4x256xf32> -> vector<4x256xf32>
    %c0_116 = arith.constant 0 : index
    %c0_117 = arith.constant 0 : index
    %352 = vector.load %arg5[%c0_116, %c0_117] : memref<4x1xf32, #tpu.memory_space<vmem>>, vector<4x1xf32>
    %353 = vector.broadcast %352 : vector<4x1xf32> to vector<4x256xf32>
    %354 = arith.addf %351, %353 : vector<4x256xf32>
    %cst_118 = arith.constant dense<0.000000e+00> : vector<4xf32>
    %355 = vector.multi_reduction <add>, %354, %cst_118 [1] : vector<4x256xf32> to vector<4xf32>
    %356 = vector.shape_cast %355 : vector<4xf32> to vector<4x1xf32>
    %cst_119 = arith.constant 2.560000e+02 : f32
    %357 = vector.broadcast %cst_119 : f32 to vector<4x1xf32>
    %358 = arith.divf %356, %357 : vector<4x1xf32>
    %359 = vector.broadcast %358 : vector<4x1xf32> to vector<4x256xf32>
    %360 = arith.subf %354, %359 : vector<4x256xf32>
    %361 = arith.mulf %360, %360 : vector<4x256xf32>
    %cst_120 = arith.constant dense<0.000000e+00> : vector<4xf32>
    %362 = vector.multi_reduction <add>, %361, %cst_120 [1] : vector<4x256xf32> to vector<4xf32>
    %363 = vector.shape_cast %362 : vector<4xf32> to vector<4x1xf32>
    %cst_121 = arith.constant 2.560000e+02 : f32
    %364 = vector.broadcast %cst_121 : f32 to vector<4x1xf32>
    %365 = arith.divf %363, %364 : vector<4x1xf32>
    %366 = vector.broadcast %358 : vector<4x1xf32> to vector<4x256xf32>
    %367 = arith.subf %354, %366 : vector<4x256xf32>
    %cst_122 = arith.constant 9.99999974E-6 : f32
    %368 = vector.broadcast %cst_122 : f32 to vector<4x1xf32>
    %369 = arith.addf %365, %368 : vector<4x1xf32>
    %370 = math.rsqrt %369 : vector<4x1xf32>
    %371 = vector.broadcast %370 : vector<4x1xf32> to vector<4x256xf32>
    %372 = arith.mulf %367, %371 : vector<4x256xf32>
    %373 = arith.addf %372, %226 : vector<4x256xf32>
    %cst_123 = arith.constant 0.000000e+00 : f32
    %374 = vector.broadcast %cst_123 : f32 to vector<4x256xf32>
    %375 = arith.maximumf %373, %374 : vector<4x256xf32>
    %cst_124 = arith.constant 0.000000e+00 : f32
    %376 = vector.broadcast %cst_124 : f32 to vector<4x17xf32>
    %377 = vector.extract_strided_slice %375 {offsets = [0, 0], sizes = [4, 239], strides = [1, 1]} : vector<4x256xf32> to vector<4x239xf32>
    %378 = tpu.concatenate %376, %377 in 1 : vector<4x17xf32>, vector<4x239xf32> -> vector<4x256xf32>
    %cst_125 = arith.constant 0.000000e+00 : f32
    %379 = vector.shape_cast %18 : vector<1x256xi1> to vector<1x256xi1>
    %380 = vector.broadcast %379 : vector<1x256xi1> to vector<4x256xi1>
    %381 = vector.broadcast %cst_125 : f32 to vector<4x256xf32>
    %382 = arith.select %380, %378, %381 : vector<4x256xi1>, vector<4x256xf32>
    %cst_126 = arith.constant 0.000000e+00 : f32
    %383 = vector.broadcast %cst_126 : f32 to vector<4x16xf32>
    %384 = vector.extract_strided_slice %375 {offsets = [0, 0], sizes = [4, 240], strides = [1, 1]} : vector<4x256xf32> to vector<4x240xf32>
    %385 = tpu.concatenate %383, %384 in 1 : vector<4x16xf32>, vector<4x240xf32> -> vector<4x256xf32>
    %cst_127 = arith.constant 0.000000e+00 : f32
    %386 = vector.broadcast %cst_127 : f32 to vector<4x15xf32>
    %387 = vector.extract_strided_slice %375 {offsets = [0, 0], sizes = [4, 241], strides = [1, 1]} : vector<4x256xf32> to vector<4x241xf32>
    %388 = tpu.concatenate %386, %387 in 1 : vector<4x15xf32>, vector<4x241xf32> -> vector<4x256xf32>
    %cst_128 = arith.constant 0.000000e+00 : f32
    %389 = vector.shape_cast %20 : vector<1x256xi1> to vector<1x256xi1>
    %390 = vector.broadcast %389 : vector<1x256xi1> to vector<4x256xi1>
    %391 = vector.broadcast %cst_128 : f32 to vector<4x256xf32>
    %392 = arith.select %390, %388, %391 : vector<4x256xi1>, vector<4x256xf32>
    %cst_129 = arith.constant 0.000000e+00 : f32
    %393 = vector.broadcast %cst_129 : f32 to vector<4x1xf32>
    %394 = vector.extract_strided_slice %375 {offsets = [0, 0], sizes = [4, 255], strides = [1, 1]} : vector<4x256xf32> to vector<4x255xf32>
    %395 = tpu.concatenate %393, %394 in 1 : vector<4x1xf32>, vector<4x255xf32> -> vector<4x256xf32>
    %cst_130 = arith.constant 0.000000e+00 : f32
    %396 = vector.shape_cast %18 : vector<1x256xi1> to vector<1x256xi1>
    %397 = vector.broadcast %396 : vector<1x256xi1> to vector<4x256xi1>
    %398 = vector.broadcast %cst_130 : f32 to vector<4x256xf32>
    %399 = arith.select %397, %395, %398 : vector<4x256xi1>, vector<4x256xf32>
    %cst_131 = arith.constant 0.000000e+00 : f32
    %400 = vector.broadcast %cst_131 : f32 to vector<4x1xf32>
    %401 = vector.extract_strided_slice %375 {offsets = [0, 1], sizes = [4, 255], strides = [1, 1]} : vector<4x256xf32> to vector<4x255xf32>
    %402 = tpu.concatenate %401, %400 in 1 : vector<4x255xf32>, vector<4x1xf32> -> vector<4x256xf32>
    %cst_132 = arith.constant 0.000000e+00 : f32
    %403 = vector.shape_cast %20 : vector<1x256xi1> to vector<1x256xi1>
    %404 = vector.broadcast %403 : vector<1x256xi1> to vector<4x256xi1>
    %405 = vector.broadcast %cst_132 : f32 to vector<4x256xf32>
    %406 = arith.select %404, %402, %405 : vector<4x256xi1>, vector<4x256xf32>
    %cst_133 = arith.constant 0.000000e+00 : f32
    %407 = vector.broadcast %cst_133 : f32 to vector<4x15xf32>
    %408 = vector.extract_strided_slice %375 {offsets = [0, 15], sizes = [4, 241], strides = [1, 1]} : vector<4x256xf32> to vector<4x241xf32>
    %409 = tpu.concatenate %408, %407 in 1 : vector<4x241xf32>, vector<4x15xf32> -> vector<4x256xf32>
    %cst_134 = arith.constant 0.000000e+00 : f32
    %410 = vector.shape_cast %18 : vector<1x256xi1> to vector<1x256xi1>
    %411 = vector.broadcast %410 : vector<1x256xi1> to vector<4x256xi1>
    %412 = vector.broadcast %cst_134 : f32 to vector<4x256xf32>
    %413 = arith.select %411, %409, %412 : vector<4x256xi1>, vector<4x256xf32>
    %cst_135 = arith.constant 0.000000e+00 : f32
    %414 = vector.broadcast %cst_135 : f32 to vector<4x16xf32>
    %415 = vector.extract_strided_slice %375 {offsets = [0, 16], sizes = [4, 240], strides = [1, 1]} : vector<4x256xf32> to vector<4x240xf32>
    %416 = tpu.concatenate %415, %414 in 1 : vector<4x240xf32>, vector<4x16xf32> -> vector<4x256xf32>
    %cst_136 = arith.constant 0.000000e+00 : f32
    %417 = vector.broadcast %cst_136 : f32 to vector<4x17xf32>
    %418 = vector.extract_strided_slice %375 {offsets = [0, 17], sizes = [4, 239], strides = [1, 1]} : vector<4x256xf32> to vector<4x239xf32>
    %419 = tpu.concatenate %418, %417 in 1 : vector<4x239xf32>, vector<4x17xf32> -> vector<4x256xf32>
    %cst_137 = arith.constant 0.000000e+00 : f32
    %420 = vector.shape_cast %20 : vector<1x256xi1> to vector<1x256xi1>
    %421 = vector.broadcast %420 : vector<1x256xi1> to vector<4x256xi1>
    %422 = vector.broadcast %cst_137 : f32 to vector<4x256xf32>
    %423 = arith.select %421, %419, %422 : vector<4x256xi1>, vector<4x256xf32>
    %424 = tpu.concatenate %382, %385, %392, %399, %375, %406, %413, %416, %423 in 0 : vector<4x256xf32>, vector<4x256xf32>, vector<4x256xf32>, vector<4x256xf32>, vector<4x256xf32>, vector<4x256xf32>, vector<4x256xf32>, vector<4x256xf32>, vector<4x256xf32> -> vector<36x256xf32>
    %c0_138 = arith.constant 0 : index
    %c0_139 = arith.constant 0 : index
    %425 = vector.load %arg6[%c0_138, %c0_139] : memref<4x36xf32, #tpu.memory_space<vmem>>, vector<4x36xf32>
    %cst_140 = arith.constant dense<0.000000e+00> : vector<4x256xf32>
    %426 = tpu.matmul %425, %424, %cst_140 {dimension_numbers = #tpu.dot_dimension_numbers<[1], [0], [0], [1], [0, 0, 1, 1], [], []>, precision = #tpu.contract_precision<fp32>} : vector<4x36xf32>, vector<36x256xf32>, vector<4x256xf32> -> vector<4x256xf32>
    %c0_141 = arith.constant 0 : index
    %c0_142 = arith.constant 0 : index
    %427 = vector.load %arg7[%c0_141, %c0_142] : memref<4x1xf32, #tpu.memory_space<vmem>>, vector<4x1xf32>
    %428 = vector.broadcast %427 : vector<4x1xf32> to vector<4x256xf32>
    %429 = arith.addf %426, %428 : vector<4x256xf32>
    %430 = arith.addf %429, %226 : vector<4x256xf32>
    %cst_143 = arith.constant 0.000000e+00 : f32
    %431 = vector.broadcast %cst_143 : f32 to vector<4x17xf32>
    %432 = vector.extract_strided_slice %430 {offsets = [0, 0], sizes = [4, 239], strides = [1, 1]} : vector<4x256xf32> to vector<4x239xf32>
    %433 = tpu.concatenate %431, %432 in 1 : vector<4x17xf32>, vector<4x239xf32> -> vector<4x256xf32>
    %cst_144 = arith.constant 0.000000e+00 : f32
    %434 = vector.shape_cast %18 : vector<1x256xi1> to vector<1x256xi1>
    %435 = vector.broadcast %434 : vector<1x256xi1> to vector<4x256xi1>
    %436 = vector.broadcast %cst_144 : f32 to vector<4x256xf32>
    %437 = arith.select %435, %433, %436 : vector<4x256xi1>, vector<4x256xf32>
    %cst_145 = arith.constant 0.000000e+00 : f32
    %438 = vector.broadcast %cst_145 : f32 to vector<4x16xf32>
    %439 = vector.extract_strided_slice %430 {offsets = [0, 0], sizes = [4, 240], strides = [1, 1]} : vector<4x256xf32> to vector<4x240xf32>
    %440 = tpu.concatenate %438, %439 in 1 : vector<4x16xf32>, vector<4x240xf32> -> vector<4x256xf32>
    %cst_146 = arith.constant 0.000000e+00 : f32
    %441 = vector.broadcast %cst_146 : f32 to vector<4x15xf32>
    %442 = vector.extract_strided_slice %430 {offsets = [0, 0], sizes = [4, 241], strides = [1, 1]} : vector<4x256xf32> to vector<4x241xf32>
    %443 = tpu.concatenate %441, %442 in 1 : vector<4x15xf32>, vector<4x241xf32> -> vector<4x256xf32>
    %cst_147 = arith.constant 0.000000e+00 : f32
    %444 = vector.shape_cast %20 : vector<1x256xi1> to vector<1x256xi1>
    %445 = vector.broadcast %444 : vector<1x256xi1> to vector<4x256xi1>
    %446 = vector.broadcast %cst_147 : f32 to vector<4x256xf32>
    %447 = arith.select %445, %443, %446 : vector<4x256xi1>, vector<4x256xf32>
    %cst_148 = arith.constant 0.000000e+00 : f32
    %448 = vector.broadcast %cst_148 : f32 to vector<4x1xf32>
    %449 = vector.extract_strided_slice %430 {offsets = [0, 0], sizes = [4, 255], strides = [1, 1]} : vector<4x256xf32> to vector<4x255xf32>
    %450 = tpu.concatenate %448, %449 in 1 : vector<4x1xf32>, vector<4x255xf32> -> vector<4x256xf32>
    %cst_149 = arith.constant 0.000000e+00 : f32
    %451 = vector.shape_cast %18 : vector<1x256xi1> to vector<1x256xi1>
    %452 = vector.broadcast %451 : vector<1x256xi1> to vector<4x256xi1>
    %453 = vector.broadcast %cst_149 : f32 to vector<4x256xf32>
    %454 = arith.select %452, %450, %453 : vector<4x256xi1>, vector<4x256xf32>
    %cst_150 = arith.constant 0.000000e+00 : f32
    %455 = vector.broadcast %cst_150 : f32 to vector<4x1xf32>
    %456 = vector.extract_strided_slice %430 {offsets = [0, 1], sizes = [4, 255], strides = [1, 1]} : vector<4x256xf32> to vector<4x255xf32>
    %457 = tpu.concatenate %456, %455 in 1 : vector<4x255xf32>, vector<4x1xf32> -> vector<4x256xf32>
    %cst_151 = arith.constant 0.000000e+00 : f32
    %458 = vector.shape_cast %20 : vector<1x256xi1> to vector<1x256xi1>
    %459 = vector.broadcast %458 : vector<1x256xi1> to vector<4x256xi1>
    %460 = vector.broadcast %cst_151 : f32 to vector<4x256xf32>
    %461 = arith.select %459, %457, %460 : vector<4x256xi1>, vector<4x256xf32>
    %cst_152 = arith.constant 0.000000e+00 : f32
    %462 = vector.broadcast %cst_152 : f32 to vector<4x15xf32>
    %463 = vector.extract_strided_slice %430 {offsets = [0, 15], sizes = [4, 241], strides = [1, 1]} : vector<4x256xf32> to vector<4x241xf32>
    %464 = tpu.concatenate %463, %462 in 1 : vector<4x241xf32>, vector<4x15xf32> -> vector<4x256xf32>
    %cst_153 = arith.constant 0.000000e+00 : f32
    %465 = vector.shape_cast %18 : vector<1x256xi1> to vector<1x256xi1>
    %466 = vector.broadcast %465 : vector<1x256xi1> to vector<4x256xi1>
    %467 = vector.broadcast %cst_153 : f32 to vector<4x256xf32>
    %468 = arith.select %466, %464, %467 : vector<4x256xi1>, vector<4x256xf32>
    %cst_154 = arith.constant 0.000000e+00 : f32
    %469 = vector.broadcast %cst_154 : f32 to vector<4x16xf32>
    %470 = vector.extract_strided_slice %430 {offsets = [0, 16], sizes = [4, 240], strides = [1, 1]} : vector<4x256xf32> to vector<4x240xf32>
    %471 = tpu.concatenate %470, %469 in 1 : vector<4x240xf32>, vector<4x16xf32> -> vector<4x256xf32>
    %cst_155 = arith.constant 0.000000e+00 : f32
    %472 = vector.broadcast %cst_155 : f32 to vector<4x17xf32>
    %473 = vector.extract_strided_slice %430 {offsets = [0, 17], sizes = [4, 239], strides = [1, 1]} : vector<4x256xf32> to vector<4x239xf32>
    %474 = tpu.concatenate %473, %472 in 1 : vector<4x239xf32>, vector<4x17xf32> -> vector<4x256xf32>
    %cst_156 = arith.constant 0.000000e+00 : f32
    %475 = vector.shape_cast %20 : vector<1x256xi1> to vector<1x256xi1>
    %476 = vector.broadcast %475 : vector<1x256xi1> to vector<4x256xi1>
    %477 = vector.broadcast %cst_156 : f32 to vector<4x256xf32>
    %478 = arith.select %476, %474, %477 : vector<4x256xi1>, vector<4x256xf32>
    %479 = tpu.concatenate %437, %440, %447, %454, %430, %461, %468, %471, %478 in 0 : vector<4x256xf32>, vector<4x256xf32>, vector<4x256xf32>, vector<4x256xf32>, vector<4x256xf32>, vector<4x256xf32>, vector<4x256xf32>, vector<4x256xf32>, vector<4x256xf32> -> vector<36x256xf32>
    %c0_157 = arith.constant 0 : index
    %c0_158 = arith.constant 0 : index
    %480 = vector.load %arg2[%c0_157, %c0_158] : memref<4x36xf32, #tpu.memory_space<vmem>>, vector<4x36xf32>
    %cst_159 = arith.constant dense<0.000000e+00> : vector<4x256xf32>
    %481 = tpu.matmul %480, %479, %cst_159 {dimension_numbers = #tpu.dot_dimension_numbers<[1], [0], [0], [1], [0, 0, 1, 1], [], []>, precision = #tpu.contract_precision<fp32>} : vector<4x36xf32>, vector<36x256xf32>, vector<4x256xf32> -> vector<4x256xf32>
    %c0_160 = arith.constant 0 : index
    %c0_161 = arith.constant 0 : index
    %482 = vector.load %arg3[%c0_160, %c0_161] : memref<4x1xf32, #tpu.memory_space<vmem>>, vector<4x1xf32>
    %483 = vector.broadcast %482 : vector<4x1xf32> to vector<4x256xf32>
    %484 = arith.addf %481, %483 : vector<4x256xf32>
    %cst_162 = arith.constant dense<0.000000e+00> : vector<4xf32>
    %485 = vector.multi_reduction <add>, %484, %cst_162 [1] : vector<4x256xf32> to vector<4xf32>
    %486 = vector.shape_cast %485 : vector<4xf32> to vector<4x1xf32>
    %cst_163 = arith.constant 2.560000e+02 : f32
    %487 = vector.broadcast %cst_163 : f32 to vector<4x1xf32>
    %488 = arith.divf %486, %487 : vector<4x1xf32>
    %489 = vector.broadcast %488 : vector<4x1xf32> to vector<4x256xf32>
    %490 = arith.subf %484, %489 : vector<4x256xf32>
    %491 = arith.mulf %490, %490 : vector<4x256xf32>
    %cst_164 = arith.constant dense<0.000000e+00> : vector<4xf32>
    %492 = vector.multi_reduction <add>, %491, %cst_164 [1] : vector<4x256xf32> to vector<4xf32>
    %493 = vector.shape_cast %492 : vector<4xf32> to vector<4x1xf32>
    %cst_165 = arith.constant 2.560000e+02 : f32
    %494 = vector.broadcast %cst_165 : f32 to vector<4x1xf32>
    %495 = arith.divf %493, %494 : vector<4x1xf32>
    %496 = vector.broadcast %488 : vector<4x1xf32> to vector<4x256xf32>
    %497 = arith.subf %484, %496 : vector<4x256xf32>
    %cst_166 = arith.constant 9.99999974E-6 : f32
    %498 = vector.broadcast %cst_166 : f32 to vector<4x1xf32>
    %499 = arith.addf %495, %498 : vector<4x1xf32>
    %500 = math.rsqrt %499 : vector<4x1xf32>
    %501 = vector.broadcast %500 : vector<4x1xf32> to vector<4x256xf32>
    %502 = arith.mulf %497, %501 : vector<4x256xf32>
    %cst_167 = arith.constant 0.000000e+00 : f32
    %503 = vector.broadcast %cst_167 : f32 to vector<4x256xf32>
    %504 = arith.maximumf %502, %503 : vector<4x256xf32>
    %cst_168 = arith.constant 0.000000e+00 : f32
    %505 = vector.broadcast %cst_168 : f32 to vector<4x17xf32>
    %506 = vector.extract_strided_slice %504 {offsets = [0, 0], sizes = [4, 239], strides = [1, 1]} : vector<4x256xf32> to vector<4x239xf32>
    %507 = tpu.concatenate %505, %506 in 1 : vector<4x17xf32>, vector<4x239xf32> -> vector<4x256xf32>
    %cst_169 = arith.constant 0.000000e+00 : f32
    %508 = vector.shape_cast %18 : vector<1x256xi1> to vector<1x256xi1>
    %509 = vector.broadcast %508 : vector<1x256xi1> to vector<4x256xi1>
    %510 = vector.broadcast %cst_169 : f32 to vector<4x256xf32>
    %511 = arith.select %509, %507, %510 : vector<4x256xi1>, vector<4x256xf32>
    %cst_170 = arith.constant 0.000000e+00 : f32
    %512 = vector.broadcast %cst_170 : f32 to vector<4x16xf32>
    %513 = vector.extract_strided_slice %504 {offsets = [0, 0], sizes = [4, 240], strides = [1, 1]} : vector<4x256xf32> to vector<4x240xf32>
    %514 = tpu.concatenate %512, %513 in 1 : vector<4x16xf32>, vector<4x240xf32> -> vector<4x256xf32>
    %cst_171 = arith.constant 0.000000e+00 : f32
    %515 = vector.broadcast %cst_171 : f32 to vector<4x15xf32>
    %516 = vector.extract_strided_slice %504 {offsets = [0, 0], sizes = [4, 241], strides = [1, 1]} : vector<4x256xf32> to vector<4x241xf32>
    %517 = tpu.concatenate %515, %516 in 1 : vector<4x15xf32>, vector<4x241xf32> -> vector<4x256xf32>
    %cst_172 = arith.constant 0.000000e+00 : f32
    %518 = vector.shape_cast %20 : vector<1x256xi1> to vector<1x256xi1>
    %519 = vector.broadcast %518 : vector<1x256xi1> to vector<4x256xi1>
    %520 = vector.broadcast %cst_172 : f32 to vector<4x256xf32>
    %521 = arith.select %519, %517, %520 : vector<4x256xi1>, vector<4x256xf32>
    %cst_173 = arith.constant 0.000000e+00 : f32
    %522 = vector.broadcast %cst_173 : f32 to vector<4x1xf32>
    %523 = vector.extract_strided_slice %504 {offsets = [0, 0], sizes = [4, 255], strides = [1, 1]} : vector<4x256xf32> to vector<4x255xf32>
    %524 = tpu.concatenate %522, %523 in 1 : vector<4x1xf32>, vector<4x255xf32> -> vector<4x256xf32>
    %cst_174 = arith.constant 0.000000e+00 : f32
    %525 = vector.shape_cast %18 : vector<1x256xi1> to vector<1x256xi1>
    %526 = vector.broadcast %525 : vector<1x256xi1> to vector<4x256xi1>
    %527 = vector.broadcast %cst_174 : f32 to vector<4x256xf32>
    %528 = arith.select %526, %524, %527 : vector<4x256xi1>, vector<4x256xf32>
    %cst_175 = arith.constant 0.000000e+00 : f32
    %529 = vector.broadcast %cst_175 : f32 to vector<4x1xf32>
    %530 = vector.extract_strided_slice %504 {offsets = [0, 1], sizes = [4, 255], strides = [1, 1]} : vector<4x256xf32> to vector<4x255xf32>
    %531 = tpu.concatenate %530, %529 in 1 : vector<4x255xf32>, vector<4x1xf32> -> vector<4x256xf32>
    %cst_176 = arith.constant 0.000000e+00 : f32
    %532 = vector.shape_cast %20 : vector<1x256xi1> to vector<1x256xi1>
    %533 = vector.broadcast %532 : vector<1x256xi1> to vector<4x256xi1>
    %534 = vector.broadcast %cst_176 : f32 to vector<4x256xf32>
    %535 = arith.select %533, %531, %534 : vector<4x256xi1>, vector<4x256xf32>
    %cst_177 = arith.constant 0.000000e+00 : f32
    %536 = vector.broadcast %cst_177 : f32 to vector<4x15xf32>
    %537 = vector.extract_strided_slice %504 {offsets = [0, 15], sizes = [4, 241], strides = [1, 1]} : vector<4x256xf32> to vector<4x241xf32>
    %538 = tpu.concatenate %537, %536 in 1 : vector<4x241xf32>, vector<4x15xf32> -> vector<4x256xf32>
    %cst_178 = arith.constant 0.000000e+00 : f32
    %539 = vector.shape_cast %18 : vector<1x256xi1> to vector<1x256xi1>
    %540 = vector.broadcast %539 : vector<1x256xi1> to vector<4x256xi1>
    %541 = vector.broadcast %cst_178 : f32 to vector<4x256xf32>
    %542 = arith.select %540, %538, %541 : vector<4x256xi1>, vector<4x256xf32>
    %cst_179 = arith.constant 0.000000e+00 : f32
    %543 = vector.broadcast %cst_179 : f32 to vector<4x16xf32>
    %544 = vector.extract_strided_slice %504 {offsets = [0, 16], sizes = [4, 240], strides = [1, 1]} : vector<4x256xf32> to vector<4x240xf32>
    %545 = tpu.concatenate %544, %543 in 1 : vector<4x240xf32>, vector<4x16xf32> -> vector<4x256xf32>
    %cst_180 = arith.constant 0.000000e+00 : f32
    %546 = vector.broadcast %cst_180 : f32 to vector<4x17xf32>
    %547 = vector.extract_strided_slice %504 {offsets = [0, 17], sizes = [4, 239], strides = [1, 1]} : vector<4x256xf32> to vector<4x239xf32>
    %548 = tpu.concatenate %547, %546 in 1 : vector<4x239xf32>, vector<4x17xf32> -> vector<4x256xf32>
    %cst_181 = arith.constant 0.000000e+00 : f32
    %549 = vector.shape_cast %20 : vector<1x256xi1> to vector<1x256xi1>
    %550 = vector.broadcast %549 : vector<1x256xi1> to vector<4x256xi1>
    %551 = vector.broadcast %cst_181 : f32 to vector<4x256xf32>
    %552 = arith.select %550, %548, %551 : vector<4x256xi1>, vector<4x256xf32>
    %553 = tpu.concatenate %511, %514, %521, %528, %504, %535, %542, %545, %552 in 0 : vector<4x256xf32>, vector<4x256xf32>, vector<4x256xf32>, vector<4x256xf32>, vector<4x256xf32>, vector<4x256xf32>, vector<4x256xf32>, vector<4x256xf32>, vector<4x256xf32> -> vector<36x256xf32>
    %c0_182 = arith.constant 0 : index
    %c0_183 = arith.constant 0 : index
    %554 = vector.load %arg4[%c0_182, %c0_183] : memref<4x36xf32, #tpu.memory_space<vmem>>, vector<4x36xf32>
    %cst_184 = arith.constant dense<0.000000e+00> : vector<4x256xf32>
    %555 = tpu.matmul %554, %553, %cst_184 {dimension_numbers = #tpu.dot_dimension_numbers<[1], [0], [0], [1], [0, 0, 1, 1], [], []>, precision = #tpu.contract_precision<fp32>} : vector<4x36xf32>, vector<36x256xf32>, vector<4x256xf32> -> vector<4x256xf32>
    %c0_185 = arith.constant 0 : index
    %c0_186 = arith.constant 0 : index
    %556 = vector.load %arg5[%c0_185, %c0_186] : memref<4x1xf32, #tpu.memory_space<vmem>>, vector<4x1xf32>
    %557 = vector.broadcast %556 : vector<4x1xf32> to vector<4x256xf32>
    %558 = arith.addf %555, %557 : vector<4x256xf32>
    %cst_187 = arith.constant dense<0.000000e+00> : vector<4xf32>
    %559 = vector.multi_reduction <add>, %558, %cst_187 [1] : vector<4x256xf32> to vector<4xf32>
    %560 = vector.shape_cast %559 : vector<4xf32> to vector<4x1xf32>
    %cst_188 = arith.constant 2.560000e+02 : f32
    %561 = vector.broadcast %cst_188 : f32 to vector<4x1xf32>
    %562 = arith.divf %560, %561 : vector<4x1xf32>
    %563 = vector.broadcast %562 : vector<4x1xf32> to vector<4x256xf32>
    %564 = arith.subf %558, %563 : vector<4x256xf32>
    %565 = arith.mulf %564, %564 : vector<4x256xf32>
    %cst_189 = arith.constant dense<0.000000e+00> : vector<4xf32>
    %566 = vector.multi_reduction <add>, %565, %cst_189 [1] : vector<4x256xf32> to vector<4xf32>
    %567 = vector.shape_cast %566 : vector<4xf32> to vector<4x1xf32>
    %cst_190 = arith.constant 2.560000e+02 : f32
    %568 = vector.broadcast %cst_190 : f32 to vector<4x1xf32>
    %569 = arith.divf %567, %568 : vector<4x1xf32>
    %570 = vector.broadcast %562 : vector<4x1xf32> to vector<4x256xf32>
    %571 = arith.subf %558, %570 : vector<4x256xf32>
    %cst_191 = arith.constant 9.99999974E-6 : f32
    %572 = vector.broadcast %cst_191 : f32 to vector<4x1xf32>
    %573 = arith.addf %569, %572 : vector<4x1xf32>
    %574 = math.rsqrt %573 : vector<4x1xf32>
    %575 = vector.broadcast %574 : vector<4x1xf32> to vector<4x256xf32>
    %576 = arith.mulf %571, %575 : vector<4x256xf32>
    %577 = arith.addf %576, %430 : vector<4x256xf32>
    %cst_192 = arith.constant 0.000000e+00 : f32
    %578 = vector.broadcast %cst_192 : f32 to vector<4x256xf32>
    %579 = arith.maximumf %577, %578 : vector<4x256xf32>
    %cst_193 = arith.constant 0.000000e+00 : f32
    %580 = vector.broadcast %cst_193 : f32 to vector<4x17xf32>
    %581 = vector.extract_strided_slice %579 {offsets = [0, 0], sizes = [4, 239], strides = [1, 1]} : vector<4x256xf32> to vector<4x239xf32>
    %582 = tpu.concatenate %580, %581 in 1 : vector<4x17xf32>, vector<4x239xf32> -> vector<4x256xf32>
    %cst_194 = arith.constant 0.000000e+00 : f32
    %583 = vector.shape_cast %18 : vector<1x256xi1> to vector<1x256xi1>
    %584 = vector.broadcast %583 : vector<1x256xi1> to vector<4x256xi1>
    %585 = vector.broadcast %cst_194 : f32 to vector<4x256xf32>
    %586 = arith.select %584, %582, %585 : vector<4x256xi1>, vector<4x256xf32>
    %cst_195 = arith.constant 0.000000e+00 : f32
    %587 = vector.broadcast %cst_195 : f32 to vector<4x16xf32>
    %588 = vector.extract_strided_slice %579 {offsets = [0, 0], sizes = [4, 240], strides = [1, 1]} : vector<4x256xf32> to vector<4x240xf32>
    %589 = tpu.concatenate %587, %588 in 1 : vector<4x16xf32>, vector<4x240xf32> -> vector<4x256xf32>
    %cst_196 = arith.constant 0.000000e+00 : f32
    %590 = vector.broadcast %cst_196 : f32 to vector<4x15xf32>
    %591 = vector.extract_strided_slice %579 {offsets = [0, 0], sizes = [4, 241], strides = [1, 1]} : vector<4x256xf32> to vector<4x241xf32>
    %592 = tpu.concatenate %590, %591 in 1 : vector<4x15xf32>, vector<4x241xf32> -> vector<4x256xf32>
    %cst_197 = arith.constant 0.000000e+00 : f32
    %593 = vector.shape_cast %20 : vector<1x256xi1> to vector<1x256xi1>
    %594 = vector.broadcast %593 : vector<1x256xi1> to vector<4x256xi1>
    %595 = vector.broadcast %cst_197 : f32 to vector<4x256xf32>
    %596 = arith.select %594, %592, %595 : vector<4x256xi1>, vector<4x256xf32>
    %cst_198 = arith.constant 0.000000e+00 : f32
    %597 = vector.broadcast %cst_198 : f32 to vector<4x1xf32>
    %598 = vector.extract_strided_slice %579 {offsets = [0, 0], sizes = [4, 255], strides = [1, 1]} : vector<4x256xf32> to vector<4x255xf32>
    %599 = tpu.concatenate %597, %598 in 1 : vector<4x1xf32>, vector<4x255xf32> -> vector<4x256xf32>
    %cst_199 = arith.constant 0.000000e+00 : f32
    %600 = vector.shape_cast %18 : vector<1x256xi1> to vector<1x256xi1>
    %601 = vector.broadcast %600 : vector<1x256xi1> to vector<4x256xi1>
    %602 = vector.broadcast %cst_199 : f32 to vector<4x256xf32>
    %603 = arith.select %601, %599, %602 : vector<4x256xi1>, vector<4x256xf32>
    %cst_200 = arith.constant 0.000000e+00 : f32
    %604 = vector.broadcast %cst_200 : f32 to vector<4x1xf32>
    %605 = vector.extract_strided_slice %579 {offsets = [0, 1], sizes = [4, 255], strides = [1, 1]} : vector<4x256xf32> to vector<4x255xf32>
    %606 = tpu.concatenate %605, %604 in 1 : vector<4x255xf32>, vector<4x1xf32> -> vector<4x256xf32>
    %cst_201 = arith.constant 0.000000e+00 : f32
    %607 = vector.shape_cast %20 : vector<1x256xi1> to vector<1x256xi1>
    %608 = vector.broadcast %607 : vector<1x256xi1> to vector<4x256xi1>
    %609 = vector.broadcast %cst_201 : f32 to vector<4x256xf32>
    %610 = arith.select %608, %606, %609 : vector<4x256xi1>, vector<4x256xf32>
    %cst_202 = arith.constant 0.000000e+00 : f32
    %611 = vector.broadcast %cst_202 : f32 to vector<4x15xf32>
    %612 = vector.extract_strided_slice %579 {offsets = [0, 15], sizes = [4, 241], strides = [1, 1]} : vector<4x256xf32> to vector<4x241xf32>
    %613 = tpu.concatenate %612, %611 in 1 : vector<4x241xf32>, vector<4x15xf32> -> vector<4x256xf32>
    %cst_203 = arith.constant 0.000000e+00 : f32
    %614 = vector.shape_cast %18 : vector<1x256xi1> to vector<1x256xi1>
    %615 = vector.broadcast %614 : vector<1x256xi1> to vector<4x256xi1>
    %616 = vector.broadcast %cst_203 : f32 to vector<4x256xf32>
    %617 = arith.select %615, %613, %616 : vector<4x256xi1>, vector<4x256xf32>
    %cst_204 = arith.constant 0.000000e+00 : f32
    %618 = vector.broadcast %cst_204 : f32 to vector<4x16xf32>
    %619 = vector.extract_strided_slice %579 {offsets = [0, 16], sizes = [4, 240], strides = [1, 1]} : vector<4x256xf32> to vector<4x240xf32>
    %620 = tpu.concatenate %619, %618 in 1 : vector<4x240xf32>, vector<4x16xf32> -> vector<4x256xf32>
    %cst_205 = arith.constant 0.000000e+00 : f32
    %621 = vector.broadcast %cst_205 : f32 to vector<4x17xf32>
    %622 = vector.extract_strided_slice %579 {offsets = [0, 17], sizes = [4, 239], strides = [1, 1]} : vector<4x256xf32> to vector<4x239xf32>
    %623 = tpu.concatenate %622, %621 in 1 : vector<4x239xf32>, vector<4x17xf32> -> vector<4x256xf32>
    %cst_206 = arith.constant 0.000000e+00 : f32
    %624 = vector.shape_cast %20 : vector<1x256xi1> to vector<1x256xi1>
    %625 = vector.broadcast %624 : vector<1x256xi1> to vector<4x256xi1>
    %626 = vector.broadcast %cst_206 : f32 to vector<4x256xf32>
    %627 = arith.select %625, %623, %626 : vector<4x256xi1>, vector<4x256xf32>
    %628 = tpu.concatenate %586, %589, %596, %603, %579, %610, %617, %620, %627 in 0 : vector<4x256xf32>, vector<4x256xf32>, vector<4x256xf32>, vector<4x256xf32>, vector<4x256xf32>, vector<4x256xf32>, vector<4x256xf32>, vector<4x256xf32>, vector<4x256xf32> -> vector<36x256xf32>
    %c0_207 = arith.constant 0 : index
    %c0_208 = arith.constant 0 : index
    %629 = vector.load %arg6[%c0_207, %c0_208] : memref<4x36xf32, #tpu.memory_space<vmem>>, vector<4x36xf32>
    %cst_209 = arith.constant dense<0.000000e+00> : vector<4x256xf32>
    %630 = tpu.matmul %629, %628, %cst_209 {dimension_numbers = #tpu.dot_dimension_numbers<[1], [0], [0], [1], [0, 0, 1, 1], [], []>, precision = #tpu.contract_precision<fp32>} : vector<4x36xf32>, vector<36x256xf32>, vector<4x256xf32> -> vector<4x256xf32>
    %c0_210 = arith.constant 0 : index
    %c0_211 = arith.constant 0 : index
    %631 = vector.load %arg7[%c0_210, %c0_211] : memref<4x1xf32, #tpu.memory_space<vmem>>, vector<4x1xf32>
    %632 = vector.broadcast %631 : vector<4x1xf32> to vector<4x256xf32>
    %633 = arith.addf %630, %632 : vector<4x256xf32>
    %634 = arith.addf %633, %430 : vector<4x256xf32>
    %cst_212 = arith.constant 0.000000e+00 : f32
    %635 = vector.broadcast %cst_212 : f32 to vector<4x17xf32>
    %636 = vector.extract_strided_slice %634 {offsets = [0, 0], sizes = [4, 239], strides = [1, 1]} : vector<4x256xf32> to vector<4x239xf32>
    %637 = tpu.concatenate %635, %636 in 1 : vector<4x17xf32>, vector<4x239xf32> -> vector<4x256xf32>
    %cst_213 = arith.constant 0.000000e+00 : f32
    %638 = vector.shape_cast %18 : vector<1x256xi1> to vector<1x256xi1>
    %639 = vector.broadcast %638 : vector<1x256xi1> to vector<4x256xi1>
    %640 = vector.broadcast %cst_213 : f32 to vector<4x256xf32>
    %641 = arith.select %639, %637, %640 : vector<4x256xi1>, vector<4x256xf32>
    %cst_214 = arith.constant 0.000000e+00 : f32
    %642 = vector.broadcast %cst_214 : f32 to vector<4x16xf32>
    %643 = vector.extract_strided_slice %634 {offsets = [0, 0], sizes = [4, 240], strides = [1, 1]} : vector<4x256xf32> to vector<4x240xf32>
    %644 = tpu.concatenate %642, %643 in 1 : vector<4x16xf32>, vector<4x240xf32> -> vector<4x256xf32>
    %cst_215 = arith.constant 0.000000e+00 : f32
    %645 = vector.broadcast %cst_215 : f32 to vector<4x15xf32>
    %646 = vector.extract_strided_slice %634 {offsets = [0, 0], sizes = [4, 241], strides = [1, 1]} : vector<4x256xf32> to vector<4x241xf32>
    %647 = tpu.concatenate %645, %646 in 1 : vector<4x15xf32>, vector<4x241xf32> -> vector<4x256xf32>
    %cst_216 = arith.constant 0.000000e+00 : f32
    %648 = vector.shape_cast %20 : vector<1x256xi1> to vector<1x256xi1>
    %649 = vector.broadcast %648 : vector<1x256xi1> to vector<4x256xi1>
    %650 = vector.broadcast %cst_216 : f32 to vector<4x256xf32>
    %651 = arith.select %649, %647, %650 : vector<4x256xi1>, vector<4x256xf32>
    %cst_217 = arith.constant 0.000000e+00 : f32
    %652 = vector.broadcast %cst_217 : f32 to vector<4x1xf32>
    %653 = vector.extract_strided_slice %634 {offsets = [0, 0], sizes = [4, 255], strides = [1, 1]} : vector<4x256xf32> to vector<4x255xf32>
    %654 = tpu.concatenate %652, %653 in 1 : vector<4x1xf32>, vector<4x255xf32> -> vector<4x256xf32>
    %cst_218 = arith.constant 0.000000e+00 : f32
    %655 = vector.shape_cast %18 : vector<1x256xi1> to vector<1x256xi1>
    %656 = vector.broadcast %655 : vector<1x256xi1> to vector<4x256xi1>
    %657 = vector.broadcast %cst_218 : f32 to vector<4x256xf32>
    %658 = arith.select %656, %654, %657 : vector<4x256xi1>, vector<4x256xf32>
    %cst_219 = arith.constant 0.000000e+00 : f32
    %659 = vector.broadcast %cst_219 : f32 to vector<4x1xf32>
    %660 = vector.extract_strided_slice %634 {offsets = [0, 1], sizes = [4, 255], strides = [1, 1]} : vector<4x256xf32> to vector<4x255xf32>
    %661 = tpu.concatenate %660, %659 in 1 : vector<4x255xf32>, vector<4x1xf32> -> vector<4x256xf32>
    %cst_220 = arith.constant 0.000000e+00 : f32
    %662 = vector.shape_cast %20 : vector<1x256xi1> to vector<1x256xi1>
    %663 = vector.broadcast %662 : vector<1x256xi1> to vector<4x256xi1>
    %664 = vector.broadcast %cst_220 : f32 to vector<4x256xf32>
    %665 = arith.select %663, %661, %664 : vector<4x256xi1>, vector<4x256xf32>
    %cst_221 = arith.constant 0.000000e+00 : f32
    %666 = vector.broadcast %cst_221 : f32 to vector<4x15xf32>
    %667 = vector.extract_strided_slice %634 {offsets = [0, 15], sizes = [4, 241], strides = [1, 1]} : vector<4x256xf32> to vector<4x241xf32>
    %668 = tpu.concatenate %667, %666 in 1 : vector<4x241xf32>, vector<4x15xf32> -> vector<4x256xf32>
    %cst_222 = arith.constant 0.000000e+00 : f32
    %669 = vector.shape_cast %18 : vector<1x256xi1> to vector<1x256xi1>
    %670 = vector.broadcast %669 : vector<1x256xi1> to vector<4x256xi1>
    %671 = vector.broadcast %cst_222 : f32 to vector<4x256xf32>
    %672 = arith.select %670, %668, %671 : vector<4x256xi1>, vector<4x256xf32>
    %cst_223 = arith.constant 0.000000e+00 : f32
    %673 = vector.broadcast %cst_223 : f32 to vector<4x16xf32>
    %674 = vector.extract_strided_slice %634 {offsets = [0, 16], sizes = [4, 240], strides = [1, 1]} : vector<4x256xf32> to vector<4x240xf32>
    %675 = tpu.concatenate %674, %673 in 1 : vector<4x240xf32>, vector<4x16xf32> -> vector<4x256xf32>
    %cst_224 = arith.constant 0.000000e+00 : f32
    %676 = vector.broadcast %cst_224 : f32 to vector<4x17xf32>
    %677 = vector.extract_strided_slice %634 {offsets = [0, 17], sizes = [4, 239], strides = [1, 1]} : vector<4x256xf32> to vector<4x239xf32>
    %678 = tpu.concatenate %677, %676 in 1 : vector<4x239xf32>, vector<4x17xf32> -> vector<4x256xf32>
    %cst_225 = arith.constant 0.000000e+00 : f32
    %679 = vector.shape_cast %20 : vector<1x256xi1> to vector<1x256xi1>
    %680 = vector.broadcast %679 : vector<1x256xi1> to vector<4x256xi1>
    %681 = vector.broadcast %cst_225 : f32 to vector<4x256xf32>
    %682 = arith.select %680, %678, %681 : vector<4x256xi1>, vector<4x256xf32>
    %683 = tpu.concatenate %641, %644, %651, %658, %634, %665, %672, %675, %682 in 0 : vector<4x256xf32>, vector<4x256xf32>, vector<4x256xf32>, vector<4x256xf32>, vector<4x256xf32>, vector<4x256xf32>, vector<4x256xf32>, vector<4x256xf32>, vector<4x256xf32> -> vector<36x256xf32>
    %c0_226 = arith.constant 0 : index
    %c0_227 = arith.constant 0 : index
    %684 = vector.load %arg2[%c0_226, %c0_227] : memref<4x36xf32, #tpu.memory_space<vmem>>, vector<4x36xf32>
    %cst_228 = arith.constant dense<0.000000e+00> : vector<4x256xf32>
    %685 = tpu.matmul %684, %683, %cst_228 {dimension_numbers = #tpu.dot_dimension_numbers<[1], [0], [0], [1], [0, 0, 1, 1], [], []>, precision = #tpu.contract_precision<fp32>} : vector<4x36xf32>, vector<36x256xf32>, vector<4x256xf32> -> vector<4x256xf32>
    %c0_229 = arith.constant 0 : index
    %c0_230 = arith.constant 0 : index
    %686 = vector.load %arg3[%c0_229, %c0_230] : memref<4x1xf32, #tpu.memory_space<vmem>>, vector<4x1xf32>
    %687 = vector.broadcast %686 : vector<4x1xf32> to vector<4x256xf32>
    %688 = arith.addf %685, %687 : vector<4x256xf32>
    %cst_231 = arith.constant dense<0.000000e+00> : vector<4xf32>
    %689 = vector.multi_reduction <add>, %688, %cst_231 [1] : vector<4x256xf32> to vector<4xf32>
    %690 = vector.shape_cast %689 : vector<4xf32> to vector<4x1xf32>
    %cst_232 = arith.constant 2.560000e+02 : f32
    %691 = vector.broadcast %cst_232 : f32 to vector<4x1xf32>
    %692 = arith.divf %690, %691 : vector<4x1xf32>
    %693 = vector.broadcast %692 : vector<4x1xf32> to vector<4x256xf32>
    %694 = arith.subf %688, %693 : vector<4x256xf32>
    %695 = arith.mulf %694, %694 : vector<4x256xf32>
    %cst_233 = arith.constant dense<0.000000e+00> : vector<4xf32>
    %696 = vector.multi_reduction <add>, %695, %cst_233 [1] : vector<4x256xf32> to vector<4xf32>
    %697 = vector.shape_cast %696 : vector<4xf32> to vector<4x1xf32>
    %cst_234 = arith.constant 2.560000e+02 : f32
    %698 = vector.broadcast %cst_234 : f32 to vector<4x1xf32>
    %699 = arith.divf %697, %698 : vector<4x1xf32>
    %700 = vector.broadcast %692 : vector<4x1xf32> to vector<4x256xf32>
    %701 = arith.subf %688, %700 : vector<4x256xf32>
    %cst_235 = arith.constant 9.99999974E-6 : f32
    %702 = vector.broadcast %cst_235 : f32 to vector<4x1xf32>
    %703 = arith.addf %699, %702 : vector<4x1xf32>
    %704 = math.rsqrt %703 : vector<4x1xf32>
    %705 = vector.broadcast %704 : vector<4x1xf32> to vector<4x256xf32>
    %706 = arith.mulf %701, %705 : vector<4x256xf32>
    %cst_236 = arith.constant 0.000000e+00 : f32
    %707 = vector.broadcast %cst_236 : f32 to vector<4x256xf32>
    %708 = arith.maximumf %706, %707 : vector<4x256xf32>
    %cst_237 = arith.constant 0.000000e+00 : f32
    %709 = vector.broadcast %cst_237 : f32 to vector<4x17xf32>
    %710 = vector.extract_strided_slice %708 {offsets = [0, 0], sizes = [4, 239], strides = [1, 1]} : vector<4x256xf32> to vector<4x239xf32>
    %711 = tpu.concatenate %709, %710 in 1 : vector<4x17xf32>, vector<4x239xf32> -> vector<4x256xf32>
    %cst_238 = arith.constant 0.000000e+00 : f32
    %712 = vector.shape_cast %18 : vector<1x256xi1> to vector<1x256xi1>
    %713 = vector.broadcast %712 : vector<1x256xi1> to vector<4x256xi1>
    %714 = vector.broadcast %cst_238 : f32 to vector<4x256xf32>
    %715 = arith.select %713, %711, %714 : vector<4x256xi1>, vector<4x256xf32>
    %cst_239 = arith.constant 0.000000e+00 : f32
    %716 = vector.broadcast %cst_239 : f32 to vector<4x16xf32>
    %717 = vector.extract_strided_slice %708 {offsets = [0, 0], sizes = [4, 240], strides = [1, 1]} : vector<4x256xf32> to vector<4x240xf32>
    %718 = tpu.concatenate %716, %717 in 1 : vector<4x16xf32>, vector<4x240xf32> -> vector<4x256xf32>
    %cst_240 = arith.constant 0.000000e+00 : f32
    %719 = vector.broadcast %cst_240 : f32 to vector<4x15xf32>
    %720 = vector.extract_strided_slice %708 {offsets = [0, 0], sizes = [4, 241], strides = [1, 1]} : vector<4x256xf32> to vector<4x241xf32>
    %721 = tpu.concatenate %719, %720 in 1 : vector<4x15xf32>, vector<4x241xf32> -> vector<4x256xf32>
    %cst_241 = arith.constant 0.000000e+00 : f32
    %722 = vector.shape_cast %20 : vector<1x256xi1> to vector<1x256xi1>
    %723 = vector.broadcast %722 : vector<1x256xi1> to vector<4x256xi1>
    %724 = vector.broadcast %cst_241 : f32 to vector<4x256xf32>
    %725 = arith.select %723, %721, %724 : vector<4x256xi1>, vector<4x256xf32>
    %cst_242 = arith.constant 0.000000e+00 : f32
    %726 = vector.broadcast %cst_242 : f32 to vector<4x1xf32>
    %727 = vector.extract_strided_slice %708 {offsets = [0, 0], sizes = [4, 255], strides = [1, 1]} : vector<4x256xf32> to vector<4x255xf32>
    %728 = tpu.concatenate %726, %727 in 1 : vector<4x1xf32>, vector<4x255xf32> -> vector<4x256xf32>
    %cst_243 = arith.constant 0.000000e+00 : f32
    %729 = vector.shape_cast %18 : vector<1x256xi1> to vector<1x256xi1>
    %730 = vector.broadcast %729 : vector<1x256xi1> to vector<4x256xi1>
    %731 = vector.broadcast %cst_243 : f32 to vector<4x256xf32>
    %732 = arith.select %730, %728, %731 : vector<4x256xi1>, vector<4x256xf32>
    %cst_244 = arith.constant 0.000000e+00 : f32
    %733 = vector.broadcast %cst_244 : f32 to vector<4x1xf32>
    %734 = vector.extract_strided_slice %708 {offsets = [0, 1], sizes = [4, 255], strides = [1, 1]} : vector<4x256xf32> to vector<4x255xf32>
    %735 = tpu.concatenate %734, %733 in 1 : vector<4x255xf32>, vector<4x1xf32> -> vector<4x256xf32>
    %cst_245 = arith.constant 0.000000e+00 : f32
    %736 = vector.shape_cast %20 : vector<1x256xi1> to vector<1x256xi1>
    %737 = vector.broadcast %736 : vector<1x256xi1> to vector<4x256xi1>
    %738 = vector.broadcast %cst_245 : f32 to vector<4x256xf32>
    %739 = arith.select %737, %735, %738 : vector<4x256xi1>, vector<4x256xf32>
    %cst_246 = arith.constant 0.000000e+00 : f32
    %740 = vector.broadcast %cst_246 : f32 to vector<4x15xf32>
    %741 = vector.extract_strided_slice %708 {offsets = [0, 15], sizes = [4, 241], strides = [1, 1]} : vector<4x256xf32> to vector<4x241xf32>
    %742 = tpu.concatenate %741, %740 in 1 : vector<4x241xf32>, vector<4x15xf32> -> vector<4x256xf32>
    %cst_247 = arith.constant 0.000000e+00 : f32
    %743 = vector.shape_cast %18 : vector<1x256xi1> to vector<1x256xi1>
    %744 = vector.broadcast %743 : vector<1x256xi1> to vector<4x256xi1>
    %745 = vector.broadcast %cst_247 : f32 to vector<4x256xf32>
    %746 = arith.select %744, %742, %745 : vector<4x256xi1>, vector<4x256xf32>
    %cst_248 = arith.constant 0.000000e+00 : f32
    %747 = vector.broadcast %cst_248 : f32 to vector<4x16xf32>
    %748 = vector.extract_strided_slice %708 {offsets = [0, 16], sizes = [4, 240], strides = [1, 1]} : vector<4x256xf32> to vector<4x240xf32>
    %749 = tpu.concatenate %748, %747 in 1 : vector<4x240xf32>, vector<4x16xf32> -> vector<4x256xf32>
    %cst_249 = arith.constant 0.000000e+00 : f32
    %750 = vector.broadcast %cst_249 : f32 to vector<4x17xf32>
    %751 = vector.extract_strided_slice %708 {offsets = [0, 17], sizes = [4, 239], strides = [1, 1]} : vector<4x256xf32> to vector<4x239xf32>
    %752 = tpu.concatenate %751, %750 in 1 : vector<4x239xf32>, vector<4x17xf32> -> vector<4x256xf32>
    %cst_250 = arith.constant 0.000000e+00 : f32
    %753 = vector.shape_cast %20 : vector<1x256xi1> to vector<1x256xi1>
    %754 = vector.broadcast %753 : vector<1x256xi1> to vector<4x256xi1>
    %755 = vector.broadcast %cst_250 : f32 to vector<4x256xf32>
    %756 = arith.select %754, %752, %755 : vector<4x256xi1>, vector<4x256xf32>
    %757 = tpu.concatenate %715, %718, %725, %732, %708, %739, %746, %749, %756 in 0 : vector<4x256xf32>, vector<4x256xf32>, vector<4x256xf32>, vector<4x256xf32>, vector<4x256xf32>, vector<4x256xf32>, vector<4x256xf32>, vector<4x256xf32>, vector<4x256xf32> -> vector<36x256xf32>
    %c0_251 = arith.constant 0 : index
    %c0_252 = arith.constant 0 : index
    %758 = vector.load %arg4[%c0_251, %c0_252] : memref<4x36xf32, #tpu.memory_space<vmem>>, vector<4x36xf32>
    %cst_253 = arith.constant dense<0.000000e+00> : vector<4x256xf32>
    %759 = tpu.matmul %758, %757, %cst_253 {dimension_numbers = #tpu.dot_dimension_numbers<[1], [0], [0], [1], [0, 0, 1, 1], [], []>, precision = #tpu.contract_precision<fp32>} : vector<4x36xf32>, vector<36x256xf32>, vector<4x256xf32> -> vector<4x256xf32>
    %c0_254 = arith.constant 0 : index
    %c0_255 = arith.constant 0 : index
    %760 = vector.load %arg5[%c0_254, %c0_255] : memref<4x1xf32, #tpu.memory_space<vmem>>, vector<4x1xf32>
    %761 = vector.broadcast %760 : vector<4x1xf32> to vector<4x256xf32>
    %762 = arith.addf %759, %761 : vector<4x256xf32>
    %cst_256 = arith.constant dense<0.000000e+00> : vector<4xf32>
    %763 = vector.multi_reduction <add>, %762, %cst_256 [1] : vector<4x256xf32> to vector<4xf32>
    %764 = vector.shape_cast %763 : vector<4xf32> to vector<4x1xf32>
    %cst_257 = arith.constant 2.560000e+02 : f32
    %765 = vector.broadcast %cst_257 : f32 to vector<4x1xf32>
    %766 = arith.divf %764, %765 : vector<4x1xf32>
    %767 = vector.broadcast %766 : vector<4x1xf32> to vector<4x256xf32>
    %768 = arith.subf %762, %767 : vector<4x256xf32>
    %769 = arith.mulf %768, %768 : vector<4x256xf32>
    %cst_258 = arith.constant dense<0.000000e+00> : vector<4xf32>
    %770 = vector.multi_reduction <add>, %769, %cst_258 [1] : vector<4x256xf32> to vector<4xf32>
    %771 = vector.shape_cast %770 : vector<4xf32> to vector<4x1xf32>
    %cst_259 = arith.constant 2.560000e+02 : f32
    %772 = vector.broadcast %cst_259 : f32 to vector<4x1xf32>
    %773 = arith.divf %771, %772 : vector<4x1xf32>
    %774 = vector.broadcast %766 : vector<4x1xf32> to vector<4x256xf32>
    %775 = arith.subf %762, %774 : vector<4x256xf32>
    %cst_260 = arith.constant 9.99999974E-6 : f32
    %776 = vector.broadcast %cst_260 : f32 to vector<4x1xf32>
    %777 = arith.addf %773, %776 : vector<4x1xf32>
    %778 = math.rsqrt %777 : vector<4x1xf32>
    %779 = vector.broadcast %778 : vector<4x1xf32> to vector<4x256xf32>
    %780 = arith.mulf %775, %779 : vector<4x256xf32>
    %781 = arith.addf %780, %634 : vector<4x256xf32>
    %cst_261 = arith.constant 0.000000e+00 : f32
    %782 = vector.broadcast %cst_261 : f32 to vector<4x256xf32>
    %783 = arith.maximumf %781, %782 : vector<4x256xf32>
    %cst_262 = arith.constant 0.000000e+00 : f32
    %784 = vector.broadcast %cst_262 : f32 to vector<4x17xf32>
    %785 = vector.extract_strided_slice %783 {offsets = [0, 0], sizes = [4, 239], strides = [1, 1]} : vector<4x256xf32> to vector<4x239xf32>
    %786 = tpu.concatenate %784, %785 in 1 : vector<4x17xf32>, vector<4x239xf32> -> vector<4x256xf32>
    %cst_263 = arith.constant 0.000000e+00 : f32
    %787 = vector.shape_cast %18 : vector<1x256xi1> to vector<1x256xi1>
    %788 = vector.broadcast %787 : vector<1x256xi1> to vector<4x256xi1>
    %789 = vector.broadcast %cst_263 : f32 to vector<4x256xf32>
    %790 = arith.select %788, %786, %789 : vector<4x256xi1>, vector<4x256xf32>
    %cst_264 = arith.constant 0.000000e+00 : f32
    %791 = vector.broadcast %cst_264 : f32 to vector<4x16xf32>
    %792 = vector.extract_strided_slice %783 {offsets = [0, 0], sizes = [4, 240], strides = [1, 1]} : vector<4x256xf32> to vector<4x240xf32>
    %793 = tpu.concatenate %791, %792 in 1 : vector<4x16xf32>, vector<4x240xf32> -> vector<4x256xf32>
    %cst_265 = arith.constant 0.000000e+00 : f32
    %794 = vector.broadcast %cst_265 : f32 to vector<4x15xf32>
    %795 = vector.extract_strided_slice %783 {offsets = [0, 0], sizes = [4, 241], strides = [1, 1]} : vector<4x256xf32> to vector<4x241xf32>
    %796 = tpu.concatenate %794, %795 in 1 : vector<4x15xf32>, vector<4x241xf32> -> vector<4x256xf32>
    %cst_266 = arith.constant 0.000000e+00 : f32
    %797 = vector.shape_cast %20 : vector<1x256xi1> to vector<1x256xi1>
    %798 = vector.broadcast %797 : vector<1x256xi1> to vector<4x256xi1>
    %799 = vector.broadcast %cst_266 : f32 to vector<4x256xf32>
    %800 = arith.select %798, %796, %799 : vector<4x256xi1>, vector<4x256xf32>
    %cst_267 = arith.constant 0.000000e+00 : f32
    %801 = vector.broadcast %cst_267 : f32 to vector<4x1xf32>
    %802 = vector.extract_strided_slice %783 {offsets = [0, 0], sizes = [4, 255], strides = [1, 1]} : vector<4x256xf32> to vector<4x255xf32>
    %803 = tpu.concatenate %801, %802 in 1 : vector<4x1xf32>, vector<4x255xf32> -> vector<4x256xf32>
    %cst_268 = arith.constant 0.000000e+00 : f32
    %804 = vector.shape_cast %18 : vector<1x256xi1> to vector<1x256xi1>
    %805 = vector.broadcast %804 : vector<1x256xi1> to vector<4x256xi1>
    %806 = vector.broadcast %cst_268 : f32 to vector<4x256xf32>
    %807 = arith.select %805, %803, %806 : vector<4x256xi1>, vector<4x256xf32>
    %cst_269 = arith.constant 0.000000e+00 : f32
    %808 = vector.broadcast %cst_269 : f32 to vector<4x1xf32>
    %809 = vector.extract_strided_slice %783 {offsets = [0, 1], sizes = [4, 255], strides = [1, 1]} : vector<4x256xf32> to vector<4x255xf32>
    %810 = tpu.concatenate %809, %808 in 1 : vector<4x255xf32>, vector<4x1xf32> -> vector<4x256xf32>
    %cst_270 = arith.constant 0.000000e+00 : f32
    %811 = vector.shape_cast %20 : vector<1x256xi1> to vector<1x256xi1>
    %812 = vector.broadcast %811 : vector<1x256xi1> to vector<4x256xi1>
    %813 = vector.broadcast %cst_270 : f32 to vector<4x256xf32>
    %814 = arith.select %812, %810, %813 : vector<4x256xi1>, vector<4x256xf32>
    %cst_271 = arith.constant 0.000000e+00 : f32
    %815 = vector.broadcast %cst_271 : f32 to vector<4x15xf32>
    %816 = vector.extract_strided_slice %783 {offsets = [0, 15], sizes = [4, 241], strides = [1, 1]} : vector<4x256xf32> to vector<4x241xf32>
    %817 = tpu.concatenate %816, %815 in 1 : vector<4x241xf32>, vector<4x15xf32> -> vector<4x256xf32>
    %cst_272 = arith.constant 0.000000e+00 : f32
    %818 = vector.shape_cast %18 : vector<1x256xi1> to vector<1x256xi1>
    %819 = vector.broadcast %818 : vector<1x256xi1> to vector<4x256xi1>
    %820 = vector.broadcast %cst_272 : f32 to vector<4x256xf32>
    %821 = arith.select %819, %817, %820 : vector<4x256xi1>, vector<4x256xf32>
    %cst_273 = arith.constant 0.000000e+00 : f32
    %822 = vector.broadcast %cst_273 : f32 to vector<4x16xf32>
    %823 = vector.extract_strided_slice %783 {offsets = [0, 16], sizes = [4, 240], strides = [1, 1]} : vector<4x256xf32> to vector<4x240xf32>
    %824 = tpu.concatenate %823, %822 in 1 : vector<4x240xf32>, vector<4x16xf32> -> vector<4x256xf32>
    %cst_274 = arith.constant 0.000000e+00 : f32
    %825 = vector.broadcast %cst_274 : f32 to vector<4x17xf32>
    %826 = vector.extract_strided_slice %783 {offsets = [0, 17], sizes = [4, 239], strides = [1, 1]} : vector<4x256xf32> to vector<4x239xf32>
    %827 = tpu.concatenate %826, %825 in 1 : vector<4x239xf32>, vector<4x17xf32> -> vector<4x256xf32>
    %cst_275 = arith.constant 0.000000e+00 : f32
    %828 = vector.shape_cast %20 : vector<1x256xi1> to vector<1x256xi1>
    %829 = vector.broadcast %828 : vector<1x256xi1> to vector<4x256xi1>
    %830 = vector.broadcast %cst_275 : f32 to vector<4x256xf32>
    %831 = arith.select %829, %827, %830 : vector<4x256xi1>, vector<4x256xf32>
    %832 = tpu.concatenate %790, %793, %800, %807, %783, %814, %821, %824, %831 in 0 : vector<4x256xf32>, vector<4x256xf32>, vector<4x256xf32>, vector<4x256xf32>, vector<4x256xf32>, vector<4x256xf32>, vector<4x256xf32>, vector<4x256xf32>, vector<4x256xf32> -> vector<36x256xf32>
    %c0_276 = arith.constant 0 : index
    %c0_277 = arith.constant 0 : index
    %833 = vector.load %arg6[%c0_276, %c0_277] : memref<4x36xf32, #tpu.memory_space<vmem>>, vector<4x36xf32>
    %cst_278 = arith.constant dense<0.000000e+00> : vector<4x256xf32>
    %834 = tpu.matmul %833, %832, %cst_278 {dimension_numbers = #tpu.dot_dimension_numbers<[1], [0], [0], [1], [0, 0, 1, 1], [], []>, precision = #tpu.contract_precision<fp32>} : vector<4x36xf32>, vector<36x256xf32>, vector<4x256xf32> -> vector<4x256xf32>
    %c0_279 = arith.constant 0 : index
    %c0_280 = arith.constant 0 : index
    %835 = vector.load %arg7[%c0_279, %c0_280] : memref<4x1xf32, #tpu.memory_space<vmem>>, vector<4x1xf32>
    %836 = vector.broadcast %835 : vector<4x1xf32> to vector<4x256xf32>
    %837 = arith.addf %834, %836 : vector<4x256xf32>
    %838 = arith.addf %837, %634 : vector<4x256xf32>
    %839 = tpu.concatenate %226, %430, %634, %838 in 0 : vector<4x256xf32>, vector<4x256xf32>, vector<4x256xf32>, vector<4x256xf32> -> vector<16x256xf32>
    %c0_281 = arith.constant 0 : index
    %c0_282 = arith.constant 0 : index
    %c0_283 = arith.constant 0 : index
    %840 = vector.load %arg8[%c0_281, %c0_282, %c0_283] : memref<1x16x256xf32, #tpu.memory_space<vmem>>, vector<1x16x256xf32>
    %841 = vector.shape_cast %840 : vector<1x16x256xf32> to vector<16x256xf32>
    %842 = vector.shape_cast %839 : vector<16x256xf32> to vector<1x16x256xf32>
    tpu.vector_store %arg8[%c0_281, %c0_282, %c0_283], %842 {strides = array<i32>} : memref<1x16x256xf32, #tpu.memory_space<vmem>>, vector<1x16x256xf32>,
    return
  }
  func.func @transform_0(%arg0: i32) -> (i32, i32, i32) {
    %c0_i32 = arith.constant 0 : i32
    %c0_i32_0 = arith.constant 0 : i32
    %c0_i32_1 = arith.constant 0 : i32
    return %arg0, %c0_i32, %c0_i32_0 : i32, i32, i32
  }
  func.func @transform_1(%arg0: i32) -> (i32, i32) {
    %c0_i32 = arith.constant 0 : i32
    %c0_i32_0 = arith.constant 0 : i32
    %c0_i32_1 = arith.constant 0 : i32
    return %c0_i32, %c0_i32_0 : i32, i32
  }
  func.func @transform_2(%arg0: i32) -> (i32, i32) {
    %c0_i32 = arith.constant 0 : i32
    %c0_i32_0 = arith.constant 0 : i32
    %c0_i32_1 = arith.constant 0 : i32
    return %c0_i32, %c0_i32_0 : i32, i32
  }
  func.func @transform_3(%arg0: i32) -> (i32, i32) {
    %c0_i32 = arith.constant 0 : i32
    %c0_i32_0 = arith.constant 0 : i32
    %c0_i32_1 = arith.constant 0 : i32
    return %c0_i32, %c0_i32_0 : i32, i32
  }
  func.func @transform_4(%arg0: i32) -> (i32, i32) {
    %c0_i32 = arith.constant 0 : i32
    %c0_i32_0 = arith.constant 0 : i32
    %c0_i32_1 = arith.constant 0 : i32
    return %c0_i32, %c0_i32_0 : i32, i32
  }
  func.func @transform_5(%arg0: i32) -> (i32, i32) {
    %c0_i32 = arith.constant 0 : i32
    %c0_i32_0 = arith.constant 0 : i32
    %c0_i32_1 = arith.constant 0 : i32
    return %c0_i32, %c0_i32_0 : i32, i32
  }
  func.func @transform_6(%arg0: i32) -> (i32, i32) {
    %c0_i32 = arith.constant 0 : i32
    %c0_i32_0 = arith.constant 0 : i32
    %c0_i32_1 = arith.constant 0 : i32
    return %c0_i32, %c0_i32_0 : i32, i32
  }
  func.func @transform_7(%arg0: i32) -> (i32, i32, i32) {
    %c0_i32 = arith.constant 0 : i32
    %c0_i32_0 = arith.constant 0 : i32
    %c0_i32_1 = arith.constant 0 : i32
    return %arg0, %c0_i32, %c0_i32_0 : i32, i32, i32
  }
}

</mosaic_0001>

<llo_original>
// kernel: tpu_custom_call.1
$region0: #{tpu_custom_call.1}
  #allocation0 [shape = 'u32[]', space=smem, size = 0x4, offset = 0x4, fixed_abs, tag = 'smem constant byte address 0x4 - core index']
  #allocation1 [shape = 'u32[144,128]{1,0:T(1,128)}', space=vmem, size = 0x12000, scoped, tag = 'internal scratch']
  %s0 = inlined_call_operand.hbm [shape: f32[2,4,256], index: 0, kind: input, shape index: {}]
  %s1 = inlined_call_operand.vmem [shape: f32[4,36], index: 1, kind: input, shape index: {}]
  %s2 = inlined_call_operand.vmem [shape: f32[4,1], index: 2, kind: input, shape index: {}]
  %s3 = inlined_call_operand.vmem [shape: f32[4,36], index: 3, kind: input, shape index: {}]
  %s4 = inlined_call_operand.vmem [shape: f32[4,1], index: 4, kind: input, shape index: {}]
  %s5 = inlined_call_operand.vmem [shape: f32[4,36], index: 5, kind: input, shape index: {}]
  %s6 = inlined_call_operand.vmem [shape: f32[4,1], index: 6, kind: input, shape index: {}]
  %s7 = inlined_call_operand.hbm [shape: f32[2,16,256], index: 7, kind: output, shape index: {}]
  %s8 = sld [smem:[#allocation0]]
  $region65: #{tpu_custom_call.1} parent=0
    _
  %s10 = ssub.s32 1, %s8
  %s11 = scalar_select 0, %s10, %s8
  $region1: #{tpu_custom_call.1} parent=0
    #allocation2 [shape = 'u8[8192]{0}', space=vmem, size = 0x2000, scoped, tag = 'input window, operand 0']
    #allocation3 [shape = 's32[2]{0}', space=sflag, size = 0x8, scoped, tag = 'scoped memory for tpu_custom_call.1']
    #allocation4 [shape = 's32[2]{0}', space=sflag, size = 0x8, scoped, tag = 'scoped memory for tpu_custom_call.1']
    #allocation5 [shape = 'u8[32768]{0}', space=vmem, size = 0x8000, scoped, tag = 'output window, operand 0']
    %12 = vsyncpa [#allocation3], 0
    %s13 = scalar_lea.sflag [#allocation3], 1
    %14 = vsyncpa %s13, 0
    %15 = vsyncpa [#allocation4], 0
    %s16 = scalar_lea.sflag [#allocation4], 1
    %17 = vsyncpa %s16, 0
    loop: start=0, step=1, limit=4
    $region2: #{tpu_custom_call.1} parent=1 // loop_pre_header
      _
    $region3: #{tpu_custom_call.1} parent=1 // loop_header
      %s19 = sphi 0, %s23
      %p20 = scmp.ge.s32.totalorder %s19, 4
      %s29 = sphi 0, %s31
      %s32 = sphi 0, %s29
      %s33 = sphi 0, %s32
      %s49 = sphi 0, %s33
      %s53 = sphi 0, %s53
      %s55 = sphi 0, %s53
      %s56 = sphi 0, %s55
      %s70 = sphi 0, %s56
      %s74 = sphi 0, %s74
      %s76 = sphi 0, %s74
      %s77 = sphi 0, %s76
      %s91 = sphi 0, %s77
      %s95 = sphi 0, %s95
      %s97 = sphi 0, %s95
      %s98 = sphi 0, %s97
      %s112 = sphi 0, %s98
      %s116 = sphi 0, %s116
      %s118 = sphi 0, %s116
      %s119 = sphi 0, %s118
      %s133 = sphi 0, %s119
      %s137 = sphi 0, %s137
      %s139 = sphi 0, %s137
      %s140 = sphi 0, %s139
      %s154 = sphi 0, %s140
      %s158 = sphi 0, %s158
      %s160 = sphi 0, %s158
      %s161 = sphi 0, %s160
      %s175 = sphi 0, %s161
      %s181 = sphi 0, %s183
      %s184 = sphi 0, %s181
      %s185 = sphi 0, %s184
      %s201 = sphi 0, %s185
    $region4: #{tpu_custom_call.1} parent=1 // loop_header_branch
      %22 = sbr.rel (%p20) target = $region8
    $region5: #{tpu_custom_call.1} parent=1 // loop_body
      %s24 = ssub.s32 %s19, 1
      %s25 = ssub.s32 %s19, 2
      %s26 = sadd.s32 %s19, 1
      %s27 = ssub.s32 %s19, %s26
      %p28 = scmp.eq.s32.totalorder %s27, 0
      %s30 = sadd.s32 %s29, 1
      %s31 = scalar_select %p28, %s29, %s30
      %p34 = pneg %p28
      %p35 = scmp.eq.s32.totalorder %s19, 1
      %p36 = por %p34, %p35
      %p37 = scmp.ne.s32.totalorder %s29, %s32
      %p38 = scmp.eq.s32.totalorder %s19, 0
      %p39 = por %p37, %p38
      %p40 = scmp.ne.s32.totalorder %s29, %s32
      %p41 = scmp.eq.s32.totalorder %s24, 1
      %p42 = por %p40, %p41
      %p43 = scmp.ne.s32.totalorder %s32, %s33
      %p44 = scmp.eq.s32.totalorder %s24, 0
      %p45 = por %p43, %p44
      %p46 = scmp.ne.s32.totalorder %s32, %s33
      %p47 = scmp.eq.s32.totalorder %s25, 1
      %p48 = por %p46, %p47
      %p50 = scmp.ne.s32.totalorder %s33, %s49
      %p51 = scmp.eq.s32.totalorder %s25, 0
      %p52 = por %p50, %p51
      %s54 = sadd.s32 %s53, 1
      %p57 = scmp.eq.s32.totalorder %s19, 1
      %p58 = scmp.ne.s32.totalorder %s53, %s55
      %p59 = scmp.eq.s32.totalorder %s19, 0
      %p60 = por %p58, %p59
      %p61 = scmp.ne.s32.totalorder %s53, %s55
      %p62 = scmp.eq.s32.totalorder %s24, 1
      %p63 = por %p61, %p62
      %p64 = scmp.ne.s32.totalorder %s55, %s56
      %p65 = scmp.eq.s32.totalorder %s24, 0
      %p66 = por %p64, %p65
      %p67 = scmp.ne.s32.totalorder %s55, %s56
      %p68 = scmp.eq.s32.totalorder %s25, 1
      %p69 = por %p67, %p68
      %p71 = scmp.ne.s32.totalorder %s56, %s70
      %p72 = scmp.eq.s32.totalorder %s25, 0
      %p73 = por %p71, %p72
      %s75 = sadd.s32 %s74, 1
      %p78 = scmp.eq.s32.totalorder %s19, 1
      %p79 = scmp.ne.s32.totalorder %s74, %s76
      %p80 = scmp.eq.s32.totalorder %s19, 0
      %p81 = por %p79, %p80
      %p82 = scmp.ne.s32.totalorder %s74, %s76
      %p83 = scmp.eq.s32.totalorder %s24, 1
      %p84 = por %p82, %p83
      %p85 = scmp.ne.s32.totalorder %s76, %s77
      %p86 = scmp.eq.s32.totalorder %s24, 0
      %p87 = por %p85, %p86
      %p88 = scmp.ne.s32.totalorder %s76, %s77
      %p89 = scmp.eq.s32.totalorder %s25, 1
      %p90 = por %p88, %p89
      %p92 = scmp.ne.s32.totalorder %s77, %s91
      %p93 = scmp.eq.s32.totalorder %s25, 0
      %p94 = por %p92, %p93
      %s96 = sadd.s32 %s95, 1
      %p99 = scmp.eq.s32.totalorder %s19, 1
      %p100 = scmp.ne.s32.totalorder %s95, %s97
      %p101 = scmp.eq.s32.totalorder %s19, 0
      %p102 = por %p100, %p101
      %p103 = scmp.ne.s32.totalorder %s95, %s97
      %p104 = scmp.eq.s32.totalorder %s24, 1
      %p105 = por %p103, %p104
      %p106 = scmp.ne.s32.totalorder %s97, %s98
      %p107 = scmp.eq.s32.totalorder %s24, 0
      %p108 = por %p106, %p107
      %p109 = scmp.ne.s32.totalorder %s97, %s98
      %p110 = scmp.eq.s32.totalorder %s25, 1
      %p111 = por %p109, %p110
      %p113 = scmp.ne.s32.totalorder %s98, %s112
      %p114 = scmp.eq.s32.totalorder %s25, 0
      %p115 = por %p113, %p114
      %s117 = sadd.s32 %s116, 1
      %p120 = scmp.eq.s32.totalorder %s19, 1
      %p121 = scmp.ne.s32.totalorder %s116, %s118
      %p122 = scmp.eq.s32.totalorder %s19, 0
      %p123 = por %p121, %p122
      %p124 = scmp.ne.s32.totalorder %s116, %s118
      %p125 = scmp.eq.s32.totalorder %s24, 1
      %p126 = por %p124, %p125
      %p127 = scmp.ne.s32.totalorder %s118, %s119
      %p128 = scmp.eq.s32.totalorder %s24, 0
      %p129 = por %p127, %p128
      %p130 = scmp.ne.s32.totalorder %s118, %s119
      %p131 = scmp.eq.s32.totalorder %s25, 1
      %p132 = por %p130, %p131
      %p134 = scmp.ne.s32.totalorder %s119, %s133
      %p135 = scmp.eq.s32.totalorder %s25, 0
      %p136 = por %p134, %p135
      %s138 = sadd.s32 %s137, 1
      %p141 = scmp.eq.s32.totalorder %s19, 1
      %p142 = scmp.ne.s32.totalorder %s137, %s139
      %p143 = scmp.eq.s32.totalorder %s19, 0
      %p144 = por %p142, %p143
      %p145 = scmp.ne.s32.totalorder %s137, %s139
      %p146 = scmp.eq.s32.totalorder %s24, 1
      %p147 = por %p145, %p146
      %p148 = scmp.ne.s32.totalorder %s139, %s140
      %p149 = scmp.eq.s32.totalorder %s24, 0
      %p150 = por %p148, %p149
      %p151 = scmp.ne.s32.totalorder %s139, %s140
      %p152 = scmp.eq.s32.totalorder %s25, 1
      %p153 = por %p151, %p152
      %p155 = scmp.ne.s32.totalorder %s140, %s154
      %p156 = scmp.eq.s32.totalorder %s25, 0
      %p157 = por %p155, %p156
      %s159 = sadd.s32 %s158, 1
      %p162 = scmp.eq.s32.totalorder %s19, 1
      %p163 = scmp.ne.s32.totalorder %s158, %s160
      %p164 = scmp.eq.s32.totalorder %s19, 0
      %p165 = por %p163, %p164
      %p166 = scmp.ne.s32.totalorder %s158, %s160
      %p167 = scmp.eq.s32.totalorder %s24, 1
      %p168 = por %p166, %p167
      %p169 = scmp.ne.s32.totalorder %s160, %s161
      %p170 = scmp.eq.s32.totalorder %s24, 0
      %p171 = por %p169, %p170
      %p172 = scmp.ne.s32.totalorder %s160, %s161
      %p173 = scmp.eq.s32.totalorder %s25, 1
      %p174 = por %p172, %p173
      %p176 = scmp.ne.s32.totalorder %s161, %s175
      %p177 = scmp.eq.s32.totalorder %s25, 0
      %p178 = por %p176, %p177
      %s179 = ssub.s32 %s19, %s26
      %p180 = scmp.eq.s32.totalorder %s179, 0
      %s182 = sadd.s32 %s181, 1
      %s183 = scalar_select %p180, %s181, %s182
      %p186 = pneg %p180
      %p187 = scmp.eq.s32.totalorder %s19, 1
      %p188 = por %p186, %p187
      %p189 = scmp.ne.s32.totalorder %s181, %s184
      %p190 = scmp.eq.s32.totalorder %s19, 0
      %p191 = por %p189, %p190
      %p192 = scmp.ne.s32.totalorder %s181, %s184
      %p193 = scmp.eq.s32.totalorder %s24, 1
      %p194 = por %p192, %p193
      %p195 = scmp.ne.s32.totalorder %s184, %s185
      %p196 = scmp.eq.s32.totalorder %s24, 0
      %p197 = por %p195, %p196
      %p198 = scmp.ne.s32.totalorder %s184, %s185
      %p199 = scmp.eq.s32.totalorder %s25, 1
      %p200 = por %p198, %p199
      %p202 = scmp.ne.s32.totalorder %s185, %s201
      %p203 = scmp.eq.s32.totalorder %s25, 0
      %p204 = por %p202, %p203
      %p205 = scmp.le.s32.totalorder 1, %s19
      %p206 = scmp.lt.s32.totalorder %s19, 3
      %p207 = pnand %p205, %p206
      %p208 = pneg %p207
      // Predicated region
      $region9: #{tpu_custom_call.1} parent=5 // pred_check
        _
      $region10: #{tpu_custom_call.1} parent=5 // pred_check_branch
        %210 = sbr.rel (%p207) target = $region12
      $region11: #{tpu_custom_call.1} parent=5 // pred_region
        %s211 = ssub.s32 %s19, 1
        // Predicated region
        $region13: #{tpu_custom_call.1} parent=11 // pred_check
          %p212 = pneg %p66
        $region14: #{tpu_custom_call.1} parent=11 // pred_check_branch
          %214 = sbr.rel (%p212) target = $region16
        $region15: #{tpu_custom_call.1} parent=11 // pred_region
          _
        $region16: #{tpu_custom_call.1} parent=11 // pred_fallthru
          _
        // Predicated region
        $region17: #{tpu_custom_call.1} parent=11 // pred_check
          %p215 = pneg %p87
        $region18: #{tpu_custom_call.1} parent=11 // pred_check_branch
          %217 = sbr.rel (%p215) target = $region20
        $region19: #{tpu_custom_call.1} parent=11 // pred_region
          _
        $region20: #{tpu_custom_call.1} parent=11 // pred_fallthru
          _
        // Predicated region
        $region21: #{tpu_custom_call.1} parent=11 // pred_check
          %p218 = pneg %p108
        $region22: #{tpu_custom_call.1} parent=11 // pred_check_branch
          %220 = sbr.rel (%p218) target = $region24
        $region23: #{tpu_custom_call.1} parent=11 // pred_region
          _
        $region24: #{tpu_custom_call.1} parent=11 // pred_fallthru
          _
        // Predicated region
        $region25: #{tpu_custom_call.1} parent=11 // pred_check
          %p221 = pneg %p129
        $region26: #{tpu_custom_call.1} parent=11 // pred_check_branch
          %223 = sbr.rel (%p221) target = $region28
        $region27: #{tpu_custom_call.1} parent=11 // pred_region
          _
        $region28: #{tpu_custom_call.1} parent=11 // pred_fallthru
          _
        // Predicated region
        $region29: #{tpu_custom_call.1} parent=11 // pred_check
          %p224 = pneg %p150
        $region30: #{tpu_custom_call.1} parent=11 // pred_check_branch
          %226 = sbr.rel (%p224) target = $region32
        $region31: #{tpu_custom_call.1} parent=11 // pred_region
          _
        $region32: #{tpu_custom_call.1} parent=11 // pred_fallthru
          _
        // Predicated region
        $region33: #{tpu_custom_call.1} parent=11 // pred_check
          %p227 = pneg %p171
        $region34: #{tpu_custom_call.1} parent=11 // pred_check_branch
          %229 = sbr.rel (%p227) target = $region36
        $region35: #{tpu_custom_call.1} parent=11 // pred_region
          _
        $region36: #{tpu_custom_call.1} parent=11 // pred_fallthru
          _
      $region12: #{tpu_custom_call.1} parent=5 // pred_fallthru
        _
      %p230 = scmp.lt.s32.totalorder %s19, 2
      // Predicated region
      $region37: #{tpu_custom_call.1} parent=5 // pred_check
        %p231 = pneg %p230
      $region38: #{tpu_custom_call.1} parent=5 // pred_check_branch
        %233 = sbr.rel (%p231) target = $region40
      $region39: #{tpu_custom_call.1} parent=5 // pred_region
        // Predicated region
        $region41: #{tpu_custom_call.1} parent=39 // pred_check
          %p234 = pneg %p39
        $region42: #{tpu_custom_call.1} parent=39 // pred_check_branch
          %236 = sbr.rel (%p234) target = $region44
        $region43: #{tpu_custom_call.1} parent=39 // pred_region
          %s237 = sand.u32 %s29, 1
          %s238 = scalar_lea.sflag [#allocation3], %s237
          %s239 = sand.u32 %s29, 1
          %s240 = smul.addr %s239, 8
          %s241 = scalar_lea.vmem [#allocation2], %s240
          %s243 = ssub.s32 128, 128
          %244 = vsyncadd %s238, %s243
          %s245 = smul.addr %s19, 2
          %s246 = smul.addr %s245, 64
          %s247 = scalar_lea.hbm %s0, %s246
          %s249 = sshll.u32 %s241, 4
          %s250 = int_to_ptr.vmem [resolvable:$true] %s249
          %252 = dma.hbm_to_vmem [thread:$0]  %s247, 128, %s250, %s238
        $region44: #{tpu_custom_call.1} parent=39 // pred_fallthru
          _
      $region40: #{tpu_custom_call.1} parent=5 // pred_fallthru
        _
      %p253 = scmp.le.s32.totalorder 1, %s19
      %p254 = scmp.lt.s32.totalorder %s19, 3
      %p255 = pnand %p253, %p254
      %p256 = pneg %p255
      // Predicated region
      $region45: #{tpu_custom_call.1} parent=5 // pred_check
        _
      $region46: #{tpu_custom_call.1} parent=5 // pred_check_branch
        %258 = sbr.rel (%p255) target = $region48
      $region47: #{tpu_custom_call.1} parent=5 // pred_region
        %s259 = ssub.s32 %s19, 1
        %s260 = sand.u32 %s32, 1
        %s261 = scalar_lea.sflag [#allocation3], %s260
        %s262 = sand.u32 %s32, 1
        %s263 = smul.addr %s262, 8
        %s264 = scalar_lea.vmem [#allocation2], %s263
        // Predicated region
        $region49: #{tpu_custom_call.1} parent=47 // pred_check
          %p265 = pneg %p45
        $region50: #{tpu_custom_call.1} parent=47 // pred_check_branch
          %267 = sbr.rel (%p265) target = $region52
        $region51: #{tpu_custom_call.1} parent=47 // pred_region
          %268 = dma.done %s261, 128
        $region52: #{tpu_custom_call.1} parent=47 // pred_fallthru
          _
        %s269 = sand.u32 %s32, 1
        %s270 = scalar_lea.sflag [#allocation3], %s269
        %s271 = sand.u32 %s32, 1
        %s272 = smul.addr %s271, 8
        %s273 = scalar_lea.vmem [#allocation2], %s272
        %p274 = pneg %p45
        %p275 = pneg %p42
        %p276 = pneg %p66
        %p277 = pneg %p63
        %p278 = pneg %p87
        %p279 = pneg %p84
        %p280 = pneg %p108
        %p281 = pneg %p105
        %p282 = pneg %p129
        %p283 = pneg %p126
        %p284 = pneg %p150
        %p285 = pneg %p147
        %p286 = pneg %p171
        %p287 = pneg %p168
        %p288 = pneg %p197
        %p289 = pneg %p194
        %s290 = sand.u32 %s184, 1
        %s291 = scalar_lea.sflag [#allocation4], %s290
        %s292 = sand.u32 %s184, 1
        %s293 = smul.addr %s292, 32
        %s294 = scalar_lea.vmem [#allocation5], %s293
        %v295 = vlaneseq
        %v296 = vand.u32 %v295, 127
        %v297 = vadd.s32 %v296, 128
        %vm298 = vcmp.lt.s32.totalorder %v296, 0
        %v299 = vsub.s32 0, %v296
        %v300 = vsel %vm298, %v299, %v296
        %v301 = vshrl.u32 %v300, 4
        %v302 = vand.u32 %v300, 15
        %v303 = vsub.s32 0, %v302
        %v304 = vsel %vm298, %v303, %v302
        %vm305 = vcmp.lt.s32.totalorder %v297, 0
        %v306 = vsub.s32 0, %v297
        %v307 = vsel %vm305, %v306, %v297
        %v308 = vshrl.u32 %v307, 4
        %v309 = vand.u32 %v307, 15
        %v310 = vsub.s32 0, %v309
        %v311 = vsel %vm305, %v310, %v309
        %vm312 = vcmp.ne.s32.totalorder %v304, 0
        %vm313 = vcmp.ne.s32.totalorder %v311, 0
        %vm314 = vcmp.lt.s32.totalorder %v304, 0
        %vm315 = vcmp.lt.s32.totalorder %v311, 0
        %vm316 = vmand %vm314, %vm312
        %vm317 = vmand %vm315, %vm313
        %v318 = vadd.s32 %v304, 16
        %v319 = vadd.s32 %v311, 16
        %v320 = vsel %vm316, %v318, %v304
        %v321 = vsel %vm317, %v319, %v311
        %vm322 = vcmp.ge.s32.totalorder %v320, 1
        %vm323 = vcmp.ge.s32.totalorder %v321, 1
        %vm324 = vcmp.le.s32.totalorder %v320, 14
        %vm325 = vcmp.le.s32.totalorder %v321, 14
        %v326 = vld [vmem:[%s264] sm:$0xff]
        %v328 = vcombine.high %v326, %v326
        %329 = vrot.lane.b32.xlu0 %v326, 17
        %v330 = vpop.permute.xlu0 %329
        %331 = vrot.lane.b32.xlu0 %v328, 17
        %v332 = vpop.permute.xlu0 %331
        %vm333 = vcmask 138240
        %v334 = vsel %vm333, %v330, %v332
        %v337 = vsel %vm333, 0.0, %v330
        %v338 = vsel %vm322, 1, 0
        %v339 = vsel %vm323, 1, 0
        %vm340 = vcmp.eq.s32.totalorder %v338, 1
        %vm341 = vcmp.eq.s32.totalorder %v339, 1
        %v342 = vsel %vm340, %v337, 0.0
        %v343 = vsel %vm341, %v334, 0.0
        %344 = vrot.lane.b32.xlu0 %v326, 16
        %v345 = vpop.permute.xlu0 %344
        %346 = vrot.lane.b32.xlu0 %v328, 16
        %v347 = vpop.permute.xlu0 %346
        %vm348 = vcmask 130048
        %v349 = vsel %vm348, %v345, %v347
        %v351 = vsel %vm348, 0.0, %v345
        %352 = vrot.lane.b32.xlu0 %v326, 15
        %v353 = vpop.permute.xlu0 %352
        %354 = vrot.lane.b32.xlu0 %v328, 15
        %v355 = vpop.permute.xlu0 %354
        %vm356 = vcmask 121856
        %v357 = vsel %vm356, %v353, %v355
        %v360 = vsel %vm356, 0.0, %v353
        %v361 = vsel %vm324, 1, 0
        %v362 = vsel %vm325, 1, 0
        %vm363 = vcmp.eq.s32.totalorder %v361, 1
        %vm364 = vcmp.eq.s32.totalorder %v362, 1
        %v365 = vsel %vm363, %v360, 0.0
        %v366 = vsel %vm364, %v357, 0.0
        %367 = vrot.lane.b32.xlu0 %v326, 1
        %v368 = vpop.permute.xlu0 %367
        %369 = vrot.lane.b32.xlu0 %v328, 1
        %v370 = vpop.permute.xlu0 %369
        %vm371 = vcmask 7168
        %v372 = vsel %vm371, %v368, %v370
        %v375 = vsel %vm371, 0.0, %v368
        %v376 = vsel %vm340, %v375, 0.0
        %v377 = vsel %vm341, %v372, 0.0
        %378 = vrot.lane.b32.xlu0 %v326, 127
        %v379 = vpop.permute.xlu0 %378
        %380 = vrot.lane.b32.xlu0 %v328, 127
        %v381 = vpop.permute.xlu0 %380
        %vm382 = vcmask 1039360
        %v383 = vsel %vm382, %v379, %v381
        %v386 = vsel %vm382, %v381, 0.0
        %v387 = vsel %vm363, %v383, 0.0
        %v388 = vsel %vm364, %v386, 0.0
        %389 = vrot.lane.b32.xlu0 %v326, 113
        %v390 = vpop.permute.xlu0 %389
        %391 = vrot.lane.b32.xlu0 %v328, 113
        %v392 = vpop.permute.xlu0 %391
        %vm393 = vcmask 924672
        %v394 = vsel %vm393, %v390, %v392
        %v397 = vsel %vm393, %v392, 0.0
        %v398 = vsel %vm340, %v394, 0.0
        %v399 = vsel %vm341, %v397, 0.0
        %400 = vrot.lane.b32.xlu0 %v326, 112
        %v401 = vpop.permute.xlu0 %400
        %402 = vrot.lane.b32.xlu0 %v328, 112
        %v403 = vpop.permute.xlu0 %402
        %vm404 = vcmask 916480
        %v405 = vsel %vm404, %v401, %v403
        %v407 = vsel %vm404, %v403, 0.0
        %408 = vrot.lane.b32.xlu0 %v326, 111
        %v409 = vpop.permute.xlu0 %408
        %410 = vrot.lane.b32.xlu0 %v328, 111
        %v411 = vpop.permute.xlu0 %410
        %vm412 = vcmask 908288
        %v413 = vsel %vm412, %v409, %v411
        %v416 = vsel %vm412, %v411, 0.0
        %v417 = vsel %vm363, %v413, 0.0
        %v418 = vsel %vm364, %v416, 0.0
        %v420 = vrot.slane %v351, 4
        %v421 = vrot.slane %v349, 4
        %v426 = vrot.slane %v376, 4
        %v427 = vrot.slane %v377, 4
        %v433 = vrot.slane %v387, 4
        %v434 = vrot.slane %v388, 4
        %v438 = vrot.slane %v405, 4
        %v439 = vrot.slane %v407, 4
        %vm442 = vcmask 1043456
        %v443 = vsel %vm442, %v342, %v420
        %v444 = vsel %vm442, %v343, %v421
        %v445 = vsel %vm442, %v365, %v426
        %v446 = vsel %vm442, %v366, %v427
        %v447 = vsel %vm442, %v326, %v433
        %v448 = vsel %vm442, %v328, %v434
        %v449 = vsel %vm442, %v398, %v438
        %v450 = vsel %vm442, %v399, %v439
        %v451 = vld [vmem:[%s1] sm:$0xf]
        %v452 = vld [vmem:[%s2] sm:$0xf]
        %454 = vset.pattern.permute.xlu0 0
        %455 = vperm.xlu0 %454, %v452
        %v456 = vpop.permute.xlu0 %455
        %vm458 = vcmask 293888
        %v460 = vsel %vm458, %v451, 0
        %v463 = vsel %vm442, %v417, 0
        %v466 = vsel %vm442, %v418, 0
        %v468 = vand.u32 %v444, 4294901760
        %469 = vmatprep.subr.mxu0 %v468
        %v470 = vand.u32 %v443, 4294901760
        %471 = vmatpush1.msra.mxu0 %v470
        %v472 = vand.u32 %v446, 4294901760
        %473 = vmatprep.subr.mxu0 %v472
        %v474 = vand.u32 %v445, 4294901760
        %475 = vmatpush1.msra.mxu0 %v474
        %v476 = vand.u32 %v448, 4294901760
        %477 = vmatprep.subr.mxu0 %v476
        %v478 = vand.u32 %v447, 4294901760
        %479 = vmatpush1.msra.mxu0 %v478
        %v480 = vand.u32 %v450, 4294901760
        %481 = vmatprep.subr.mxu0 %v480
        %v482 = vand.u32 %v449, 4294901760
        %483 = vmatpush1.msra.mxu0 %v482
        %v484 = vand.u32 %v466, 4294901760
        %485 = vmatprep.subr.mxu0 %v484
        %v486 = vand.u32 %v463, 4294901760
        %487 = vmatpush1.msra.mxu0 %v486
        %488 = vmatprep.subr.mxu0 0.0
        %489 = vmatpush1.msra.mxu0 0.0
        %490 = vmatprep.subr.mxu0 0.0
        %491 = vmatpush1.msra.mxu0 0.0
        %492 = vmatprep.subr.mxu0 0.0
        %493 = vmatpush1.msra.mxu0 0.0
        %494 = vmatprep.subr.mxu0 0.0
        %495 = vmatpush1.msra.mxu0 0.0
        %496 = vmatprep.subr.mxu0 0.0
        %497 = vmatpush1.msra.mxu0 0.0
        %498 = vmatprep.subr.mxu0 0.0
        %499 = vmatpush1.msra.mxu0 0.0
        %500 = vmatprep.subr.mxu0 0.0
        %501 = vmatpush1.msra.mxu0 0.0
        %502 = vmatprep.subr.mxu0 0.0
        %503 = vmatpush1.msra.mxu0 0.0
        %504 = vmatprep.subr.mxu0 0.0
        %505 = vmatpush1.msra.mxu0 0.0
        %506 = vmatprep.subr.mxu0 0.0
        %507 = vmatpush1.msra.mxu0 0.0
        %508 = vmatprep.subr.mxu0 0.0
        %509 = vmatpush1.msra.mxu0 0.0
        %510 = vmatprep.subr.mxu0 0.0
        %511 = vmatpush1.msra.mxu0 0.0
        %512 = vmatprep.subr.mxu0 0.0
        %513 = vmatpush1.msra.mxu0 0.0
        %514 = vmatprep.subr.mxu0 0.0
        %515 = vmatpush1.msra.mxu0 0.0
        %516 = vmatprep.subr.mxu0 0.0
        %517 = vmatpush1.msra.mxu0 0.0
        %518 = vmatprep.subr.mxu0 0.0
        %519 = vmatpush1.msra.mxu0 0.0
        %520 = vmatprep.subr.mxu0 0.0
        %521 = vmatpush1.msra.mxu0 0.0
        %522 = vmatprep.subr.mxu0 0.0
        %523 = vmatpush1.msra.mxu0 0.0
        %524 = vmatprep.subr.mxu0 0.0
        %525 = vmatpush1.msra.mxu0 0.0
        %526 = vmatprep.subr.mxu0 0.0
        %527 = vmatpush1.msra.mxu0 0.0
        %528 = vmatprep.subr.mxu0 0.0
        %529 = vmatpush1.msra.mxu0 0.0
        %530 = vmatprep.subr.mxu0 0.0
        %531 = vmatpush1.msra.mxu0 0.0
        %532 = vmatprep.subr.mxu0 0.0
        %533 = vmatpush1.msra.mxu0 0.0
        %534 = vmatprep.subr.mxu0 0.0
        %535 = vmatpush1.msra.mxu0 0.0
        %536 = vmatprep.subr.mxu0 0.0
        %537 = vmatpush1.msra.mxu0 0.0
        %538 = vmatprep.subr.mxu0 0.0
        %539 = vmatpush1.msra.mxu0 0.0
        %540 = vmatprep.subr.mxu0 0.0
        %541 = vmatpush1.msra.mxu0 0.0
        %542 = vmatprep.mubr.f32.mxu0 0.0
        %v543 = vand.u32 %v460, 4294901760
        %v544 = vsub.f32 %v460, %v543
        %v545 = vand.u32 %v544, 4294901760
        %v546 = vsub.f32 %v544, %v545
        %v547 = vand.u32 %v546, 4294901760
        %548 = vmatmul.mubr.f32.gmra.mrb[0].mxu0 %v547
        %v549 = vpop.f32.mrb[0].mxu0
        %v550 = vadd.f32 %v456, %v549
        %v551 = vpop.f32.mrb[0].mxu0
        %v552 = vadd.f32 %v456, %v551
        %553 = vdwg.mxu0
        %v554 = vand.u32 %v444, 4294901760
        %v555 = vsub.f32 %v444, %v554
        %v556 = vand.u32 %v555, 4294901760
        %v557 = vsub.f32 %v555, %v556
        %v558 = vand.u32 %v557, 4294901760
        %559 = vmatprep.subr.mxu0 %v558
        %v560 = vand.u32 %v443, 4294901760
        %v561 = vsub.f32 %v443, %v560
        %v562 = vand.u32 %v561, 4294901760
        %v563 = vsub.f32 %v561, %v562
        %v564 = vand.u32 %v563, 4294901760
        %565 = vmatpush1.msra.mxu0 %v564
        %v566 = vand.u32 %v446, 4294901760
        %v567 = vsub.f32 %v446, %v566
        %v568 = vand.u32 %v567, 4294901760
        %v569 = vsub.f32 %v567, %v568
        %v570 = vand.u32 %v569, 4294901760
        %571 = vmatprep.subr.mxu0 %v570
        %v572 = vand.u32 %v445, 4294901760
        %v573 = vsub.f32 %v445, %v572
        %v574 = vand.u32 %v573, 4294901760
        %v575 = vsub.f32 %v573, %v574
        %v576 = vand.u32 %v575, 4294901760
        %577 = vmatpush1.msra.mxu0 %v576
        %v578 = vand.u32 %v448, 4294901760
        %v579 = vsub.f32 %v448, %v578
        %v580 = vand.u32 %v579, 4294901760
        %v581 = vsub.f32 %v579, %v580
        %v582 = vand.u32 %v581, 4294901760
        %583 = vmatprep.subr.mxu0 %v582
        %v584 = vand.u32 %v447, 4294901760
        %v585 = vsub.f32 %v447, %v584
        %v586 = vand.u32 %v585, 4294901760
        %v587 = vsub.f32 %v585, %v586
        %v588 = vand.u32 %v587, 4294901760
        %589 = vmatpush1.msra.mxu0 %v588
        %v590 = vand.u32 %v450, 4294901760
        %v591 = vsub.f32 %v450, %v590
        %v592 = vand.u32 %v591, 4294901760
        %v593 = vsub.f32 %v591, %v592
        %v594 = vand.u32 %v593, 4294901760
        %595 = vmatprep.subr.mxu0 %v594
        %v596 = vand.u32 %v449, 4294901760
        %v597 = vsub.f32 %v449, %v596
        %v598 = vand.u32 %v597, 4294901760
        %v599 = vsub.f32 %v597, %v598
        %v600 = vand.u32 %v599, 4294901760
        %601 = vmatpush1.msra.mxu0 %v600
        %v602 = vand.u32 %v466, 4294901760
        %v603 = vsub.f32 %v466, %v602
        %v604 = vand.u32 %v603, 4294901760
        %v605 = vsub.f32 %v603, %v604
        %v606 = vand.u32 %v605, 4294901760
        %607 = vmatprep.subr.mxu0 %v606
        %v608 = vand.u32 %v463, 4294901760
        %v609 = vsub.f32 %v463, %v608
        %v610 = vand.u32 %v609, 4294901760
        %v611 = vsub.f32 %v609, %v610
        %v612 = vand.u32 %v611, 4294901760
        %613 = vmatpush1.msra.mxu0 %v612
        %614 = vmatprep.subr.mxu0 0.0
        %615 = vmatpush1.msra.mxu0 0.0
        %616 = vmatprep.subr.mxu0 0.0
        %617 = vmatpush1.msra.mxu0 0.0
        %618 = vmatprep.subr.mxu0 0.0
        %619 = vmatpush1.msra.mxu0 0.0
        %620 = vmatprep.subr.mxu0 0.0
        %621 = vmatpush1.msra.mxu0 0.0
        %622 = vmatprep.subr.mxu0 0.0
        %623 = vmatpush1.msra.mxu0 0.0
        %624 = vmatprep.subr.mxu0 0.0
        %625 = vmatpush1.msra.mxu0 0.0
        %626 = vmatprep.subr.mxu0 0.0
        %627 = vmatpush1.msra.mxu0 0.0
        %628 = vmatprep.subr.mxu0 0.0
        %629 = vmatpush1.msra.mxu0 0.0
        %630 = vmatprep.subr.mxu0 0.0
        %631 = vmatpush1.msra.mxu0 0.0
        %632 = vmatprep.subr.mxu0 0.0
        %633 = vmatpush1.msra.mxu0 0.0
        %634 = vmatprep.subr.mxu0 0.0
        %635 = vmatpush1.msra.mxu0 0.0
        %636 = vmatprep.subr.mxu0 0.0
        %637 = vmatpush1.msra.mxu0 0.0
        %638 = vmatprep.subr.mxu0 0.0
        %639 = vmatpush1.msra.mxu0 0.0
        %640 = vmatprep.subr.mxu0 0.0
        %641 = vmatpush1.msra.mxu0 0.0
        %642 = vmatprep.subr.mxu0 0.0
        %643 = vmatpush1.msra.mxu0 0.0
        %644 = vmatprep.subr.mxu0 0.0
        %645 = vmatpush1.msra.mxu0 0.0
        %646 = vmatprep.subr.mxu0 0.0
        %647 = vmatpush1.msra.mxu0 0.0
        %648 = vmatprep.subr.mxu0 0.0
        %649 = vmatpush1.msra.mxu0 0.0
        %650 = vmatprep.subr.mxu0 0.0
        %651 = vmatpush1.msra.mxu0 0.0
        %652 = vmatprep.subr.mxu0 0.0
        %653 = vmatpush1.msra.mxu0 0.0
        %654 = vmatprep.subr.mxu0 0.0
        %655 = vmatpush1.msra.mxu0 0.0
        %656 = vmatprep.subr.mxu0 0.0
        %657 = vmatpush1.msra.mxu0 0.0
        %658 = vmatprep.subr.mxu0 0.0
        %659 = vmatpush1.msra.mxu0 0.0
        %660 = vmatprep.subr.mxu0 0.0
        %661 = vmatpush1.msra.mxu0 0.0
        %662 = vmatprep.subr.mxu0 0.0
        %663 = vmatpush1.msra.mxu0 0.0
        %664 = vmatprep.subr.mxu0 0.0
        %665 = vmatpush1.msra.mxu0 0.0
        %666 = vmatprep.subr.mxu0 0.0
        %667 = vmatpush1.msra.mxu0 0.0
        %668 = vmatprep.mubr.f32.mxu0 0.0
        %v669 = vand.u32 %v460, 4294901760
        %670 = vmatmul.mubr.f32.gmra.mrb[0].mxu0 %v669
        %v671 = vpop.f32.mrb[0].mxu0
        %v672 = vadd.f32 %v550, %v671
        %v673 = vpop.f32.mrb[0].mxu0
        %v674 = vadd.f32 %v552, %v673
        %675 = vdwg.mxu0
        %v676 = vand.u32 %v444, 4294901760
        %v677 = vsub.f32 %v444, %v676
        %678 = vmatprep.subr.mxu0 %v677
        %v679 = vand.u32 %v443, 4294901760
        %v680 = vsub.f32 %v443, %v679
        %681 = vmatpush1.msra.mxu0 %v680
        %v682 = vand.u32 %v446, 4294901760
        %v683 = vsub.f32 %v446, %v682
        %684 = vmatprep.subr.mxu0 %v683
        %v685 = vand.u32 %v445, 4294901760
        %v686 = vsub.f32 %v445, %v685
        %687 = vmatpush1.msra.mxu0 %v686
        %v688 = vand.u32 %v448, 4294901760
        %v689 = vsub.f32 %v448, %v688
        %690 = vmatprep.subr.mxu0 %v689
        %v691 = vand.u32 %v447, 4294901760
        %v692 = vsub.f32 %v447, %v691
        %693 = vmatpush1.msra.mxu0 %v692
        %v694 = vand.u32 %v450, 4294901760
        %v695 = vsub.f32 %v450, %v694
        %696 = vmatprep.subr.mxu0 %v695
        %v697 = vand.u32 %v449, 4294901760
        %v698 = vsub.f32 %v449, %v697
        %699 = vmatpush1.msra.mxu0 %v698
        %v700 = vand.u32 %v466, 4294901760
        %v701 = vsub.f32 %v466, %v700
        %702 = vmatprep.subr.mxu0 %v701
        %v703 = vand.u32 %v463, 4294901760
        %v704 = vsub.f32 %v463, %v703
        %705 = vmatpush1.msra.mxu0 %v704
        %706 = vmatprep.subr.mxu0 0.0
        %707 = vmatpush1.msra.mxu0 0.0
        %708 = vmatprep.subr.mxu0 0.0
        %709 = vmatpush1.msra.mxu0 0.0
        %710 = vmatprep.subr.mxu0 0.0
        %711 = vmatpush1.msra.mxu0 0.0
        %712 = vmatprep.subr.mxu0 0.0
        %713 = vmatpush1.msra.mxu0 0.0
        %714 = vmatprep.subr.mxu0 0.0
        %715 = vmatpush1.msra.mxu0 0.0
        %716 = vmatprep.subr.mxu0 0.0
        %717 = vmatpush1.msra.mxu0 0.0
        %718 = vmatprep.subr.mxu0 0.0
        %719 = vmatpush1.msra.mxu0 0.0
        %720 = vmatprep.subr.mxu0 0.0
        %721 = vmatpush1.msra.mxu0 0.0
        %722 = vmatprep.subr.mxu0 0.0
        %723 = vmatpush1.msra.mxu0 0.0
        %724 = vmatprep.subr.mxu0 0.0
        %725 = vmatpush1.msra.mxu0 0.0
        %726 = vmatprep.subr.mxu0 0.0
        %727 = vmatpush1.msra.mxu0 0.0
        %728 = vmatprep.subr.mxu0 0.0
        %729 = vmatpush1.msra.mxu0 0.0
        %730 = vmatprep.subr.mxu0 0.0
        %731 = vmatpush1.msra.mxu0 0.0
        %732 = vmatprep.subr.mxu0 0.0
        %733 = vmatpush1.msra.mxu0 0.0
        %734 = vmatprep.subr.mxu0 0.0
        %735 = vmatpush1.msra.mxu0 0.0
        %736 = vmatprep.subr.mxu0 0.0
        %737 = vmatpush1.msra.mxu0 0.0
        %738 = vmatprep.subr.mxu0 0.0
        %739 = vmatpush1.msra.mxu0 0.0
        %740 = vmatprep.subr.mxu0 0.0
        %741 = vmatpush1.msra.mxu0 0.0
        %742 = vmatprep.subr.mxu0 0.0
        %743 = vmatpush1.msra.mxu0 0.0
        %744 = vmatprep.subr.mxu0 0.0
        %745 = vmatpush1.msra.mxu0 0.0
        %746 = vmatprep.subr.mxu0 0.0
        %747 = vmatpush1.msra.mxu0 0.0
        %748 = vmatprep.subr.mxu0 0.0
        %749 = vmatpush1.msra.mxu0 0.0
        %750 = vmatprep.subr.mxu0 0.0
        %751 = vmatpush1.msra.mxu0 0.0
        %752 = vmatprep.subr.mxu0 0.0
        %753 = vmatpush1.msra.mxu0 0.0
        %754 = vmatprep.subr.mxu0 0.0
        %755 = vmatpush1.msra.mxu0 0.0
        %756 = vmatprep.subr.mxu0 0.0
        %757 = vmatpush1.msra.mxu0 0.0
        %758 = vmatprep.subr.mxu0 0.0
        %759 = vmatpush1.msra.mxu0 0.0
        %760 = vmatprep.mubr.f32.mxu0 0.0
        %v761 = vand.u32 %v460, 4294901760
        %v762 = vsub.f32 %v460, %v761
        %763 = vmatmul.mubr.f32.gmra.mrb[0].mxu0 %v762
        %v764 = vpop.f32.mrb[0].mxu0
        %v765 = vadd.f32 %v672, %v764
        %v766 = vpop.f32.mrb[0].mxu0
        %v767 = vadd.f32 %v674, %v766
        %768 = vdwg.mxu0
        %v769 = vand.u32 %v444, 4294901760
        %770 = vmatprep.subr.mxu0 %v769
        %v771 = vand.u32 %v443, 4294901760
        %772 = vmatpush1.msra.mxu0 %v771
        %v773 = vand.u32 %v446, 4294901760
        %774 = vmatprep.subr.mxu0 %v773
        %v775 = vand.u32 %v445, 4294901760
        %776 = vmatpush1.msra.mxu0 %v775
        %v777 = vand.u32 %v448, 4294901760
        %778 = vmatprep.subr.mxu0 %v777
        %v779 = vand.u32 %v447, 4294901760
        %780 = vmatpush1.msra.mxu0 %v779
        %v781 = vand.u32 %v450, 4294901760
        %782 = vmatprep.subr.mxu0 %v781
        %v783 = vand.u32 %v449, 4294901760
        %784 = vmatpush1.msra.mxu0 %v783
        %v785 = vand.u32 %v466, 4294901760
        %786 = vmatprep.subr.mxu0 %v785
        %v787 = vand.u32 %v463, 4294901760
        %788 = vmatpush1.msra.mxu0 %v787
        %789 = vmatprep.subr.mxu0 0.0
        %790 = vmatpush1.msra.mxu0 0.0
        %791 = vmatprep.subr.mxu0 0.0
        %792 = vmatpush1.msra.mxu0 0.0
        %793 = vmatprep.subr.mxu0 0.0
        %794 = vmatpush1.msra.mxu0 0.0
        %795 = vmatprep.subr.mxu0 0.0
        %796 = vmatpush1.msra.mxu0 0.0
        %797 = vmatprep.subr.mxu0 0.0
        %798 = vmatpush1.msra.mxu0 0.0
        %799 = vmatprep.subr.mxu0 0.0
        %800 = vmatpush1.msra.mxu0 0.0
        %801 = vmatprep.subr.mxu0 0.0
        %802 = vmatpush1.msra.mxu0 0.0
        %803 = vmatprep.subr.mxu0 0.0
        %804 = vmatpush1.msra.mxu0 0.0
        %805 = vmatprep.subr.mxu0 0.0
        %806 = vmatpush1.msra.mxu0 0.0
        %807 = vmatprep.subr.mxu0 0.0
        %808 = vmatpush1.msra.mxu0 0.0
        %809 = vmatprep.subr.mxu0 0.0
        %810 = vmatpush1.msra.mxu0 0.0
        %811 = vmatprep.subr.mxu0 0.0
        %812 = vmatpush1.msra.mxu0 0.0
        %813 = vmatprep.subr.mxu0 0.0
        %814 = vmatpush1.msra.mxu0 0.0
        %815 = vmatprep.subr.mxu0 0.0
        %816 = vmatpush1.msra.mxu0 0.0
        %817 = vmatprep.subr.mxu0 0.0
        %818 = vmatpush1.msra.mxu0 0.0
        %819 = vmatprep.subr.mxu0 0.0
        %820 = vmatpush1.msra.mxu0 0.0
        %821 = vmatprep.subr.mxu0 0.0
        %822 = vmatpush1.msra.mxu0 0.0
        %823 = vmatprep.subr.mxu0 0.0
        %824 = vmatpush1.msra.mxu0 0.0
        %825 = vmatprep.subr.mxu0 0.0
        %826 = vmatpush1.msra.mxu0 0.0
        %827 = vmatprep.subr.mxu0 0.0
        %828 = vmatpush1.msra.mxu0 0.0
        %829 = vmatprep.subr.mxu0 0.0
        %830 = vmatpush1.msra.mxu0 0.0
        %831 = vmatprep.subr.mxu0 0.0
        %832 = vmatpush1.msra.mxu0 0.0
        %833 = vmatprep.subr.mxu0 0.0
        %834 = vmatpush1.msra.mxu0 0.0
        %835 = vmatprep.subr.mxu0 0.0
        %836 = vmatpush1.msra.mxu0 0.0
        %837 = vmatprep.subr.mxu0 0.0
        %838 = vmatpush1.msra.mxu0 0.0
        %839 = vmatprep.subr.mxu0 0.0
        %840 = vmatpush1.msra.mxu0 0.0
        %841 = vmatprep.subr.mxu0 0.0
        %842 = vmatpush1.msra.mxu0 0.0
        %843 = vmatprep.mubr.f32.mxu0 0.0
        %v844 = vand.u32 %v460, 4294901760
        %v845 = vsub.f32 %v460, %v844
        %v846 = vand.u32 %v845, 4294901760
        %847 = vmatmul.mubr.f32.gmra.mrb[0].mxu0 %v846
        %v848 = vpop.f32.mrb[0].mxu0
        %v849 = vadd.f32 %v765, %v848
        %v850 = vpop.f32.mrb[0].mxu0
        %v851 = vadd.f32 %v767, %v850
        %852 = vdwg.mxu0
        %v853 = vand.u32 %v444, 4294901760
        %v854 = vsub.f32 %v444, %v853
        %v855 = vand.u32 %v854, 4294901760
        %856 = vmatprep.subr.mxu0 %v855
        %v857 = vand.u32 %v443, 4294901760
        %v858 = vsub.f32 %v443, %v857
        %v859 = vand.u32 %v858, 4294901760
        %860 = vmatpush1.msra.mxu0 %v859
        %v861 = vand.u32 %v446, 4294901760
        %v862 = vsub.f32 %v446, %v861
        %v863 = vand.u32 %v862, 4294901760
        %864 = vmatprep.subr.mxu0 %v863
        %v865 = vand.u32 %v445, 4294901760
        %v866 = vsub.f32 %v445, %v865
        %v867 = vand.u32 %v866, 4294901760
        %868 = vmatpush1.msra.mxu0 %v867
        %v869 = vand.u32 %v448, 4294901760
        %v870 = vsub.f32 %v448, %v869
        %v871 = vand.u32 %v870, 4294901760
        %872 = vmatprep.subr.mxu0 %v871
        %v873 = vand.u32 %v447, 4294901760
        %v874 = vsub.f32 %v447, %v873
        %v875 = vand.u32 %v874, 4294901760
        %876 = vmatpush1.msra.mxu0 %v875
        %v877 = vand.u32 %v450, 4294901760
        %v878 = vsub.f32 %v450, %v877
        %v879 = vand.u32 %v878, 4294901760
        %880 = vmatprep.subr.mxu0 %v879
        %v881 = vand.u32 %v449, 4294901760
        %v882 = vsub.f32 %v449, %v881
        %v883 = vand.u32 %v882, 4294901760
        %884 = vmatpush1.msra.mxu0 %v883
        %v885 = vand.u32 %v466, 4294901760
        %v886 = vsub.f32 %v466, %v885
        %v887 = vand.u32 %v886, 4294901760
        %888 = vmatprep.subr.mxu0 %v887
        %v889 = vand.u32 %v463, 4294901760
        %v890 = vsub.f32 %v463, %v889
        %v891 = vand.u32 %v890, 4294901760
        %892 = vmatpush1.msra.mxu0 %v891
        %893 = vmatprep.subr.mxu0 0.0
        %894 = vmatpush1.msra.mxu0 0.0
        %895 = vmatprep.subr.mxu0 0.0
        %896 = vmatpush1.msra.mxu0 0.0
        %897 = vmatprep.subr.mxu0 0.0
        %898 = vmatpush1.msra.mxu0 0.0
        %899 = vmatprep.subr.mxu0 0.0
        %900 = vmatpush1.msra.mxu0 0.0
        %901 = vmatprep.subr.mxu0 0.0
        %902 = vmatpush1.msra.mxu0 0.0
        %903 = vmatprep.subr.mxu0 0.0
        %904 = vmatpush1.msra.mxu0 0.0
        %905 = vmatprep.subr.mxu0 0.0
        %906 = vmatpush1.msra.mxu0 0.0
        %907 = vmatprep.subr.mxu0 0.0
        %908 = vmatpush1.msra.mxu0 0.0
        %909 = vmatprep.subr.mxu0 0.0
        %910 = vmatpush1.msra.mxu0 0.0
        %911 = vmatprep.subr.mxu0 0.0
        %912 = vmatpush1.msra.mxu0 0.0
        %913 = vmatprep.subr.mxu0 0.0
        %914 = vmatpush1.msra.mxu0 0.0
        %915 = vmatprep.subr.mxu0 0.0
        %916 = vmatpush1.msra.mxu0 0.0
        %917 = vmatprep.subr.mxu0 0.0
        %918 = vmatpush1.msra.mxu0 0.0
        %919 = vmatprep.subr.mxu0 0.0
        %920 = vmatpush1.msra.mxu0 0.0
        %921 = vmatprep.subr.mxu0 0.0
        %922 = vmatpush1.msra.mxu0 0.0
        %923 = vmatprep.subr.mxu0 0.0
        %924 = vmatpush1.msra.mxu0 0.0
        %925 = vmatprep.subr.mxu0 0.0
        %926 = vmatpush1.msra.mxu0 0.0
        %927 = vmatprep.subr.mxu0 0.0
        %928 = vmatpush1.msra.mxu0 0.0
        %929 = vmatprep.subr.mxu0 0.0
        %930 = vmatpush1.msra.mxu0 0.0
        %931 = vmatprep.subr.mxu0 0.0
        %932 = vmatpush1.msra.mxu0 0.0
        %933 = vmatprep.subr.mxu0 0.0
        %934 = vmatpush1.msra.mxu0 0.0
        %935 = vmatprep.subr.mxu0 0.0
        %936 = vmatpush1.msra.mxu0 0.0
        %937 = vmatprep.subr.mxu0 0.0
        %938 = vmatpush1.msra.mxu0 0.0
        %939 = vmatprep.subr.mxu0 0.0
        %940 = vmatpush1.msra.mxu0 0.0
        %941 = vmatprep.subr.mxu0 0.0
        %942 = vmatpush1.msra.mxu0 0.0
        %943 = vmatprep.subr.mxu0 0.0
        %944 = vmatpush1.msra.mxu0 0.0
        %945 = vmatprep.subr.mxu0 0.0
        %946 = vmatpush1.msra.mxu0 0.0
        %947 = vmatprep.mubr.f32.mxu0 0.0
        %v948 = vand.u32 %v460, 4294901760
        %949 = vmatmul.mubr.f32.gmra.mrb[0].mxu0 %v948
        %v950 = vpop.f32.mrb[0].mxu0
        %v951 = vadd.f32 %v849, %v950
        %v952 = vpop.f32.mrb[0].mxu0
        %v953 = vadd.f32 %v851, %v952
        %954 = vdwg.mxu0
        %v955 = vand.u32 %v444, 4294901760
        %956 = vmatprep.subr.mxu0 %v955
        %v957 = vand.u32 %v443, 4294901760
        %958 = vmatpush1.msra.mxu0 %v957
        %v959 = vand.u32 %v446, 4294901760
        %960 = vmatprep.subr.mxu0 %v959
        %v961 = vand.u32 %v445, 4294901760
        %962 = vmatpush1.msra.mxu0 %v961
        %v963 = vand.u32 %v448, 4294901760
        %964 = vmatprep.subr.mxu0 %v963
        %v965 = vand.u32 %v447, 4294901760
        %966 = vmatpush1.msra.mxu0 %v965
        %v967 = vand.u32 %v450, 4294901760
        %968 = vmatprep.subr.mxu0 %v967
        %v969 = vand.u32 %v449, 4294901760
        %970 = vmatpush1.msra.mxu0 %v969
        %v971 = vand.u32 %v466, 4294901760
        %972 = vmatprep.subr.mxu0 %v971
        %v973 = vand.u32 %v463, 4294901760
        %974 = vmatpush1.msra.mxu0 %v973
        %975 = vmatprep.subr.mxu0 0.0
        %976 = vmatpush1.msra.mxu0 0.0
        %977 = vmatprep.subr.mxu0 0.0
        %978 = vmatpush1.msra.mxu0 0.0
        %979 = vmatprep.subr.mxu0 0.0
        %980 = vmatpush1.msra.mxu0 0.0
        %981 = vmatprep.subr.mxu0 0.0
        %982 = vmatpush1.msra.mxu0 0.0
        %983 = vmatprep.subr.mxu0 0.0
        %984 = vmatpush1.msra.mxu0 0.0
        %985 = vmatprep.subr.mxu0 0.0
        %986 = vmatpush1.msra.mxu0 0.0
        %987 = vmatprep.subr.mxu0 0.0
        %988 = vmatpush1.msra.mxu0 0.0
        %989 = vmatprep.subr.mxu0 0.0
        %990 = vmatpush1.msra.mxu0 0.0
        %991 = vmatprep.subr.mxu0 0.0
        %992 = vmatpush1.msra.mxu0 0.0
        %993 = vmatprep.subr.mxu0 0.0
        %994 = vmatpush1.msra.mxu0 0.0
        %995 = vmatprep.subr.mxu0 0.0
        %996 = vmatpush1.msra.mxu0 0.0
        %997 = vmatprep.subr.mxu0 0.0
        %998 = vmatpush1.msra.mxu0 0.0
        %999 = vmatprep.subr.mxu0 0.0
        %1000 = vmatpush1.msra.mxu0 0.0
        %1001 = vmatprep.subr.mxu0 0.0
        %1002 = vmatpush1.msra.mxu0 0.0
        %1003 = vmatprep.subr.mxu0 0.0
        %1004 = vmatpush1.msra.mxu0 0.0
        %1005 = vmatprep.subr.mxu0 0.0
        %1006 = vmatpush1.msra.mxu0 0.0
        %1007 = vmatprep.subr.mxu0 0.0
        %1008 = vmatpush1.msra.mxu0 0.0
        %1009 = vmatprep.subr.mxu0 0.0
        %1010 = vmatpush1.msra.mxu0 0.0
        %1011 = vmatprep.subr.mxu0 0.0
        %1012 = vmatpush1.msra.mxu0 0.0
        %1013 = vmatprep.subr.mxu0 0.0
        %1014 = vmatpush1.msra.mxu0 0.0
        %1015 = vmatprep.subr.mxu0 0.0
        %1016 = vmatpush1.msra.mxu0 0.0
        %1017 = vmatprep.subr.mxu0 0.0
        %1018 = vmatpush1.msra.mxu0 0.0
        %1019 = vmatprep.subr.mxu0 0.0
        %1020 = vmatpush1.msra.mxu0 0.0
        %1021 = vmatprep.subr.mxu0 0.0
        %1022 = vmatpush1.msra.mxu0 0.0
        %1023 = vmatprep.subr.mxu0 0.0
        %1024 = vmatpush1.msra.mxu0 0.0
        %1025 = vmatprep.subr.mxu0 0.0
        %1026 = vmatpush1.msra.mxu0 0.0
        %1027 = vmatprep.subr.mxu0 0.0
        %1028 = vmatpush1.msra.mxu0 0.0
        %1029 = vmatprep.mubr.f32.mxu0 0.0
        %v1030 = vand.u32 %v460, 4294901760
        %1031 = vmatmul.mubr.f32.gmra.mrb[0].mxu0 %v1030
        %v1032 = vpop.f32.mrb[0].mxu0
        %v1033 = vadd.f32 %v951, %v1032
        %v1034 = vpop.f32.mrb[0].mxu0
        %v1035 = vadd.f32 %v953, %v1034
        %1036 = vdwg.mxu0
        %v1037 = vsel %vm442, %v1033, 0.0
        %v1038 = vsel %vm442, %v1035, 0.0
        %v1039 = vadd.f32 %v1037, %v1038
        %1040 = vadd.xlane.f32.xlu0 %v1039
        %v1041 = vpop.xlane.xlu0 %1040
        %v1042 = vrcp.pop 256.0
        %v1043 = vmul.f32 %v1041, %v1042
        %v1044 = vsub.f32 %v1033, %v1043
        %v1045 = vsub.f32 %v1035, %v1043
        %v1046 = vmul.f32 %v1044, %v1044
        %v1047 = vmul.f32 %v1045, %v1045
        %v1048 = vsel %vm442, %v1046, 0.0
        %v1049 = vsel %vm442, %v1047, 0.0
        %v1050 = vadd.f32 %v1048, %v1049
        %1051 = vadd.xlane.f32.xlu0 %v1050
        %v1052 = vpop.xlane.xlu0 %1051
        %v1053 = vmul.f32 %v1052, %v1042
        %v1054 = vadd.f32 %v1053, 1e-05
        %v1055 = vrsqrt.pop %v1054
        %v1056 = vmul.f32 %v1044, %v1055
        %v1057 = vmul.f32 %v1045, %v1055
        %v1058 = vmax.f32 %v1056, 0.0
        %v1059 = vmax.f32 %v1057, 0.0
        %1062 = vrot.lane.b32.xlu0 %v1058, 17
        %v1063 = vpop.permute.xlu0 %1062
        %1064 = vrot.lane.b32.xlu0 %v1059, 17
        %v1065 = vpop.permute.xlu0 %1064
        %v1066 = vsel %vm333, %v1063, %v1065
        %v1069 = vsel %vm333, 0.0, %v1063
        %v1070 = vsel %vm340, %v1069, 0.0
        %v1071 = vsel %vm341, %v1066, 0.0
        %1072 = vrot.lane.b32.xlu0 %v1058, 16
        %v1073 = vpop.permute.xlu0 %1072
        %1074 = vrot.lane.b32.xlu0 %v1059, 16
        %v1075 = vpop.permute.xlu0 %1074
        %v1076 = vsel %vm348, %v1073, %v1075
        %v1078 = vsel %vm348, 0.0, %v1073
        %1079 = vrot.lane.b32.xlu0 %v1058, 15
        %v1080 = vpop.permute.xlu0 %1079
        %1081 = vrot.lane.b32.xlu0 %v1059, 15
        %v1082 = vpop.permute.xlu0 %1081
        %v1083 = vsel %vm356, %v1080, %v1082
        %v1086 = vsel %vm356, 0.0, %v1080
        %v1087 = vsel %vm363, %v1086, 0.0
        %v1088 = vsel %vm364, %v1083, 0.0
        %1089 = vrot.lane.b32.xlu0 %v1058, 1
        %v1090 = vpop.permute.xlu0 %1089
        %1091 = vrot.lane.b32.xlu0 %v1059, 1
        %v1092 = vpop.permute.xlu0 %1091
        %v1093 = vsel %vm371, %v1090, %v1092
        %v1096 = vsel %vm371, 0.0, %v1090
        %v1097 = vsel %vm340, %v1096, 0.0
        %v1098 = vsel %vm341, %v1093, 0.0
        %1099 = vrot.lane.b32.xlu0 %v1058, 127
        %v1100 = vpop.permute.xlu0 %1099
        %1101 = vrot.lane.b32.xlu0 %v1059, 127
        %v1102 = vpop.permute.xlu0 %1101
        %v1103 = vsel %vm382, %v1100, %v1102
        %v1106 = vsel %vm382, %v1102, 0.0
        %v1107 = vsel %vm363, %v1103, 0.0
        %v1108 = vsel %vm364, %v1106, 0.0
        %1109 = vrot.lane.b32.xlu0 %v1058, 113
        %v1110 = vpop.permute.xlu0 %1109
        %1111 = vrot.lane.b32.xlu0 %v1059, 113
        %v1112 = vpop.permute.xlu0 %1111
        %v1113 = vsel %vm393, %v1110, %v1112
        %v1116 = vsel %vm393, %v1112, 0.0
        %v1117 = vsel %vm340, %v1113, 0.0
        %v1118 = vsel %vm341, %v1116, 0.0
        %1119 = vrot.lane.b32.xlu0 %v1058, 112
        %v1120 = vpop.permute.xlu0 %1119
        %1121 = vrot.lane.b32.xlu0 %v1059, 112
        %v1122 = vpop.permute.xlu0 %1121
        %v1123 = vsel %vm404, %v1120, %v1122
        %v1125 = vsel %vm404, %v1122, 0.0
        %1126 = vrot.lane.b32.xlu0 %v1058, 111
        %v1127 = vpop.permute.xlu0 %1126
        %1128 = vrot.lane.b32.xlu0 %v1059, 111
        %v1129 = vpop.permute.xlu0 %1128
        %v1130 = vsel %vm412, %v1127, %v1129
        %v1133 = vsel %vm412, %v1129, 0.0
        %v1134 = vsel %vm363, %v1130, 0.0
        %v1135 = vsel %vm364, %v1133, 0.0
        %v1137 = vrot.slane %v1078, 4
        %v1138 = vrot.slane %v1076, 4
        %v1143 = vrot.slane %v1097, 4
        %v1144 = vrot.slane %v1098, 4
        %v1149 = vrot.slane %v1107, 4
        %v1150 = vrot.slane %v1108, 4
        %v1154 = vrot.slane %v1123, 4
        %v1155 = vrot.slane %v1125, 4
        %v1158 = vsel %vm442, %v1070, %v1137
        %v1159 = vsel %vm442, %v1071, %v1138
        %v1160 = vsel %vm442, %v1087, %v1143
        %v1161 = vsel %vm442, %v1088, %v1144
        %v1162 = vsel %vm442, %v1058, %v1149
        %v1163 = vsel %vm442, %v1059, %v1150
        %v1164 = vsel %vm442, %v1117, %v1154
        %v1165 = vsel %vm442, %v1118, %v1155
        %v1166 = vld [vmem:[%s3] sm:$0xf]
        %v1167 = vld [vmem:[%s4] sm:$0xf]
        %1169 = vset.pattern.permute.xlu0 0
        %1170 = vperm.xlu0 %1169, %v1167
        %v1171 = vpop.permute.xlu0 %1170
        %v1174 = vsel %vm458, %v1166, 0
        %v1177 = vsel %vm442, %v1134, 0
        %v1180 = vsel %vm442, %v1135, 0
        %v1182 = vand.u32 %v1159, 4294901760
        %1183 = vmatprep.subr.mxu0 %v1182
        %v1184 = vand.u32 %v1158, 4294901760
        %1185 = vmatpush1.msra.mxu0 %v1184
        %v1186 = vand.u32 %v1161, 4294901760
        %1187 = vmatprep.subr.mxu0 %v1186
        %v1188 = vand.u32 %v1160, 4294901760
        %1189 = vmatpush1.msra.mxu0 %v1188
        %v1190 = vand.u32 %v1163, 4294901760
        %1191 = vmatprep.subr.mxu0 %v1190
        %v1192 = vand.u32 %v1162, 4294901760
        %1193 = vmatpush1.msra.mxu0 %v1192
        %v1194 = vand.u32 %v1165, 4294901760
        %1195 = vmatprep.subr.mxu0 %v1194
        %v1196 = vand.u32 %v1164, 4294901760
        %1197 = vmatpush1.msra.mxu0 %v1196
        %v1198 = vand.u32 %v1180, 4294901760
        %1199 = vmatprep.subr.mxu0 %v1198
        %v1200 = vand.u32 %v1177, 4294901760
        %1201 = vmatpush1.msra.mxu0 %v1200
        %1202 = vmatprep.subr.mxu0 0.0
        %1203 = vmatpush1.msra.mxu0 0.0
        %1204 = vmatprep.subr.mxu0 0.0
        %1205 = vmatpush1.msra.mxu0 0.0
        %1206 = vmatprep.subr.mxu0 0.0
        %1207 = vmatpush1.msra.mxu0 0.0
        %1208 = vmatprep.subr.mxu0 0.0
        %1209 = vmatpush1.msra.mxu0 0.0
        %1210 = vmatprep.subr.mxu0 0.0
        %1211 = vmatpush1.msra.mxu0 0.0
        %1212 = vmatprep.subr.mxu0 0.0
        %1213 = vmatpush1.msra.mxu0 0.0
        %1214 = vmatprep.subr.mxu0 0.0
        %1215 = vmatpush1.msra.mxu0 0.0
        %1216 = vmatprep.subr.mxu0 0.0
        %1217 = vmatpush1.msra.mxu0 0.0
        %1218 = vmatprep.subr.mxu0 0.0
        %1219 = vmatpush1.msra.mxu0 0.0
        %1220 = vmatprep.subr.mxu0 0.0
        %1221 = vmatpush1.msra.mxu0 0.0
        %1222 = vmatprep.subr.mxu0 0.0
        %1223 = vmatpush1.msra.mxu0 0.0
        %1224 = vmatprep.subr.mxu0 0.0
        %1225 = vmatpush1.msra.mxu0 0.0
        %1226 = vmatprep.subr.mxu0 0.0
        %1227 = vmatpush1.msra.mxu0 0.0
        %1228 = vmatprep.subr.mxu0 0.0
        %1229 = vmatpush1.msra.mxu0 0.0
        %1230 = vmatprep.subr.mxu0 0.0
        %1231 = vmatpush1.msra.mxu0 0.0
        %1232 = vmatprep.subr.mxu0 0.0
        %1233 = vmatpush1.msra.mxu0 0.0
        %1234 = vmatprep.subr.mxu0 0.0
        %1235 = vmatpush1.msra.mxu0 0.0
        %1236 = vmatprep.subr.mxu0 0.0
        %1237 = vmatpush1.msra.mxu0 0.0
        %1238 = vmatprep.subr.mxu0 0.0
        %1239 = vmatpush1.msra.mxu0 0.0
        %1240 = vmatprep.subr.mxu0 0.0
        %1241 = vmatpush1.msra.mxu0 0.0
        %1242 = vmatprep.subr.mxu0 0.0
        %1243 = vmatpush1.msra.mxu0 0.0
        %1244 = vmatprep.subr.mxu0 0.0
        %1245 = vmatpush1.msra.mxu0 0.0
        %1246 = vmatprep.subr.mxu0 0.0
        %1247 = vmatpush1.msra.mxu0 0.0
        %1248 = vmatprep.subr.mxu0 0.0
        %1249 = vmatpush1.msra.mxu0 0.0
        %1250 = vmatprep.subr.mxu0 0.0
        %1251 = vmatpush1.msra.mxu0 0.0
        %1252 = vmatprep.subr.mxu0 0.0
        %1253 = vmatpush1.msra.mxu0 0.0
        %1254 = vmatprep.subr.mxu0 0.0
        %1255 = vmatpush1.msra.mxu0 0.0
        %1256 = vmatprep.mubr.f32.mxu0 0.0
        %v1257 = vand.u32 %v1174, 4294901760
        %v1258 = vsub.f32 %v1174, %v1257
        %v1259 = vand.u32 %v1258, 4294901760
        %v1260 = vsub.f32 %v1258, %v1259
        %v1261 = vand.u32 %v1260, 4294901760
        %1262 = vmatmul.mubr.f32.gmra.mrb[0].mxu0 %v1261
        %v1263 = vpop.f32.mrb[0].mxu0
        %v1264 = vadd.f32 %v1171, %v1263
        %v1265 = vpop.f32.mrb[0].mxu0
        %v1266 = vadd.f32 %v1171, %v1265
        %1267 = vdwg.mxu0
        %v1268 = vand.u32 %v1159, 4294901760
        %v1269 = vsub.f32 %v1159, %v1268
        %v1270 = vand.u32 %v1269, 4294901760
        %v1271 = vsub.f32 %v1269, %v1270
        %v1272 = vand.u32 %v1271, 4294901760
        %1273 = vmatprep.subr.mxu0 %v1272
        %v1274 = vand.u32 %v1158, 4294901760
        %v1275 = vsub.f32 %v1158, %v1274
        %v1276 = vand.u32 %v1275, 4294901760
        %v1277 = vsub.f32 %v1275, %v1276
        %v1278 = vand.u32 %v1277, 4294901760
        %1279 = vmatpush1.msra.mxu0 %v1278
        %v1280 = vand.u32 %v1161, 4294901760
        %v1281 = vsub.f32 %v1161, %v1280
        %v1282 = vand.u32 %v1281, 4294901760
        %v1283 = vsub.f32 %v1281, %v1282
        %v1284 = vand.u32 %v1283, 4294901760
        %1285 = vmatprep.subr.mxu0 %v1284
        %v1286 = vand.u32 %v1160, 4294901760
        %v1287 = vsub.f32 %v1160, %v1286
        %v1288 = vand.u32 %v1287, 4294901760
        %v1289 = vsub.f32 %v1287, %v1288
        %v1290 = vand.u32 %v1289, 4294901760
        %1291 = vmatpush1.msra.mxu0 %v1290
        %v1292 = vand.u32 %v1163, 4294901760
        %v1293 = vsub.f32 %v1163, %v1292
        %v1294 = vand.u32 %v1293, 4294901760
        %v1295 = vsub.f32 %v1293, %v1294
        %v1296 = vand.u32 %v1295, 4294901760
        %1297 = vmatprep.subr.mxu0 %v1296
        %v1298 = vand.u32 %v1162, 4294901760
        %v1299 = vsub.f32 %v1162, %v1298
        %v1300 = vand.u32 %v1299, 4294901760
        %v1301 = vsub.f32 %v1299, %v1300
        %v1302 = vand.u32 %v1301, 4294901760
        %1303 = vmatpush1.msra.mxu0 %v1302
        %v1304 = vand.u32 %v1165, 4294901760
        %v1305 = vsub.f32 %v1165, %v1304
        %v1306 = vand.u32 %v1305, 4294901760
        %v1307 = vsub.f32 %v1305, %v1306
        %v1308 = vand.u32 %v1307, 4294901760
        %1309 = vmatprep.subr.mxu0 %v1308
        %v1310 = vand.u32 %v1164, 4294901760
        %v1311 = vsub.f32 %v1164, %v1310
        %v1312 = vand.u32 %v1311, 4294901760
        %v1313 = vsub.f32 %v1311, %v1312
        %v1314 = vand.u32 %v1313, 4294901760
        %1315 = vmatpush1.msra.mxu0 %v1314
        %v1316 = vand.u32 %v1180, 4294901760
        %v1317 = vsub.f32 %v1180, %v1316
        %v1318 = vand.u32 %v1317, 4294901760
        %v1319 = vsub.f32 %v1317, %v1318
        %v1320 = vand.u32 %v1319, 4294901760
        %1321 = vmatprep.subr.mxu0 %v1320
        %v1322 = vand.u32 %v1177, 4294901760
        %v1323 = vsub.f32 %v1177, %v1322
        %v1324 = vand.u32 %v1323, 4294901760
        %v1325 = vsub.f32 %v1323, %v1324
        %v1326 = vand.u32 %v1325, 4294901760
        %1327 = vmatpush1.msra.mxu0 %v1326
        %1328 = vmatprep.subr.mxu0 0.0
        %1329 = vmatpush1.msra.mxu0 0.0
        %1330 = vmatprep.subr.mxu0 0.0
        %1331 = vmatpush1.msra.mxu0 0.0
        %1332 = vmatprep.subr.mxu0 0.0
        %1333 = vmatpush1.msra.mxu0 0.0
        %1334 = vmatprep.subr.mxu0 0.0
        %1335 = vmatpush1.msra.mxu0 0.0
        %1336 = vmatprep.subr.mxu0 0.0
        %1337 = vmatpush1.msra.mxu0 0.0
        %1338 = vmatprep.subr.mxu0 0.0
        %1339 = vmatpush1.msra.mxu0 0.0
        %1340 = vmatprep.subr.mxu0 0.0
        %1341 = vmatpush1.msra.mxu0 0.0
        %1342 = vmatprep.subr.mxu0 0.0
        %1343 = vmatpush1.msra.mxu0 0.0
        %1344 = vmatprep.subr.mxu0 0.0
        %1345 = vmatpush1.msra.mxu0 0.0
        %1346 = vmatprep.subr.mxu0 0.0
        %1347 = vmatpush1.msra.mxu0 0.0
        %1348 = vmatprep.subr.mxu0 0.0
        %1349 = vmatpush1.msra.mxu0 0.0
        %1350 = vmatprep.subr.mxu0 0.0
        %1351 = vmatpush1.msra.mxu0 0.0
        %1352 = vmatprep.subr.mxu0 0.0
        %1353 = vmatpush1.msra.mxu0 0.0
        %1354 = vmatprep.subr.mxu0 0.0
        %1355 = vmatpush1.msra.mxu0 0.0
        %1356 = vmatprep.subr.mxu0 0.0
        %1357 = vmatpush1.msra.mxu0 0.0
        %1358 = vmatprep.subr.mxu0 0.0
        %1359 = vmatpush1.msra.mxu0 0.0
        %1360 = vmatprep.subr.mxu0 0.0
        %1361 = vmatpush1.msra.mxu0 0.0
        %1362 = vmatprep.subr.mxu0 0.0
        %1363 = vmatpush1.msra.mxu0 0.0
        %1364 = vmatprep.subr.mxu0 0.0
        %1365 = vmatpush1.msra.mxu0 0.0
        %1366 = vmatprep.subr.mxu0 0.0
        %1367 = vmatpush1.msra.mxu0 0.0
        %1368 = vmatprep.subr.mxu0 0.0
        %1369 = vmatpush1.msra.mxu0 0.0
        %1370 = vmatprep.subr.mxu0 0.0
        %1371 = vmatpush1.msra.mxu0 0.0
        %1372 = vmatprep.subr.mxu0 0.0
        %1373 = vmatpush1.msra.mxu0 0.0
        %1374 = vmatprep.subr.mxu0 0.0
        %1375 = vmatpush1.msra.mxu0 0.0
        %1376 = vmatprep.subr.mxu0 0.0
        %1377 = vmatpush1.msra.mxu0 0.0
        %1378 = vmatprep.subr.mxu0 0.0
        %1379 = vmatpush1.msra.mxu0 0.0
        %1380 = vmatprep.subr.mxu0 0.0
        %1381 = vmatpush1.msra.mxu0 0.0
        %1382 = vmatprep.mubr.f32.mxu0 0.0
        %v1383 = vand.u32 %v1174, 4294901760
        %1384 = vmatmul.mubr.f32.gmra.mrb[0].mxu0 %v1383
        %v1385 = vpop.f32.mrb[0].mxu0
        %v1386 = vadd.f32 %v1264, %v1385
        %v1387 = vpop.f32.mrb[0].mxu0
        %v1388 = vadd.f32 %v1266, %v1387
        %1389 = vdwg.mxu0
        %v1390 = vand.u32 %v1159, 4294901760
        %v1391 = vsub.f32 %v1159, %v1390
        %1392 = vmatprep.subr.mxu0 %v1391
        %v1393 = vand.u32 %v1158, 4294901760
        %v1394 = vsub.f32 %v1158, %v1393
        %1395 = vmatpush1.msra.mxu0 %v1394
        %v1396 = vand.u32 %v1161, 4294901760
        %v1397 = vsub.f32 %v1161, %v1396
        %1398 = vmatprep.subr.mxu0 %v1397
        %v1399 = vand.u32 %v1160, 4294901760
        %v1400 = vsub.f32 %v1160, %v1399
        %1401 = vmatpush1.msra.mxu0 %v1400
        %v1402 = vand.u32 %v1163, 4294901760
        %v1403 = vsub.f32 %v1163, %v1402
        %1404 = vmatprep.subr.mxu0 %v1403
        %v1405 = vand.u32 %v1162, 4294901760
        %v1406 = vsub.f32 %v1162, %v1405
        %1407 = vmatpush1.msra.mxu0 %v1406
        %v1408 = vand.u32 %v1165, 4294901760
        %v1409 = vsub.f32 %v1165, %v1408
        %1410 = vmatprep.subr.mxu0 %v1409
        %v1411 = vand.u32 %v1164, 4294901760
        %v1412 = vsub.f32 %v1164, %v1411
        %1413 = vmatpush1.msra.mxu0 %v1412
        %v1414 = vand.u32 %v1180, 4294901760
        %v1415 = vsub.f32 %v1180, %v1414
        %1416 = vmatprep.subr.mxu0 %v1415
        %v1417 = vand.u32 %v1177, 4294901760
        %v1418 = vsub.f32 %v1177, %v1417
        %1419 = vmatpush1.msra.mxu0 %v1418
        %1420 = vmatprep.subr.mxu0 0.0
        %1421 = vmatpush1.msra.mxu0 0.0
        %1422 = vmatprep.subr.mxu0 0.0
        %1423 = vmatpush1.msra.mxu0 0.0
        %1424 = vmatprep.subr.mxu0 0.0
        %1425 = vmatpush1.msra.mxu0 0.0
        %1426 = vmatprep.subr.mxu0 0.0
        %1427 = vmatpush1.msra.mxu0 0.0
        %1428 = vmatprep.subr.mxu0 0.0
        %1429 = vmatpush1.msra.mxu0 0.0
        %1430 = vmatprep.subr.mxu0 0.0
        %1431 = vmatpush1.msra.mxu0 0.0
        %1432 = vmatprep.subr.mxu0 0.0
        %1433 = vmatpush1.msra.mxu0 0.0
        %1434 = vmatprep.subr.mxu0 0.0
        %1435 = vmatpush1.msra.mxu0 0.0
        %1436 = vmatprep.subr.mxu0 0.0
        %1437 = vmatpush1.msra.mxu0 0.0
        %1438 = vmatprep.subr.mxu0 0.0
        %1439 = vmatpush1.msra.mxu0 0.0
        %1440 = vmatprep.subr.mxu0 0.0
        %1441 = vmatpush1.msra.mxu0 0.0
        %1442 = vmatprep.subr.mxu0 0.0
        %1443 = vmatpush1.msra.mxu0 0.0
        %1444 = vmatprep.subr.mxu0 0.0
        %1445 = vmatpush1.msra.mxu0 0.0
        %1446 = vmatprep.subr.mxu0 0.0
        %1447 = vmatpush1.msra.mxu0 0.0
        %1448 = vmatprep.subr.mxu0 0.0
        %1449 = vmatpush1.msra.mxu0 0.0
        %1450 = vmatprep.subr.mxu0 0.0
        %1451 = vmatpush1.msra.mxu0 0.0
        %1452 = vmatprep.subr.mxu0 0.0
        %1453 = vmatpush1.msra.mxu0 0.0
        %1454 = vmatprep.subr.mxu0 0.0
        %1455 = vmatpush1.msra.mxu0 0.0
        %1456 = vmatprep.subr.mxu0 0.0
        %1457 = vmatpush1.msra.mxu0 0.0
        %1458 = vmatprep.subr.mxu0 0.0
        %1459 = vmatpush1.msra.mxu0 0.0
        %1460 = vmatprep.subr.mxu0 0.0
        %1461 = vmatpush1.msra.mxu0 0.0
        %1462 = vmatprep.subr.mxu0 0.0
        %1463 = vmatpush1.msra.mxu0 0.0
        %1464 = vmatprep.subr.mxu0 0.0
        %1465 = vmatpush1.msra.mxu0 0.0
        %1466 = vmatprep.subr.mxu0 0.0
        %1467 = vmatpush1.msra.mxu0 0.0
        %1468 = vmatprep.subr.mxu0 0.0
        %1469 = vmatpush1.msra.mxu0 0.0
        %1470 = vmatprep.subr.mxu0 0.0
        %1471 = vmatpush1.msra.mxu0 0.0
        %1472 = vmatprep.subr.mxu0 0.0
        %1473 = vmatpush1.msra.mxu0 0.0
        %1474 = vmatprep.mubr.f32.mxu0 0.0
        %v1475 = vand.u32 %v1174, 4294901760
        %v1476 = vsub.f32 %v1174, %v1475
        %1477 = vmatmul.mubr.f32.gmra.mrb[0].mxu0 %v1476
        %v1478 = vpop.f32.mrb[0].mxu0
        %v1479 = vadd.f32 %v1386, %v1478
        %v1480 = vpop.f32.mrb[0].mxu0
        %v1481 = vadd.f32 %v1388, %v1480
        %1482 = vdwg.mxu0
        %v1483 = vand.u32 %v1159, 4294901760
        %1484 = vmatprep.subr.mxu0 %v1483
        %v1485 = vand.u32 %v1158, 4294901760
        %1486 = vmatpush1.msra.mxu0 %v1485
        %v1487 = vand.u32 %v1161, 4294901760
        %1488 = vmatprep.subr.mxu0 %v1487
        %v1489 = vand.u32 %v1160, 4294901760
        %1490 = vmatpush1.msra.mxu0 %v1489
        %v1491 = vand.u32 %v1163, 4294901760
        %1492 = vmatprep.subr.mxu0 %v1491
        %v1493 = vand.u32 %v1162, 4294901760
        %1494 = vmatpush1.msra.mxu0 %v1493
        %v1495 = vand.u32 %v1165, 4294901760
        %1496 = vmatprep.subr.mxu0 %v1495
        %v1497 = vand.u32 %v1164, 4294901760
        %1498 = vmatpush1.msra.mxu0 %v1497
        %v1499 = vand.u32 %v1180, 4294901760
        %1500 = vmatprep.subr.mxu0 %v1499
        %v1501 = vand.u32 %v1177, 4294901760
        %1502 = vmatpush1.msra.mxu0 %v1501
        %1503 = vmatprep.subr.mxu0 0.0
        %1504 = vmatpush1.msra.mxu0 0.0
        %1505 = vmatprep.subr.mxu0 0.0
        %1506 = vmatpush1.msra.mxu0 0.0
        %1507 = vmatprep.subr.mxu0 0.0
        %1508 = vmatpush1.msra.mxu0 0.0
        %1509 = vmatprep.subr.mxu0 0.0
        %1510 = vmatpush1.msra.mxu0 0.0
        %1511 = vmatprep.subr.mxu0 0.0
        %1512 = vmatpush1.msra.mxu0 0.0
        %1513 = vmatprep.subr.mxu0 0.0
        %1514 = vmatpush1.msra.mxu0 0.0
        %1515 = vmatprep.subr.mxu0 0.0
        %1516 = vmatpush1.msra.mxu0 0.0
        %1517 = vmatprep.subr.mxu0 0.0
        %1518 = vmatpush1.msra.mxu0 0.0
        %1519 = vmatprep.subr.mxu0 0.0
        %1520 = vmatpush1.msra.mxu0 0.0
        %1521 = vmatprep.subr.mxu0 0.0
        %1522 = vmatpush1.msra.mxu0 0.0
        %1523 = vmatprep.subr.mxu0 0.0
        %1524 = vmatpush1.msra.mxu0 0.0
        %1525 = vmatprep.subr.mxu0 0.0
        %1526 = vmatpush1.msra.mxu0 0.0
        %1527 = vmatprep.subr.mxu0 0.0
        %1528 = vmatpush1.msra.mxu0 0.0
        %1529 = vmatprep.subr.mxu0 0.0
        %1530 = vmatpush1.msra.mxu0 0.0
        %1531 = vmatprep.subr.mxu0 0.0
        %1532 = vmatpush1.msra.mxu0 0.0
        %1533 = vmatprep.subr.mxu0 0.0
        %1534 = vmatpush1.msra.mxu0 0.0
        %1535 = vmatprep.subr.mxu0 0.0
        %1536 = vmatpush1.msra.mxu0 0.0
        %1537 = vmatprep.subr.mxu0 0.0
        %1538 = vmatpush1.msra.mxu0 0.0
        %1539 = vmatprep.subr.mxu0 0.0
        %1540 = vmatpush1.msra.mxu0 0.0
        %1541 = vmatprep.subr.mxu0 0.0
        %1542 = vmatpush1.msra.mxu0 0.0
        %1543 = vmatprep.subr.mxu0 0.0
        %1544 = vmatpush1.msra.mxu0 0.0
        %1545 = vmatprep.subr.mxu0 0.0
        %1546 = vmatpush1.msra.mxu0 0.0
        %1547 = vmatprep.subr.mxu0 0.0
        %1548 = vmatpush1.msra.mxu0 0.0
        %1549 = vmatprep.subr.mxu0 0.0
        %1550 = vmatpush1.msra.mxu0 0.0
        %1551 = vmatprep.subr.mxu0 0.0
        %1552 = vmatpush1.msra.mxu0 0.0
        %1553 = vmatprep.subr.mxu0 0.0
        %1554 = vmatpush1.msra.mxu0 0.0
        %1555 = vmatprep.subr.mxu0 0.0
        %1556 = vmatpush1.msra.mxu0 0.0
        %1557 = vmatprep.mubr.f32.mxu0 0.0
        %v1558 = vand.u32 %v1174, 4294901760
        %v1559 = vsub.f32 %v1174, %v1558
        %v1560 = vand.u32 %v1559, 4294901760
        %1561 = vmatmul.mubr.f32.gmra.mrb[0].mxu0 %v1560
        %v1562 = vpop.f32.mrb[0].mxu0
        %v1563 = vadd.f32 %v1479, %v1562
        %v1564 = vpop.f32.mrb[0].mxu0
        %v1565 = vadd.f32 %v1481, %v1564
        %1566 = vdwg.mxu0
        %v1567 = vand.u32 %v1159, 4294901760
        %v1568 = vsub.f32 %v1159, %v1567
        %v1569 = vand.u32 %v1568, 4294901760
        %1570 = vmatprep.subr.mxu0 %v1569
        %v1571 = vand.u32 %v1158, 4294901760
        %v1572 = vsub.f32 %v1158, %v1571
        %v1573 = vand.u32 %v1572, 4294901760
        %1574 = vmatpush1.msra.mxu0 %v1573
        %v1575 = vand.u32 %v1161, 4294901760
        %v1576 = vsub.f32 %v1161, %v1575
        %v1577 = vand.u32 %v1576, 4294901760
        %1578 = vmatprep.subr.mxu0 %v1577
        %v1579 = vand.u32 %v1160, 4294901760
        %v1580 = vsub.f32 %v1160, %v1579
        %v1581 = vand.u32 %v1580, 4294901760
        %1582 = vmatpush1.msra.mxu0 %v1581
        %v1583 = vand.u32 %v1163, 4294901760
        %v1584 = vsub.f32 %v1163, %v1583
        %v1585 = vand.u32 %v1584, 4294901760
        %1586 = vmatprep.subr.mxu0 %v1585
        %v1587 = vand.u32 %v1162, 4294901760
        %v1588 = vsub.f32 %v1162, %v1587
        %v1589 = vand.u32 %v1588, 4294901760
        %1590 = vmatpush1.msra.mxu0 %v1589
        %v1591 = vand.u32 %v1165, 4294901760
        %v1592 = vsub.f32 %v1165, %v1591
        %v1593 = vand.u32 %v1592, 4294901760
        %1594 = vmatprep.subr.mxu0 %v1593
        %v1595 = vand.u32 %v1164, 4294901760
        %v1596 = vsub.f32 %v1164, %v1595
        %v1597 = vand.u32 %v1596, 4294901760
        %1598 = vmatpush1.msra.mxu0 %v1597
        %v1599 = vand.u32 %v1180, 4294901760
        %v1600 = vsub.f32 %v1180, %v1599
        %v1601 = vand.u32 %v1600, 4294901760
        %1602 = vmatprep.subr.mxu0 %v1601
        %v1603 = vand.u32 %v1177, 4294901760
        %v1604 = vsub.f32 %v1177, %v1603
        %v1605 = vand.u32 %v1604, 4294901760
        %1606 = vmatpush1.msra.mxu0 %v1605
        %1607 = vmatprep.subr.mxu0 0.0
        %1608 = vmatpush1.msra.mxu0 0.0
        %1609 = vmatprep.subr.mxu0 0.0
        %1610 = vmatpush1.msra.mxu0 0.0
        %1611 = vmatprep.subr.mxu0 0.0
        %1612 = vmatpush1.msra.mxu0 0.0
        %1613 = vmatprep.subr.mxu0 0.0
        %1614 = vmatpush1.msra.mxu0 0.0
        %1615 = vmatprep.subr.mxu0 0.0
        %1616 = vmatpush1.msra.mxu0 0.0
        %1617 = vmatprep.subr.mxu0 0.0
        %1618 = vmatpush1.msra.mxu0 0.0
        %1619 = vmatprep.subr.mxu0 0.0
        %1620 = vmatpush1.msra.mxu0 0.0
        %1621 = vmatprep.subr.mxu0 0.0
        %1622 = vmatpush1.msra.mxu0 0.0
        %1623 = vmatprep.subr.mxu0 0.0
        %1624 = vmatpush1.msra.mxu0 0.0
        %1625 = vmatprep.subr.mxu0 0.0
        %1626 = vmatpush1.msra.mxu0 0.0
        %1627 = vmatprep.subr.mxu0 0.0
        %1628 = vmatpush1.msra.mxu0 0.0
        %1629 = vmatprep.subr.mxu0 0.0
        %1630 = vmatpush1.msra.mxu0 0.0
        %1631 = vmatprep.subr.mxu0 0.0
        %1632 = vmatpush1.msra.mxu0 0.0
        %1633 = vmatprep.subr.mxu0 0.0
        %1634 = vmatpush1.msra.mxu0 0.0
        %1635 = vmatprep.subr.mxu0 0.0
        %1636 = vmatpush1.msra.mxu0 0.0
        %1637 = vmatprep.subr.mxu0 0.0
        %1638 = vmatpush1.msra.mxu0 0.0
        %1639 = vmatprep.subr.mxu0 0.0
        %1640 = vmatpush1.msra.mxu0 0.0
        %1641 = vmatprep.subr.mxu0 0.0
        %1642 = vmatpush1.msra.mxu0 0.0
        %1643 = vmatprep.subr.mxu0 0.0
        %1644 = vmatpush1.msra.mxu0 0.0
        %1645 = vmatprep.subr.mxu0 0.0
        %1646 = vmatpush1.msra.mxu0 0.0
        %1647 = vmatprep.subr.mxu0 0.0
        %1648 = vmatpush1.msra.mxu0 0.0
        %1649 = vmatprep.subr.mxu0 0.0
        %1650 = vmatpush1.msra.mxu0 0.0
        %1651 = vmatprep.subr.mxu0 0.0
        %1652 = vmatpush1.msra.mxu0 0.0
        %1653 = vmatprep.subr.mxu0 0.0
        %1654 = vmatpush1.msra.mxu0 0.0
        %1655 = vmatprep.subr.mxu0 0.0
        %1656 = vmatpush1.msra.mxu0 0.0
        %1657 = vmatprep.subr.mxu0 0.0
        %1658 = vmatpush1.msra.mxu0 0.0
        %1659 = vmatprep.subr.mxu0 0.0
        %1660 = vmatpush1.msra.mxu0 0.0
        %1661 = vmatprep.mubr.f32.mxu0 0.0
        %v1662 = vand.u32 %v1174, 4294901760
        %1663 = vmatmul.mubr.f32.gmra.mrb[0].mxu0 %v1662
        %v1664 = vpop.f32.mrb[0].mxu0
        %v1665 = vadd.f32 %v1563, %v1664
        %v1666 = vpop.f32.mrb[0].mxu0
        %v1667 = vadd.f32 %v1565, %v1666
        %1668 = vdwg.mxu0
        %v1669 = vand.u32 %v1159, 4294901760
        %1670 = vmatprep.subr.mxu0 %v1669
        %v1671 = vand.u32 %v1158, 4294901760
        %1672 = vmatpush1.msra.mxu0 %v1671
        %v1673 = vand.u32 %v1161, 4294901760
        %1674 = vmatprep.subr.mxu0 %v1673
        %v1675 = vand.u32 %v1160, 4294901760
        %1676 = vmatpush1.msra.mxu0 %v1675
        %v1677 = vand.u32 %v1163, 4294901760
        %1678 = vmatprep.subr.mxu0 %v1677
        %v1679 = vand.u32 %v1162, 4294901760
        %1680 = vmatpush1.msra.mxu0 %v1679
        %v1681 = vand.u32 %v1165, 4294901760
        %1682 = vmatprep.subr.mxu0 %v1681
        %v1683 = vand.u32 %v1164, 4294901760
        %1684 = vmatpush1.msra.mxu0 %v1683
        %v1685 = vand.u32 %v1180, 4294901760
        %1686 = vmatprep.subr.mxu0 %v1685
        %v1687 = vand.u32 %v1177, 4294901760
        %1688 = vmatpush1.msra.mxu0 %v1687
        %1689 = vmatprep.subr.mxu0 0.0
        %1690 = vmatpush1.msra.mxu0 0.0
        %1691 = vmatprep.subr.mxu0 0.0
        %1692 = vmatpush1.msra.mxu0 0.0
        %1693 = vmatprep.subr.mxu0 0.0
        %1694 = vmatpush1.msra.mxu0 0.0
        %1695 = vmatprep.subr.mxu0 0.0
        %1696 = vmatpush1.msra.mxu0 0.0
        %1697 = vmatprep.subr.mxu0 0.0
        %1698 = vmatpush1.msra.mxu0 0.0
        %1699 = vmatprep.subr.mxu0 0.0
        %1700 = vmatpush1.msra.mxu0 0.0
        %1701 = vmatprep.subr.mxu0 0.0
        %1702 = vmatpush1.msra.mxu0 0.0
        %1703 = vmatprep.subr.mxu0 0.0
        %1704 = vmatpush1.msra.mxu0 0.0
        %1705 = vmatprep.subr.mxu0 0.0
        %1706 = vmatpush1.msra.mxu0 0.0
        %1707 = vmatprep.subr.mxu0 0.0
        %1708 = vmatpush1.msra.mxu0 0.0
        %1709 = vmatprep.subr.mxu0 0.0
        %1710 = vmatpush1.msra.mxu0 0.0
        %1711 = vmatprep.subr.mxu0 0.0
        %1712 = vmatpush1.msra.mxu0 0.0
        %1713 = vmatprep.subr.mxu0 0.0
        %1714 = vmatpush1.msra.mxu0 0.0
        %1715 = vmatprep.subr.mxu0 0.0
        %1716 = vmatpush1.msra.mxu0 0.0
        %1717 = vmatprep.subr.mxu0 0.0
        %1718 = vmatpush1.msra.mxu0 0.0
        %1719 = vmatprep.subr.mxu0 0.0
        %1720 = vmatpush1.msra.mxu0 0.0
        %1721 = vmatprep.subr.mxu0 0.0
        %1722 = vmatpush1.msra.mxu0 0.0
        %1723 = vmatprep.subr.mxu0 0.0
        %1724 = vmatpush1.msra.mxu0 0.0
        %1725 = vmatprep.subr.mxu0 0.0
        %1726 = vmatpush1.msra.mxu0 0.0
        %1727 = vmatprep.subr.mxu0 0.0
        %1728 = vmatpush1.msra.mxu0 0.0
        %1729 = vmatprep.subr.mxu0 0.0
        %1730 = vmatpush1.msra.mxu0 0.0
        %1731 = vmatprep.subr.mxu0 0.0
        %1732 = vmatpush1.msra.mxu0 0.0
        %1733 = vmatprep.subr.mxu0 0.0
        %1734 = vmatpush1.msra.mxu0 0.0
        %1735 = vmatprep.subr.mxu0 0.0
        %1736 = vmatpush1.msra.mxu0 0.0
        %1737 = vmatprep.subr.mxu0 0.0
        %1738 = vmatpush1.msra.mxu0 0.0
        %1739 = vmatprep.subr.mxu0 0.0
        %1740 = vmatpush1.msra.mxu0 0.0
        %1741 = vmatprep.subr.mxu0 0.0
        %1742 = vmatpush1.msra.mxu0 0.0
        %1743 = vmatprep.mubr.f32.mxu0 0.0
        %v1744 = vand.u32 %v1174, 4294901760
        %1745 = vmatmul.mubr.f32.gmra.mrb[0].mxu0 %v1744
        %v1746 = vpop.f32.mrb[0].mxu0
        %v1747 = vadd.f32 %v1665, %v1746
        %v1748 = vpop.f32.mrb[0].mxu0
        %v1749 = vadd.f32 %v1667, %v1748
        %1750 = vdwg.mxu0
        %v1751 = vsel %vm442, %v1747, 0.0
        %v1752 = vsel %vm442, %v1749, 0.0
        %v1753 = vadd.f32 %v1751, %v1752
        %1754 = vadd.xlane.f32.xlu0 %v1753
        %v1755 = vpop.xlane.xlu0 %1754
        %v1756 = vmul.f32 %v1755, %v1042
        %v1757 = vsub.f32 %v1747, %v1756
        %v1758 = vsub.f32 %v1749, %v1756
        %v1759 = vmul.f32 %v1757, %v1757
        %v1760 = vmul.f32 %v1758, %v1758
        %v1761 = vsel %vm442, %v1759, 0.0
        %v1762 = vsel %vm442, %v1760, 0.0
        %v1763 = vadd.f32 %v1761, %v1762
        %1764 = vadd.xlane.f32.xlu0 %v1763
        %v1765 = vpop.xlane.xlu0 %1764
        %v1766 = vmul.f32 %v1765, %v1042
        %v1767 = vadd.f32 %v1766, 1e-05
        %v1768 = vrsqrt.pop %v1767
        %v1769 = vmul.f32 %v1757, %v1768
        %v1770 = vmul.f32 %v1758, %v1768
        %v1771 = vadd.f32 %v1769, %v326
        %v1772 = vadd.f32 %v1770, %v328
        %v1773 = vmax.f32 %v1771, 0.0
        %v1774 = vmax.f32 %v1772, 0.0
        %1777 = vrot.lane.b32.xlu0 %v1773, 17
        %v1778 = vpop.permute.xlu0 %1777
        %1779 = vrot.lane.b32.xlu0 %v1774, 17
        %v1780 = vpop.permute.xlu0 %1779
        %v1781 = vsel %vm333, %v1778, %v1780
        %v1784 = vsel %vm333, 0.0, %v1778
        %v1785 = vsel %vm340, %v1784, 0.0
        %v1786 = vsel %vm341, %v1781, 0.0
        %1787 = vrot.lane.b32.xlu0 %v1773, 16
        %v1788 = vpop.permute.xlu0 %1787
        %1789 = vrot.lane.b32.xlu0 %v1774, 16
        %v1790 = vpop.permute.xlu0 %1789
        %v1791 = vsel %vm348, %v1788, %v1790
        %v1793 = vsel %vm348, 0.0, %v1788
        %1794 = vrot.lane.b32.xlu0 %v1773, 15
        %v1795 = vpop.permute.xlu0 %1794
        %1796 = vrot.lane.b32.xlu0 %v1774, 15
        %v1797 = vpop.permute.xlu0 %1796
        %v1798 = vsel %vm356, %v1795, %v1797
        %v1801 = vsel %vm356, 0.0, %v1795
        %v1802 = vsel %vm363, %v1801, 0.0
        %v1803 = vsel %vm364, %v1798, 0.0
        %1804 = vrot.lane.b32.xlu0 %v1773, 1
        %v1805 = vpop.permute.xlu0 %1804
        %1806 = vrot.lane.b32.xlu0 %v1774, 1
        %v1807 = vpop.permute.xlu0 %1806
        %v1808 = vsel %vm371, %v1805, %v1807
        %v1811 = vsel %vm371, 0.0, %v1805
        %v1812 = vsel %vm340, %v1811, 0.0
        %v1813 = vsel %vm341, %v1808, 0.0
        %1814 = vrot.lane.b32.xlu0 %v1773, 127
        %v1815 = vpop.permute.xlu0 %1814
        %1816 = vrot.lane.b32.xlu0 %v1774, 127
        %v1817 = vpop.permute.xlu0 %1816
        %v1818 = vsel %vm382, %v1815, %v1817
        %v1821 = vsel %vm382, %v1817, 0.0
        %v1822 = vsel %vm363, %v1818, 0.0
        %v1823 = vsel %vm364, %v1821, 0.0
        %1824 = vrot.lane.b32.xlu0 %v1773, 113
        %v1825 = vpop.permute.xlu0 %1824
        %1826 = vrot.lane.b32.xlu0 %v1774, 113
        %v1827 = vpop.permute.xlu0 %1826
        %v1828 = vsel %vm393, %v1825, %v1827
        %v1831 = vsel %vm393, %v1827, 0.0
        %v1832 = vsel %vm340, %v1828, 0.0
        %v1833 = vsel %vm341, %v1831, 0.0
        %1834 = vrot.lane.b32.xlu0 %v1773, 112
        %v1835 = vpop.permute.xlu0 %1834
        %1836 = vrot.lane.b32.xlu0 %v1774, 112
        %v1837 = vpop.permute.xlu0 %1836
        %v1838 = vsel %vm404, %v1835, %v1837
        %v1840 = vsel %vm404, %v1837, 0.0
        %1841 = vrot.lane.b32.xlu0 %v1773, 111
        %v1842 = vpop.permute.xlu0 %1841
        %1843 = vrot.lane.b32.xlu0 %v1774, 111
        %v1844 = vpop.permute.xlu0 %1843
        %v1845 = vsel %vm412, %v1842, %v1844
        %v1848 = vsel %vm412, %v1844, 0.0
        %v1849 = vsel %vm363, %v1845, 0.0
        %v1850 = vsel %vm364, %v1848, 0.0
        %v1852 = vrot.slane %v1793, 4
        %v1853 = vrot.slane %v1791, 4
        %v1858 = vrot.slane %v1812, 4
        %v1859 = vrot.slane %v1813, 4
        %v1864 = vrot.slane %v1822, 4
        %v1865 = vrot.slane %v1823, 4
        %v1869 = vrot.slane %v1838, 4
        %v1870 = vrot.slane %v1840, 4
        %v1873 = vsel %vm442, %v1785, %v1852
        %v1874 = vsel %vm442, %v1786, %v1853
        %v1875 = vsel %vm442, %v1802, %v1858
        %v1876 = vsel %vm442, %v1803, %v1859
        %v1877 = vsel %vm442, %v1773, %v1864
        %v1878 = vsel %vm442, %v1774, %v1865
        %v1879 = vsel %vm442, %v1832, %v1869
        %v1880 = vsel %vm442, %v1833, %v1870
        %v1881 = vld [vmem:[%s5] sm:$0xf]
        %v1882 = vld [vmem:[%s6] sm:$0xf]
        %1884 = vset.pattern.permute.xlu0 0
        %1885 = vperm.xlu0 %1884, %v1882
        %v1886 = vpop.permute.xlu0 %1885
        %v1889 = vsel %vm458, %v1881, 0
        %v1892 = vsel %vm442, %v1849, 0
        %v1895 = vsel %vm442, %v1850, 0
        %v1897 = vand.u32 %v1874, 4294901760
        %1898 = vmatprep.subr.mxu0 %v1897
        %v1899 = vand.u32 %v1873, 4294901760
        %1900 = vmatpush1.msra.mxu0 %v1899
        %v1901 = vand.u32 %v1876, 4294901760
        %1902 = vmatprep.subr.mxu0 %v1901
        %v1903 = vand.u32 %v1875, 4294901760
        %1904 = vmatpush1.msra.mxu0 %v1903
        %v1905 = vand.u32 %v1878, 4294901760
        %1906 = vmatprep.subr.mxu0 %v1905
        %v1907 = vand.u32 %v1877, 4294901760
        %1908 = vmatpush1.msra.mxu0 %v1907
        %v1909 = vand.u32 %v1880, 4294901760
        %1910 = vmatprep.subr.mxu0 %v1909
        %v1911 = vand.u32 %v1879, 4294901760
        %1912 = vmatpush1.msra.mxu0 %v1911
        %v1913 = vand.u32 %v1895, 4294901760
        %1914 = vmatprep.subr.mxu0 %v1913
        %v1915 = vand.u32 %v1892, 4294901760
        %1916 = vmatpush1.msra.mxu0 %v1915
        %1917 = vmatprep.subr.mxu0 0.0
        %1918 = vmatpush1.msra.mxu0 0.0
        %1919 = vmatprep.subr.mxu0 0.0
        %1920 = vmatpush1.msra.mxu0 0.0
        %1921 = vmatprep.subr.mxu0 0.0
        %1922 = vmatpush1.msra.mxu0 0.0
        %1923 = vmatprep.subr.mxu0 0.0
        %1924 = vmatpush1.msra.mxu0 0.0
        %1925 = vmatprep.subr.mxu0 0.0
        %1926 = vmatpush1.msra.mxu0 0.0
        %1927 = vmatprep.subr.mxu0 0.0
        %1928 = vmatpush1.msra.mxu0 0.0
        %1929 = vmatprep.subr.mxu0 0.0
        %1930 = vmatpush1.msra.mxu0 0.0
        %1931 = vmatprep.subr.mxu0 0.0
        %1932 = vmatpush1.msra.mxu0 0.0
        %1933 = vmatprep.subr.mxu0 0.0
        %1934 = vmatpush1.msra.mxu0 0.0
        %1935 = vmatprep.subr.mxu0 0.0
        %1936 = vmatpush1.msra.mxu0 0.0
        %1937 = vmatprep.subr.mxu0 0.0
        %1938 = vmatpush1.msra.mxu0 0.0
        %1939 = vmatprep.subr.mxu0 0.0
        %1940 = vmatpush1.msra.mxu0 0.0
        %1941 = vmatprep.subr.mxu0 0.0
        %1942 = vmatpush1.msra.mxu0 0.0
        %1943 = vmatprep.subr.mxu0 0.0
        %1944 = vmatpush1.msra.mxu0 0.0
        %1945 = vmatprep.subr.mxu0 0.0
        %1946 = vmatpush1.msra.mxu0 0.0
        %1947 = vmatprep.subr.mxu0 0.0
        %1948 = vmatpush1.msra.mxu0 0.0
        %1949 = vmatprep.subr.mxu0 0.0
        %1950 = vmatpush1.msra.mxu0 0.0
        %1951 = vmatprep.subr.mxu0 0.0
        %1952 = vmatpush1.msra.mxu0 0.0
        %1953 = vmatprep.subr.mxu0 0.0
        %1954 = vmatpush1.msra.mxu0 0.0
        %1955 = vmatprep.subr.mxu0 0.0
        %1956 = vmatpush1.msra.mxu0 0.0
        %1957 = vmatprep.subr.mxu0 0.0
        %1958 = vmatpush1.msra.mxu0 0.0
        %1959 = vmatprep.subr.mxu0 0.0
        %1960 = vmatpush1.msra.mxu0 0.0
        %1961 = vmatprep.subr.mxu0 0.0
        %1962 = vmatpush1.msra.mxu0 0.0
        %1963 = vmatprep.subr.mxu0 0.0
        %1964 = vmatpush1.msra.mxu0 0.0
        %1965 = vmatprep.subr.mxu0 0.0
        %1966 = vmatpush1.msra.mxu0 0.0
        %1967 = vmatprep.subr.mxu0 0.0
        %1968 = vmatpush1.msra.mxu0 0.0
        %1969 = vmatprep.subr.mxu0 0.0
        %1970 = vmatpush1.msra.mxu0 0.0
        %1971 = vmatprep.mubr.f32.mxu0 0.0
        %v1972 = vand.u32 %v1889, 4294901760
        %v1973 = vsub.f32 %v1889, %v1972
        %v1974 = vand.u32 %v1973, 4294901760
        %v1975 = vsub.f32 %v1973, %v1974
        %v1976 = vand.u32 %v1975, 4294901760
        %1977 = vmatmul.mubr.f32.gmra.mrb[0].mxu0 %v1976
        %v1978 = vpop.f32.mrb[0].mxu0
        %v1979 = vadd.f32 %v1886, %v1978
        %v1980 = vpop.f32.mrb[0].mxu0
        %v1981 = vadd.f32 %v1886, %v1980
        %1982 = vdwg.mxu0
        %v1983 = vand.u32 %v1874, 4294901760
        %v1984 = vsub.f32 %v1874, %v1983
        %v1985 = vand.u32 %v1984, 4294901760
        %v1986 = vsub.f32 %v1984, %v1985
        %v1987 = vand.u32 %v1986, 4294901760
        %1988 = vmatprep.subr.mxu0 %v1987
        %v1989 = vand.u32 %v1873, 4294901760
        %v1990 = vsub.f32 %v1873, %v1989
        %v1991 = vand.u32 %v1990, 4294901760
        %v1992 = vsub.f32 %v1990, %v1991
        %v1993 = vand.u32 %v1992, 4294901760
        %1994 = vmatpush1.msra.mxu0 %v1993
        %v1995 = vand.u32 %v1876, 4294901760
        %v1996 = vsub.f32 %v1876, %v1995
        %v1997 = vand.u32 %v1996, 4294901760
        %v1998 = vsub.f32 %v1996, %v1997
        %v1999 = vand.u32 %v1998, 4294901760
        %2000 = vmatprep.subr.mxu0 %v1999
        %v2001 = vand.u32 %v1875, 4294901760
        %v2002 = vsub.f32 %v1875, %v2001
        %v2003 = vand.u32 %v2002, 4294901760
        %v2004 = vsub.f32 %v2002, %v2003
        %v2005 = vand.u32 %v2004, 4294901760
        %2006 = vmatpush1.msra.mxu0 %v2005
        %v2007 = vand.u32 %v1878, 4294901760
        %v2008 = vsub.f32 %v1878, %v2007
        %v2009 = vand.u32 %v2008, 4294901760
        %v2010 = vsub.f32 %v2008, %v2009
        %v2011 = vand.u32 %v2010, 4294901760
        %2012 = vmatprep.subr.mxu0 %v2011
        %v2013 = vand.u32 %v1877, 4294901760
        %v2014 = vsub.f32 %v1877, %v2013
        %v2015 = vand.u32 %v2014, 4294901760
        %v2016 = vsub.f32 %v2014, %v2015
        %v2017 = vand.u32 %v2016, 4294901760
        %2018 = vmatpush1.msra.mxu0 %v2017
        %v2019 = vand.u32 %v1880, 4294901760
        %v2020 = vsub.f32 %v1880, %v2019
        %v2021 = vand.u32 %v2020, 4294901760
        %v2022 = vsub.f32 %v2020, %v2021
        %v2023 = vand.u32 %v2022, 4294901760
        %2024 = vmatprep.subr.mxu0 %v2023
        %v2025 = vand.u32 %v1879, 4294901760
        %v2026 = vsub.f32 %v1879, %v2025
        %v2027 = vand.u32 %v2026, 4294901760
        %v2028 = vsub.f32 %v2026, %v2027
        %v2029 = vand.u32 %v2028, 4294901760
        %2030 = vmatpush1.msra.mxu0 %v2029
        %v2031 = vand.u32 %v1895, 4294901760
        %v2032 = vsub.f32 %v1895, %v2031
        %v2033 = vand.u32 %v2032, 4294901760
        %v2034 = vsub.f32 %v2032, %v2033
        %v2035 = vand.u32 %v2034, 4294901760
        %2036 = vmatprep.subr.mxu0 %v2035
        %v2037 = vand.u32 %v1892, 4294901760
        %v2038 = vsub.f32 %v1892, %v2037
        %v2039 = vand.u32 %v2038, 4294901760
        %v2040 = vsub.f32 %v2038, %v2039
        %v2041 = vand.u32 %v2040, 4294901760
        %2042 = vmatpush1.msra.mxu0 %v2041
        %2043 = vmatprep.subr.mxu0 0.0
        %2044 = vmatpush1.msra.mxu0 0.0
        %2045 = vmatprep.subr.mxu0 0.0
        %2046 = vmatpush1.msra.mxu0 0.0
        %2047 = vmatprep.subr.mxu0 0.0
        %2048 = vmatpush1.msra.mxu0 0.0
        %2049 = vmatprep.subr.mxu0 0.0
        %2050 = vmatpush1.msra.mxu0 0.0
        %2051 = vmatprep.subr.mxu0 0.0
        %2052 = vmatpush1.msra.mxu0 0.0
        %2053 = vmatprep.subr.mxu0 0.0
        %2054 = vmatpush1.msra.mxu0 0.0
        %2055 = vmatprep.subr.mxu0 0.0
        %2056 = vmatpush1.msra.mxu0 0.0
        %2057 = vmatprep.subr.mxu0 0.0
        %2058 = vmatpush1.msra.mxu0 0.0
        %2059 = vmatprep.subr.mxu0 0.0
        %2060 = vmatpush1.msra.mxu0 0.0
        %2061 = vmatprep.subr.mxu0 0.0
        %2062 = vmatpush1.msra.mxu0 0.0
        %2063 = vmatprep.subr.mxu0 0.0
        %2064 = vmatpush1.msra.mxu0 0.0
        %2065 = vmatprep.subr.mxu0 0.0
        %2066 = vmatpush1.msra.mxu0 0.0
        %2067 = vmatprep.subr.mxu0 0.0
        %2068 = vmatpush1.msra.mxu0 0.0
        %2069 = vmatprep.subr.mxu0 0.0
        %2070 = vmatpush1.msra.mxu0 0.0
        %2071 = vmatprep.subr.mxu0 0.0
        %2072 = vmatpush1.msra.mxu0 0.0
        %2073 = vmatprep.subr.mxu0 0.0
        %2074 = vmatpush1.msra.mxu0 0.0
        %2075 = vmatprep.subr.mxu0 0.0
        %2076 = vmatpush1.msra.mxu0 0.0
        %2077 = vmatprep.subr.mxu0 0.0
        %2078 = vmatpush1.msra.mxu0 0.0
        %2079 = vmatprep.subr.mxu0 0.0
        %2080 = vmatpush1.msra.mxu0 0.0
        %2081 = vmatprep.subr.mxu0 0.0
        %2082 = vmatpush1.msra.mxu0 0.0
        %2083 = vmatprep.subr.mxu0 0.0
        %2084 = vmatpush1.msra.mxu0 0.0
        %2085 = vmatprep.subr.mxu0 0.0
        %2086 = vmatpush1.msra.mxu0 0.0
        %2087 = vmatprep.subr.mxu0 0.0
        %2088 = vmatpush1.msra.mxu0 0.0
        %2089 = vmatprep.subr.mxu0 0.0
        %2090 = vmatpush1.msra.mxu0 0.0
        %2091 = vmatprep.subr.mxu0 0.0
        %2092 = vmatpush1.msra.mxu0 0.0
        %2093 = vmatprep.subr.mxu0 0.0
        %2094 = vmatpush1.msra.mxu0 0.0
        %2095 = vmatprep.subr.mxu0 0.0
        %2096 = vmatpush1.msra.mxu0 0.0
        %2097 = vmatprep.mubr.f32.mxu0 0.0
        %v2098 = vand.u32 %v1889, 4294901760
        %2099 = vmatmul.mubr.f32.gmra.mrb[0].mxu0 %v2098
        %v2100 = vpop.f32.mrb[0].mxu0
        %v2101 = vadd.f32 %v1979, %v2100
        %v2102 = vpop.f32.mrb[0].mxu0
        %v2103 = vadd.f32 %v1981, %v2102
        %2104 = vdwg.mxu0
        %v2105 = vand.u32 %v1874, 4294901760
        %v2106 = vsub.f32 %v1874, %v2105
        %2107 = vmatprep.subr.mxu0 %v2106
        %v2108 = vand.u32 %v1873, 4294901760
        %v2109 = vsub.f32 %v1873, %v2108
        %2110 = vmatpush1.msra.mxu0 %v2109
        %v2111 = vand.u32 %v1876, 4294901760
        %v2112 = vsub.f32 %v1876, %v2111
        %2113 = vmatprep.subr.mxu0 %v2112
        %v2114 = vand.u32 %v1875, 4294901760
        %v2115 = vsub.f32 %v1875, %v2114
        %2116 = vmatpush1.msra.mxu0 %v2115
        %v2117 = vand.u32 %v1878, 4294901760
        %v2118 = vsub.f32 %v1878, %v2117
        %2119 = vmatprep.subr.mxu0 %v2118
        %v2120 = vand.u32 %v1877, 4294901760
        %v2121 = vsub.f32 %v1877, %v2120
        %2122 = vmatpush1.msra.mxu0 %v2121
        %v2123 = vand.u32 %v1880, 4294901760
        %v2124 = vsub.f32 %v1880, %v2123
        %2125 = vmatprep.subr.mxu0 %v2124
        %v2126 = vand.u32 %v1879, 4294901760
        %v2127 = vsub.f32 %v1879, %v2126
        %2128 = vmatpush1.msra.mxu0 %v2127
        %v2129 = vand.u32 %v1895, 4294901760
        %v2130 = vsub.f32 %v1895, %v2129
        %2131 = vmatprep.subr.mxu0 %v2130
        %v2132 = vand.u32 %v1892, 4294901760
        %v2133 = vsub.f32 %v1892, %v2132
        %2134 = vmatpush1.msra.mxu0 %v2133
        %2135 = vmatprep.subr.mxu0 0.0
        %2136 = vmatpush1.msra.mxu0 0.0
        %2137 = vmatprep.subr.mxu0 0.0
        %2138 = vmatpush1.msra.mxu0 0.0
        %2139 = vmatprep.subr.mxu0 0.0
        %2140 = vmatpush1.msra.mxu0 0.0
        %2141 = vmatprep.subr.mxu0 0.0
        %2142 = vmatpush1.msra.mxu0 0.0
        %2143 = vmatprep.subr.mxu0 0.0
        %2144 = vmatpush1.msra.mxu0 0.0
        %2145 = vmatprep.subr.mxu0 0.0
        %2146 = vmatpush1.msra.mxu0 0.0
        %2147 = vmatprep.subr.mxu0 0.0
        %2148 = vmatpush1.msra.mxu0 0.0
        %2149 = vmatprep.subr.mxu0 0.0
        %2150 = vmatpush1.msra.mxu0 0.0
        %2151 = vmatprep.subr.mxu0 0.0
        %2152 = vmatpush1.msra.mxu0 0.0
        %2153 = vmatprep.subr.mxu0 0.0
        %2154 = vmatpush1.msra.mxu0 0.0
        %2155 = vmatprep.subr.mxu0 0.0
        %2156 = vmatpush1.msra.mxu0 0.0
        %2157 = vmatprep.subr.mxu0 0.0
        %2158 = vmatpush1.msra.mxu0 0.0
        %2159 = vmatprep.subr.mxu0 0.0
        %2160 = vmatpush1.msra.mxu0 0.0
        %2161 = vmatprep.subr.mxu0 0.0
        %2162 = vmatpush1.msra.mxu0 0.0
        %2163 = vmatprep.subr.mxu0 0.0
        %2164 = vmatpush1.msra.mxu0 0.0
        %2165 = vmatprep.subr.mxu0 0.0
        %2166 = vmatpush1.msra.mxu0 0.0
        %2167 = vmatprep.subr.mxu0 0.0
        %2168 = vmatpush1.msra.mxu0 0.0
        %2169 = vmatprep.subr.mxu0 0.0
        %2170 = vmatpush1.msra.mxu0 0.0
        %2171 = vmatprep.subr.mxu0 0.0
        %2172 = vmatpush1.msra.mxu0 0.0
        %2173 = vmatprep.subr.mxu0 0.0
        %2174 = vmatpush1.msra.mxu0 0.0
        %2175 = vmatprep.subr.mxu0 0.0
        %2176 = vmatpush1.msra.mxu0 0.0
        %2177 = vmatprep.subr.mxu0 0.0
        %2178 = vmatpush1.msra.mxu0 0.0
        %2179 = vmatprep.subr.mxu0 0.0
        %2180 = vmatpush1.msra.mxu0 0.0
        %2181 = vmatprep.subr.mxu0 0.0
        %2182 = vmatpush1.msra.mxu0 0.0
        %2183 = vmatprep.subr.mxu0 0.0
        %2184 = vmatpush1.msra.mxu0 0.0
        %2185 = vmatprep.subr.mxu0 0.0
        %2186 = vmatpush1.msra.mxu0 0.0
        %2187 = vmatprep.subr.mxu0 0.0
        %2188 = vmatpush1.msra.mxu0 0.0
        %2189 = vmatprep.mubr.f32.mxu0 0.0
        %v2190 = vand.u32 %v1889, 4294901760
        %v2191 = vsub.f32 %v1889, %v2190
        %2192 = vmatmul.mubr.f32.gmra.mrb[0].mxu0 %v2191
        %v2193 = vpop.f32.mrb[0].mxu0
        %v2194 = vadd.f32 %v2101, %v2193
        %v2195 = vpop.f32.mrb[0].mxu0
        %v2196 = vadd.f32 %v2103, %v2195
        %2197 = vdwg.mxu0
        %v2198 = vand.u32 %v1874, 4294901760
        %2199 = vmatprep.subr.mxu0 %v2198
        %v2200 = vand.u32 %v1873, 4294901760
        %2201 = vmatpush1.msra.mxu0 %v2200
        %v2202 = vand.u32 %v1876, 4294901760
        %2203 = vmatprep.subr.mxu0 %v2202
        %v2204 = vand.u32 %v1875, 4294901760
        %2205 = vmatpush1.msra.mxu0 %v2204
        %v2206 = vand.u32 %v1878, 4294901760
        %2207 = vmatprep.subr.mxu0 %v2206
        %v2208 = vand.u32 %v1877, 4294901760
        %2209 = vmatpush1.msra.mxu0 %v2208
        %v2210 = vand.u32 %v1880, 4294901760
        %2211 = vmatprep.subr.mxu0 %v2210
        %v2212 = vand.u32 %v1879, 4294901760
        %2213 = vmatpush1.msra.mxu0 %v2212
        %v2214 = vand.u32 %v1895, 4294901760
        %2215 = vmatprep.subr.mxu0 %v2214
        %v2216 = vand.u32 %v1892, 4294901760
        %2217 = vmatpush1.msra.mxu0 %v2216
        %2218 = vmatprep.subr.mxu0 0.0
        %2219 = vmatpush1.msra.mxu0 0.0
        %2220 = vmatprep.subr.mxu0 0.0
        %2221 = vmatpush1.msra.mxu0 0.0
        %2222 = vmatprep.subr.mxu0 0.0
        %2223 = vmatpush1.msra.mxu0 0.0
        %2224 = vmatprep.subr.mxu0 0.0
        %2225 = vmatpush1.msra.mxu0 0.0
        %2226 = vmatprep.subr.mxu0 0.0
        %2227 = vmatpush1.msra.mxu0 0.0
        %2228 = vmatprep.subr.mxu0 0.0
        %2229 = vmatpush1.msra.mxu0 0.0
        %2230 = vmatprep.subr.mxu0 0.0
        %2231 = vmatpush1.msra.mxu0 0.0
        %2232 = vmatprep.subr.mxu0 0.0
        %2233 = vmatpush1.msra.mxu0 0.0
        %2234 = vmatprep.subr.mxu0 0.0
        %2235 = vmatpush1.msra.mxu0 0.0
        %2236 = vmatprep.subr.mxu0 0.0
        %2237 = vmatpush1.msra.mxu0 0.0
        %2238 = vmatprep.subr.mxu0 0.0
        %2239 = vmatpush1.msra.mxu0 0.0
        %2240 = vmatprep.subr.mxu0 0.0
        %2241 = vmatpush1.msra.mxu0 0.0
        %2242 = vmatprep.subr.mxu0 0.0
        %2243 = vmatpush1.msra.mxu0 0.0
        %2244 = vmatprep.subr.mxu0 0.0
        %2245 = vmatpush1.msra.mxu0 0.0
        %2246 = vmatprep.subr.mxu0 0.0
        %2247 = vmatpush1.msra.mxu0 0.0
        %2248 = vmatprep.subr.mxu0 0.0
        %2249 = vmatpush1.msra.mxu0 0.0
        %2250 = vmatprep.subr.mxu0 0.0
        %2251 = vmatpush1.msra.mxu0 0.0
        %2252 = vmatprep.subr.mxu0 0.0
        %2253 = vmatpush1.msra.mxu0 0.0
        %2254 = vmatprep.subr.mxu0 0.0
        %2255 = vmatpush1.msra.mxu0 0.0
        %2256 = vmatprep.subr.mxu0 0.0
        %2257 = vmatpush1.msra.mxu0 0.0
        %2258 = vmatprep.subr.mxu0 0.0
        %2259 = vmatpush1.msra.mxu0 0.0
        %2260 = vmatprep.subr.mxu0 0.0
        %2261 = vmatpush1.msra.mxu0 0.0
        %2262 = vmatprep.subr.mxu0 0.0
        %2263 = vmatpush1.msra.mxu0 0.0
        %2264 = vmatprep.subr.mxu0 0.0
        %2265 = vmatpush1.msra.mxu0 0.0
        %2266 = vmatprep.subr.mxu0 0.0
        %2267 = vmatpush1.msra.mxu0 0.0
        %2268 = vmatprep.subr.mxu0 0.0
        %2269 = vmatpush1.msra.mxu0 0.0
        %2270 = vmatprep.subr.mxu0 0.0
        %2271 = vmatpush1.msra.mxu0 0.0
        %2272 = vmatprep.mubr.f32.mxu0 0.0
        %v2273 = vand.u32 %v1889, 4294901760
        %v2274 = vsub.f32 %v1889, %v2273
        %v2275 = vand.u32 %v2274, 4294901760
        %2276 = vmatmul.mubr.f32.gmra.mrb[0].mxu0 %v2275
        %v2277 = vpop.f32.mrb[0].mxu0
        %v2278 = vadd.f32 %v2194, %v2277
        %v2279 = vpop.f32.mrb[0].mxu0
        %v2280 = vadd.f32 %v2196, %v2279
        %2281 = vdwg.mxu0
        %v2282 = vand.u32 %v1874, 4294901760
        %v2283 = vsub.f32 %v1874, %v2282
        %v2284 = vand.u32 %v2283, 4294901760
        %2285 = vmatprep.subr.mxu0 %v2284
        %v2286 = vand.u32 %v1873, 4294901760
        %v2287 = vsub.f32 %v1873, %v2286
        %v2288 = vand.u32 %v2287, 4294901760
        %2289 = vmatpush1.msra.mxu0 %v2288
        %v2290 = vand.u32 %v1876, 4294901760
        %v2291 = vsub.f32 %v1876, %v2290
        %v2292 = vand.u32 %v2291, 4294901760
        %2293 = vmatprep.subr.mxu0 %v2292
        %v2294 = vand.u32 %v1875, 4294901760
        %v2295 = vsub.f32 %v1875, %v2294
        %v2296 = vand.u32 %v2295, 4294901760
        %2297 = vmatpush1.msra.mxu0 %v2296
        %v2298 = vand.u32 %v1878, 4294901760
        %v2299 = vsub.f32 %v1878, %v2298
        %v2300 = vand.u32 %v2299, 4294901760
        %2301 = vmatprep.subr.mxu0 %v2300
        %v2302 = vand.u32 %v1877, 4294901760
        %v2303 = vsub.f32 %v1877, %v2302
        %v2304 = vand.u32 %v2303, 4294901760
        %2305 = vmatpush1.msra.mxu0 %v2304
        %v2306 = vand.u32 %v1880, 4294901760
        %v2307 = vsub.f32 %v1880, %v2306
        %v2308 = vand.u32 %v2307, 4294901760
        %2309 = vmatprep.subr.mxu0 %v2308
        %v2310 = vand.u32 %v1879, 4294901760
        %v2311 = vsub.f32 %v1879, %v2310
        %v2312 = vand.u32 %v2311, 4294901760
        %2313 = vmatpush1.msra.mxu0 %v2312
        %v2314 = vand.u32 %v1895, 4294901760
        %v2315 = vsub.f32 %v1895, %v2314
        %v2316 = vand.u32 %v2315, 4294901760
        %2317 = vmatprep.subr.mxu0 %v2316
        %v2318 = vand.u32 %v1892, 4294901760
        %v2319 = vsub.f32 %v1892, %v2318
        %v2320 = vand.u32 %v2319, 4294901760
        %2321 = vmatpush1.msra.mxu0 %v2320
        %2322 = vmatprep.subr.mxu0 0.0
        %2323 = vmatpush1.msra.mxu0 0.0
        %2324 = vmatprep.subr.mxu0 0.0
        %2325 = vmatpush1.msra.mxu0 0.0
        %2326 = vmatprep.subr.mxu0 0.0
        %2327 = vmatpush1.msra.mxu0 0.0
        %2328 = vmatprep.subr.mxu0 0.0
        %2329 = vmatpush1.msra.mxu0 0.0
        %2330 = vmatprep.subr.mxu0 0.0
        %2331 = vmatpush1.msra.mxu0 0.0
        %2332 = vmatprep.subr.mxu0 0.0
        %2333 = vmatpush1.msra.mxu0 0.0
        %2334 = vmatprep.subr.mxu0 0.0
        %2335 = vmatpush1.msra.mxu0 0.0
        %2336 = vmatprep.subr.mxu0 0.0
        %2337 = vmatpush1.msra.mxu0 0.0
        %2338 = vmatprep.subr.mxu0 0.0
        %2339 = vmatpush1.msra.mxu0 0.0
        %2340 = vmatprep.subr.mxu0 0.0
        %2341 = vmatpush1.msra.mxu0 0.0
        %2342 = vmatprep.subr.mxu0 0.0
        %2343 = vmatpush1.msra.mxu0 0.0
        %2344 = vmatprep.subr.mxu0 0.0
        %2345 = vmatpush1.msra.mxu0 0.0
        %2346 = vmatprep.subr.mxu0 0.0
        %2347 = vmatpush1.msra.mxu0 0.0
        %2348 = vmatprep.subr.mxu0 0.0
        %2349 = vmatpush1.msra.mxu0 0.0
        %2350 = vmatprep.subr.mxu0 0.0
        %2351 = vmatpush1.msra.mxu0 0.0
        %2352 = vmatprep.subr.mxu0 0.0
        %2353 = vmatpush1.msra.mxu0 0.0
        %2354 = vmatprep.subr.mxu0 0.0
        %2355 = vmatpush1.msra.mxu0 0.0
        %2356 = vmatprep.subr.mxu0 0.0
        %2357 = vmatpush1.msra.mxu0 0.0
        %2358 = vmatprep.subr.mxu0 0.0
        %2359 = vmatpush1.msra.mxu0 0.0
        %2360 = vmatprep.subr.mxu0 0.0
        %2361 = vmatpush1.msra.mxu0 0.0
        %2362 = vmatprep.subr.mxu0 0.0
        %2363 = vmatpush1.msra.mxu0 0.0
        %2364 = vmatprep.subr.mxu0 0.0
        %2365 = vmatpush1.msra.mxu0 0.0
        %2366 = vmatprep.subr.mxu0 0.0
        %2367 = vmatpush1.msra.mxu0 0.0
        %2368 = vmatprep.subr.mxu0 0.0
        %2369 = vmatpush1.msra.mxu0 0.0
        %2370 = vmatprep.subr.mxu0 0.0
        %2371 = vmatpush1.msra.mxu0 0.0
        %2372 = vmatprep.subr.mxu0 0.0
        %2373 = vmatpush1.msra.mxu0 0.0
        %2374 = vmatprep.subr.mxu0 0.0
        %2375 = vmatpush1.msra.mxu0 0.0
        %2376 = vmatprep.mubr.f32.mxu0 0.0
        %v2377 = vand.u32 %v1889, 4294901760
        %2378 = vmatmul.mubr.f32.gmra.mrb[0].mxu0 %v2377
        %v2379 = vpop.f32.mrb[0].mxu0
        %v2380 = vadd.f32 %v2278, %v2379
        %v2381 = vpop.f32.mrb[0].mxu0
        %v2382 = vadd.f32 %v2280, %v2381
        %2383 = vdwg.mxu0
        %v2384 = vand.u32 %v1874, 4294901760
        %2385 = vmatprep.subr.mxu0 %v2384
        %v2386 = vand.u32 %v1873, 4294901760
        %2387 = vmatpush1.msra.mxu0 %v2386
        %v2388 = vand.u32 %v1876, 4294901760
        %2389 = vmatprep.subr.mxu0 %v2388
        %v2390 = vand.u32 %v1875, 4294901760
        %2391 = vmatpush1.msra.mxu0 %v2390
        %v2392 = vand.u32 %v1878, 4294901760
        %2393 = vmatprep.subr.mxu0 %v2392
        %v2394 = vand.u32 %v1877, 4294901760
        %2395 = vmatpush1.msra.mxu0 %v2394
        %v2396 = vand.u32 %v1880, 4294901760
        %2397 = vmatprep.subr.mxu0 %v2396
        %v2398 = vand.u32 %v1879, 4294901760
        %2399 = vmatpush1.msra.mxu0 %v2398
        %v2400 = vand.u32 %v1895, 4294901760
        %2401 = vmatprep.subr.mxu0 %v2400
        %v2402 = vand.u32 %v1892, 4294901760
        %2403 = vmatpush1.msra.mxu0 %v2402
        %2404 = vmatprep.subr.mxu0 0.0
        %2405 = vmatpush1.msra.mxu0 0.0
        %2406 = vmatprep.subr.mxu0 0.0
        %2407 = vmatpush1.msra.mxu0 0.0
        %2408 = vmatprep.subr.mxu0 0.0
        %2409 = vmatpush1.msra.mxu0 0.0
        %2410 = vmatprep.subr.mxu0 0.0
        %2411 = vmatpush1.msra.mxu0 0.0
        %2412 = vmatprep.subr.mxu0 0.0
        %2413 = vmatpush1.msra.mxu0 0.0
        %2414 = vmatprep.subr.mxu0 0.0
        %2415 = vmatpush1.msra.mxu0 0.0
        %2416 = vmatprep.subr.mxu0 0.0
        %2417 = vmatpush1.msra.mxu0 0.0
        %2418 = vmatprep.subr.mxu0 0.0
        %2419 = vmatpush1.msra.mxu0 0.0
        %2420 = vmatprep.subr.mxu0 0.0
        %2421 = vmatpush1.msra.mxu0 0.0
        %2422 = vmatprep.subr.mxu0 0.0
        %2423 = vmatpush1.msra.mxu0 0.0
        %2424 = vmatprep.subr.mxu0 0.0
        %2425 = vmatpush1.msra.mxu0 0.0
        %2426 = vmatprep.subr.mxu0 0.0
        %2427 = vmatpush1.msra.mxu0 0.0
        %2428 = vmatprep.subr.mxu0 0.0
        %2429 = vmatpush1.msra.mxu0 0.0
        %2430 = vmatprep.subr.mxu0 0.0
        %2431 = vmatpush1.msra.mxu0 0.0
        %2432 = vmatprep.subr.mxu0 0.0
        %2433 = vmatpush1.msra.mxu0 0.0
        %2434 = vmatprep.subr.mxu0 0.0
        %2435 = vmatpush1.msra.mxu0 0.0
        %2436 = vmatprep.subr.mxu0 0.0
        %2437 = vmatpush1.msra.mxu0 0.0
        %2438 = vmatprep.subr.mxu0 0.0
        %2439 = vmatpush1.msra.mxu0 0.0
        %2440 = vmatprep.subr.mxu0 0.0
        %2441 = vmatpush1.msra.mxu0 0.0
        %2442 = vmatprep.subr.mxu0 0.0
        %2443 = vmatpush1.msra.mxu0 0.0
        %2444 = vmatprep.subr.mxu0 0.0
        %2445 = vmatpush1.msra.mxu0 0.0
        %2446 = vmatprep.subr.mxu0 0.0
        %2447 = vmatpush1.msra.mxu0 0.0
        %2448 = vmatprep.subr.mxu0 0.0
        %2449 = vmatpush1.msra.mxu0 0.0
        %2450 = vmatprep.subr.mxu0 0.0
        %2451 = vmatpush1.msra.mxu0 0.0
        %2452 = vmatprep.subr.mxu0 0.0
        %2453 = vmatpush1.msra.mxu0 0.0
        %2454 = vmatprep.subr.mxu0 0.0
        %2455 = vmatpush1.msra.mxu0 0.0
        %2456 = vmatprep.subr.mxu0 0.0
        %2457 = vmatpush1.msra.mxu0 0.0
        %2458 = vmatprep.mubr.f32.mxu0 0.0
        %v2459 = vand.u32 %v1889, 4294901760
        %2460 = vmatmul.mubr.f32.gmra.mrb[0].mxu0 %v2459
        %v2461 = vpop.f32.mrb[0].mxu0
        %v2462 = vadd.f32 %v2380, %v2461
        %v2463 = vpop.f32.mrb[0].mxu0
        %v2464 = vadd.f32 %v2382, %v2463
        %2465 = vdwg.mxu0
        %v2466 = vadd.f32 %v2462, %v326
        %v2467 = vadd.f32 %v2464, %v328
        %2470 = vrot.lane.b32.xlu0 %v2466, 17
        %v2471 = vpop.permute.xlu0 %2470
        %2472 = vrot.lane.b32.xlu0 %v2467, 17
        %v2473 = vpop.permute.xlu0 %2472
        %v2474 = vsel %vm333, %v2471, %v2473
        %v2477 = vsel %vm333, 0.0, %v2471
        %v2478 = vsel %vm340, %v2477, 0.0
        %v2479 = vsel %vm341, %v2474, 0.0
        %2480 = vrot.lane.b32.xlu0 %v2466, 16
        %v2481 = vpop.permute.xlu0 %2480
        %2482 = vrot.lane.b32.xlu0 %v2467, 16
        %v2483 = vpop.permute.xlu0 %2482
        %v2484 = vsel %vm348, %v2481, %v2483
        %v2486 = vsel %vm348, 0.0, %v2481
        %2487 = vrot.lane.b32.xlu0 %v2466, 15
        %v2488 = vpop.permute.xlu0 %2487
        %2489 = vrot.lane.b32.xlu0 %v2467, 15
        %v2490 = vpop.permute.xlu0 %2489
        %v2491 = vsel %vm356, %v2488, %v2490
        %v2494 = vsel %vm356, 0.0, %v2488
        %v2495 = vsel %vm363, %v2494, 0.0
        %v2496 = vsel %vm364, %v2491, 0.0
        %2497 = vrot.lane.b32.xlu0 %v2466, 1
        %v2498 = vpop.permute.xlu0 %2497
        %2499 = vrot.lane.b32.xlu0 %v2467, 1
        %v2500 = vpop.permute.xlu0 %2499
        %v2501 = vsel %vm371, %v2498, %v2500
        %v2504 = vsel %vm371, 0.0, %v2498
        %v2505 = vsel %vm340, %v2504, 0.0
        %v2506 = vsel %vm341, %v2501, 0.0
        %2507 = vrot.lane.b32.xlu0 %v2466, 127
        %v2508 = vpop.permute.xlu0 %2507
        %2509 = vrot.lane.b32.xlu0 %v2467, 127
        %v2510 = vpop.permute.xlu0 %2509
        %v2511 = vsel %vm382, %v2508, %v2510
        %v2514 = vsel %vm382, %v2510, 0.0
        %v2515 = vsel %vm363, %v2511, 0.0
        %v2516 = vsel %vm364, %v2514, 0.0
        %2517 = vrot.lane.b32.xlu0 %v2466, 113
        %v2518 = vpop.permute.xlu0 %2517
        %2519 = vrot.lane.b32.xlu0 %v2467, 113
        %v2520 = vpop.permute.xlu0 %2519
        %v2521 = vsel %vm393, %v2518, %v2520
        %v2524 = vsel %vm393, %v2520, 0.0
        %v2525 = vsel %vm340, %v2521, 0.0
        %v2526 = vsel %vm341, %v2524, 0.0
        %2527 = vrot.lane.b32.xlu0 %v2466, 112
        %v2528 = vpop.permute.xlu0 %2527
        %2529 = vrot.lane.b32.xlu0 %v2467, 112
        %v2530 = vpop.permute.xlu0 %2529
        %v2531 = vsel %vm404, %v2528, %v2530
        %v2533 = vsel %vm404, %v2530, 0.0
        %2534 = vrot.lane.b32.xlu0 %v2466, 111
        %v2535 = vpop.permute.xlu0 %2534
        %2536 = vrot.lane.b32.xlu0 %v2467, 111
        %v2537 = vpop.permute.xlu0 %2536
        %v2538 = vsel %vm412, %v2535, %v2537
        %v2541 = vsel %vm412, %v2537, 0.0
        %v2542 = vsel %vm363, %v2538, 0.0
        %v2543 = vsel %vm364, %v2541, 0.0
        %v2545 = vrot.slane %v2486, 4
        %v2546 = vrot.slane %v2484, 4
        %v2551 = vrot.slane %v2505, 4
        %v2552 = vrot.slane %v2506, 4
        %v2557 = vrot.slane %v2515, 4
        %v2558 = vrot.slane %v2516, 4
        %v2562 = vrot.slane %v2531, 4
        %v2563 = vrot.slane %v2533, 4
        %v2566 = vsel %vm442, %v2478, %v2545
        %v2567 = vsel %vm442, %v2479, %v2546
        %v2568 = vsel %vm442, %v2495, %v2551
        %v2569 = vsel %vm442, %v2496, %v2552
        %v2570 = vsel %vm442, %v2466, %v2557
        %v2571 = vsel %vm442, %v2467, %v2558
        %v2572 = vsel %vm442, %v2525, %v2562
        %v2573 = vsel %vm442, %v2526, %v2563
        %v2575 = vsel %vm442, %v2542, 0
        %v2578 = vsel %vm442, %v2543, 0
        %v2580 = vand.u32 %v2567, 4294901760
        %2581 = vmatprep.subr.mxu0 %v2580
        %v2582 = vand.u32 %v2566, 4294901760
        %2583 = vmatpush1.msra.mxu0 %v2582
        %v2584 = vand.u32 %v2569, 4294901760
        %2585 = vmatprep.subr.mxu0 %v2584
        %v2586 = vand.u32 %v2568, 4294901760
        %2587 = vmatpush1.msra.mxu0 %v2586
        %v2588 = vand.u32 %v2571, 4294901760
        %2589 = vmatprep.subr.mxu0 %v2588
        %v2590 = vand.u32 %v2570, 4294901760
        %2591 = vmatpush1.msra.mxu0 %v2590
        %v2592 = vand.u32 %v2573, 4294901760
        %2593 = vmatprep.subr.mxu0 %v2592
        %v2594 = vand.u32 %v2572, 4294901760
        %2595 = vmatpush1.msra.mxu0 %v2594
        %v2596 = vand.u32 %v2578, 4294901760
        %2597 = vmatprep.subr.mxu0 %v2596
        %v2598 = vand.u32 %v2575, 4294901760
        %2599 = vmatpush1.msra.mxu0 %v2598
        %2600 = vmatprep.subr.mxu0 0.0
        %2601 = vmatpush1.msra.mxu0 0.0
        %2602 = vmatprep.subr.mxu0 0.0
        %2603 = vmatpush1.msra.mxu0 0.0
        %2604 = vmatprep.subr.mxu0 0.0
        %2605 = vmatpush1.msra.mxu0 0.0
        %2606 = vmatprep.subr.mxu0 0.0
        %2607 = vmatpush1.msra.mxu0 0.0
        %2608 = vmatprep.subr.mxu0 0.0
        %2609 = vmatpush1.msra.mxu0 0.0
        %2610 = vmatprep.subr.mxu0 0.0
        %2611 = vmatpush1.msra.mxu0 0.0
        %2612 = vmatprep.subr.mxu0 0.0
        %2613 = vmatpush1.msra.mxu0 0.0
        %2614 = vmatprep.subr.mxu0 0.0
        %2615 = vmatpush1.msra.mxu0 0.0
        %2616 = vmatprep.subr.mxu0 0.0
        %2617 = vmatpush1.msra.mxu0 0.0
        %2618 = vmatprep.subr.mxu0 0.0
        %2619 = vmatpush1.msra.mxu0 0.0
        %2620 = vmatprep.subr.mxu0 0.0
        %2621 = vmatpush1.msra.mxu0 0.0
        %2622 = vmatprep.subr.mxu0 0.0
        %2623 = vmatpush1.msra.mxu0 0.0
        %2624 = vmatprep.subr.mxu0 0.0
        %2625 = vmatpush1.msra.mxu0 0.0
        %2626 = vmatprep.subr.mxu0 0.0
        %2627 = vmatpush1.msra.mxu0 0.0
        %2628 = vmatprep.subr.mxu0 0.0
        %2629 = vmatpush1.msra.mxu0 0.0
        %2630 = vmatprep.subr.mxu0 0.0
        %2631 = vmatpush1.msra.mxu0 0.0
        %2632 = vmatprep.subr.mxu0 0.0
        %2633 = vmatpush1.msra.mxu0 0.0
        %2634 = vmatprep.subr.mxu0 0.0
        %2635 = vmatpush1.msra.mxu0 0.0
        %2636 = vmatprep.subr.mxu0 0.0
        %2637 = vmatpush1.msra.mxu0 0.0
        %2638 = vmatprep.subr.mxu0 0.0
        %2639 = vmatpush1.msra.mxu0 0.0
        %2640 = vmatprep.subr.mxu0 0.0
        %2641 = vmatpush1.msra.mxu0 0.0
        %2642 = vmatprep.subr.mxu0 0.0
        %2643 = vmatpush1.msra.mxu0 0.0
        %2644 = vmatprep.subr.mxu0 0.0
        %2645 = vmatpush1.msra.mxu0 0.0
        %2646 = vmatprep.subr.mxu0 0.0
        %2647 = vmatpush1.msra.mxu0 0.0
        %2648 = vmatprep.subr.mxu0 0.0
        %2649 = vmatpush1.msra.mxu0 0.0
        %2650 = vmatprep.subr.mxu0 0.0
        %2651 = vmatpush1.msra.mxu0 0.0
        %2652 = vmatprep.subr.mxu0 0.0
        %2653 = vmatpush1.msra.mxu0 0.0
        %2654 = vmatprep.mubr.f32.mxu0 0.0
        %v2655 = vand.u32 %v460, 4294901760
        %v2656 = vsub.f32 %v460, %v2655
        %v2657 = vand.u32 %v2656, 4294901760
        %v2658 = vsub.f32 %v2656, %v2657
        %v2659 = vand.u32 %v2658, 4294901760
        %2660 = vmatmul.mubr.f32.gmra.mrb[0].mxu0 %v2659
        %v2661 = vpop.f32.mrb[0].mxu0
        %v2662 = vadd.f32 %v456, %v2661
        %v2663 = vpop.f32.mrb[0].mxu0
        %v2664 = vadd.f32 %v456, %v2663
        %2665 = vdwg.mxu0
        %v2666 = vand.u32 %v2567, 4294901760
        %v2667 = vsub.f32 %v2567, %v2666
        %v2668 = vand.u32 %v2667, 4294901760
        %v2669 = vsub.f32 %v2667, %v2668
        %v2670 = vand.u32 %v2669, 4294901760
        %2671 = vmatprep.subr.mxu0 %v2670
        %v2672 = vand.u32 %v2566, 4294901760
        %v2673 = vsub.f32 %v2566, %v2672
        %v2674 = vand.u32 %v2673, 4294901760
        %v2675 = vsub.f32 %v2673, %v2674
        %v2676 = vand.u32 %v2675, 4294901760
        %2677 = vmatpush1.msra.mxu0 %v2676
        %v2678 = vand.u32 %v2569, 4294901760
        %v2679 = vsub.f32 %v2569, %v2678
        %v2680 = vand.u32 %v2679, 4294901760
        %v2681 = vsub.f32 %v2679, %v2680
        %v2682 = vand.u32 %v2681, 4294901760
        %2683 = vmatprep.subr.mxu0 %v2682
        %v2684 = vand.u32 %v2568, 4294901760
        %v2685 = vsub.f32 %v2568, %v2684
        %v2686 = vand.u32 %v2685, 4294901760
        %v2687 = vsub.f32 %v2685, %v2686
        %v2688 = vand.u32 %v2687, 4294901760
        %2689 = vmatpush1.msra.mxu0 %v2688
        %v2690 = vand.u32 %v2571, 4294901760
        %v2691 = vsub.f32 %v2571, %v2690
        %v2692 = vand.u32 %v2691, 4294901760
        %v2693 = vsub.f32 %v2691, %v2692
        %v2694 = vand.u32 %v2693, 4294901760
        %2695 = vmatprep.subr.mxu0 %v2694
        %v2696 = vand.u32 %v2570, 4294901760
        %v2697 = vsub.f32 %v2570, %v2696
        %v2698 = vand.u32 %v2697, 4294901760
        %v2699 = vsub.f32 %v2697, %v2698
        %v2700 = vand.u32 %v2699, 4294901760
        %2701 = vmatpush1.msra.mxu0 %v2700
        %v2702 = vand.u32 %v2573, 4294901760
        %v2703 = vsub.f32 %v2573, %v2702
        %v2704 = vand.u32 %v2703, 4294901760
        %v2705 = vsub.f32 %v2703, %v2704
        %v2706 = vand.u32 %v2705, 4294901760
        %2707 = vmatprep.subr.mxu0 %v2706
        %v2708 = vand.u32 %v2572, 4294901760
        %v2709 = vsub.f32 %v2572, %v2708
        %v2710 = vand.u32 %v2709, 4294901760
        %v2711 = vsub.f32 %v2709, %v2710
        %v2712 = vand.u32 %v2711, 4294901760
        %2713 = vmatpush1.msra.mxu0 %v2712
        %v2714 = vand.u32 %v2578, 4294901760
        %v2715 = vsub.f32 %v2578, %v2714
        %v2716 = vand.u32 %v2715, 4294901760
        %v2717 = vsub.f32 %v2715, %v2716
        %v2718 = vand.u32 %v2717, 4294901760
        %2719 = vmatprep.subr.mxu0 %v2718
        %v2720 = vand.u32 %v2575, 4294901760
        %v2721 = vsub.f32 %v2575, %v2720
        %v2722 = vand.u32 %v2721, 4294901760
        %v2723 = vsub.f32 %v2721, %v2722
        %v2724 = vand.u32 %v2723, 4294901760
        %2725 = vmatpush1.msra.mxu0 %v2724
        %2726 = vmatprep.subr.mxu0 0.0
        %2727 = vmatpush1.msra.mxu0 0.0
        %2728 = vmatprep.subr.mxu0 0.0
        %2729 = vmatpush1.msra.mxu0 0.0
        %2730 = vmatprep.subr.mxu0 0.0
        %2731 = vmatpush1.msra.mxu0 0.0
        %2732 = vmatprep.subr.mxu0 0.0
        %2733 = vmatpush1.msra.mxu0 0.0
        %2734 = vmatprep.subr.mxu0 0.0
        %2735 = vmatpush1.msra.mxu0 0.0
        %2736 = vmatprep.subr.mxu0 0.0
        %2737 = vmatpush1.msra.mxu0 0.0
        %2738 = vmatprep.subr.mxu0 0.0
        %2739 = vmatpush1.msra.mxu0 0.0
        %2740 = vmatprep.subr.mxu0 0.0
        %2741 = vmatpush1.msra.mxu0 0.0
        %2742 = vmatprep.subr.mxu0 0.0
        %2743 = vmatpush1.msra.mxu0 0.0
        %2744 = vmatprep.subr.mxu0 0.0
        %2745 = vmatpush1.msra.mxu0 0.0
        %2746 = vmatprep.subr.mxu0 0.0
        %2747 = vmatpush1.msra.mxu0 0.0
        %2748 = vmatprep.subr.mxu0 0.0
        %2749 = vmatpush1.msra.mxu0 0.0
        %2750 = vmatprep.subr.mxu0 0.0
        %2751 = vmatpush1.msra.mxu0 0.0
        %2752 = vmatprep.subr.mxu0 0.0
        %2753 = vmatpush1.msra.mxu0 0.0
        %2754 = vmatprep.subr.mxu0 0.0
        %2755 = vmatpush1.msra.mxu0 0.0
        %2756 = vmatprep.subr.mxu0 0.0
        %2757 = vmatpush1.msra.mxu0 0.0
        %2758 = vmatprep.subr.mxu0 0.0
        %2759 = vmatpush1.msra.mxu0 0.0
        %2760 = vmatprep.subr.mxu0 0.0
        %2761 = vmatpush1.msra.mxu0 0.0
        %2762 = vmatprep.subr.mxu0 0.0
        %2763 = vmatpush1.msra.mxu0 0.0
        %2764 = vmatprep.subr.mxu0 0.0
        %2765 = vmatpush1.msra.mxu0 0.0
        %2766 = vmatprep.subr.mxu0 0.0
        %2767 = vmatpush1.msra.mxu0 0.0
        %2768 = vmatprep.subr.mxu0 0.0
        %2769 = vmatpush1.msra.mxu0 0.0
        %2770 = vmatprep.subr.mxu0 0.0
        %2771 = vmatpush1.msra.mxu0 0.0
        %2772 = vmatprep.subr.mxu0 0.0
        %2773 = vmatpush1.msra.mxu0 0.0
        %2774 = vmatprep.subr.mxu0 0.0
        %2775 = vmatpush1.msra.mxu0 0.0
        %2776 = vmatprep.subr.mxu0 0.0
        %2777 = vmatpush1.msra.mxu0 0.0
        %2778 = vmatprep.subr.mxu0 0.0
        %2779 = vmatpush1.msra.mxu0 0.0
        %2780 = vmatprep.mubr.f32.mxu0 0.0
        %v2781 = vand.u32 %v460, 4294901760
        %2782 = vmatmul.mubr.f32.gmra.mrb[0].mxu0 %v2781
        %v2783 = vpop.f32.mrb[0].mxu0
        %v2784 = vadd.f32 %v2662, %v2783
        %v2785 = vpop.f32.mrb[0].mxu0
        %v2786 = vadd.f32 %v2664, %v2785
        %2787 = vdwg.mxu0
        %v2788 = vand.u32 %v2567, 4294901760
        %v2789 = vsub.f32 %v2567, %v2788
        %2790 = vmatprep.subr.mxu0 %v2789
        %v2791 = vand.u32 %v2566, 4294901760
        %v2792 = vsub.f32 %v2566, %v2791
        %2793 = vmatpush1.msra.mxu0 %v2792
        %v2794 = vand.u32 %v2569, 4294901760
        %v2795 = vsub.f32 %v2569, %v2794
        %2796 = vmatprep.subr.mxu0 %v2795
        %v2797 = vand.u32 %v2568, 4294901760
        %v2798 = vsub.f32 %v2568, %v2797
        %2799 = vmatpush1.msra.mxu0 %v2798
        %v2800 = vand.u32 %v2571, 4294901760
        %v2801 = vsub.f32 %v2571, %v2800
        %2802 = vmatprep.subr.mxu0 %v2801
        %v2803 = vand.u32 %v2570, 4294901760
        %v2804 = vsub.f32 %v2570, %v2803
        %2805 = vmatpush1.msra.mxu0 %v2804
        %v2806 = vand.u32 %v2573, 4294901760
        %v2807 = vsub.f32 %v2573, %v2806
        %2808 = vmatprep.subr.mxu0 %v2807
        %v2809 = vand.u32 %v2572, 4294901760
        %v2810 = vsub.f32 %v2572, %v2809
        %2811 = vmatpush1.msra.mxu0 %v2810
        %v2812 = vand.u32 %v2578, 4294901760
        %v2813 = vsub.f32 %v2578, %v2812
        %2814 = vmatprep.subr.mxu0 %v2813
        %v2815 = vand.u32 %v2575, 4294901760
        %v2816 = vsub.f32 %v2575, %v2815
        %2817 = vmatpush1.msra.mxu0 %v2816
        %2818 = vmatprep.subr.mxu0 0.0
        %2819 = vmatpush1.msra.mxu0 0.0
        %2820 = vmatprep.subr.mxu0 0.0
        %2821 = vmatpush1.msra.mxu0 0.0
        %2822 = vmatprep.subr.mxu0 0.0
        %2823 = vmatpush1.msra.mxu0 0.0
        %2824 = vmatprep.subr.mxu0 0.0
        %2825 = vmatpush1.msra.mxu0 0.0
        %2826 = vmatprep.subr.mxu0 0.0
        %2827 = vmatpush1.msra.mxu0 0.0
        %2828 = vmatprep.subr.mxu0 0.0
        %2829 = vmatpush1.msra.mxu0 0.0
        %2830 = vmatprep.subr.mxu0 0.0
        %2831 = vmatpush1.msra.mxu0 0.0
        %2832 = vmatprep.subr.mxu0 0.0
        %2833 = vmatpush1.msra.mxu0 0.0
        %2834 = vmatprep.subr.mxu0 0.0
        %2835 = vmatpush1.msra.mxu0 0.0
        %2836 = vmatprep.subr.mxu0 0.0
        %2837 = vmatpush1.msra.mxu0 0.0
        %2838 = vmatprep.subr.mxu0 0.0
        %2839 = vmatpush1.msra.mxu0 0.0
        %2840 = vmatprep.subr.mxu0 0.0
        %2841 = vmatpush1.msra.mxu0 0.0
        %2842 = vmatprep.subr.mxu0 0.0
        %2843 = vmatpush1.msra.mxu0 0.0
        %2844 = vmatprep.subr.mxu0 0.0
        %2845 = vmatpush1.msra.mxu0 0.0
        %2846 = vmatprep.subr.mxu0 0.0
        %2847 = vmatpush1.msra.mxu0 0.0
        %2848 = vmatprep.subr.mxu0 0.0
        %2849 = vmatpush1.msra.mxu0 0.0
        %2850 = vmatprep.subr.mxu0 0.0
        %2851 = vmatpush1.msra.mxu0 0.0
        %2852 = vmatprep.subr.mxu0 0.0
        %2853 = vmatpush1.msra.mxu0 0.0
        %2854 = vmatprep.subr.mxu0 0.0
        %2855 = vmatpush1.msra.mxu0 0.0
        %2856 = vmatprep.subr.mxu0 0.0
        %2857 = vmatpush1.msra.mxu0 0.0
        %2858 = vmatprep.subr.mxu0 0.0
        %2859 = vmatpush1.msra.mxu0 0.0
        %2860 = vmatprep.subr.mxu0 0.0
        %2861 = vmatpush1.msra.mxu0 0.0
        %2862 = vmatprep.subr.mxu0 0.0
        %2863 = vmatpush1.msra.mxu0 0.0
        %2864 = vmatprep.subr.mxu0 0.0
        %2865 = vmatpush1.msra.mxu0 0.0
        %2866 = vmatprep.subr.mxu0 0.0
        %2867 = vmatpush1.msra.mxu0 0.0
        %2868 = vmatprep.subr.mxu0 0.0
        %2869 = vmatpush1.msra.mxu0 0.0
        %2870 = vmatprep.subr.mxu0 0.0
        %2871 = vmatpush1.msra.mxu0 0.0
        %2872 = vmatprep.mubr.f32.mxu0 0.0
        %v2873 = vand.u32 %v460, 4294901760
        %v2874 = vsub.f32 %v460, %v2873
        %2875 = vmatmul.mubr.f32.gmra.mrb[0].mxu0 %v2874
        %v2876 = vpop.f32.mrb[0].mxu0
        %v2877 = vadd.f32 %v2784, %v2876
        %v2878 = vpop.f32.mrb[0].mxu0
        %v2879 = vadd.f32 %v2786, %v2878
        %2880 = vdwg.mxu0
        %v2881 = vand.u32 %v2567, 4294901760
        %2882 = vmatprep.subr.mxu0 %v2881
        %v2883 = vand.u32 %v2566, 4294901760
        %2884 = vmatpush1.msra.mxu0 %v2883
        %v2885 = vand.u32 %v2569, 4294901760
        %2886 = vmatprep.subr.mxu0 %v2885
        %v2887 = vand.u32 %v2568, 4294901760
        %2888 = vmatpush1.msra.mxu0 %v2887
        %v2889 = vand.u32 %v2571, 4294901760
        %2890 = vmatprep.subr.mxu0 %v2889
        %v2891 = vand.u32 %v2570, 4294901760
        %2892 = vmatpush1.msra.mxu0 %v2891
        %v2893 = vand.u32 %v2573, 4294901760
        %2894 = vmatprep.subr.mxu0 %v2893
        %v2895 = vand.u32 %v2572, 4294901760
        %2896 = vmatpush1.msra.mxu0 %v2895
        %v2897 = vand.u32 %v2578, 4294901760
        %2898 = vmatprep.subr.mxu0 %v2897
        %v2899 = vand.u32 %v2575, 4294901760
        %2900 = vmatpush1.msra.mxu0 %v2899
        %2901 = vmatprep.subr.mxu0 0.0
        %2902 = vmatpush1.msra.mxu0 0.0
        %2903 = vmatprep.subr.mxu0 0.0
        %2904 = vmatpush1.msra.mxu0 0.0
        %2905 = vmatprep.subr.mxu0 0.0
        %2906 = vmatpush1.msra.mxu0 0.0
        %2907 = vmatprep.subr.mxu0 0.0
        %2908 = vmatpush1.msra.mxu0 0.0
        %2909 = vmatprep.subr.mxu0 0.0
        %2910 = vmatpush1.msra.mxu0 0.0
        %2911 = vmatprep.subr.mxu0 0.0
        %2912 = vmatpush1.msra.mxu0 0.0
        %2913 = vmatprep.subr.mxu0 0.0
        %2914 = vmatpush1.msra.mxu0 0.0
        %2915 = vmatprep.subr.mxu0 0.0
        %2916 = vmatpush1.msra.mxu0 0.0
        %2917 = vmatprep.subr.mxu0 0.0
        %2918 = vmatpush1.msra.mxu0 0.0
        %2919 = vmatprep.subr.mxu0 0.0
        %2920 = vmatpush1.msra.mxu0 0.0
        %2921 = vmatprep.subr.mxu0 0.0
        %2922 = vmatpush1.msra.mxu0 0.0
        %2923 = vmatprep.subr.mxu0 0.0
        %2924 = vmatpush1.msra.mxu0 0.0
        %2925 = vmatprep.subr.mxu0 0.0
        %2926 = vmatpush1.msra.mxu0 0.0
        %2927 = vmatprep.subr.mxu0 0.0
        %2928 = vmatpush1.msra.mxu0 0.0
        %2929 = vmatprep.subr.mxu0 0.0
        %2930 = vmatpush1.msra.mxu0 0.0
        %2931 = vmatprep.subr.mxu0 0.0
        %2932 = vmatpush1.msra.mxu0 0.0
        %2933 = vmatprep.subr.mxu0 0.0
        %2934 = vmatpush1.msra.mxu0 0.0
        %2935 = vmatprep.subr.mxu0 0.0
        %2936 = vmatpush1.msra.mxu0 0.0
        %2937 = vmatprep.subr.mxu0 0.0
        %2938 = vmatpush1.msra.mxu0 0.0
        %2939 = vmatprep.subr.mxu0 0.0
        %2940 = vmatpush1.msra.mxu0 0.0
        %2941 = vmatprep.subr.mxu0 0.0
        %2942 = vmatpush1.msra.mxu0 0.0
        %2943 = vmatprep.subr.mxu0 0.0
        %2944 = vmatpush1.msra.mxu0 0.0
        %2945 = vmatprep.subr.mxu0 0.0
        %2946 = vmatpush1.msra.mxu0 0.0
        %2947 = vmatprep.subr.mxu0 0.0
        %2948 = vmatpush1.msra.mxu0 0.0
        %2949 = vmatprep.subr.mxu0 0.0
        %2950 = vmatpush1.msra.mxu0 0.0
        %2951 = vmatprep.subr.mxu0 0.0
        %2952 = vmatpush1.msra.mxu0 0.0
        %2953 = vmatprep.subr.mxu0 0.0
        %2954 = vmatpush1.msra.mxu0 0.0
        %2955 = vmatprep.mubr.f32.mxu0 0.0
        %v2956 = vand.u32 %v460, 4294901760
        %v2957 = vsub.f32 %v460, %v2956
        %v2958 = vand.u32 %v2957, 4294901760
        %2959 = vmatmul.mubr.f32.gmra.mrb[0].mxu0 %v2958
        %v2960 = vpop.f32.mrb[0].mxu0
        %v2961 = vadd.f32 %v2877, %v2960
        %v2962 = vpop.f32.mrb[0].mxu0
        %v2963 = vadd.f32 %v2879, %v2962
        %2964 = vdwg.mxu0
        %v2965 = vand.u32 %v2567, 4294901760
        %v2966 = vsub.f32 %v2567, %v2965
        %v2967 = vand.u32 %v2966, 4294901760
        %2968 = vmatprep.subr.mxu0 %v2967
        %v2969 = vand.u32 %v2566, 4294901760
        %v2970 = vsub.f32 %v2566, %v2969
        %v2971 = vand.u32 %v2970, 4294901760
        %2972 = vmatpush1.msra.mxu0 %v2971
        %v2973 = vand.u32 %v2569, 4294901760
        %v2974 = vsub.f32 %v2569, %v2973
        %v2975 = vand.u32 %v2974, 4294901760
        %2976 = vmatprep.subr.mxu0 %v2975
        %v2977 = vand.u32 %v2568, 4294901760
        %v2978 = vsub.f32 %v2568, %v2977
        %v2979 = vand.u32 %v2978, 4294901760
        %2980 = vmatpush1.msra.mxu0 %v2979
        %v2981 = vand.u32 %v2571, 4294901760
        %v2982 = vsub.f32 %v2571, %v2981
        %v2983 = vand.u32 %v2982, 4294901760
        %2984 = vmatprep.subr.mxu0 %v2983
        %v2985 = vand.u32 %v2570, 4294901760
        %v2986 = vsub.f32 %v2570, %v2985
        %v2987 = vand.u32 %v2986, 4294901760
        %2988 = vmatpush1.msra.mxu0 %v2987
        %v2989 = vand.u32 %v2573, 4294901760
        %v2990 = vsub.f32 %v2573, %v2989
        %v2991 = vand.u32 %v2990, 4294901760
        %2992 = vmatprep.subr.mxu0 %v2991
        %v2993 = vand.u32 %v2572, 4294901760
        %v2994 = vsub.f32 %v2572, %v2993
        %v2995 = vand.u32 %v2994, 4294901760
        %2996 = vmatpush1.msra.mxu0 %v2995
        %v2997 = vand.u32 %v2578, 4294901760
        %v2998 = vsub.f32 %v2578, %v2997
        %v2999 = vand.u32 %v2998, 4294901760
        %3000 = vmatprep.subr.mxu0 %v2999
        %v3001 = vand.u32 %v2575, 4294901760
        %v3002 = vsub.f32 %v2575, %v3001
        %v3003 = vand.u32 %v3002, 4294901760
        %3004 = vmatpush1.msra.mxu0 %v3003
        %3005 = vmatprep.subr.mxu0 0.0
        %3006 = vmatpush1.msra.mxu0 0.0
        %3007 = vmatprep.subr.mxu0 0.0
        %3008 = vmatpush1.msra.mxu0 0.0
        %3009 = vmatprep.subr.mxu0 0.0
        %3010 = vmatpush1.msra.mxu0 0.0
        %3011 = vmatprep.subr.mxu0 0.0
        %3012 = vmatpush1.msra.mxu0 0.0
        %3013 = vmatprep.subr.mxu0 0.0
        %3014 = vmatpush1.msra.mxu0 0.0
        %3015 = vmatprep.subr.mxu0 0.0
        %3016 = vmatpush1.msra.mxu0 0.0
        %3017 = vmatprep.subr.mxu0 0.0
        %3018 = vmatpush1.msra.mxu0 0.0
        %3019 = vmatprep.subr.mxu0 0.0
        %3020 = vmatpush1.msra.mxu0 0.0
        %3021 = vmatprep.subr.mxu0 0.0
        %3022 = vmatpush1.msra.mxu0 0.0
        %3023 = vmatprep.subr.mxu0 0.0
        %3024 = vmatpush1.msra.mxu0 0.0
        %3025 = vmatprep.subr.mxu0 0.0
        %3026 = vmatpush1.msra.mxu0 0.0
        %3027 = vmatprep.subr.mxu0 0.0
        %3028 = vmatpush1.msra.mxu0 0.0
        %3029 = vmatprep.subr.mxu0 0.0
        %3030 = vmatpush1.msra.mxu0 0.0
        %3031 = vmatprep.subr.mxu0 0.0
        %3032 = vmatpush1.msra.mxu0 0.0
        %3033 = vmatprep.subr.mxu0 0.0
        %3034 = vmatpush1.msra.mxu0 0.0
        %3035 = vmatprep.subr.mxu0 0.0
        %3036 = vmatpush1.msra.mxu0 0.0
        %3037 = vmatprep.subr.mxu0 0.0
        %3038 = vmatpush1.msra.mxu0 0.0
        %3039 = vmatprep.subr.mxu0 0.0
        %3040 = vmatpush1.msra.mxu0 0.0
        %3041 = vmatprep.subr.mxu0 0.0
        %3042 = vmatpush1.msra.mxu0 0.0
        %3043 = vmatprep.subr.mxu0 0.0
        %3044 = vmatpush1.msra.mxu0 0.0
        %3045 = vmatprep.subr.mxu0 0.0
        %3046 = vmatpush1.msra.mxu0 0.0
        %3047 = vmatprep.subr.mxu0 0.0
        %3048 = vmatpush1.msra.mxu0 0.0
        %3049 = vmatprep.subr.mxu0 0.0
        %3050 = vmatpush1.msra.mxu0 0.0
        %3051 = vmatprep.subr.mxu0 0.0
        %3052 = vmatpush1.msra.mxu0 0.0
        %3053 = vmatprep.subr.mxu0 0.0
        %3054 = vmatpush1.msra.mxu0 0.0
        %3055 = vmatprep.subr.mxu0 0.0
        %3056 = vmatpush1.msra.mxu0 0.0
        %3057 = vmatprep.subr.mxu0 0.0
        %3058 = vmatpush1.msra.mxu0 0.0
        %3059 = vmatprep.mubr.f32.mxu0 0.0
        %v3060 = vand.u32 %v460, 4294901760
        %3061 = vmatmul.mubr.f32.gmra.mrb[0].mxu0 %v3060
        %v3062 = vpop.f32.mrb[0].mxu0
        %v3063 = vadd.f32 %v2961, %v3062
        %v3064 = vpop.f32.mrb[0].mxu0
        %v3065 = vadd.f32 %v2963, %v3064
        %3066 = vdwg.mxu0
        %v3067 = vand.u32 %v2567, 4294901760
        %3068 = vmatprep.subr.mxu0 %v3067
        %v3069 = vand.u32 %v2566, 4294901760
        %3070 = vmatpush1.msra.mxu0 %v3069
        %v3071 = vand.u32 %v2569, 4294901760
        %3072 = vmatprep.subr.mxu0 %v3071
        %v3073 = vand.u32 %v2568, 4294901760
        %3074 = vmatpush1.msra.mxu0 %v3073
        %v3075 = vand.u32 %v2571, 4294901760
        %3076 = vmatprep.subr.mxu0 %v3075
        %v3077 = vand.u32 %v2570, 4294901760
        %3078 = vmatpush1.msra.mxu0 %v3077
        %v3079 = vand.u32 %v2573, 4294901760
        %3080 = vmatprep.subr.mxu0 %v3079
        %v3081 = vand.u32 %v2572, 4294901760
        %3082 = vmatpush1.msra.mxu0 %v3081
        %v3083 = vand.u32 %v2578, 4294901760
        %3084 = vmatprep.subr.mxu0 %v3083
        %v3085 = vand.u32 %v2575, 4294901760
        %3086 = vmatpush1.msra.mxu0 %v3085
        %3087 = vmatprep.subr.mxu0 0.0
        %3088 = vmatpush1.msra.mxu0 0.0
        %3089 = vmatprep.subr.mxu0 0.0
        %3090 = vmatpush1.msra.mxu0 0.0
        %3091 = vmatprep.subr.mxu0 0.0
        %3092 = vmatpush1.msra.mxu0 0.0
        %3093 = vmatprep.subr.mxu0 0.0
        %3094 = vmatpush1.msra.mxu0 0.0
        %3095 = vmatprep.subr.mxu0 0.0
        %3096 = vmatpush1.msra.mxu0 0.0
        %3097 = vmatprep.subr.mxu0 0.0
        %3098 = vmatpush1.msra.mxu0 0.0
        %3099 = vmatprep.subr.mxu0 0.0
        %3100 = vmatpush1.msra.mxu0 0.0
        %3101 = vmatprep.subr.mxu0 0.0
        %3102 = vmatpush1.msra.mxu0 0.0
        %3103 = vmatprep.subr.mxu0 0.0
        %3104 = vmatpush1.msra.mxu0 0.0
        %3105 = vmatprep.subr.mxu0 0.0
        %3106 = vmatpush1.msra.mxu0 0.0
        %3107 = vmatprep.subr.mxu0 0.0
        %3108 = vmatpush1.msra.mxu0 0.0
        %3109 = vmatprep.subr.mxu0 0.0
        %3110 = vmatpush1.msra.mxu0 0.0
        %3111 = vmatprep.subr.mxu0 0.0
        %3112 = vmatpush1.msra.mxu0 0.0
        %3113 = vmatprep.subr.mxu0 0.0
        %3114 = vmatpush1.msra.mxu0 0.0
        %3115 = vmatprep.subr.mxu0 0.0
        %3116 = vmatpush1.msra.mxu0 0.0
        %3117 = vmatprep.subr.mxu0 0.0
        %3118 = vmatpush1.msra.mxu0 0.0
        %3119 = vmatprep.subr.mxu0 0.0
        %3120 = vmatpush1.msra.mxu0 0.0
        %3121 = vmatprep.subr.mxu0 0.0
        %3122 = vmatpush1.msra.mxu0 0.0
        %3123 = vmatprep.subr.mxu0 0.0
        %3124 = vmatpush1.msra.mxu0 0.0
        %3125 = vmatprep.subr.mxu0 0.0
        %3126 = vmatpush1.msra.mxu0 0.0
        %3127 = vmatprep.subr.mxu0 0.0
        %3128 = vmatpush1.msra.mxu0 0.0
        %3129 = vmatprep.subr.mxu0 0.0
        %3130 = vmatpush1.msra.mxu0 0.0
        %3131 = vmatprep.subr.mxu0 0.0
        %3132 = vmatpush1.msra.mxu0 0.0
        %3133 = vmatprep.subr.mxu0 0.0
        %3134 = vmatpush1.msra.mxu0 0.0
        %3135 = vmatprep.subr.mxu0 0.0
        %3136 = vmatpush1.msra.mxu0 0.0
        %3137 = vmatprep.subr.mxu0 0.0
        %3138 = vmatpush1.msra.mxu0 0.0
        %3139 = vmatprep.subr.mxu0 0.0
        %3140 = vmatpush1.msra.mxu0 0.0
        %3141 = vmatprep.mubr.f32.mxu0 0.0
        %v3142 = vand.u32 %v460, 4294901760
        %3143 = vmatmul.mubr.f32.gmra.mrb[0].mxu0 %v3142
        %v3144 = vpop.f32.mrb[0].mxu0
        %v3145 = vadd.f32 %v3063, %v3144
        %v3146 = vpop.f32.mrb[0].mxu0
        %v3147 = vadd.f32 %v3065, %v3146
        %3148 = vdwg.mxu0
        %v3149 = vsel %vm442, %v3145, 0.0
        %v3150 = vsel %vm442, %v3147, 0.0
        %v3151 = vadd.f32 %v3149, %v3150
        %3152 = vadd.xlane.f32.xlu0 %v3151
        %v3153 = vpop.xlane.xlu0 %3152
        %v3154 = vmul.f32 %v3153, %v1042
        %v3155 = vsub.f32 %v3145, %v3154
        %v3156 = vsub.f32 %v3147, %v3154
        %v3157 = vmul.f32 %v3155, %v3155
        %v3158 = vmul.f32 %v3156, %v3156
        %v3159 = vsel %vm442, %v3157, 0.0
        %v3160 = vsel %vm442, %v3158, 0.0
        %v3161 = vadd.f32 %v3159, %v3160
        %3162 = vadd.xlane.f32.xlu0 %v3161
        %v3163 = vpop.xlane.xlu0 %3162
        %v3164 = vmul.f32 %v3163, %v1042
        %v3165 = vadd.f32 %v3164, 1e-05
        %v3166 = vrsqrt.pop %v3165
        %v3167 = vmul.f32 %v3155, %v3166
        %v3168 = vmul.f32 %v3156, %v3166
        %v3169 = vmax.f32 %v3167, 0.0
        %v3170 = vmax.f32 %v3168, 0.0
        %3173 = vrot.lane.b32.xlu0 %v3169, 17
        %v3174 = vpop.permute.xlu0 %3173
        %3175 = vrot.lane.b32.xlu0 %v3170, 17
        %v3176 = vpop.permute.xlu0 %3175
        %v3177 = vsel %vm333, %v3174, %v3176
        %v3180 = vsel %vm333, 0.0, %v3174
        %v3181 = vsel %vm340, %v3180, 0.0
        %v3182 = vsel %vm341, %v3177, 0.0
        %3183 = vrot.lane.b32.xlu0 %v3169, 16
        %v3184 = vpop.permute.xlu0 %3183
        %3185 = vrot.lane.b32.xlu0 %v3170, 16
        %v3186 = vpop.permute.xlu0 %3185
        %v3187 = vsel %vm348, %v3184, %v3186
        %v3189 = vsel %vm348, 0.0, %v3184
        %3190 = vrot.lane.b32.xlu0 %v3169, 15
        %v3191 = vpop.permute.xlu0 %3190
        %3192 = vrot.lane.b32.xlu0 %v3170, 15
        %v3193 = vpop.permute.xlu0 %3192
        %v3194 = vsel %vm356, %v3191, %v3193
        %v3197 = vsel %vm356, 0.0, %v3191
        %v3198 = vsel %vm363, %v3197, 0.0
        %v3199 = vsel %vm364, %v3194, 0.0
        %3200 = vrot.lane.b32.xlu0 %v3169, 1
        %v3201 = vpop.permute.xlu0 %3200
        %3202 = vrot.lane.b32.xlu0 %v3170, 1
        %v3203 = vpop.permute.xlu0 %3202
        %v3204 = vsel %vm371, %v3201, %v3203
        %v3207 = vsel %vm371, 0.0, %v3201
        %v3208 = vsel %vm340, %v3207, 0.0
        %v3209 = vsel %vm341, %v3204, 0.0
        %3210 = vrot.lane.b32.xlu0 %v3169, 127
        %v3211 = vpop.permute.xlu0 %3210
        %3212 = vrot.lane.b32.xlu0 %v3170, 127
        %v3213 = vpop.permute.xlu0 %3212
        %v3214 = vsel %vm382, %v3211, %v3213
        %v3217 = vsel %vm382, %v3213, 0.0
        %v3218 = vsel %vm363, %v3214, 0.0
        %v3219 = vsel %vm364, %v3217, 0.0
        %3220 = vrot.lane.b32.xlu0 %v3169, 113
        %v3221 = vpop.permute.xlu0 %3220
        %3222 = vrot.lane.b32.xlu0 %v3170, 113
        %v3223 = vpop.permute.xlu0 %3222
        %v3224 = vsel %vm393, %v3221, %v3223
        %v3227 = vsel %vm393, %v3223, 0.0
        %v3228 = vsel %vm340, %v3224, 0.0
        %v3229 = vsel %vm341, %v3227, 0.0
        %3230 = vrot.lane.b32.xlu0 %v3169, 112
        %v3231 = vpop.permute.xlu0 %3230
        %3232 = vrot.lane.b32.xlu0 %v3170, 112
        %v3233 = vpop.permute.xlu0 %3232
        %v3234 = vsel %vm404, %v3231, %v3233
        %v3236 = vsel %vm404, %v3233, 0.0
        %3237 = vrot.lane.b32.xlu0 %v3169, 111
        %v3238 = vpop.permute.xlu0 %3237
        %3239 = vrot.lane.b32.xlu0 %v3170, 111
        %v3240 = vpop.permute.xlu0 %3239
        %v3241 = vsel %vm412, %v3238, %v3240
        %v3244 = vsel %vm412, %v3240, 0.0
        %v3245 = vsel %vm363, %v3241, 0.0
        %v3246 = vsel %vm364, %v3244, 0.0
        %v3248 = vrot.slane %v3189, 4
        %v3249 = vrot.slane %v3187, 4
        %v3254 = vrot.slane %v3208, 4
        %v3255 = vrot.slane %v3209, 4
        %v3260 = vrot.slane %v3218, 4
        %v3261 = vrot.slane %v3219, 4
        %v3265 = vrot.slane %v3234, 4
        %v3266 = vrot.slane %v3236, 4
        %v3269 = vsel %vm442, %v3181, %v3248
        %v3270 = vsel %vm442, %v3182, %v3249
        %v3271 = vsel %vm442, %v3198, %v3254
        %v3272 = vsel %vm442, %v3199, %v3255
        %v3273 = vsel %vm442, %v3169, %v3260
        %v3274 = vsel %vm442, %v3170, %v3261
        %v3275 = vsel %vm442, %v3228, %v3265
        %v3276 = vsel %vm442, %v3229, %v3266
        %v3278 = vsel %vm442, %v3245, 0
        %v3281 = vsel %vm442, %v3246, 0
        %v3283 = vand.u32 %v3270, 4294901760
        %3284 = vmatprep.subr.mxu0 %v3283
        %v3285 = vand.u32 %v3269, 4294901760
        %3286 = vmatpush1.msra.mxu0 %v3285
        %v3287 = vand.u32 %v3272, 4294901760
        %3288 = vmatprep.subr.mxu0 %v3287
        %v3289 = vand.u32 %v3271, 4294901760
        %3290 = vmatpush1.msra.mxu0 %v3289
        %v3291 = vand.u32 %v3274, 4294901760
        %3292 = vmatprep.subr.mxu0 %v3291
        %v3293 = vand.u32 %v3273, 4294901760
        %3294 = vmatpush1.msra.mxu0 %v3293
        %v3295 = vand.u32 %v3276, 4294901760
        %3296 = vmatprep.subr.mxu0 %v3295
        %v3297 = vand.u32 %v3275, 4294901760
        %3298 = vmatpush1.msra.mxu0 %v3297
        %v3299 = vand.u32 %v3281, 4294901760
        %3300 = vmatprep.subr.mxu0 %v3299
        %v3301 = vand.u32 %v3278, 4294901760
        %3302 = vmatpush1.msra.mxu0 %v3301
        %3303 = vmatprep.subr.mxu0 0.0
        %3304 = vmatpush1.msra.mxu0 0.0
        %3305 = vmatprep.subr.mxu0 0.0
        %3306 = vmatpush1.msra.mxu0 0.0
        %3307 = vmatprep.subr.mxu0 0.0
        %3308 = vmatpush1.msra.mxu0 0.0
        %3309 = vmatprep.subr.mxu0 0.0
        %3310 = vmatpush1.msra.mxu0 0.0
        %3311 = vmatprep.subr.mxu0 0.0
        %3312 = vmatpush1.msra.mxu0 0.0
        %3313 = vmatprep.subr.mxu0 0.0
        %3314 = vmatpush1.msra.mxu0 0.0
        %3315 = vmatprep.subr.mxu0 0.0
        %3316 = vmatpush1.msra.mxu0 0.0
        %3317 = vmatprep.subr.mxu0 0.0
        %3318 = vmatpush1.msra.mxu0 0.0
        %3319 = vmatprep.subr.mxu0 0.0
        %3320 = vmatpush1.msra.mxu0 0.0
        %3321 = vmatprep.subr.mxu0 0.0
        %3322 = vmatpush1.msra.mxu0 0.0
        %3323 = vmatprep.subr.mxu0 0.0
        %3324 = vmatpush1.msra.mxu0 0.0
        %3325 = vmatprep.subr.mxu0 0.0
        %3326 = vmatpush1.msra.mxu0 0.0
        %3327 = vmatprep.subr.mxu0 0.0
        %3328 = vmatpush1.msra.mxu0 0.0
        %3329 = vmatprep.subr.mxu0 0.0
        %3330 = vmatpush1.msra.mxu0 0.0
        %3331 = vmatprep.subr.mxu0 0.0
        %3332 = vmatpush1.msra.mxu0 0.0
        %3333 = vmatprep.subr.mxu0 0.0
        %3334 = vmatpush1.msra.mxu0 0.0
        %3335 = vmatprep.subr.mxu0 0.0
        %3336 = vmatpush1.msra.mxu0 0.0
        %3337 = vmatprep.subr.mxu0 0.0
        %3338 = vmatpush1.msra.mxu0 0.0
        %3339 = vmatprep.subr.mxu0 0.0
        %3340 = vmatpush1.msra.mxu0 0.0
        %3341 = vmatprep.subr.mxu0 0.0
        %3342 = vmatpush1.msra.mxu0 0.0
        %3343 = vmatprep.subr.mxu0 0.0
        %3344 = vmatpush1.msra.mxu0 0.0
        %3345 = vmatprep.subr.mxu0 0.0
        %3346 = vmatpush1.msra.mxu0 0.0
        %3347 = vmatprep.subr.mxu0 0.0
        %3348 = vmatpush1.msra.mxu0 0.0
        %3349 = vmatprep.subr.mxu0 0.0
        %3350 = vmatpush1.msra.mxu0 0.0
        %3351 = vmatprep.subr.mxu0 0.0
        %3352 = vmatpush1.msra.mxu0 0.0
        %3353 = vmatprep.subr.mxu0 0.0
        %3354 = vmatpush1.msra.mxu0 0.0
        %3355 = vmatprep.subr.mxu0 0.0
        %3356 = vmatpush1.msra.mxu0 0.0
        %3357 = vmatprep.mubr.f32.mxu0 0.0
        %v3358 = vand.u32 %v1174, 4294901760
        %v3359 = vsub.f32 %v1174, %v3358
        %v3360 = vand.u32 %v3359, 4294901760
        %v3361 = vsub.f32 %v3359, %v3360
        %v3362 = vand.u32 %v3361, 4294901760
        %3363 = vmatmul.mubr.f32.gmra.mrb[0].mxu0 %v3362
        %v3364 = vpop.f32.mrb[0].mxu0
        %v3365 = vadd.f32 %v1171, %v3364
        %v3366 = vpop.f32.mrb[0].mxu0
        %v3367 = vadd.f32 %v1171, %v3366
        %3368 = vdwg.mxu0
        %v3369 = vand.u32 %v3270, 4294901760
        %v3370 = vsub.f32 %v3270, %v3369
        %v3371 = vand.u32 %v3370, 4294901760
        %v3372 = vsub.f32 %v3370, %v3371
        %v3373 = vand.u32 %v3372, 4294901760
        %3374 = vmatprep.subr.mxu0 %v3373
        %v3375 = vand.u32 %v3269, 4294901760
        %v3376 = vsub.f32 %v3269, %v3375
        %v3377 = vand.u32 %v3376, 4294901760
        %v3378 = vsub.f32 %v3376, %v3377
        %v3379 = vand.u32 %v3378, 4294901760
        %3380 = vmatpush1.msra.mxu0 %v3379
        %v3381 = vand.u32 %v3272, 4294901760
        %v3382 = vsub.f32 %v3272, %v3381
        %v3383 = vand.u32 %v3382, 4294901760
        %v3384 = vsub.f32 %v3382, %v3383
        %v3385 = vand.u32 %v3384, 4294901760
        %3386 = vmatprep.subr.mxu0 %v3385
        %v3387 = vand.u32 %v3271, 4294901760
        %v3388 = vsub.f32 %v3271, %v3387
        %v3389 = vand.u32 %v3388, 4294901760
        %v3390 = vsub.f32 %v3388, %v3389
        %v3391 = vand.u32 %v3390, 4294901760
        %3392 = vmatpush1.msra.mxu0 %v3391
        %v3393 = vand.u32 %v3274, 4294901760
        %v3394 = vsub.f32 %v3274, %v3393
        %v3395 = vand.u32 %v3394, 4294901760
        %v3396 = vsub.f32 %v3394, %v3395
        %v3397 = vand.u32 %v3396, 4294901760
        %3398 = vmatprep.subr.mxu0 %v3397
        %v3399 = vand.u32 %v3273, 4294901760
        %v3400 = vsub.f32 %v3273, %v3399
        %v3401 = vand.u32 %v3400, 4294901760
        %v3402 = vsub.f32 %v3400, %v3401
        %v3403 = vand.u32 %v3402, 4294901760
        %3404 = vmatpush1.msra.mxu0 %v3403
        %v3405 = vand.u32 %v3276, 4294901760
        %v3406 = vsub.f32 %v3276, %v3405
        %v3407 = vand.u32 %v3406, 4294901760
        %v3408 = vsub.f32 %v3406, %v3407
        %v3409 = vand.u32 %v3408, 4294901760
        %3410 = vmatprep.subr.mxu0 %v3409
        %v3411 = vand.u32 %v3275, 4294901760
        %v3412 = vsub.f32 %v3275, %v3411
        %v3413 = vand.u32 %v3412, 4294901760
        %v3414 = vsub.f32 %v3412, %v3413
        %v3415 = vand.u32 %v3414, 4294901760
        %3416 = vmatpush1.msra.mxu0 %v3415
        %v3417 = vand.u32 %v3281, 4294901760
        %v3418 = vsub.f32 %v3281, %v3417
        %v3419 = vand.u32 %v3418, 4294901760
        %v3420 = vsub.f32 %v3418, %v3419
        %v3421 = vand.u32 %v3420, 4294901760
        %3422 = vmatprep.subr.mxu0 %v3421
        %v3423 = vand.u32 %v3278, 4294901760
        %v3424 = vsub.f32 %v3278, %v3423
        %v3425 = vand.u32 %v3424, 4294901760
        %v3426 = vsub.f32 %v3424, %v3425
        %v3427 = vand.u32 %v3426, 4294901760
        %3428 = vmatpush1.msra.mxu0 %v3427
        %3429 = vmatprep.subr.mxu0 0.0
        %3430 = vmatpush1.msra.mxu0 0.0
        %3431 = vmatprep.subr.mxu0 0.0
        %3432 = vmatpush1.msra.mxu0 0.0
        %3433 = vmatprep.subr.mxu0 0.0
        %3434 = vmatpush1.msra.mxu0 0.0
        %3435 = vmatprep.subr.mxu0 0.0
        %3436 = vmatpush1.msra.mxu0 0.0
        %3437 = vmatprep.subr.mxu0 0.0
        %3438 = vmatpush1.msra.mxu0 0.0
        %3439 = vmatprep.subr.mxu0 0.0
        %3440 = vmatpush1.msra.mxu0 0.0
        %3441 = vmatprep.subr.mxu0 0.0
        %3442 = vmatpush1.msra.mxu0 0.0
        %3443 = vmatprep.subr.mxu0 0.0
        %3444 = vmatpush1.msra.mxu0 0.0
        %3445 = vmatprep.subr.mxu0 0.0
        %3446 = vmatpush1.msra.mxu0 0.0
        %3447 = vmatprep.subr.mxu0 0.0
        %3448 = vmatpush1.msra.mxu0 0.0
        %3449 = vmatprep.subr.mxu0 0.0
        %3450 = vmatpush1.msra.mxu0 0.0
        %3451 = vmatprep.subr.mxu0 0.0
        %3452 = vmatpush1.msra.mxu0 0.0
        %3453 = vmatprep.subr.mxu0 0.0
        %3454 = vmatpush1.msra.mxu0 0.0
        %3455 = vmatprep.subr.mxu0 0.0
        %3456 = vmatpush1.msra.mxu0 0.0
        %3457 = vmatprep.subr.mxu0 0.0
        %3458 = vmatpush1.msra.mxu0 0.0
        %3459 = vmatprep.subr.mxu0 0.0
        %3460 = vmatpush1.msra.mxu0 0.0
        %3461 = vmatprep.subr.mxu0 0.0
        %3462 = vmatpush1.msra.mxu0 0.0
        %3463 = vmatprep.subr.mxu0 0.0
        %3464 = vmatpush1.msra.mxu0 0.0
        %3465 = vmatprep.subr.mxu0 0.0
        %3466 = vmatpush1.msra.mxu0 0.0
        %3467 = vmatprep.subr.mxu0 0.0
        %3468 = vmatpush1.msra.mxu0 0.0
        %3469 = vmatprep.subr.mxu0 0.0
        %3470 = vmatpush1.msra.mxu0 0.0
        %3471 = vmatprep.subr.mxu0 0.0
        %3472 = vmatpush1.msra.mxu0 0.0
        %3473 = vmatprep.subr.mxu0 0.0
        %3474 = vmatpush1.msra.mxu0 0.0
        %3475 = vmatprep.subr.mxu0 0.0
        %3476 = vmatpush1.msra.mxu0 0.0
        %3477 = vmatprep.subr.mxu0 0.0
        %3478 = vmatpush1.msra.mxu0 0.0
        %3479 = vmatprep.subr.mxu0 0.0
        %3480 = vmatpush1.msra.mxu0 0.0
        %3481 = vmatprep.subr.mxu0 0.0
        %3482 = vmatpush1.msra.mxu0 0.0
        %3483 = vmatprep.mubr.f32.mxu0 0.0
        %v3484 = vand.u32 %v1174, 4294901760
        %3485 = vmatmul.mubr.f32.gmra.mrb[0].mxu0 %v3484
        %v3486 = vpop.f32.mrb[0].mxu0
        %v3487 = vadd.f32 %v3365, %v3486
        %v3488 = vpop.f32.mrb[0].mxu0
        %v3489 = vadd.f32 %v3367, %v3488
        %3490 = vdwg.mxu0
        %v3491 = vand.u32 %v3270, 4294901760
        %v3492 = vsub.f32 %v3270, %v3491
        %3493 = vmatprep.subr.mxu0 %v3492
        %v3494 = vand.u32 %v3269, 4294901760
        %v3495 = vsub.f32 %v3269, %v3494
        %3496 = vmatpush1.msra.mxu0 %v3495
        %v3497 = vand.u32 %v3272, 4294901760
        %v3498 = vsub.f32 %v3272, %v3497
        %3499 = vmatprep.subr.mxu0 %v3498
        %v3500 = vand.u32 %v3271, 4294901760
        %v3501 = vsub.f32 %v3271, %v3500
        %3502 = vmatpush1.msra.mxu0 %v3501
        %v3503 = vand.u32 %v3274, 4294901760
        %v3504 = vsub.f32 %v3274, %v3503
        %3505 = vmatprep.subr.mxu0 %v3504
        %v3506 = vand.u32 %v3273, 4294901760
        %v3507 = vsub.f32 %v3273, %v3506
        %3508 = vmatpush1.msra.mxu0 %v3507
        %v3509 = vand.u32 %v3276, 4294901760
        %v3510 = vsub.f32 %v3276, %v3509
        %3511 = vmatprep.subr.mxu0 %v3510
        %v3512 = vand.u32 %v3275, 4294901760
        %v3513 = vsub.f32 %v3275, %v3512
        %3514 = vmatpush1.msra.mxu0 %v3513
        %v3515 = vand.u32 %v3281, 4294901760
        %v3516 = vsub.f32 %v3281, %v3515
        %3517 = vmatprep.subr.mxu0 %v3516
        %v3518 = vand.u32 %v3278, 4294901760
        %v3519 = vsub.f32 %v3278, %v3518
        %3520 = vmatpush1.msra.mxu0 %v3519
        %3521 = vmatprep.subr.mxu0 0.0
        %3522 = vmatpush1.msra.mxu0 0.0
        %3523 = vmatprep.subr.mxu0 0.0
        %3524 = vmatpush1.msra.mxu0 0.0
        %3525 = vmatprep.subr.mxu0 0.0
        %3526 = vmatpush1.msra.mxu0 0.0
        %3527 = vmatprep.subr.mxu0 0.0
        %3528 = vmatpush1.msra.mxu0 0.0
        %3529 = vmatprep.subr.mxu0 0.0
        %3530 = vmatpush1.msra.mxu0 0.0
        %3531 = vmatprep.subr.mxu0 0.0
        %3532 = vmatpush1.msra.mxu0 0.0
        %3533 = vmatprep.subr.mxu0 0.0
        %3534 = vmatpush1.msra.mxu0 0.0
        %3535 = vmatprep.subr.mxu0 0.0
        %3536 = vmatpush1.msra.mxu0 0.0
        %3537 = vmatprep.subr.mxu0 0.0
        %3538 = vmatpush1.msra.mxu0 0.0
        %3539 = vmatprep.subr.mxu0 0.0
        %3540 = vmatpush1.msra.mxu0 0.0
        %3541 = vmatprep.subr.mxu0 0.0
        %3542 = vmatpush1.msra.mxu0 0.0
        %3543 = vmatprep.subr.mxu0 0.0
        %3544 = vmatpush1.msra.mxu0 0.0
        %3545 = vmatprep.subr.mxu0 0.0
        %3546 = vmatpush1.msra.mxu0 0.0
        %3547 = vmatprep.subr.mxu0 0.0
        %3548 = vmatpush1.msra.mxu0 0.0
        %3549 = vmatprep.subr.mxu0 0.0
        %3550 = vmatpush1.msra.mxu0 0.0
        %3551 = vmatprep.subr.mxu0 0.0
        %3552 = vmatpush1.msra.mxu0 0.0
        %3553 = vmatprep.subr.mxu0 0.0
        %3554 = vmatpush1.msra.mxu0 0.0
        %3555 = vmatprep.subr.mxu0 0.0
        %3556 = vmatpush1.msra.mxu0 0.0
        %3557 = vmatprep.subr.mxu0 0.0
        %3558 = vmatpush1.msra.mxu0 0.0
        %3559 = vmatprep.subr.mxu0 0.0
        %3560 = vmatpush1.msra.mxu0 0.0
        %3561 = vmatprep.subr.mxu0 0.0
        %3562 = vmatpush1.msra.mxu0 0.0
        %3563 = vmatprep.subr.mxu0 0.0
        %3564 = vmatpush1.msra.mxu0 0.0
        %3565 = vmatprep.subr.mxu0 0.0
        %3566 = vmatpush1.msra.mxu0 0.0
        %3567 = vmatprep.subr.mxu0 0.0
        %3568 = vmatpush1.msra.mxu0 0.0
        %3569 = vmatprep.subr.mxu0 0.0
        %3570 = vmatpush1.msra.mxu0 0.0
        %3571 = vmatprep.subr.mxu0 0.0
        %3572 = vmatpush1.msra.mxu0 0.0
        %3573 = vmatprep.subr.mxu0 0.0
        %3574 = vmatpush1.msra.mxu0 0.0
        %3575 = vmatprep.mubr.f32.mxu0 0.0
        %v3576 = vand.u32 %v1174, 4294901760
        %v3577 = vsub.f32 %v1174, %v3576
        %3578 = vmatmul.mubr.f32.gmra.mrb[0].mxu0 %v3577
        %v3579 = vpop.f32.mrb[0].mxu0
        %v3580 = vadd.f32 %v3487, %v3579
        %v3581 = vpop.f32.mrb[0].mxu0
        %v3582 = vadd.f32 %v3489, %v3581
        %3583 = vdwg.mxu0
        %v3584 = vand.u32 %v3270, 4294901760
        %3585 = vmatprep.subr.mxu0 %v3584
        %v3586 = vand.u32 %v3269, 4294901760
        %3587 = vmatpush1.msra.mxu0 %v3586
        %v3588 = vand.u32 %v3272, 4294901760
        %3589 = vmatprep.subr.mxu0 %v3588
        %v3590 = vand.u32 %v3271, 4294901760
        %3591 = vmatpush1.msra.mxu0 %v3590
        %v3592 = vand.u32 %v3274, 4294901760
        %3593 = vmatprep.subr.mxu0 %v3592
        %v3594 = vand.u32 %v3273, 4294901760
        %3595 = vmatpush1.msra.mxu0 %v3594
        %v3596 = vand.u32 %v3276, 4294901760
        %3597 = vmatprep.subr.mxu0 %v3596
        %v3598 = vand.u32 %v3275, 4294901760
        %3599 = vmatpush1.msra.mxu0 %v3598
        %v3600 = vand.u32 %v3281, 4294901760
        %3601 = vmatprep.subr.mxu0 %v3600
        %v3602 = vand.u32 %v3278, 4294901760
        %3603 = vmatpush1.msra.mxu0 %v3602
        %3604 = vmatprep.subr.mxu0 0.0
        %3605 = vmatpush1.msra.mxu0 0.0
        %3606 = vmatprep.subr.mxu0 0.0
        %3607 = vmatpush1.msra.mxu0 0.0
        %3608 = vmatprep.subr.mxu0 0.0
        %3609 = vmatpush1.msra.mxu0 0.0
        %3610 = vmatprep.subr.mxu0 0.0
        %3611 = vmatpush1.msra.mxu0 0.0
        %3612 = vmatprep.subr.mxu0 0.0
        %3613 = vmatpush1.msra.mxu0 0.0
        %3614 = vmatprep.subr.mxu0 0.0
        %3615 = vmatpush1.msra.mxu0 0.0
        %3616 = vmatprep.subr.mxu0 0.0
        %3617 = vmatpush1.msra.mxu0 0.0
        %3618 = vmatprep.subr.mxu0 0.0
        %3619 = vmatpush1.msra.mxu0 0.0
        %3620 = vmatprep.subr.mxu0 0.0
        %3621 = vmatpush1.msra.mxu0 0.0
        %3622 = vmatprep.subr.mxu0 0.0
        %3623 = vmatpush1.msra.mxu0 0.0
        %3624 = vmatprep.subr.mxu0 0.0
        %3625 = vmatpush1.msra.mxu0 0.0
        %3626 = vmatprep.subr.mxu0 0.0
        %3627 = vmatpush1.msra.mxu0 0.0
        %3628 = vmatprep.subr.mxu0 0.0
        %3629 = vmatpush1.msra.mxu0 0.0
        %3630 = vmatprep.subr.mxu0 0.0
        %3631 = vmatpush1.msra.mxu0 0.0
        %3632 = vmatprep.subr.mxu0 0.0
        %3633 = vmatpush1.msra.mxu0 0.0
        %3634 = vmatprep.subr.mxu0 0.0
        %3635 = vmatpush1.msra.mxu0 0.0
        %3636 = vmatprep.subr.mxu0 0.0
        %3637 = vmatpush1.msra.mxu0 0.0
        %3638 = vmatprep.subr.mxu0 0.0
        %3639 = vmatpush1.msra.mxu0 0.0
        %3640 = vmatprep.subr.mxu0 0.0
        %3641 = vmatpush1.msra.mxu0 0.0
        %3642 = vmatprep.subr.mxu0 0.0
        %3643 = vmatpush1.msra.mxu0 0.0
        %3644 = vmatprep.subr.mxu0 0.0
        %3645 = vmatpush1.msra.mxu0 0.0
        %3646 = vmatprep.subr.mxu0 0.0
        %3647 = vmatpush1.msra.mxu0 0.0
        %3648 = vmatprep.subr.mxu0 0.0
        %3649 = vmatpush1.msra.mxu0 0.0
        %3650 = vmatprep.subr.mxu0 0.0
        %3651 = vmatpush1.msra.mxu0 0.0
        %3652 = vmatprep.subr.mxu0 0.0
        %3653 = vmatpush1.msra.mxu0 0.0
        %3654 = vmatprep.subr.mxu0 0.0
        %3655 = vmatpush1.msra.mxu0 0.0
        %3656 = vmatprep.subr.mxu0 0.0
        %3657 = vmatpush1.msra.mxu0 0.0
        %3658 = vmatprep.mubr.f32.mxu0 0.0
        %v3659 = vand.u32 %v1174, 4294901760
        %v3660 = vsub.f32 %v1174, %v3659
        %v3661 = vand.u32 %v3660, 4294901760
        %3662 = vmatmul.mubr.f32.gmra.mrb[0].mxu0 %v3661
        %v3663 = vpop.f32.mrb[0].mxu0
        %v3664 = vadd.f32 %v3580, %v3663
        %v3665 = vpop.f32.mrb[0].mxu0
        %v3666 = vadd.f32 %v3582, %v3665
        %3667 = vdwg.mxu0
        %v3668 = vand.u32 %v3270, 4294901760
        %v3669 = vsub.f32 %v3270, %v3668
        %v3670 = vand.u32 %v3669, 4294901760
        %3671 = vmatprep.subr.mxu0 %v3670
        %v3672 = vand.u32 %v3269, 4294901760
        %v3673 = vsub.f32 %v3269, %v3672
        %v3674 = vand.u32 %v3673, 4294901760
        %3675 = vmatpush1.msra.mxu0 %v3674
        %v3676 = vand.u32 %v3272, 4294901760
        %v3677 = vsub.f32 %v3272, %v3676
        %v3678 = vand.u32 %v3677, 4294901760
        %3679 = vmatprep.subr.mxu0 %v3678
        %v3680 = vand.u32 %v3271, 4294901760
        %v3681 = vsub.f32 %v3271, %v3680
        %v3682 = vand.u32 %v3681, 4294901760
        %3683 = vmatpush1.msra.mxu0 %v3682
        %v3684 = vand.u32 %v3274, 4294901760
        %v3685 = vsub.f32 %v3274, %v3684
        %v3686 = vand.u32 %v3685, 4294901760
        %3687 = vmatprep.subr.mxu0 %v3686
        %v3688 = vand.u32 %v3273, 4294901760
        %v3689 = vsub.f32 %v3273, %v3688
        %v3690 = vand.u32 %v3689, 4294901760
        %3691 = vmatpush1.msra.mxu0 %v3690
        %v3692 = vand.u32 %v3276, 4294901760
        %v3693 = vsub.f32 %v3276, %v3692
        %v3694 = vand.u32 %v3693, 4294901760
        %3695 = vmatprep.subr.mxu0 %v3694
        %v3696 = vand.u32 %v3275, 4294901760
        %v3697 = vsub.f32 %v3275, %v3696
        %v3698 = vand.u32 %v3697, 4294901760
        %3699 = vmatpush1.msra.mxu0 %v3698
        %v3700 = vand.u32 %v3281, 4294901760
        %v3701 = vsub.f32 %v3281, %v3700
        %v3702 = vand.u32 %v3701, 4294901760
        %3703 = vmatprep.subr.mxu0 %v3702
        %v3704 = vand.u32 %v3278, 4294901760
        %v3705 = vsub.f32 %v3278, %v3704
        %v3706 = vand.u32 %v3705, 4294901760
        %3707 = vmatpush1.msra.mxu0 %v3706
        %3708 = vmatprep.subr.mxu0 0.0
        %3709 = vmatpush1.msra.mxu0 0.0
        %3710 = vmatprep.subr.mxu0 0.0
        %3711 = vmatpush1.msra.mxu0 0.0
        %3712 = vmatprep.subr.mxu0 0.0
        %3713 = vmatpush1.msra.mxu0 0.0
        %3714 = vmatprep.subr.mxu0 0.0
        %3715 = vmatpush1.msra.mxu0 0.0
        %3716 = vmatprep.subr.mxu0 0.0
        %3717 = vmatpush1.msra.mxu0 0.0
        %3718 = vmatprep.subr.mxu0 0.0
        %3719 = vmatpush1.msra.mxu0 0.0
        %3720 = vmatprep.subr.mxu0 0.0
        %3721 = vmatpush1.msra.mxu0 0.0
        %3722 = vmatprep.subr.mxu0 0.0
        %3723 = vmatpush1.msra.mxu0 0.0
        %3724 = vmatprep.subr.mxu0 0.0
        %3725 = vmatpush1.msra.mxu0 0.0
        %3726 = vmatprep.subr.mxu0 0.0
        %3727 = vmatpush1.msra.mxu0 0.0
        %3728 = vmatprep.subr.mxu0 0.0
        %3729 = vmatpush1.msra.mxu0 0.0
        %3730 = vmatprep.subr.mxu0 0.0
        %3731 = vmatpush1.msra.mxu0 0.0
        %3732 = vmatprep.subr.mxu0 0.0
        %3733 = vmatpush1.msra.mxu0 0.0
        %3734 = vmatprep.subr.mxu0 0.0
        %3735 = vmatpush1.msra.mxu0 0.0
        %3736 = vmatprep.subr.mxu0 0.0
        %3737 = vmatpush1.msra.mxu0 0.0
        %3738 = vmatprep.subr.mxu0 0.0
        %3739 = vmatpush1.msra.mxu0 0.0
        %3740 = vmatprep.subr.mxu0 0.0
        %3741 = vmatpush1.msra.mxu0 0.0
        %3742 = vmatprep.subr.mxu0 0.0
        %3743 = vmatpush1.msra.mxu0 0.0
        %3744 = vmatprep.subr.mxu0 0.0
        %3745 = vmatpush1.msra.mxu0 0.0
        %3746 = vmatprep.subr.mxu0 0.0
        %3747 = vmatpush1.msra.mxu0 0.0
        %3748 = vmatprep.subr.mxu0 0.0
        %3749 = vmatpush1.msra.mxu0 0.0
        %3750 = vmatprep.subr.mxu0 0.0
        %3751 = vmatpush1.msra.mxu0 0.0
        %3752 = vmatprep.subr.mxu0 0.0
        %3753 = vmatpush1.msra.mxu0 0.0
        %3754 = vmatprep.subr.mxu0 0.0
        %3755 = vmatpush1.msra.mxu0 0.0
        %3756 = vmatprep.subr.mxu0 0.0
        %3757 = vmatpush1.msra.mxu0 0.0
        %3758 = vmatprep.subr.mxu0 0.0
        %3759 = vmatpush1.msra.mxu0 0.0
        %3760 = vmatprep.subr.mxu0 0.0
        %3761 = vmatpush1.msra.mxu0 0.0
        %3762 = vmatprep.mubr.f32.mxu0 0.0
        %v3763 = vand.u32 %v1174, 4294901760
        %3764 = vmatmul.mubr.f32.gmra.mrb[0].mxu0 %v3763
        %v3765 = vpop.f32.mrb[0].mxu0
        %v3766 = vadd.f32 %v3664, %v3765
        %v3767 = vpop.f32.mrb[0].mxu0
        %v3768 = vadd.f32 %v3666, %v3767
        %3769 = vdwg.mxu0
        %v3770 = vand.u32 %v3270, 4294901760
        %3771 = vmatprep.subr.mxu0 %v3770
        %v3772 = vand.u32 %v3269, 4294901760
        %3773 = vmatpush1.msra.mxu0 %v3772
        %v3774 = vand.u32 %v3272, 4294901760
        %3775 = vmatprep.subr.mxu0 %v3774
        %v3776 = vand.u32 %v3271, 4294901760
        %3777 = vmatpush1.msra.mxu0 %v3776
        %v3778 = vand.u32 %v3274, 4294901760
        %3779 = vmatprep.subr.mxu0 %v3778
        %v3780 = vand.u32 %v3273, 4294901760
        %3781 = vmatpush1.msra.mxu0 %v3780
        %v3782 = vand.u32 %v3276, 4294901760
        %3783 = vmatprep.subr.mxu0 %v3782
        %v3784 = vand.u32 %v3275, 4294901760
        %3785 = vmatpush1.msra.mxu0 %v3784
        %v3786 = vand.u32 %v3281, 4294901760
        %3787 = vmatprep.subr.mxu0 %v3786
        %v3788 = vand.u32 %v3278, 4294901760
        %3789 = vmatpush1.msra.mxu0 %v3788
        %3790 = vmatprep.subr.mxu0 0.0
        %3791 = vmatpush1.msra.mxu0 0.0
        %3792 = vmatprep.subr.mxu0 0.0
        %3793 = vmatpush1.msra.mxu0 0.0
        %3794 = vmatprep.subr.mxu0 0.0
        %3795 = vmatpush1.msra.mxu0 0.0
        %3796 = vmatprep.subr.mxu0 0.0
        %3797 = vmatpush1.msra.mxu0 0.0
        %3798 = vmatprep.subr.mxu0 0.0
        %3799 = vmatpush1.msra.mxu0 0.0
        %3800 = vmatprep.subr.mxu0 0.0
        %3801 = vmatpush1.msra.mxu0 0.0
        %3802 = vmatprep.subr.mxu0 0.0
        %3803 = vmatpush1.msra.mxu0 0.0
        %3804 = vmatprep.subr.mxu0 0.0
        %3805 = vmatpush1.msra.mxu0 0.0
        %3806 = vmatprep.subr.mxu0 0.0
        %3807 = vmatpush1.msra.mxu0 0.0
        %3808 = vmatprep.subr.mxu0 0.0
        %3809 = vmatpush1.msra.mxu0 0.0
        %3810 = vmatprep.subr.mxu0 0.0
        %3811 = vmatpush1.msra.mxu0 0.0
        %3812 = vmatprep.subr.mxu0 0.0
        %3813 = vmatpush1.msra.mxu0 0.0
        %3814 = vmatprep.subr.mxu0 0.0
        %3815 = vmatpush1.msra.mxu0 0.0
        %3816 = vmatprep.subr.mxu0 0.0
        %3817 = vmatpush1.msra.mxu0 0.0
        %3818 = vmatprep.subr.mxu0 0.0
        %3819 = vmatpush1.msra.mxu0 0.0
        %3820 = vmatprep.subr.mxu0 0.0
        %3821 = vmatpush1.msra.mxu0 0.0
        %3822 = vmatprep.subr.mxu0 0.0
        %3823 = vmatpush1.msra.mxu0 0.0
        %3824 = vmatprep.subr.mxu0 0.0
        %3825 = vmatpush1.msra.mxu0 0.0
        %3826 = vmatprep.subr.mxu0 0.0
        %3827 = vmatpush1.msra.mxu0 0.0
        %3828 = vmatprep.subr.mxu0 0.0
        %3829 = vmatpush1.msra.mxu0 0.0
        %3830 = vmatprep.subr.mxu0 0.0
        %3831 = vmatpush1.msra.mxu0 0.0
        %3832 = vmatprep.subr.mxu0 0.0
        %3833 = vmatpush1.msra.mxu0 0.0
        %3834 = vmatprep.subr.mxu0 0.0
        %3835 = vmatpush1.msra.mxu0 0.0
        %3836 = vmatprep.subr.mxu0 0.0
        %3837 = vmatpush1.msra.mxu0 0.0
        %3838 = vmatprep.subr.mxu0 0.0
        %3839 = vmatpush1.msra.mxu0 0.0
        %3840 = vmatprep.subr.mxu0 0.0
        %3841 = vmatpush1.msra.mxu0 0.0
        %3842 = vmatprep.subr.mxu0 0.0
        %3843 = vmatpush1.msra.mxu0 0.0
        %3844 = vmatprep.mubr.f32.mxu0 0.0
        %v3845 = vand.u32 %v1174, 4294901760
        %3846 = vmatmul.mubr.f32.gmra.mrb[0].mxu0 %v3845
        %v3847 = vpop.f32.mrb[0].mxu0
        %v3848 = vadd.f32 %v3766, %v3847
        %v3849 = vpop.f32.mrb[0].mxu0
        %v3850 = vadd.f32 %v3768, %v3849
        %3851 = vdwg.mxu0
        %v3852 = vsel %vm442, %v3848, 0.0
        %v3853 = vsel %vm442, %v3850, 0.0
        %v3854 = vadd.f32 %v3852, %v3853
        %3855 = vadd.xlane.f32.xlu0 %v3854
        %v3856 = vpop.xlane.xlu0 %3855
        %v3857 = vmul.f32 %v3856, %v1042
        %v3858 = vsub.f32 %v3848, %v3857
        %v3859 = vsub.f32 %v3850, %v3857
        %v3860 = vmul.f32 %v3858, %v3858
        %v3861 = vmul.f32 %v3859, %v3859
        %v3862 = vsel %vm442, %v3860, 0.0
        %v3863 = vsel %vm442, %v3861, 0.0
        %v3864 = vadd.f32 %v3862, %v3863
        %3865 = vadd.xlane.f32.xlu0 %v3864
        %v3866 = vpop.xlane.xlu0 %3865
        %v3867 = vmul.f32 %v3866, %v1042
        %v3868 = vadd.f32 %v3867, 1e-05
        %v3869 = vrsqrt.pop %v3868
        %v3870 = vmul.f32 %v3858, %v3869
        %v3871 = vmul.f32 %v3859, %v3869
        %v3872 = vadd.f32 %v3870, %v2466
        %v3873 = vadd.f32 %v3871, %v2467
        %v3874 = vmax.f32 %v3872, 0.0
        %v3875 = vmax.f32 %v3873, 0.0
        %3878 = vrot.lane.b32.xlu0 %v3874, 17
        %v3879 = vpop.permute.xlu0 %3878
        %3880 = vrot.lane.b32.xlu0 %v3875, 17
        %v3881 = vpop.permute.xlu0 %3880
        %v3882 = vsel %vm333, %v3879, %v3881
        %v3885 = vsel %vm333, 0.0, %v3879
        %v3886 = vsel %vm340, %v3885, 0.0
        %v3887 = vsel %vm341, %v3882, 0.0
        %3888 = vrot.lane.b32.xlu0 %v3874, 16
        %v3889 = vpop.permute.xlu0 %3888
        %3890 = vrot.lane.b32.xlu0 %v3875, 16
        %v3891 = vpop.permute.xlu0 %3890
        %v3892 = vsel %vm348, %v3889, %v3891
        %v3894 = vsel %vm348, 0.0, %v3889
        %3895 = vrot.lane.b32.xlu0 %v3874, 15
        %v3896 = vpop.permute.xlu0 %3895
        %3897 = vrot.lane.b32.xlu0 %v3875, 15
        %v3898 = vpop.permute.xlu0 %3897
        %v3899 = vsel %vm356, %v3896, %v3898
        %v3902 = vsel %vm356, 0.0, %v3896
        %v3903 = vsel %vm363, %v3902, 0.0
        %v3904 = vsel %vm364, %v3899, 0.0
        %3905 = vrot.lane.b32.xlu0 %v3874, 1
        %v3906 = vpop.permute.xlu0 %3905
        %3907 = vrot.lane.b32.xlu0 %v3875, 1
        %v3908 = vpop.permute.xlu0 %3907
        %v3909 = vsel %vm371, %v3906, %v3908
        %v3912 = vsel %vm371, 0.0, %v3906
        %v3913 = vsel %vm340, %v3912, 0.0
        %v3914 = vsel %vm341, %v3909, 0.0
        %3915 = vrot.lane.b32.xlu0 %v3874, 127
        %v3916 = vpop.permute.xlu0 %3915
        %3917 = vrot.lane.b32.xlu0 %v3875, 127
        %v3918 = vpop.permute.xlu0 %3917
        %v3919 = vsel %vm382, %v3916, %v3918
        %v3922 = vsel %vm382, %v3918, 0.0
        %v3923 = vsel %vm363, %v3919, 0.0
        %v3924 = vsel %vm364, %v3922, 0.0
        %3925 = vrot.lane.b32.xlu0 %v3874, 113
        %v3926 = vpop.permute.xlu0 %3925
        %3927 = vrot.lane.b32.xlu0 %v3875, 113
        %v3928 = vpop.permute.xlu0 %3927
        %v3929 = vsel %vm393, %v3926, %v3928
        %v3932 = vsel %vm393, %v3928, 0.0
        %v3933 = vsel %vm340, %v3929, 0.0
        %v3934 = vsel %vm341, %v3932, 0.0
        %3935 = vrot.lane.b32.xlu0 %v3874, 112
        %v3936 = vpop.permute.xlu0 %3935
        %3937 = vrot.lane.b32.xlu0 %v3875, 112
        %v3938 = vpop.permute.xlu0 %3937
        %v3939 = vsel %vm404, %v3936, %v3938
        %v3941 = vsel %vm404, %v3938, 0.0
        %3942 = vrot.lane.b32.xlu0 %v3874, 111
        %v3943 = vpop.permute.xlu0 %3942
        %3944 = vrot.lane.b32.xlu0 %v3875, 111
        %v3945 = vpop.permute.xlu0 %3944
        %v3946 = vsel %vm412, %v3943, %v3945
        %v3949 = vsel %vm412, %v3945, 0.0
        %v3950 = vsel %vm363, %v3946, 0.0
        %v3951 = vsel %vm364, %v3949, 0.0
        %v3953 = vrot.slane %v3894, 4
        %v3954 = vrot.slane %v3892, 4
        %v3959 = vrot.slane %v3913, 4
        %v3960 = vrot.slane %v3914, 4
        %v3965 = vrot.slane %v3923, 4
        %v3966 = vrot.slane %v3924, 4
        %v3970 = vrot.slane %v3939, 4
        %v3971 = vrot.slane %v3941, 4
        %v3974 = vsel %vm442, %v3886, %v3953
        %v3975 = vsel %vm442, %v3887, %v3954
        %v3976 = vsel %vm442, %v3903, %v3959
        %v3977 = vsel %vm442, %v3904, %v3960
        %v3978 = vsel %vm442, %v3874, %v3965
        %v3979 = vsel %vm442, %v3875, %v3966
        %v3980 = vsel %vm442, %v3933, %v3970
        %v3981 = vsel %vm442, %v3934, %v3971
        %v3983 = vsel %vm442, %v3950, 0
        %v3986 = vsel %vm442, %v3951, 0
        %v3988 = vand.u32 %v3975, 4294901760
        %3989 = vmatprep.subr.mxu0 %v3988
        %v3990 = vand.u32 %v3974, 4294901760
        %3991 = vmatpush1.msra.mxu0 %v3990
        %v3992 = vand.u32 %v3977, 4294901760
        %3993 = vmatprep.subr.mxu0 %v3992
        %v3994 = vand.u32 %v3976, 4294901760
        %3995 = vmatpush1.msra.mxu0 %v3994
        %v3996 = vand.u32 %v3979, 4294901760
        %3997 = vmatprep.subr.mxu0 %v3996
        %v3998 = vand.u32 %v3978, 4294901760
        %3999 = vmatpush1.msra.mxu0 %v3998
        %v4000 = vand.u32 %v3981, 4294901760
        %4001 = vmatprep.subr.mxu0 %v4000
        %v4002 = vand.u32 %v3980, 4294901760
        %4003 = vmatpush1.msra.mxu0 %v4002
        %v4004 = vand.u32 %v3986, 4294901760
        %4005 = vmatprep.subr.mxu0 %v4004
        %v4006 = vand.u32 %v3983, 4294901760
        %4007 = vmatpush1.msra.mxu0 %v4006
        %4008 = vmatprep.subr.mxu0 0.0
        %4009 = vmatpush1.msra.mxu0 0.0
        %4010 = vmatprep.subr.mxu0 0.0
        %4011 = vmatpush1.msra.mxu0 0.0
        %4012 = vmatprep.subr.mxu0 0.0
        %4013 = vmatpush1.msra.mxu0 0.0
        %4014 = vmatprep.subr.mxu0 0.0
        %4015 = vmatpush1.msra.mxu0 0.0
        %4016 = vmatprep.subr.mxu0 0.0
        %4017 = vmatpush1.msra.mxu0 0.0
        %4018 = vmatprep.subr.mxu0 0.0
        %4019 = vmatpush1.msra.mxu0 0.0
        %4020 = vmatprep.subr.mxu0 0.0
        %4021 = vmatpush1.msra.mxu0 0.0
        %4022 = vmatprep.subr.mxu0 0.0
        %4023 = vmatpush1.msra.mxu0 0.0
        %4024 = vmatprep.subr.mxu0 0.0
        %4025 = vmatpush1.msra.mxu0 0.0
        %4026 = vmatprep.subr.mxu0 0.0
        %4027 = vmatpush1.msra.mxu0 0.0
        %4028 = vmatprep.subr.mxu0 0.0
        %4029 = vmatpush1.msra.mxu0 0.0
        %4030 = vmatprep.subr.mxu0 0.0
        %4031 = vmatpush1.msra.mxu0 0.0
        %4032 = vmatprep.subr.mxu0 0.0
        %4033 = vmatpush1.msra.mxu0 0.0
        %4034 = vmatprep.subr.mxu0 0.0
        %4035 = vmatpush1.msra.mxu0 0.0
        %4036 = vmatprep.subr.mxu0 0.0
        %4037 = vmatpush1.msra.mxu0 0.0
        %4038 = vmatprep.subr.mxu0 0.0
        %4039 = vmatpush1.msra.mxu0 0.0
        %4040 = vmatprep.subr.mxu0 0.0
        %4041 = vmatpush1.msra.mxu0 0.0
        %4042 = vmatprep.subr.mxu0 0.0
        %4043 = vmatpush1.msra.mxu0 0.0
        %4044 = vmatprep.subr.mxu0 0.0
        %4045 = vmatpush1.msra.mxu0 0.0
        %4046 = vmatprep.subr.mxu0 0.0
        %4047 = vmatpush1.msra.mxu0 0.0
        %4048 = vmatprep.subr.mxu0 0.0
        %4049 = vmatpush1.msra.mxu0 0.0
        %4050 = vmatprep.subr.mxu0 0.0
        %4051 = vmatpush1.msra.mxu0 0.0
        %4052 = vmatprep.subr.mxu0 0.0
        %4053 = vmatpush1.msra.mxu0 0.0
        %4054 = vmatprep.subr.mxu0 0.0
        %4055 = vmatpush1.msra.mxu0 0.0
        %4056 = vmatprep.subr.mxu0 0.0
        %4057 = vmatpush1.msra.mxu0 0.0
        %4058 = vmatprep.subr.mxu0 0.0
        %4059 = vmatpush1.msra.mxu0 0.0
        %4060 = vmatprep.subr.mxu0 0.0
        %4061 = vmatpush1.msra.mxu0 0.0
        %4062 = vmatprep.mubr.f32.mxu0 0.0
        %v4063 = vand.u32 %v1889, 4294901760
        %v4064 = vsub.f32 %v1889, %v4063
        %v4065 = vand.u32 %v4064, 4294901760
        %v4066 = vsub.f32 %v4064, %v4065
        %v4067 = vand.u32 %v4066, 4294901760
        %4068 = vmatmul.mubr.f32.gmra.mrb[0].mxu0 %v4067
        %v4069 = vpop.f32.mrb[0].mxu0
        %v4070 = vadd.f32 %v1886, %v4069
        %v4071 = vpop.f32.mrb[0].mxu0
        %v4072 = vadd.f32 %v1886, %v4071
        %4073 = vdwg.mxu0
        %v4074 = vand.u32 %v3975, 4294901760
        %v4075 = vsub.f32 %v3975, %v4074
        %v4076 = vand.u32 %v4075, 4294901760
        %v4077 = vsub.f32 %v4075, %v4076
        %v4078 = vand.u32 %v4077, 4294901760
        %4079 = vmatprep.subr.mxu0 %v4078
        %v4080 = vand.u32 %v3974, 4294901760
        %v4081 = vsub.f32 %v3974, %v4080
        %v4082 = vand.u32 %v4081, 4294901760
        %v4083 = vsub.f32 %v4081, %v4082
        %v4084 = vand.u32 %v4083, 4294901760
        %4085 = vmatpush1.msra.mxu0 %v4084
        %v4086 = vand.u32 %v3977, 4294901760
        %v4087 = vsub.f32 %v3977, %v4086
        %v4088 = vand.u32 %v4087, 4294901760
        %v4089 = vsub.f32 %v4087, %v4088
        %v4090 = vand.u32 %v4089, 4294901760
        %4091 = vmatprep.subr.mxu0 %v4090
        %v4092 = vand.u32 %v3976, 4294901760
        %v4093 = vsub.f32 %v3976, %v4092
        %v4094 = vand.u32 %v4093, 4294901760
        %v4095 = vsub.f32 %v4093, %v4094
        %v4096 = vand.u32 %v4095, 4294901760
        %4097 = vmatpush1.msra.mxu0 %v4096
        %v4098 = vand.u32 %v3979, 4294901760
        %v4099 = vsub.f32 %v3979, %v4098
        %v4100 = vand.u32 %v4099, 4294901760
        %v4101 = vsub.f32 %v4099, %v4100
        %v4102 = vand.u32 %v4101, 4294901760
        %4103 = vmatprep.subr.mxu0 %v4102
        %v4104 = vand.u32 %v3978, 4294901760
        %v4105 = vsub.f32 %v3978, %v4104
        %v4106 = vand.u32 %v4105, 4294901760
        %v4107 = vsub.f32 %v4105, %v4106
        %v4108 = vand.u32 %v4107, 4294901760
        %4109 = vmatpush1.msra.mxu0 %v4108
        %v4110 = vand.u32 %v3981, 4294901760
        %v4111 = vsub.f32 %v3981, %v4110
        %v4112 = vand.u32 %v4111, 4294901760
        %v4113 = vsub.f32 %v4111, %v4112
        %v4114 = vand.u32 %v4113, 4294901760
        %4115 = vmatprep.subr.mxu0 %v4114
        %v4116 = vand.u32 %v3980, 4294901760
        %v4117 = vsub.f32 %v3980, %v4116
        %v4118 = vand.u32 %v4117, 4294901760
        %v4119 = vsub.f32 %v4117, %v4118
        %v4120 = vand.u32 %v4119, 4294901760
        %4121 = vmatpush1.msra.mxu0 %v4120
        %v4122 = vand.u32 %v3986, 4294901760
        %v4123 = vsub.f32 %v3986, %v4122
        %v4124 = vand.u32 %v4123, 4294901760
        %v4125 = vsub.f32 %v4123, %v4124
        %v4126 = vand.u32 %v4125, 4294901760
        %4127 = vmatprep.subr.mxu0 %v4126
        %v4128 = vand.u32 %v3983, 4294901760
        %v4129 = vsub.f32 %v3983, %v4128
        %v4130 = vand.u32 %v4129, 4294901760
        %v4131 = vsub.f32 %v4129, %v4130
        %v4132 = vand.u32 %v4131, 4294901760
        %4133 = vmatpush1.msra.mxu0 %v4132
        %4134 = vmatprep.subr.mxu0 0.0
        %4135 = vmatpush1.msra.mxu0 0.0
        %4136 = vmatprep.subr.mxu0 0.0
        %4137 = vmatpush1.msra.mxu0 0.0
        %4138 = vmatprep.subr.mxu0 0.0
        %4139 = vmatpush1.msra.mxu0 0.0
        %4140 = vmatprep.subr.mxu0 0.0
        %4141 = vmatpush1.msra.mxu0 0.0
        %4142 = vmatprep.subr.mxu0 0.0
        %4143 = vmatpush1.msra.mxu0 0.0
        %4144 = vmatprep.subr.mxu0 0.0
        %4145 = vmatpush1.msra.mxu0 0.0
        %4146 = vmatprep.subr.mxu0 0.0
        %4147 = vmatpush1.msra.mxu0 0.0
        %4148 = vmatprep.subr.mxu0 0.0
        %4149 = vmatpush1.msra.mxu0 0.0
        %4150 = vmatprep.subr.mxu0 0.0
        %4151 = vmatpush1.msra.mxu0 0.0
        %4152 = vmatprep.subr.mxu0 0.0
        %4153 = vmatpush1.msra.mxu0 0.0
        %4154 = vmatprep.subr.mxu0 0.0
        %4155 = vmatpush1.msra.mxu0 0.0
        %4156 = vmatprep.subr.mxu0 0.0
        %4157 = vmatpush1.msra.mxu0 0.0
        %4158 = vmatprep.subr.mxu0 0.0
        %4159 = vmatpush1.msra.mxu0 0.0
        %4160 = vmatprep.subr.mxu0 0.0
        %4161 = vmatpush1.msra.mxu0 0.0
        %4162 = vmatprep.subr.mxu0 0.0
        %4163 = vmatpush1.msra.mxu0 0.0
        %4164 = vmatprep.subr.mxu0 0.0
        %4165 = vmatpush1.msra.mxu0 0.0
        %4166 = vmatprep.subr.mxu0 0.0
        %4167 = vmatpush1.msra.mxu0 0.0
        %4168 = vmatprep.subr.mxu0 0.0
        %4169 = vmatpush1.msra.mxu0 0.0
        %4170 = vmatprep.subr.mxu0 0.0
        %4171 = vmatpush1.msra.mxu0 0.0
        %4172 = vmatprep.subr.mxu0 0.0
        %4173 = vmatpush1.msra.mxu0 0.0
        %4174 = vmatprep.subr.mxu0 0.0
        %4175 = vmatpush1.msra.mxu0 0.0
        %4176 = vmatprep.subr.mxu0 0.0
        %4177 = vmatpush1.msra.mxu0 0.0
        %4178 = vmatprep.subr.mxu0 0.0
        %4179 = vmatpush1.msra.mxu0 0.0
        %4180 = vmatprep.subr.mxu0 0.0
        %4181 = vmatpush1.msra.mxu0 0.0
        %4182 = vmatprep.subr.mxu0 0.0
        %4183 = vmatpush1.msra.mxu0 0.0
        %4184 = vmatprep.subr.mxu0 0.0
        %4185 = vmatpush1.msra.mxu0 0.0
        %4186 = vmatprep.subr.mxu0 0.0
        %4187 = vmatpush1.msra.mxu0 0.0
        %4188 = vmatprep.mubr.f32.mxu0 0.0
        %v4189 = vand.u32 %v1889, 4294901760
        %4190 = vmatmul.mubr.f32.gmra.mrb[0].mxu0 %v4189
        %v4191 = vpop.f32.mrb[0].mxu0
        %v4192 = vadd.f32 %v4070, %v4191
        %v4193 = vpop.f32.mrb[0].mxu0
        %v4194 = vadd.f32 %v4072, %v4193
        %4195 = vdwg.mxu0
        %v4196 = vand.u32 %v3975, 4294901760
        %v4197 = vsub.f32 %v3975, %v4196
        %4198 = vmatprep.subr.mxu0 %v4197
        %v4199 = vand.u32 %v3974, 4294901760
        %v4200 = vsub.f32 %v3974, %v4199
        %4201 = vmatpush1.msra.mxu0 %v4200
        %v4202 = vand.u32 %v3977, 4294901760
        %v4203 = vsub.f32 %v3977, %v4202
        %4204 = vmatprep.subr.mxu0 %v4203
        %v4205 = vand.u32 %v3976, 4294901760
        %v4206 = vsub.f32 %v3976, %v4205
        %4207 = vmatpush1.msra.mxu0 %v4206
        %v4208 = vand.u32 %v3979, 4294901760
        %v4209 = vsub.f32 %v3979, %v4208
        %4210 = vmatprep.subr.mxu0 %v4209
        %v4211 = vand.u32 %v3978, 4294901760
        %v4212 = vsub.f32 %v3978, %v4211
        %4213 = vmatpush1.msra.mxu0 %v4212
        %v4214 = vand.u32 %v3981, 4294901760
        %v4215 = vsub.f32 %v3981, %v4214
        %4216 = vmatprep.subr.mxu0 %v4215
        %v4217 = vand.u32 %v3980, 4294901760
        %v4218 = vsub.f32 %v3980, %v4217
        %4219 = vmatpush1.msra.mxu0 %v4218
        %v4220 = vand.u32 %v3986, 4294901760
        %v4221 = vsub.f32 %v3986, %v4220
        %4222 = vmatprep.subr.mxu0 %v4221
        %v4223 = vand.u32 %v3983, 4294901760
        %v4224 = vsub.f32 %v3983, %v4223
        %4225 = vmatpush1.msra.mxu0 %v4224
        %4226 = vmatprep.subr.mxu0 0.0
        %4227 = vmatpush1.msra.mxu0 0.0
        %4228 = vmatprep.subr.mxu0 0.0
        %4229 = vmatpush1.msra.mxu0 0.0
        %4230 = vmatprep.subr.mxu0 0.0
        %4231 = vmatpush1.msra.mxu0 0.0
        %4232 = vmatprep.subr.mxu0 0.0
        %4233 = vmatpush1.msra.mxu0 0.0
        %4234 = vmatprep.subr.mxu0 0.0
        %4235 = vmatpush1.msra.mxu0 0.0
        %4236 = vmatprep.subr.mxu0 0.0
        %4237 = vmatpush1.msra.mxu0 0.0
        %4238 = vmatprep.subr.mxu0 0.0
        %4239 = vmatpush1.msra.mxu0 0.0
        %4240 = vmatprep.subr.mxu0 0.0
        %4241 = vmatpush1.msra.mxu0 0.0
        %4242 = vmatprep.subr.mxu0 0.0
        %4243 = vmatpush1.msra.mxu0 0.0
        %4244 = vmatprep.subr.mxu0 0.0
        %4245 = vmatpush1.msra.mxu0 0.0
        %4246 = vmatprep.subr.mxu0 0.0
        %4247 = vmatpush1.msra.mxu0 0.0
        %4248 = vmatprep.subr.mxu0 0.0
        %4249 = vmatpush1.msra.mxu0 0.0
        %4250 = vmatprep.subr.mxu0 0.0
        %4251 = vmatpush1.msra.mxu0 0.0
        %4252 = vmatprep.subr.mxu0 0.0
        %4253 = vmatpush1.msra.mxu0 0.0
        %4254 = vmatprep.subr.mxu0 0.0
        %4255 = vmatpush1.msra.mxu0 0.0
        %4256 = vmatprep.subr.mxu0 0.0
        %4257 = vmatpush1.msra.mxu0 0.0
        %4258 = vmatprep.subr.mxu0 0.0
        %4259 = vmatpush1.msra.mxu0 0.0
        %4260 = vmatprep.subr.mxu0 0.0
        %4261 = vmatpush1.msra.mxu0 0.0
        %4262 = vmatprep.subr.mxu0 0.0
        %4263 = vmatpush1.msra.mxu0 0.0
        %4264 = vmatprep.subr.mxu0 0.0
        %4265 = vmatpush1.msra.mxu0 0.0
        %4266 = vmatprep.subr.mxu0 0.0
        %4267 = vmatpush1.msra.mxu0 0.0
        %4268 = vmatprep.subr.mxu0 0.0
        %4269 = vmatpush1.msra.mxu0 0.0
        %4270 = vmatprep.subr.mxu0 0.0
        %4271 = vmatpush1.msra.mxu0 0.0
        %4272 = vmatprep.subr.mxu0 0.0
        %4273 = vmatpush1.msra.mxu0 0.0
        %4274 = vmatprep.subr.mxu0 0.0
        %4275 = vmatpush1.msra.mxu0 0.0
        %4276 = vmatprep.subr.mxu0 0.0
        %4277 = vmatpush1.msra.mxu0 0.0
        %4278 = vmatprep.subr.mxu0 0.0
        %4279 = vmatpush1.msra.mxu0 0.0
        %4280 = vmatprep.mubr.f32.mxu0 0.0
        %v4281 = vand.u32 %v1889, 4294901760
        %v4282 = vsub.f32 %v1889, %v4281
        %4283 = vmatmul.mubr.f32.gmra.mrb[0].mxu0 %v4282
        %v4284 = vpop.f32.mrb[0].mxu0
        %v4285 = vadd.f32 %v4192, %v4284
        %v4286 = vpop.f32.mrb[0].mxu0
        %v4287 = vadd.f32 %v4194, %v4286
        %4288 = vdwg.mxu0
        %v4289 = vand.u32 %v3975, 4294901760
        %4290 = vmatprep.subr.mxu0 %v4289
        %v4291 = vand.u32 %v3974, 4294901760
        %4292 = vmatpush1.msra.mxu0 %v4291
        %v4293 = vand.u32 %v3977, 4294901760
        %4294 = vmatprep.subr.mxu0 %v4293
        %v4295 = vand.u32 %v3976, 4294901760
        %4296 = vmatpush1.msra.mxu0 %v4295
        %v4297 = vand.u32 %v3979, 4294901760
        %4298 = vmatprep.subr.mxu0 %v4297
        %v4299 = vand.u32 %v3978, 4294901760
        %4300 = vmatpush1.msra.mxu0 %v4299
        %v4301 = vand.u32 %v3981, 4294901760
        %4302 = vmatprep.subr.mxu0 %v4301
        %v4303 = vand.u32 %v3980, 4294901760
        %4304 = vmatpush1.msra.mxu0 %v4303
        %v4305 = vand.u32 %v3986, 4294901760
        %4306 = vmatprep.subr.mxu0 %v4305
        %v4307 = vand.u32 %v3983, 4294901760
        %4308 = vmatpush1.msra.mxu0 %v4307
        %4309 = vmatprep.subr.mxu0 0.0
        %4310 = vmatpush1.msra.mxu0 0.0
        %4311 = vmatprep.subr.mxu0 0.0
        %4312 = vmatpush1.msra.mxu0 0.0
        %4313 = vmatprep.subr.mxu0 0.0
        %4314 = vmatpush1.msra.mxu0 0.0
        %4315 = vmatprep.subr.mxu0 0.0
        %4316 = vmatpush1.msra.mxu0 0.0
        %4317 = vmatprep.subr.mxu0 0.0
        %4318 = vmatpush1.msra.mxu0 0.0
        %4319 = vmatprep.subr.mxu0 0.0
        %4320 = vmatpush1.msra.mxu0 0.0
        %4321 = vmatprep.subr.mxu0 0.0
        %4322 = vmatpush1.msra.mxu0 0.0
        %4323 = vmatprep.subr.mxu0 0.0
        %4324 = vmatpush1.msra.mxu0 0.0
        %4325 = vmatprep.subr.mxu0 0.0
        %4326 = vmatpush1.msra.mxu0 0.0
        %4327 = vmatprep.subr.mxu0 0.0
        %4328 = vmatpush1.msra.mxu0 0.0
        %4329 = vmatprep.subr.mxu0 0.0
        %4330 = vmatpush1.msra.mxu0 0.0
        %4331 = vmatprep.subr.mxu0 0.0
        %4332 = vmatpush1.msra.mxu0 0.0
        %4333 = vmatprep.subr.mxu0 0.0
        %4334 = vmatpush1.msra.mxu0 0.0
        %4335 = vmatprep.subr.mxu0 0.0
        %4336 = vmatpush1.msra.mxu0 0.0
        %4337 = vmatprep.subr.mxu0 0.0
        %4338 = vmatpush1.msra.mxu0 0.0
        %4339 = vmatprep.subr.mxu0 0.0
        %4340 = vmatpush1.msra.mxu0 0.0
        %4341 = vmatprep.subr.mxu0 0.0
        %4342 = vmatpush1.msra.mxu0 0.0
        %4343 = vmatprep.subr.mxu0 0.0
        %4344 = vmatpush1.msra.mxu0 0.0
        %4345 = vmatprep.subr.mxu0 0.0
        %4346 = vmatpush1.msra.mxu0 0.0
        %4347 = vmatprep.subr.mxu0 0.0
        %4348 = vmatpush1.msra.mxu0 0.0
        %4349 = vmatprep.subr.mxu0 0.0
        %4350 = vmatpush1.msra.mxu0 0.0
        %4351 = vmatprep.subr.mxu0 0.0
        %4352 = vmatpush1.msra.mxu0 0.0
        %4353 = vmatprep.subr.mxu0 0.0
        %4354 = vmatpush1.msra.mxu0 0.0
        %4355 = vmatprep.subr.mxu0 0.0
        %4356 = vmatpush1.msra.mxu0 0.0
        %4357 = vmatprep.subr.mxu0 0.0
        %4358 = vmatpush1.msra.mxu0 0.0
        %4359 = vmatprep.subr.mxu0 0.0
        %4360 = vmatpush1.msra.mxu0 0.0
        %4361 = vmatprep.subr.mxu0 0.0
        %4362 = vmatpush1.msra.mxu0 0.0
        %4363 = vmatprep.mubr.f32.mxu0 0.0
        %v4364 = vand.u32 %v1889, 4294901760
        %v4365 = vsub.f32 %v1889, %v4364
        %v4366 = vand.u32 %v4365, 4294901760
        %4367 = vmatmul.mubr.f32.gmra.mrb[0].mxu0 %v4366
        %v4368 = vpop.f32.mrb[0].mxu0
        %v4369 = vadd.f32 %v4285, %v4368
        %v4370 = vpop.f32.mrb[0].mxu0
        %v4371 = vadd.f32 %v4287, %v4370
        %4372 = vdwg.mxu0
        %v4373 = vand.u32 %v3975, 4294901760
        %v4374 = vsub.f32 %v3975, %v4373
        %v4375 = vand.u32 %v4374, 4294901760
        %4376 = vmatprep.subr.mxu0 %v4375
        %v4377 = vand.u32 %v3974, 4294901760
        %v4378 = vsub.f32 %v3974, %v4377
        %v4379 = vand.u32 %v4378, 4294901760
        %4380 = vmatpush1.msra.mxu0 %v4379
        %v4381 = vand.u32 %v3977, 4294901760
        %v4382 = vsub.f32 %v3977, %v4381
        %v4383 = vand.u32 %v4382, 4294901760
        %4384 = vmatprep.subr.mxu0 %v4383
        %v4385 = vand.u32 %v3976, 4294901760
        %v4386 = vsub.f32 %v3976, %v4385
        %v4387 = vand.u32 %v4386, 4294901760
        %4388 = vmatpush1.msra.mxu0 %v4387
        %v4389 = vand.u32 %v3979, 4294901760
        %v4390 = vsub.f32 %v3979, %v4389
        %v4391 = vand.u32 %v4390, 4294901760
        %4392 = vmatprep.subr.mxu0 %v4391
        %v4393 = vand.u32 %v3978, 4294901760
        %v4394 = vsub.f32 %v3978, %v4393
        %v4395 = vand.u32 %v4394, 4294901760
        %4396 = vmatpush1.msra.mxu0 %v4395
        %v4397 = vand.u32 %v3981, 4294901760
        %v4398 = vsub.f32 %v3981, %v4397
        %v4399 = vand.u32 %v4398, 4294901760
        %4400 = vmatprep.subr.mxu0 %v4399
        %v4401 = vand.u32 %v3980, 4294901760
        %v4402 = vsub.f32 %v3980, %v4401
        %v4403 = vand.u32 %v4402, 4294901760
        %4404 = vmatpush1.msra.mxu0 %v4403
        %v4405 = vand.u32 %v3986, 4294901760
        %v4406 = vsub.f32 %v3986, %v4405
        %v4407 = vand.u32 %v4406, 4294901760
        %4408 = vmatprep.subr.mxu0 %v4407
        %v4409 = vand.u32 %v3983, 4294901760
        %v4410 = vsub.f32 %v3983, %v4409
        %v4411 = vand.u32 %v4410, 4294901760
        %4412 = vmatpush1.msra.mxu0 %v4411
        %4413 = vmatprep.subr.mxu0 0.0
        %4414 = vmatpush1.msra.mxu0 0.0
        %4415 = vmatprep.subr.mxu0 0.0
        %4416 = vmatpush1.msra.mxu0 0.0
        %4417 = vmatprep.subr.mxu0 0.0
        %4418 = vmatpush1.msra.mxu0 0.0
        %4419 = vmatprep.subr.mxu0 0.0
        %4420 = vmatpush1.msra.mxu0 0.0
        %4421 = vmatprep.subr.mxu0 0.0
        %4422 = vmatpush1.msra.mxu0 0.0
        %4423 = vmatprep.subr.mxu0 0.0
        %4424 = vmatpush1.msra.mxu0 0.0
        %4425 = vmatprep.subr.mxu0 0.0
        %4426 = vmatpush1.msra.mxu0 0.0
        %4427 = vmatprep.subr.mxu0 0.0
        %4428 = vmatpush1.msra.mxu0 0.0
        %4429 = vmatprep.subr.mxu0 0.0
        %4430 = vmatpush1.msra.mxu0 0.0
        %4431 = vmatprep.subr.mxu0 0.0
        %4432 = vmatpush1.msra.mxu0 0.0
        %4433 = vmatprep.subr.mxu0 0.0
        %4434 = vmatpush1.msra.mxu0 0.0
        %4435 = vmatprep.subr.mxu0 0.0
        %4436 = vmatpush1.msra.mxu0 0.0
        %4437 = vmatprep.subr.mxu0 0.0
        %4438 = vmatpush1.msra.mxu0 0.0
        %4439 = vmatprep.subr.mxu0 0.0
        %4440 = vmatpush1.msra.mxu0 0.0
        %4441 = vmatprep.subr.mxu0 0.0
        %4442 = vmatpush1.msra.mxu0 0.0
        %4443 = vmatprep.subr.mxu0 0.0
        %4444 = vmatpush1.msra.mxu0 0.0
        %4445 = vmatprep.subr.mxu0 0.0
        %4446 = vmatpush1.msra.mxu0 0.0
        %4447 = vmatprep.subr.mxu0 0.0
        %4448 = vmatpush1.msra.mxu0 0.0
        %4449 = vmatprep.subr.mxu0 0.0
        %4450 = vmatpush1.msra.mxu0 0.0
        %4451 = vmatprep.subr.mxu0 0.0
        %4452 = vmatpush1.msra.mxu0 0.0
        %4453 = vmatprep.subr.mxu0 0.0
        %4454 = vmatpush1.msra.mxu0 0.0
        %4455 = vmatprep.subr.mxu0 0.0
        %4456 = vmatpush1.msra.mxu0 0.0
        %4457 = vmatprep.subr.mxu0 0.0
        %4458 = vmatpush1.msra.mxu0 0.0
        %4459 = vmatprep.subr.mxu0 0.0
        %4460 = vmatpush1.msra.mxu0 0.0
        %4461 = vmatprep.subr.mxu0 0.0
        %4462 = vmatpush1.msra.mxu0 0.0
        %4463 = vmatprep.subr.mxu0 0.0
        %4464 = vmatpush1.msra.mxu0 0.0
        %4465 = vmatprep.subr.mxu0 0.0
        %4466 = vmatpush1.msra.mxu0 0.0
        %4467 = vmatprep.mubr.f32.mxu0 0.0
        %v4468 = vand.u32 %v1889, 4294901760
        %4469 = vmatmul.mubr.f32.gmra.mrb[0].mxu0 %v4468
        %v4470 = vpop.f32.mrb[0].mxu0
        %v4471 = vadd.f32 %v4369, %v4470
        %v4472 = vpop.f32.mrb[0].mxu0
        %v4473 = vadd.f32 %v4371, %v4472
        %4474 = vdwg.mxu0
        %v4475 = vand.u32 %v3975, 4294901760
        %4476 = vmatprep.subr.mxu0 %v4475
        %v4477 = vand.u32 %v3974, 4294901760
        %4478 = vmatpush1.msra.mxu0 %v4477
        %v4479 = vand.u32 %v3977, 4294901760
        %4480 = vmatprep.subr.mxu0 %v4479
        %v4481 = vand.u32 %v3976, 4294901760
        %4482 = vmatpush1.msra.mxu0 %v4481
        %v4483 = vand.u32 %v3979, 4294901760
        %4484 = vmatprep.subr.mxu0 %v4483
        %v4485 = vand.u32 %v3978, 4294901760
        %4486 = vmatpush1.msra.mxu0 %v4485
        %v4487 = vand.u32 %v3981, 4294901760
        %4488 = vmatprep.subr.mxu0 %v4487
        %v4489 = vand.u32 %v3980, 4294901760
        %4490 = vmatpush1.msra.mxu0 %v4489
        %v4491 = vand.u32 %v3986, 4294901760
        %4492 = vmatprep.subr.mxu0 %v4491
        %v4493 = vand.u32 %v3983, 4294901760
        %4494 = vmatpush1.msra.mxu0 %v4493
        %4495 = vmatprep.subr.mxu0 0.0
        %4496 = vmatpush1.msra.mxu0 0.0
        %4497 = vmatprep.subr.mxu0 0.0
        %4498 = vmatpush1.msra.mxu0 0.0
        %4499 = vmatprep.subr.mxu0 0.0
        %4500 = vmatpush1.msra.mxu0 0.0
        %4501 = vmatprep.subr.mxu0 0.0
        %4502 = vmatpush1.msra.mxu0 0.0
        %4503 = vmatprep.subr.mxu0 0.0
        %4504 = vmatpush1.msra.mxu0 0.0
        %4505 = vmatprep.subr.mxu0 0.0
        %4506 = vmatpush1.msra.mxu0 0.0
        %4507 = vmatprep.subr.mxu0 0.0
        %4508 = vmatpush1.msra.mxu0 0.0
        %4509 = vmatprep.subr.mxu0 0.0
        %4510 = vmatpush1.msra.mxu0 0.0
        %4511 = vmatprep.subr.mxu0 0.0
        %4512 = vmatpush1.msra.mxu0 0.0
        %4513 = vmatprep.subr.mxu0 0.0
        %4514 = vmatpush1.msra.mxu0 0.0
        %4515 = vmatprep.subr.mxu0 0.0
        %4516 = vmatpush1.msra.mxu0 0.0
        %4517 = vmatprep.subr.mxu0 0.0
        %4518 = vmatpush1.msra.mxu0 0.0
        %4519 = vmatprep.subr.mxu0 0.0
        %4520 = vmatpush1.msra.mxu0 0.0
        %4521 = vmatprep.subr.mxu0 0.0
        %4522 = vmatpush1.msra.mxu0 0.0
        %4523 = vmatprep.subr.mxu0 0.0
        %4524 = vmatpush1.msra.mxu0 0.0
        %4525 = vmatprep.subr.mxu0 0.0
        %4526 = vmatpush1.msra.mxu0 0.0
        %4527 = vmatprep.subr.mxu0 0.0
        %4528 = vmatpush1.msra.mxu0 0.0
        %4529 = vmatprep.subr.mxu0 0.0
        %4530 = vmatpush1.msra.mxu0 0.0
        %4531 = vmatprep.subr.mxu0 0.0
        %4532 = vmatpush1.msra.mxu0 0.0
        %4533 = vmatprep.subr.mxu0 0.0
        %4534 = vmatpush1.msra.mxu0 0.0
        %4535 = vmatprep.subr.mxu0 0.0
        %4536 = vmatpush1.msra.mxu0 0.0
        %4537 = vmatprep.subr.mxu0 0.0
        %4538 = vmatpush1.msra.mxu0 0.0
        %4539 = vmatprep.subr.mxu0 0.0
        %4540 = vmatpush1.msra.mxu0 0.0
        %4541 = vmatprep.subr.mxu0 0.0
        %4542 = vmatpush1.msra.mxu0 0.0
        %4543 = vmatprep.subr.mxu0 0.0
        %4544 = vmatpush1.msra.mxu0 0.0
        %4545 = vmatprep.subr.mxu0 0.0
        %4546 = vmatpush1.msra.mxu0 0.0
        %4547 = vmatprep.subr.mxu0 0.0
        %4548 = vmatpush1.msra.mxu0 0.0
        %4549 = vmatprep.mubr.f32.mxu0 0.0
        %v4550 = vand.u32 %v1889, 4294901760
        %4551 = vmatmul.mubr.f32.gmra.mrb[0].mxu0 %v4550
        %v4552 = vpop.f32.mrb[0].mxu0
        %v4553 = vadd.f32 %v4471, %v4552
        %v4554 = vpop.f32.mrb[0].mxu0
        %v4555 = vadd.f32 %v4473, %v4554
        %4556 = vdwg.mxu0
        %v4557 = vadd.f32 %v4553, %v2466
        %v4558 = vadd.f32 %v4555, %v2467
        %4561 = vrot.lane.b32.xlu0 %v4557, 17
        %v4562 = vpop.permute.xlu0 %4561
        %4563 = vrot.lane.b32.xlu0 %v4558, 17
        %v4564 = vpop.permute.xlu0 %4563
        %v4565 = vsel %vm333, %v4562, %v4564
        %v4568 = vsel %vm333, 0.0, %v4562
        %v4569 = vsel %vm340, %v4568, 0.0
        %v4570 = vsel %vm341, %v4565, 0.0
        %4571 = vrot.lane.b32.xlu0 %v4557, 16
        %v4572 = vpop.permute.xlu0 %4571
        %4573 = vrot.lane.b32.xlu0 %v4558, 16
        %v4574 = vpop.permute.xlu0 %4573
        %v4575 = vsel %vm348, %v4572, %v4574
        %v4577 = vsel %vm348, 0.0, %v4572
        %4578 = vrot.lane.b32.xlu0 %v4557, 15
        %v4579 = vpop.permute.xlu0 %4578
        %4580 = vrot.lane.b32.xlu0 %v4558, 15
        %v4581 = vpop.permute.xlu0 %4580
        %v4582 = vsel %vm356, %v4579, %v4581
        %v4585 = vsel %vm356, 0.0, %v4579
        %v4586 = vsel %vm363, %v4585, 0.0
        %v4587 = vsel %vm364, %v4582, 0.0
        %4588 = vrot.lane.b32.xlu0 %v4557, 1
        %v4589 = vpop.permute.xlu0 %4588
        %4590 = vrot.lane.b32.xlu0 %v4558, 1
        %v4591 = vpop.permute.xlu0 %4590
        %v4592 = vsel %vm371, %v4589, %v4591
        %v4595 = vsel %vm371, 0.0, %v4589
        %v4596 = vsel %vm340, %v4595, 0.0
        %v4597 = vsel %vm341, %v4592, 0.0
        %4598 = vrot.lane.b32.xlu0 %v4557, 127
        %v4599 = vpop.permute.xlu0 %4598
        %4600 = vrot.lane.b32.xlu0 %v4558, 127
        %v4601 = vpop.permute.xlu0 %4600
        %v4602 = vsel %vm382, %v4599, %v4601
        %v4605 = vsel %vm382, %v4601, 0.0
        %v4606 = vsel %vm363, %v4602, 0.0
        %v4607 = vsel %vm364, %v4605, 0.0
        %4608 = vrot.lane.b32.xlu0 %v4557, 113
        %v4609 = vpop.permute.xlu0 %4608
        %4610 = vrot.lane.b32.xlu0 %v4558, 113
        %v4611 = vpop.permute.xlu0 %4610
        %v4612 = vsel %vm393, %v4609, %v4611
        %v4615 = vsel %vm393, %v4611, 0.0
        %v4616 = vsel %vm340, %v4612, 0.0
        %v4617 = vsel %vm341, %v4615, 0.0
        %4618 = vrot.lane.b32.xlu0 %v4557, 112
        %v4619 = vpop.permute.xlu0 %4618
        %4620 = vrot.lane.b32.xlu0 %v4558, 112
        %v4621 = vpop.permute.xlu0 %4620
        %v4622 = vsel %vm404, %v4619, %v4621
        %v4624 = vsel %vm404, %v4621, 0.0
        %4625 = vrot.lane.b32.xlu0 %v4557, 111
        %v4626 = vpop.permute.xlu0 %4625
        %4627 = vrot.lane.b32.xlu0 %v4558, 111
        %v4628 = vpop.permute.xlu0 %4627
        %v4629 = vsel %vm412, %v4626, %v4628
        %v4632 = vsel %vm412, %v4628, 0.0
        %v4633 = vsel %vm363, %v4629, 0.0
        %v4634 = vsel %vm364, %v4632, 0.0
        %v4636 = vrot.slane %v4577, 4
        %v4637 = vrot.slane %v4575, 4
        %v4642 = vrot.slane %v4596, 4
        %v4643 = vrot.slane %v4597, 4
        %v4648 = vrot.slane %v4606, 4
        %v4649 = vrot.slane %v4607, 4
        %v4653 = vrot.slane %v4622, 4
        %v4654 = vrot.slane %v4624, 4
        %v4657 = vsel %vm442, %v4569, %v4636
        %v4658 = vsel %vm442, %v4570, %v4637
        %v4659 = vsel %vm442, %v4586, %v4642
        %v4660 = vsel %vm442, %v4587, %v4643
        %v4661 = vsel %vm442, %v4557, %v4648
        %v4662 = vsel %vm442, %v4558, %v4649
        %v4663 = vsel %vm442, %v4616, %v4653
        %v4664 = vsel %vm442, %v4617, %v4654
        %v4666 = vsel %vm442, %v4633, 0
        %v4669 = vsel %vm442, %v4634, 0
        %v4671 = vand.u32 %v4658, 4294901760
        %4672 = vmatprep.subr.mxu0 %v4671
        %v4673 = vand.u32 %v4657, 4294901760
        %4674 = vmatpush1.msra.mxu0 %v4673
        %v4675 = vand.u32 %v4660, 4294901760
        %4676 = vmatprep.subr.mxu0 %v4675
        %v4677 = vand.u32 %v4659, 4294901760
        %4678 = vmatpush1.msra.mxu0 %v4677
        %v4679 = vand.u32 %v4662, 4294901760
        %4680 = vmatprep.subr.mxu0 %v4679
        %v4681 = vand.u32 %v4661, 4294901760
        %4682 = vmatpush1.msra.mxu0 %v4681
        %v4683 = vand.u32 %v4664, 4294901760
        %4684 = vmatprep.subr.mxu0 %v4683
        %v4685 = vand.u32 %v4663, 4294901760
        %4686 = vmatpush1.msra.mxu0 %v4685
        %v4687 = vand.u32 %v4669, 4294901760
        %4688 = vmatprep.subr.mxu0 %v4687
        %v4689 = vand.u32 %v4666, 4294901760
        %4690 = vmatpush1.msra.mxu0 %v4689
        %4691 = vmatprep.subr.mxu0 0.0
        %4692 = vmatpush1.msra.mxu0 0.0
        %4693 = vmatprep.subr.mxu0 0.0
        %4694 = vmatpush1.msra.mxu0 0.0
        %4695 = vmatprep.subr.mxu0 0.0
        %4696 = vmatpush1.msra.mxu0 0.0
        %4697 = vmatprep.subr.mxu0 0.0
        %4698 = vmatpush1.msra.mxu0 0.0
        %4699 = vmatprep.subr.mxu0 0.0
        %4700 = vmatpush1.msra.mxu0 0.0
        %4701 = vmatprep.subr.mxu0 0.0
        %4702 = vmatpush1.msra.mxu0 0.0
        %4703 = vmatprep.subr.mxu0 0.0
        %4704 = vmatpush1.msra.mxu0 0.0
        %4705 = vmatprep.subr.mxu0 0.0
        %4706 = vmatpush1.msra.mxu0 0.0
        %4707 = vmatprep.subr.mxu0 0.0
        %4708 = vmatpush1.msra.mxu0 0.0
        %4709 = vmatprep.subr.mxu0 0.0
        %4710 = vmatpush1.msra.mxu0 0.0
        %4711 = vmatprep.subr.mxu0 0.0
        %4712 = vmatpush1.msra.mxu0 0.0
        %4713 = vmatprep.subr.mxu0 0.0
        %4714 = vmatpush1.msra.mxu0 0.0
        %4715 = vmatprep.subr.mxu0 0.0
        %4716 = vmatpush1.msra.mxu0 0.0
        %4717 = vmatprep.subr.mxu0 0.0
        %4718 = vmatpush1.msra.mxu0 0.0
        %4719 = vmatprep.subr.mxu0 0.0
        %4720 = vmatpush1.msra.mxu0 0.0
        %4721 = vmatprep.subr.mxu0 0.0
        %4722 = vmatpush1.msra.mxu0 0.0
        %4723 = vmatprep.subr.mxu0 0.0
        %4724 = vmatpush1.msra.mxu0 0.0
        %4725 = vmatprep.subr.mxu0 0.0
        %4726 = vmatpush1.msra.mxu0 0.0
        %4727 = vmatprep.subr.mxu0 0.0
        %4728 = vmatpush1.msra.mxu0 0.0
        %4729 = vmatprep.subr.mxu0 0.0
        %4730 = vmatpush1.msra.mxu0 0.0
        %4731 = vmatprep.subr.mxu0 0.0
        %4732 = vmatpush1.msra.mxu0 0.0
        %4733 = vmatprep.subr.mxu0 0.0
        %4734 = vmatpush1.msra.mxu0 0.0
        %4735 = vmatprep.subr.mxu0 0.0
        %4736 = vmatpush1.msra.mxu0 0.0
        %4737 = vmatprep.subr.mxu0 0.0
        %4738 = vmatpush1.msra.mxu0 0.0
        %4739 = vmatprep.subr.mxu0 0.0
        %4740 = vmatpush1.msra.mxu0 0.0
        %4741 = vmatprep.subr.mxu0 0.0
        %4742 = vmatpush1.msra.mxu0 0.0
        %4743 = vmatprep.subr.mxu0 0.0
        %4744 = vmatpush1.msra.mxu0 0.0
        %4745 = vmatprep.mubr.f32.mxu0 0.0
        %v4746 = vand.u32 %v460, 4294901760
        %v4747 = vsub.f32 %v460, %v4746
        %v4748 = vand.u32 %v4747, 4294901760
        %v4749 = vsub.f32 %v4747, %v4748
        %v4750 = vand.u32 %v4749, 4294901760
        %4751 = vmatmul.mubr.f32.gmra.mrb[0].mxu0 %v4750
        %v4752 = vpop.f32.mrb[0].mxu0
        %v4753 = vadd.f32 %v456, %v4752
        %v4754 = vpop.f32.mrb[0].mxu0
        %v4755 = vadd.f32 %v456, %v4754
        %4756 = vdwg.mxu0
        %v4757 = vand.u32 %v4658, 4294901760
        %v4758 = vsub.f32 %v4658, %v4757
        %v4759 = vand.u32 %v4758, 4294901760
        %v4760 = vsub.f32 %v4758, %v4759
        %v4761 = vand.u32 %v4760, 4294901760
        %4762 = vmatprep.subr.mxu0 %v4761
        %v4763 = vand.u32 %v4657, 4294901760
        %v4764 = vsub.f32 %v4657, %v4763
        %v4765 = vand.u32 %v4764, 4294901760
        %v4766 = vsub.f32 %v4764, %v4765
        %v4767 = vand.u32 %v4766, 4294901760
        %4768 = vmatpush1.msra.mxu0 %v4767
        %v4769 = vand.u32 %v4660, 4294901760
        %v4770 = vsub.f32 %v4660, %v4769
        %v4771 = vand.u32 %v4770, 4294901760
        %v4772 = vsub.f32 %v4770, %v4771
        %v4773 = vand.u32 %v4772, 4294901760
        %4774 = vmatprep.subr.mxu0 %v4773
        %v4775 = vand.u32 %v4659, 4294901760
        %v4776 = vsub.f32 %v4659, %v4775
        %v4777 = vand.u32 %v4776, 4294901760
        %v4778 = vsub.f32 %v4776, %v4777
        %v4779 = vand.u32 %v4778, 4294901760
        %4780 = vmatpush1.msra.mxu0 %v4779
        %v4781 = vand.u32 %v4662, 4294901760
        %v4782 = vsub.f32 %v4662, %v4781
        %v4783 = vand.u32 %v4782, 4294901760
        %v4784 = vsub.f32 %v4782, %v4783
        %v4785 = vand.u32 %v4784, 4294901760
        %4786 = vmatprep.subr.mxu0 %v4785
        %v4787 = vand.u32 %v4661, 4294901760
        %v4788 = vsub.f32 %v4661, %v4787
        %v4789 = vand.u32 %v4788, 4294901760
        %v4790 = vsub.f32 %v4788, %v4789
        %v4791 = vand.u32 %v4790, 4294901760
        %4792 = vmatpush1.msra.mxu0 %v4791
        %v4793 = vand.u32 %v4664, 4294901760
        %v4794 = vsub.f32 %v4664, %v4793
        %v4795 = vand.u32 %v4794, 4294901760
        %v4796 = vsub.f32 %v4794, %v4795
        %v4797 = vand.u32 %v4796, 4294901760
        %4798 = vmatprep.subr.mxu0 %v4797
        %v4799 = vand.u32 %v4663, 4294901760
        %v4800 = vsub.f32 %v4663, %v4799
        %v4801 = vand.u32 %v4800, 4294901760
        %v4802 = vsub.f32 %v4800, %v4801
        %v4803 = vand.u32 %v4802, 4294901760
        %4804 = vmatpush1.msra.mxu0 %v4803
        %v4805 = vand.u32 %v4669, 4294901760
        %v4806 = vsub.f32 %v4669, %v4805
        %v4807 = vand.u32 %v4806, 4294901760
        %v4808 = vsub.f32 %v4806, %v4807
        %v4809 = vand.u32 %v4808, 4294901760
        %4810 = vmatprep.subr.mxu0 %v4809
        %v4811 = vand.u32 %v4666, 4294901760
        %v4812 = vsub.f32 %v4666, %v4811
        %v4813 = vand.u32 %v4812, 4294901760
        %v4814 = vsub.f32 %v4812, %v4813
        %v4815 = vand.u32 %v4814, 4294901760
        %4816 = vmatpush1.msra.mxu0 %v4815
        %4817 = vmatprep.subr.mxu0 0.0
        %4818 = vmatpush1.msra.mxu0 0.0
        %4819 = vmatprep.subr.mxu0 0.0
        %4820 = vmatpush1.msra.mxu0 0.0
        %4821 = vmatprep.subr.mxu0 0.0
        %4822 = vmatpush1.msra.mxu0 0.0
        %4823 = vmatprep.subr.mxu0 0.0
        %4824 = vmatpush1.msra.mxu0 0.0
        %4825 = vmatprep.subr.mxu0 0.0
        %4826 = vmatpush1.msra.mxu0 0.0
        %4827 = vmatprep.subr.mxu0 0.0
        %4828 = vmatpush1.msra.mxu0 0.0
        %4829 = vmatprep.subr.mxu0 0.0
        %4830 = vmatpush1.msra.mxu0 0.0
        %4831 = vmatprep.subr.mxu0 0.0
        %4832 = vmatpush1.msra.mxu0 0.0
        %4833 = vmatprep.subr.mxu0 0.0
        %4834 = vmatpush1.msra.mxu0 0.0
        %4835 = vmatprep.subr.mxu0 0.0
        %4836 = vmatpush1.msra.mxu0 0.0
        %4837 = vmatprep.subr.mxu0 0.0
        %4838 = vmatpush1.msra.mxu0 0.0
        %4839 = vmatprep.subr.mxu0 0.0
        %4840 = vmatpush1.msra.mxu0 0.0
        %4841 = vmatprep.subr.mxu0 0.0
        %4842 = vmatpush1.msra.mxu0 0.0
        %4843 = vmatprep.subr.mxu0 0.0
        %4844 = vmatpush1.msra.mxu0 0.0
        %4845 = vmatprep.subr.mxu0 0.0
        %4846 = vmatpush1.msra.mxu0 0.0
        %4847 = vmatprep.subr.mxu0 0.0
        %4848 = vmatpush1.msra.mxu0 0.0
        %4849 = vmatprep.subr.mxu0 0.0
        %4850 = vmatpush1.msra.mxu0 0.0
        %4851 = vmatprep.subr.mxu0 0.0
        %4852 = vmatpush1.msra.mxu0 0.0
        %4853 = vmatprep.subr.mxu0 0.0
        %4854 = vmatpush1.msra.mxu0 0.0
        %4855 = vmatprep.subr.mxu0 0.0
        %4856 = vmatpush1.msra.mxu0 0.0
        %4857 = vmatprep.subr.mxu0 0.0
        %4858 = vmatpush1.msra.mxu0 0.0
        %4859 = vmatprep.subr.mxu0 0.0
        %4860 = vmatpush1.msra.mxu0 0.0
        %4861 = vmatprep.subr.mxu0 0.0
        %4862 = vmatpush1.msra.mxu0 0.0
        %4863 = vmatprep.subr.mxu0 0.0
        %4864 = vmatpush1.msra.mxu0 0.0
        %4865 = vmatprep.subr.mxu0 0.0
        %4866 = vmatpush1.msra.mxu0 0.0
        %4867 = vmatprep.subr.mxu0 0.0
        %4868 = vmatpush1.msra.mxu0 0.0
        %4869 = vmatprep.subr.mxu0 0.0
        %4870 = vmatpush1.msra.mxu0 0.0
        %4871 = vmatprep.mubr.f32.mxu0 0.0
        %v4872 = vand.u32 %v460, 4294901760
        %4873 = vmatmul.mubr.f32.gmra.mrb[0].mxu0 %v4872
        %v4874 = vpop.f32.mrb[0].mxu0
        %v4875 = vadd.f32 %v4753, %v4874
        %v4876 = vpop.f32.mrb[0].mxu0
        %v4877 = vadd.f32 %v4755, %v4876
        %4878 = vdwg.mxu0
        %v4879 = vand.u32 %v4658, 4294901760
        %v4880 = vsub.f32 %v4658, %v4879
        %4881 = vmatprep.subr.mxu0 %v4880
        %v4882 = vand.u32 %v4657, 4294901760
        %v4883 = vsub.f32 %v4657, %v4882
        %4884 = vmatpush1.msra.mxu0 %v4883
        %v4885 = vand.u32 %v4660, 4294901760
        %v4886 = vsub.f32 %v4660, %v4885
        %4887 = vmatprep.subr.mxu0 %v4886
        %v4888 = vand.u32 %v4659, 4294901760
        %v4889 = vsub.f32 %v4659, %v4888
        %4890 = vmatpush1.msra.mxu0 %v4889
        %v4891 = vand.u32 %v4662, 4294901760
        %v4892 = vsub.f32 %v4662, %v4891
        %4893 = vmatprep.subr.mxu0 %v4892
        %v4894 = vand.u32 %v4661, 4294901760
        %v4895 = vsub.f32 %v4661, %v4894
        %4896 = vmatpush1.msra.mxu0 %v4895
        %v4897 = vand.u32 %v4664, 4294901760
        %v4898 = vsub.f32 %v4664, %v4897
        %4899 = vmatprep.subr.mxu0 %v4898
        %v4900 = vand.u32 %v4663, 4294901760
        %v4901 = vsub.f32 %v4663, %v4900
        %4902 = vmatpush1.msra.mxu0 %v4901
        %v4903 = vand.u32 %v4669, 4294901760
        %v4904 = vsub.f32 %v4669, %v4903
        %4905 = vmatprep.subr.mxu0 %v4904
        %v4906 = vand.u32 %v4666, 4294901760
        %v4907 = vsub.f32 %v4666, %v4906
        %4908 = vmatpush1.msra.mxu0 %v4907
        %4909 = vmatprep.subr.mxu0 0.0
        %4910 = vmatpush1.msra.mxu0 0.0
        %4911 = vmatprep.subr.mxu0 0.0
        %4912 = vmatpush1.msra.mxu0 0.0
        %4913 = vmatprep.subr.mxu0 0.0
        %4914 = vmatpush1.msra.mxu0 0.0
        %4915 = vmatprep.subr.mxu0 0.0
        %4916 = vmatpush1.msra.mxu0 0.0
        %4917 = vmatprep.subr.mxu0 0.0
        %4918 = vmatpush1.msra.mxu0 0.0
        %4919 = vmatprep.subr.mxu0 0.0
        %4920 = vmatpush1.msra.mxu0 0.0
        %4921 = vmatprep.subr.mxu0 0.0
        %4922 = vmatpush1.msra.mxu0 0.0
        %4923 = vmatprep.subr.mxu0 0.0
        %4924 = vmatpush1.msra.mxu0 0.0
        %4925 = vmatprep.subr.mxu0 0.0
        %4926 = vmatpush1.msra.mxu0 0.0
        %4927 = vmatprep.subr.mxu0 0.0
        %4928 = vmatpush1.msra.mxu0 0.0
        %4929 = vmatprep.subr.mxu0 0.0
        %4930 = vmatpush1.msra.mxu0 0.0
        %4931 = vmatprep.subr.mxu0 0.0
        %4932 = vmatpush1.msra.mxu0 0.0
        %4933 = vmatprep.subr.mxu0 0.0
        %4934 = vmatpush1.msra.mxu0 0.0
        %4935 = vmatprep.subr.mxu0 0.0
        %4936 = vmatpush1.msra.mxu0 0.0
        %4937 = vmatprep.subr.mxu0 0.0
        %4938 = vmatpush1.msra.mxu0 0.0
        %4939 = vmatprep.subr.mxu0 0.0
        %4940 = vmatpush1.msra.mxu0 0.0
        %4941 = vmatprep.subr.mxu0 0.0
        %4942 = vmatpush1.msra.mxu0 0.0
        %4943 = vmatprep.subr.mxu0 0.0
        %4944 = vmatpush1.msra.mxu0 0.0
        %4945 = vmatprep.subr.mxu0 0.0
        %4946 = vmatpush1.msra.mxu0 0.0
        %4947 = vmatprep.subr.mxu0 0.0
        %4948 = vmatpush1.msra.mxu0 0.0
        %4949 = vmatprep.subr.mxu0 0.0
        %4950 = vmatpush1.msra.mxu0 0.0
        %4951 = vmatprep.subr.mxu0 0.0
        %4952 = vmatpush1.msra.mxu0 0.0
        %4953 = vmatprep.subr.mxu0 0.0
        %4954 = vmatpush1.msra.mxu0 0.0
        %4955 = vmatprep.subr.mxu0 0.0
        %4956 = vmatpush1.msra.mxu0 0.0
        %4957 = vmatprep.subr.mxu0 0.0
        %4958 = vmatpush1.msra.mxu0 0.0
        %4959 = vmatprep.subr.mxu0 0.0
        %4960 = vmatpush1.msra.mxu0 0.0
        %4961 = vmatprep.subr.mxu0 0.0
        %4962 = vmatpush1.msra.mxu0 0.0
        %4963 = vmatprep.mubr.f32.mxu0 0.0
        %v4964 = vand.u32 %v460, 4294901760
        %v4965 = vsub.f32 %v460, %v4964
        %4966 = vmatmul.mubr.f32.gmra.mrb[0].mxu0 %v4965
        %v4967 = vpop.f32.mrb[0].mxu0
        %v4968 = vadd.f32 %v4875, %v4967
        %v4969 = vpop.f32.mrb[0].mxu0
        %v4970 = vadd.f32 %v4877, %v4969
        %4971 = vdwg.mxu0
        %v4972 = vand.u32 %v4658, 4294901760
        %4973 = vmatprep.subr.mxu0 %v4972
        %v4974 = vand.u32 %v4657, 4294901760
        %4975 = vmatpush1.msra.mxu0 %v4974
        %v4976 = vand.u32 %v4660, 4294901760
        %4977 = vmatprep.subr.mxu0 %v4976
        %v4978 = vand.u32 %v4659, 4294901760
        %4979 = vmatpush1.msra.mxu0 %v4978
        %v4980 = vand.u32 %v4662, 4294901760
        %4981 = vmatprep.subr.mxu0 %v4980
        %v4982 = vand.u32 %v4661, 4294901760
        %4983 = vmatpush1.msra.mxu0 %v4982
        %v4984 = vand.u32 %v4664, 4294901760
        %4985 = vmatprep.subr.mxu0 %v4984
        %v4986 = vand.u32 %v4663, 4294901760
        %4987 = vmatpush1.msra.mxu0 %v4986
        %v4988 = vand.u32 %v4669, 4294901760
        %4989 = vmatprep.subr.mxu0 %v4988
        %v4990 = vand.u32 %v4666, 4294901760
        %4991 = vmatpush1.msra.mxu0 %v4990
        %4992 = vmatprep.subr.mxu0 0.0
        %4993 = vmatpush1.msra.mxu0 0.0
        %4994 = vmatprep.subr.mxu0 0.0
        %4995 = vmatpush1.msra.mxu0 0.0
        %4996 = vmatprep.subr.mxu0 0.0
        %4997 = vmatpush1.msra.mxu0 0.0
        %4998 = vmatprep.subr.mxu0 0.0
        %4999 = vmatpush1.msra.mxu0 0.0
        %5000 = vmatprep.subr.mxu0 0.0
        %5001 = vmatpush1.msra.mxu0 0.0
        %5002 = vmatprep.subr.mxu0 0.0
        %5003 = vmatpush1.msra.mxu0 0.0
        %5004 = vmatprep.subr.mxu0 0.0
        %5005 = vmatpush1.msra.mxu0 0.0
        %5006 = vmatprep.subr.mxu0 0.0
        %5007 = vmatpush1.msra.mxu0 0.0
        %5008 = vmatprep.subr.mxu0 0.0
        %5009 = vmatpush1.msra.mxu0 0.0
        %5010 = vmatprep.subr.mxu0 0.0
        %5011 = vmatpush1.msra.mxu0 0.0
        %5012 = vmatprep.subr.mxu0 0.0
        %5013 = vmatpush1.msra.mxu0 0.0
        %5014 = vmatprep.subr.mxu0 0.0
        %5015 = vmatpush1.msra.mxu0 0.0
        %5016 = vmatprep.subr.mxu0 0.0
        %5017 = vmatpush1.msra.mxu0 0.0
        %5018 = vmatprep.subr.mxu0 0.0
        %5019 = vmatpush1.msra.mxu0 0.0
        %5020 = vmatprep.subr.mxu0 0.0
        %5021 = vmatpush1.msra.mxu0 0.0
        %5022 = vmatprep.subr.mxu0 0.0
        %5023 = vmatpush1.msra.mxu0 0.0
        %5024 = vmatprep.subr.mxu0 0.0
        %5025 = vmatpush1.msra.mxu0 0.0
        %5026 = vmatprep.subr.mxu0 0.0
        %5027 = vmatpush1.msra.mxu0 0.0
        %5028 = vmatprep.subr.mxu0 0.0
        %5029 = vmatpush1.msra.mxu0 0.0
        %5030 = vmatprep.subr.mxu0 0.0
        %5031 = vmatpush1.msra.mxu0 0.0
        %5032 = vmatprep.subr.mxu0 0.0
        %5033 = vmatpush1.msra.mxu0 0.0
        %5034 = vmatprep.subr.mxu0 0.0
        %5035 = vmatpush1.msra.mxu0 0.0
        %5036 = vmatprep.subr.mxu0 0.0
        %5037 = vmatpush1.msra.mxu0 0.0
        %5038 = vmatprep.subr.mxu0 0.0
        %5039 = vmatpush1.msra.mxu0 0.0
        %5040 = vmatprep.subr.mxu0 0.0
        %5041 = vmatpush1.msra.mxu0 0.0
        %5042 = vmatprep.subr.mxu0 0.0
        %5043 = vmatpush1.msra.mxu0 0.0
        %5044 = vmatprep.subr.mxu0 0.0
        %5045 = vmatpush1.msra.mxu0 0.0
        %5046 = vmatprep.mubr.f32.mxu0 0.0
        %v5047 = vand.u32 %v460, 4294901760
        %v5048 = vsub.f32 %v460, %v5047
        %v5049 = vand.u32 %v5048, 4294901760
        %5050 = vmatmul.mubr.f32.gmra.mrb[0].mxu0 %v5049
        %v5051 = vpop.f32.mrb[0].mxu0
        %v5052 = vadd.f32 %v4968, %v5051
        %v5053 = vpop.f32.mrb[0].mxu0
        %v5054 = vadd.f32 %v4970, %v5053
        %5055 = vdwg.mxu0
        %v5056 = vand.u32 %v4658, 4294901760
        %v5057 = vsub.f32 %v4658, %v5056
        %v5058 = vand.u32 %v5057, 4294901760
        %5059 = vmatprep.subr.mxu0 %v5058
        %v5060 = vand.u32 %v4657, 4294901760
        %v5061 = vsub.f32 %v4657, %v5060
        %v5062 = vand.u32 %v5061, 4294901760
        %5063 = vmatpush1.msra.mxu0 %v5062
        %v5064 = vand.u32 %v4660, 4294901760
        %v5065 = vsub.f32 %v4660, %v5064
        %v5066 = vand.u32 %v5065, 4294901760
        %5067 = vmatprep.subr.mxu0 %v5066
        %v5068 = vand.u32 %v4659, 4294901760
        %v5069 = vsub.f32 %v4659, %v5068
        %v5070 = vand.u32 %v5069, 4294901760
        %5071 = vmatpush1.msra.mxu0 %v5070
        %v5072 = vand.u32 %v4662, 4294901760
        %v5073 = vsub.f32 %v4662, %v5072
        %v5074 = vand.u32 %v5073, 4294901760
        %5075 = vmatprep.subr.mxu0 %v5074
        %v5076 = vand.u32 %v4661, 4294901760
        %v5077 = vsub.f32 %v4661, %v5076
        %v5078 = vand.u32 %v5077, 4294901760
        %5079 = vmatpush1.msra.mxu0 %v5078
        %v5080 = vand.u32 %v4664, 4294901760
        %v5081 = vsub.f32 %v4664, %v5080
        %v5082 = vand.u32 %v5081, 4294901760
        %5083 = vmatprep.subr.mxu0 %v5082
        %v5084 = vand.u32 %v4663, 4294901760
        %v5085 = vsub.f32 %v4663, %v5084
        %v5086 = vand.u32 %v5085, 4294901760
        %5087 = vmatpush1.msra.mxu0 %v5086
        %v5088 = vand.u32 %v4669, 4294901760
        %v5089 = vsub.f32 %v4669, %v5088
        %v5090 = vand.u32 %v5089, 4294901760
        %5091 = vmatprep.subr.mxu0 %v5090
        %v5092 = vand.u32 %v4666, 4294901760
        %v5093 = vsub.f32 %v4666, %v5092
        %v5094 = vand.u32 %v5093, 4294901760
        %5095 = vmatpush1.msra.mxu0 %v5094
        %5096 = vmatprep.subr.mxu0 0.0
        %5097 = vmatpush1.msra.mxu0 0.0
        %5098 = vmatprep.subr.mxu0 0.0
        %5099 = vmatpush1.msra.mxu0 0.0
        %5100 = vmatprep.subr.mxu0 0.0
        %5101 = vmatpush1.msra.mxu0 0.0
        %5102 = vmatprep.subr.mxu0 0.0
        %5103 = vmatpush1.msra.mxu0 0.0
        %5104 = vmatprep.subr.mxu0 0.0
        %5105 = vmatpush1.msra.mxu0 0.0
        %5106 = vmatprep.subr.mxu0 0.0
        %5107 = vmatpush1.msra.mxu0 0.0
        %5108 = vmatprep.subr.mxu0 0.0
        %5109 = vmatpush1.msra.mxu0 0.0
        %5110 = vmatprep.subr.mxu0 0.0
        %5111 = vmatpush1.msra.mxu0 0.0
        %5112 = vmatprep.subr.mxu0 0.0
        %5113 = vmatpush1.msra.mxu0 0.0
        %5114 = vmatprep.subr.mxu0 0.0
        %5115 = vmatpush1.msra.mxu0 0.0
        %5116 = vmatprep.subr.mxu0 0.0
        %5117 = vmatpush1.msra.mxu0 0.0
        %5118 = vmatprep.subr.mxu0 0.0
        %5119 = vmatpush1.msra.mxu0 0.0
        %5120 = vmatprep.subr.mxu0 0.0
        %5121 = vmatpush1.msra.mxu0 0.0
        %5122 = vmatprep.subr.mxu0 0.0
        %5123 = vmatpush1.msra.mxu0 0.0
        %5124 = vmatprep.subr.mxu0 0.0
        %5125 = vmatpush1.msra.mxu0 0.0
        %5126 = vmatprep.subr.mxu0 0.0
        %5127 = vmatpush1.msra.mxu0 0.0
        %5128 = vmatprep.subr.mxu0 0.0
        %5129 = vmatpush1.msra.mxu0 0.0
        %5130 = vmatprep.subr.mxu0 0.0
        %5131 = vmatpush1.msra.mxu0 0.0
        %5132 = vmatprep.subr.mxu0 0.0
        %5133 = vmatpush1.msra.mxu0 0.0
        %5134 = vmatprep.subr.mxu0 0.0
        %5135 = vmatpush1.msra.mxu0 0.0
        %5136 = vmatprep.subr.mxu0 0.0
        %5137 = vmatpush1.msra.mxu0 0.0
        %5138 = vmatprep.subr.mxu0 0.0
        %5139 = vmatpush1.msra.mxu0 0.0
        %5140 = vmatprep.subr.mxu0 0.0
        %5141 = vmatpush1.msra.mxu0 0.0
        %5142 = vmatprep.subr.mxu0 0.0
        %5143 = vmatpush1.msra.mxu0 0.0
        %5144 = vmatprep.subr.mxu0 0.0
        %5145 = vmatpush1.msra.mxu0 0.0
        %5146 = vmatprep.subr.mxu0 0.0
        %5147 = vmatpush1.msra.mxu0 0.0
        %5148 = vmatprep.subr.mxu0 0.0
        %5149 = vmatpush1.msra.mxu0 0.0
        %5150 = vmatprep.mubr.f32.mxu0 0.0
        %v5151 = vand.u32 %v460, 4294901760
        %5152 = vmatmul.mubr.f32.gmra.mrb[0].mxu0 %v5151
        %v5153 = vpop.f32.mrb[0].mxu0
        %v5154 = vadd.f32 %v5052, %v5153
        %v5155 = vpop.f32.mrb[0].mxu0
        %v5156 = vadd.f32 %v5054, %v5155
        %5157 = vdwg.mxu0
        %v5158 = vand.u32 %v4658, 4294901760
        %5159 = vmatprep.subr.mxu0 %v5158
        %v5160 = vand.u32 %v4657, 4294901760
        %5161 = vmatpush1.msra.mxu0 %v5160
        %v5162 = vand.u32 %v4660, 4294901760
        %5163 = vmatprep.subr.mxu0 %v5162
        %v5164 = vand.u32 %v4659, 4294901760
        %5165 = vmatpush1.msra.mxu0 %v5164
        %v5166 = vand.u32 %v4662, 4294901760
        %5167 = vmatprep.subr.mxu0 %v5166
        %v5168 = vand.u32 %v4661, 4294901760
        %5169 = vmatpush1.msra.mxu0 %v5168
        %v5170 = vand.u32 %v4664, 4294901760
        %5171 = vmatprep.subr.mxu0 %v5170
        %v5172 = vand.u32 %v4663, 4294901760
        %5173 = vmatpush1.msra.mxu0 %v5172
        %v5174 = vand.u32 %v4669, 4294901760
        %5175 = vmatprep.subr.mxu0 %v5174
        %v5176 = vand.u32 %v4666, 4294901760
        %5177 = vmatpush1.msra.mxu0 %v5176
        %5178 = vmatprep.subr.mxu0 0.0
        %5179 = vmatpush1.msra.mxu0 0.0
        %5180 = vmatprep.subr.mxu0 0.0
        %5181 = vmatpush1.msra.mxu0 0.0
        %5182 = vmatprep.subr.mxu0 0.0
        %5183 = vmatpush1.msra.mxu0 0.0
        %5184 = vmatprep.subr.mxu0 0.0
        %5185 = vmatpush1.msra.mxu0 0.0
        %5186 = vmatprep.subr.mxu0 0.0
        %5187 = vmatpush1.msra.mxu0 0.0
        %5188 = vmatprep.subr.mxu0 0.0
        %5189 = vmatpush1.msra.mxu0 0.0
        %5190 = vmatprep.subr.mxu0 0.0
        %5191 = vmatpush1.msra.mxu0 0.0
        %5192 = vmatprep.subr.mxu0 0.0
        %5193 = vmatpush1.msra.mxu0 0.0
        %5194 = vmatprep.subr.mxu0 0.0
        %5195 = vmatpush1.msra.mxu0 0.0
        %5196 = vmatprep.subr.mxu0 0.0
        %5197 = vmatpush1.msra.mxu0 0.0
        %5198 = vmatprep.subr.mxu0 0.0
        %5199 = vmatpush1.msra.mxu0 0.0
        %5200 = vmatprep.subr.mxu0 0.0
        %5201 = vmatpush1.msra.mxu0 0.0
        %5202 = vmatprep.subr.mxu0 0.0
        %5203 = vmatpush1.msra.mxu0 0.0
        %5204 = vmatprep.subr.mxu0 0.0
        %5205 = vmatpush1.msra.mxu0 0.0
        %5206 = vmatprep.subr.mxu0 0.0
        %5207 = vmatpush1.msra.mxu0 0.0
        %5208 = vmatprep.subr.mxu0 0.0
        %5209 = vmatpush1.msra.mxu0 0.0
        %5210 = vmatprep.subr.mxu0 0.0
        %5211 = vmatpush1.msra.mxu0 0.0
        %5212 = vmatprep.subr.mxu0 0.0
        %5213 = vmatpush1.msra.mxu0 0.0
        %5214 = vmatprep.subr.mxu0 0.0
        %5215 = vmatpush1.msra.mxu0 0.0
        %5216 = vmatprep.subr.mxu0 0.0
        %5217 = vmatpush1.msra.mxu0 0.0
        %5218 = vmatprep.subr.mxu0 0.0
        %5219 = vmatpush1.msra.mxu0 0.0
        %5220 = vmatprep.subr.mxu0 0.0
        %5221 = vmatpush1.msra.mxu0 0.0
        %5222 = vmatprep.subr.mxu0 0.0
        %5223 = vmatpush1.msra.mxu0 0.0
        %5224 = vmatprep.subr.mxu0 0.0
        %5225 = vmatpush1.msra.mxu0 0.0
        %5226 = vmatprep.subr.mxu0 0.0
        %5227 = vmatpush1.msra.mxu0 0.0
        %5228 = vmatprep.subr.mxu0 0.0
        %5229 = vmatpush1.msra.mxu0 0.0
        %5230 = vmatprep.subr.mxu0 0.0
        %5231 = vmatpush1.msra.mxu0 0.0
        %5232 = vmatprep.mubr.f32.mxu0 0.0
        %v5233 = vand.u32 %v460, 4294901760
        %5234 = vmatmul.mubr.f32.gmra.mrb[0].mxu0 %v5233
        %v5235 = vpop.f32.mrb[0].mxu0
        %v5236 = vadd.f32 %v5154, %v5235
        %v5237 = vpop.f32.mrb[0].mxu0
        %v5238 = vadd.f32 %v5156, %v5237
        %5239 = vdwg.mxu0
        %v5240 = vsel %vm442, %v5236, 0.0
        %v5241 = vsel %vm442, %v5238, 0.0
        %v5242 = vadd.f32 %v5240, %v5241
        %5243 = vadd.xlane.f32.xlu0 %v5242
        %v5244 = vpop.xlane.xlu0 %5243
        %v5245 = vmul.f32 %v5244, %v1042
        %v5246 = vsub.f32 %v5236, %v5245
        %v5247 = vsub.f32 %v5238, %v5245
        %v5248 = vmul.f32 %v5246, %v5246
        %v5249 = vmul.f32 %v5247, %v5247
        %v5250 = vsel %vm442, %v5248, 0.0
        %v5251 = vsel %vm442, %v5249, 0.0
        %v5252 = vadd.f32 %v5250, %v5251
        %5253 = vadd.xlane.f32.xlu0 %v5252
        %v5254 = vpop.xlane.xlu0 %5253
        %v5255 = vmul.f32 %v5254, %v1042
        %v5256 = vadd.f32 %v5255, 1e-05
        %v5257 = vrsqrt.pop %v5256
        %v5258 = vmul.f32 %v5246, %v5257
        %v5259 = vmul.f32 %v5247, %v5257
        %v5260 = vmax.f32 %v5258, 0.0
        %v5261 = vmax.f32 %v5259, 0.0
        %5264 = vrot.lane.b32.xlu0 %v5260, 17
        %v5265 = vpop.permute.xlu0 %5264
        %5266 = vrot.lane.b32.xlu0 %v5261, 17
        %v5267 = vpop.permute.xlu0 %5266
        %v5268 = vsel %vm333, %v5265, %v5267
        %v5271 = vsel %vm333, 0.0, %v5265
        %v5272 = vsel %vm340, %v5271, 0.0
        %v5273 = vsel %vm341, %v5268, 0.0
        %5274 = vrot.lane.b32.xlu0 %v5260, 16
        %v5275 = vpop.permute.xlu0 %5274
        %5276 = vrot.lane.b32.xlu0 %v5261, 16
        %v5277 = vpop.permute.xlu0 %5276
        %v5278 = vsel %vm348, %v5275, %v5277
        %v5280 = vsel %vm348, 0.0, %v5275
        %5281 = vrot.lane.b32.xlu0 %v5260, 15
        %v5282 = vpop.permute.xlu0 %5281
        %5283 = vrot.lane.b32.xlu0 %v5261, 15
        %v5284 = vpop.permute.xlu0 %5283
        %v5285 = vsel %vm356, %v5282, %v5284
        %v5288 = vsel %vm356, 0.0, %v5282
        %v5289 = vsel %vm363, %v5288, 0.0
        %v5290 = vsel %vm364, %v5285, 0.0
        %5291 = vrot.lane.b32.xlu0 %v5260, 1
        %v5292 = vpop.permute.xlu0 %5291
        %5293 = vrot.lane.b32.xlu0 %v5261, 1
        %v5294 = vpop.permute.xlu0 %5293
        %v5295 = vsel %vm371, %v5292, %v5294
        %v5298 = vsel %vm371, 0.0, %v5292
        %v5299 = vsel %vm340, %v5298, 0.0
        %v5300 = vsel %vm341, %v5295, 0.0
        %5301 = vrot.lane.b32.xlu0 %v5260, 127
        %v5302 = vpop.permute.xlu0 %5301
        %5303 = vrot.lane.b32.xlu0 %v5261, 127
        %v5304 = vpop.permute.xlu0 %5303
        %v5305 = vsel %vm382, %v5302, %v5304
        %v5308 = vsel %vm382, %v5304, 0.0
        %v5309 = vsel %vm363, %v5305, 0.0
        %v5310 = vsel %vm364, %v5308, 0.0
        %5311 = vrot.lane.b32.xlu0 %v5260, 113
        %v5312 = vpop.permute.xlu0 %5311
        %5313 = vrot.lane.b32.xlu0 %v5261, 113
        %v5314 = vpop.permute.xlu0 %5313
        %v5315 = vsel %vm393, %v5312, %v5314
        %v5318 = vsel %vm393, %v5314, 0.0
        %v5319 = vsel %vm340, %v5315, 0.0
        %v5320 = vsel %vm341, %v5318, 0.0
        %5321 = vrot.lane.b32.xlu0 %v5260, 112
        %v5322 = vpop.permute.xlu0 %5321
        %5323 = vrot.lane.b32.xlu0 %v5261, 112
        %v5324 = vpop.permute.xlu0 %5323
        %v5325 = vsel %vm404, %v5322, %v5324
        %v5327 = vsel %vm404, %v5324, 0.0
        %5328 = vrot.lane.b32.xlu0 %v5260, 111
        %v5329 = vpop.permute.xlu0 %5328
        %5330 = vrot.lane.b32.xlu0 %v5261, 111
        %v5331 = vpop.permute.xlu0 %5330
        %v5332 = vsel %vm412, %v5329, %v5331
        %v5335 = vsel %vm412, %v5331, 0.0
        %v5336 = vsel %vm363, %v5332, 0.0
        %v5337 = vsel %vm364, %v5335, 0.0
        %v5339 = vrot.slane %v5280, 4
        %v5340 = vrot.slane %v5278, 4
        %v5345 = vrot.slane %v5299, 4
        %v5346 = vrot.slane %v5300, 4
        %v5351 = vrot.slane %v5309, 4
        %v5352 = vrot.slane %v5310, 4
        %v5356 = vrot.slane %v5325, 4
        %v5357 = vrot.slane %v5327, 4
        %v5360 = vsel %vm442, %v5272, %v5339
        %v5361 = vsel %vm442, %v5273, %v5340
        %v5362 = vsel %vm442, %v5289, %v5345
        %v5363 = vsel %vm442, %v5290, %v5346
        %v5364 = vsel %vm442, %v5260, %v5351
        %v5365 = vsel %vm442, %v5261, %v5352
        %v5366 = vsel %vm442, %v5319, %v5356
        %v5367 = vsel %vm442, %v5320, %v5357
        %v5369 = vsel %vm442, %v5336, 0
        %v5372 = vsel %vm442, %v5337, 0
        %v5374 = vand.u32 %v5361, 4294901760
        %5375 = vmatprep.subr.mxu0 %v5374
        %v5376 = vand.u32 %v5360, 4294901760
        %5377 = vmatpush1.msra.mxu0 %v5376
        %v5378 = vand.u32 %v5363, 4294901760
        %5379 = vmatprep.subr.mxu0 %v5378
        %v5380 = vand.u32 %v5362, 4294901760
        %5381 = vmatpush1.msra.mxu0 %v5380
        %v5382 = vand.u32 %v5365, 4294901760
        %5383 = vmatprep.subr.mxu0 %v5382
        %v5384 = vand.u32 %v5364, 4294901760
        %5385 = vmatpush1.msra.mxu0 %v5384
        %v5386 = vand.u32 %v5367, 4294901760
        %5387 = vmatprep.subr.mxu0 %v5386
        %v5388 = vand.u32 %v5366, 4294901760
        %5389 = vmatpush1.msra.mxu0 %v5388
        %v5390 = vand.u32 %v5372, 4294901760
        %5391 = vmatprep.subr.mxu0 %v5390
        %v5392 = vand.u32 %v5369, 4294901760
        %5393 = vmatpush1.msra.mxu0 %v5392
        %5394 = vmatprep.subr.mxu0 0.0
        %5395 = vmatpush1.msra.mxu0 0.0
        %5396 = vmatprep.subr.mxu0 0.0
        %5397 = vmatpush1.msra.mxu0 0.0
        %5398 = vmatprep.subr.mxu0 0.0
        %5399 = vmatpush1.msra.mxu0 0.0
        %5400 = vmatprep.subr.mxu0 0.0
        %5401 = vmatpush1.msra.mxu0 0.0
        %5402 = vmatprep.subr.mxu0 0.0
        %5403 = vmatpush1.msra.mxu0 0.0
        %5404 = vmatprep.subr.mxu0 0.0
        %5405 = vmatpush1.msra.mxu0 0.0
        %5406 = vmatprep.subr.mxu0 0.0
        %5407 = vmatpush1.msra.mxu0 0.0
        %5408 = vmatprep.subr.mxu0 0.0
        %5409 = vmatpush1.msra.mxu0 0.0
        %5410 = vmatprep.subr.mxu0 0.0
        %5411 = vmatpush1.msra.mxu0 0.0
        %5412 = vmatprep.subr.mxu0 0.0
        %5413 = vmatpush1.msra.mxu0 0.0
        %5414 = vmatprep.subr.mxu0 0.0
        %5415 = vmatpush1.msra.mxu0 0.0
        %5416 = vmatprep.subr.mxu0 0.0
        %5417 = vmatpush1.msra.mxu0 0.0
        %5418 = vmatprep.subr.mxu0 0.0
        %5419 = vmatpush1.msra.mxu0 0.0
        %5420 = vmatprep.subr.mxu0 0.0
        %5421 = vmatpush1.msra.mxu0 0.0
        %5422 = vmatprep.subr.mxu0 0.0
        %5423 = vmatpush1.msra.mxu0 0.0
        %5424 = vmatprep.subr.mxu0 0.0
        %5425 = vmatpush1.msra.mxu0 0.0
        %5426 = vmatprep.subr.mxu0 0.0
        %5427 = vmatpush1.msra.mxu0 0.0
        %5428 = vmatprep.subr.mxu0 0.0
        %5429 = vmatpush1.msra.mxu0 0.0
        %5430 = vmatprep.subr.mxu0 0.0
        %5431 = vmatpush1.msra.mxu0 0.0
        %5432 = vmatprep.subr.mxu0 0.0
        %5433 = vmatpush1.msra.mxu0 0.0
        %5434 = vmatprep.subr.mxu0 0.0
        %5435 = vmatpush1.msra.mxu0 0.0
        %5436 = vmatprep.subr.mxu0 0.0
        %5437 = vmatpush1.msra.mxu0 0.0
        %5438 = vmatprep.subr.mxu0 0.0
        %5439 = vmatpush1.msra.mxu0 0.0
        %5440 = vmatprep.subr.mxu0 0.0
        %5441 = vmatpush1.msra.mxu0 0.0
        %5442 = vmatprep.subr.mxu0 0.0
        %5443 = vmatpush1.msra.mxu0 0.0
        %5444 = vmatprep.subr.mxu0 0.0
        %5445 = vmatpush1.msra.mxu0 0.0
        %5446 = vmatprep.subr.mxu0 0.0
        %5447 = vmatpush1.msra.mxu0 0.0
        %5448 = vmatprep.mubr.f32.mxu0 0.0
        %v5449 = vand.u32 %v1174, 4294901760
        %v5450 = vsub.f32 %v1174, %v5449
        %v5451 = vand.u32 %v5450, 4294901760
        %v5452 = vsub.f32 %v5450, %v5451
        %v5453 = vand.u32 %v5452, 4294901760
        %5454 = vmatmul.mubr.f32.gmra.mrb[0].mxu0 %v5453
        %v5455 = vpop.f32.mrb[0].mxu0
        %v5456 = vadd.f32 %v1171, %v5455
        %v5457 = vpop.f32.mrb[0].mxu0
        %v5458 = vadd.f32 %v1171, %v5457
        %5459 = vdwg.mxu0
        %v5460 = vand.u32 %v5361, 4294901760
        %v5461 = vsub.f32 %v5361, %v5460
        %v5462 = vand.u32 %v5461, 4294901760
        %v5463 = vsub.f32 %v5461, %v5462
        %v5464 = vand.u32 %v5463, 4294901760
        %5465 = vmatprep.subr.mxu0 %v5464
        %v5466 = vand.u32 %v5360, 4294901760
        %v5467 = vsub.f32 %v5360, %v5466
        %v5468 = vand.u32 %v5467, 4294901760
        %v5469 = vsub.f32 %v5467, %v5468
        %v5470 = vand.u32 %v5469, 4294901760
        %5471 = vmatpush1.msra.mxu0 %v5470
        %v5472 = vand.u32 %v5363, 4294901760
        %v5473 = vsub.f32 %v5363, %v5472
        %v5474 = vand.u32 %v5473, 4294901760
        %v5475 = vsub.f32 %v5473, %v5474
        %v5476 = vand.u32 %v5475, 4294901760
        %5477 = vmatprep.subr.mxu0 %v5476
        %v5478 = vand.u32 %v5362, 4294901760
        %v5479 = vsub.f32 %v5362, %v5478
        %v5480 = vand.u32 %v5479, 4294901760
        %v5481 = vsub.f32 %v5479, %v5480
        %v5482 = vand.u32 %v5481, 4294901760
        %5483 = vmatpush1.msra.mxu0 %v5482
        %v5484 = vand.u32 %v5365, 4294901760
        %v5485 = vsub.f32 %v5365, %v5484
        %v5486 = vand.u32 %v5485, 4294901760
        %v5487 = vsub.f32 %v5485, %v5486
        %v5488 = vand.u32 %v5487, 4294901760
        %5489 = vmatprep.subr.mxu0 %v5488
        %v5490 = vand.u32 %v5364, 4294901760
        %v5491 = vsub.f32 %v5364, %v5490
        %v5492 = vand.u32 %v5491, 4294901760
        %v5493 = vsub.f32 %v5491, %v5492
        %v5494 = vand.u32 %v5493, 4294901760
        %5495 = vmatpush1.msra.mxu0 %v5494
        %v5496 = vand.u32 %v5367, 4294901760
        %v5497 = vsub.f32 %v5367, %v5496
        %v5498 = vand.u32 %v5497, 4294901760
        %v5499 = vsub.f32 %v5497, %v5498
        %v5500 = vand.u32 %v5499, 4294901760
        %5501 = vmatprep.subr.mxu0 %v5500
        %v5502 = vand.u32 %v5366, 4294901760
        %v5503 = vsub.f32 %v5366, %v5502
        %v5504 = vand.u32 %v5503, 4294901760
        %v5505 = vsub.f32 %v5503, %v5504
        %v5506 = vand.u32 %v5505, 4294901760
        %5507 = vmatpush1.msra.mxu0 %v5506
        %v5508 = vand.u32 %v5372, 4294901760
        %v5509 = vsub.f32 %v5372, %v5508
        %v5510 = vand.u32 %v5509, 4294901760
        %v5511 = vsub.f32 %v5509, %v5510
        %v5512 = vand.u32 %v5511, 4294901760
        %5513 = vmatprep.subr.mxu0 %v5512
        %v5514 = vand.u32 %v5369, 4294901760
        %v5515 = vsub.f32 %v5369, %v5514
        %v5516 = vand.u32 %v5515, 4294901760
        %v5517 = vsub.f32 %v5515, %v5516
        %v5518 = vand.u32 %v5517, 4294901760
        %5519 = vmatpush1.msra.mxu0 %v5518
        %5520 = vmatprep.subr.mxu0 0.0
        %5521 = vmatpush1.msra.mxu0 0.0
        %5522 = vmatprep.subr.mxu0 0.0
        %5523 = vmatpush1.msra.mxu0 0.0
        %5524 = vmatprep.subr.mxu0 0.0
        %5525 = vmatpush1.msra.mxu0 0.0
        %5526 = vmatprep.subr.mxu0 0.0
        %5527 = vmatpush1.msra.mxu0 0.0
        %5528 = vmatprep.subr.mxu0 0.0
        %5529 = vmatpush1.msra.mxu0 0.0
        %5530 = vmatprep.subr.mxu0 0.0
        %5531 = vmatpush1.msra.mxu0 0.0
        %5532 = vmatprep.subr.mxu0 0.0
        %5533 = vmatpush1.msra.mxu0 0.0
        %5534 = vmatprep.subr.mxu0 0.0
        %5535 = vmatpush1.msra.mxu0 0.0
        %5536 = vmatprep.subr.mxu0 0.0
        %5537 = vmatpush1.msra.mxu0 0.0
        %5538 = vmatprep.subr.mxu0 0.0
        %5539 = vmatpush1.msra.mxu0 0.0
        %5540 = vmatprep.subr.mxu0 0.0
        %5541 = vmatpush1.msra.mxu0 0.0
        %5542 = vmatprep.subr.mxu0 0.0
        %5543 = vmatpush1.msra.mxu0 0.0
        %5544 = vmatprep.subr.mxu0 0.0
        %5545 = vmatpush1.msra.mxu0 0.0
        %5546 = vmatprep.subr.mxu0 0.0
        %5547 = vmatpush1.msra.mxu0 0.0
        %5548 = vmatprep.subr.mxu0 0.0
        %5549 = vmatpush1.msra.mxu0 0.0
        %5550 = vmatprep.subr.mxu0 0.0
        %5551 = vmatpush1.msra.mxu0 0.0
        %5552 = vmatprep.subr.mxu0 0.0
        %5553 = vmatpush1.msra.mxu0 0.0
        %5554 = vmatprep.subr.mxu0 0.0
        %5555 = vmatpush1.msra.mxu0 0.0
        %5556 = vmatprep.subr.mxu0 0.0
        %5557 = vmatpush1.msra.mxu0 0.0
        %5558 = vmatprep.subr.mxu0 0.0
        %5559 = vmatpush1.msra.mxu0 0.0
        %5560 = vmatprep.subr.mxu0 0.0
        %5561 = vmatpush1.msra.mxu0 0.0
        %5562 = vmatprep.subr.mxu0 0.0
        %5563 = vmatpush1.msra.mxu0 0.0
        %5564 = vmatprep.subr.mxu0 0.0
        %5565 = vmatpush1.msra.mxu0 0.0
        %5566 = vmatprep.subr.mxu0 0.0
        %5567 = vmatpush1.msra.mxu0 0.0
        %5568 = vmatprep.subr.mxu0 0.0
        %5569 = vmatpush1.msra.mxu0 0.0
        %5570 = vmatprep.subr.mxu0 0.0
        %5571 = vmatpush1.msra.mxu0 0.0
        %5572 = vmatprep.subr.mxu0 0.0
        %5573 = vmatpush1.msra.mxu0 0.0
        %5574 = vmatprep.mubr.f32.mxu0 0.0
        %v5575 = vand.u32 %v1174, 4294901760
        %5576 = vmatmul.mubr.f32.gmra.mrb[0].mxu0 %v5575
        %v5577 = vpop.f32.mrb[0].mxu0
        %v5578 = vadd.f32 %v5456, %v5577
        %v5579 = vpop.f32.mrb[0].mxu0
        %v5580 = vadd.f32 %v5458, %v5579
        %5581 = vdwg.mxu0
        %v5582 = vand.u32 %v5361, 4294901760
        %v5583 = vsub.f32 %v5361, %v5582
        %5584 = vmatprep.subr.mxu0 %v5583
        %v5585 = vand.u32 %v5360, 4294901760
        %v5586 = vsub.f32 %v5360, %v5585
        %5587 = vmatpush1.msra.mxu0 %v5586
        %v5588 = vand.u32 %v5363, 4294901760
        %v5589 = vsub.f32 %v5363, %v5588
        %5590 = vmatprep.subr.mxu0 %v5589
        %v5591 = vand.u32 %v5362, 4294901760
        %v5592 = vsub.f32 %v5362, %v5591
        %5593 = vmatpush1.msra.mxu0 %v5592
        %v5594 = vand.u32 %v5365, 4294901760
        %v5595 = vsub.f32 %v5365, %v5594
        %5596 = vmatprep.subr.mxu0 %v5595
        %v5597 = vand.u32 %v5364, 4294901760
        %v5598 = vsub.f32 %v5364, %v5597
        %5599 = vmatpush1.msra.mxu0 %v5598
        %v5600 = vand.u32 %v5367, 4294901760
        %v5601 = vsub.f32 %v5367, %v5600
        %5602 = vmatprep.subr.mxu0 %v5601
        %v5603 = vand.u32 %v5366, 4294901760
        %v5604 = vsub.f32 %v5366, %v5603
        %5605 = vmatpush1.msra.mxu0 %v5604
        %v5606 = vand.u32 %v5372, 4294901760
        %v5607 = vsub.f32 %v5372, %v5606
        %5608 = vmatprep.subr.mxu0 %v5607
        %v5609 = vand.u32 %v5369, 4294901760
        %v5610 = vsub.f32 %v5369, %v5609
        %5611 = vmatpush1.msra.mxu0 %v5610
        %5612 = vmatprep.subr.mxu0 0.0
        %5613 = vmatpush1.msra.mxu0 0.0
        %5614 = vmatprep.subr.mxu0 0.0
        %5615 = vmatpush1.msra.mxu0 0.0
        %5616 = vmatprep.subr.mxu0 0.0
        %5617 = vmatpush1.msra.mxu0 0.0
        %5618 = vmatprep.subr.mxu0 0.0
        %5619 = vmatpush1.msra.mxu0 0.0
        %5620 = vmatprep.subr.mxu0 0.0
        %5621 = vmatpush1.msra.mxu0 0.0
        %5622 = vmatprep.subr.mxu0 0.0
        %5623 = vmatpush1.msra.mxu0 0.0
        %5624 = vmatprep.subr.mxu0 0.0
        %5625 = vmatpush1.msra.mxu0 0.0
        %5626 = vmatprep.subr.mxu0 0.0
        %5627 = vmatpush1.msra.mxu0 0.0
        %5628 = vmatprep.subr.mxu0 0.0
        %5629 = vmatpush1.msra.mxu0 0.0
        %5630 = vmatprep.subr.mxu0 0.0
        %5631 = vmatpush1.msra.mxu0 0.0
        %5632 = vmatprep.subr.mxu0 0.0
        %5633 = vmatpush1.msra.mxu0 0.0
        %5634 = vmatprep.subr.mxu0 0.0
        %5635 = vmatpush1.msra.mxu0 0.0
        %5636 = vmatprep.subr.mxu0 0.0
        %5637 = vmatpush1.msra.mxu0 0.0
        %5638 = vmatprep.subr.mxu0 0.0
        %5639 = vmatpush1.msra.mxu0 0.0
        %5640 = vmatprep.subr.mxu0 0.0
        %5641 = vmatpush1.msra.mxu0 0.0
        %5642 = vmatprep.subr.mxu0 0.0
        %5643 = vmatpush1.msra.mxu0 0.0
        %5644 = vmatprep.subr.mxu0 0.0
        %5645 = vmatpush1.msra.mxu0 0.0
        %5646 = vmatprep.subr.mxu0 0.0
        %5647 = vmatpush1.msra.mxu0 0.0
        %5648 = vmatprep.subr.mxu0 0.0
        %5649 = vmatpush1.msra.mxu0 0.0
        %5650 = vmatprep.subr.mxu0 0.0
        %5651 = vmatpush1.msra.mxu0 0.0
        %5652 = vmatprep.subr.mxu0 0.0
        %5653 = vmatpush1.msra.mxu0 0.0
        %5654 = vmatprep.subr.mxu0 0.0
        %5655 = vmatpush1.msra.mxu0 0.0
        %5656 = vmatprep.subr.mxu0 0.0
        %5657 = vmatpush1.msra.mxu0 0.0
        %5658 = vmatprep.subr.mxu0 0.0
        %5659 = vmatpush1.msra.mxu0 0.0
        %5660 = vmatprep.subr.mxu0 0.0
        %5661 = vmatpush1.msra.mxu0 0.0
        %5662 = vmatprep.subr.mxu0 0.0
        %5663 = vmatpush1.msra.mxu0 0.0
        %5664 = vmatprep.subr.mxu0 0.0
        %5665 = vmatpush1.msra.mxu0 0.0
        %5666 = vmatprep.mubr.f32.mxu0 0.0
        %v5667 = vand.u32 %v1174, 4294901760
        %v5668 = vsub.f32 %v1174, %v5667
        %5669 = vmatmul.mubr.f32.gmra.mrb[0].mxu0 %v5668
        %v5670 = vpop.f32.mrb[0].mxu0
        %v5671 = vadd.f32 %v5578, %v5670
        %v5672 = vpop.f32.mrb[0].mxu0
        %v5673 = vadd.f32 %v5580, %v5672
        %5674 = vdwg.mxu0
        %v5675 = vand.u32 %v5361, 4294901760
        %5676 = vmatprep.subr.mxu0 %v5675
        %v5677 = vand.u32 %v5360, 4294901760
        %5678 = vmatpush1.msra.mxu0 %v5677
        %v5679 = vand.u32 %v5363, 4294901760
        %5680 = vmatprep.subr.mxu0 %v5679
        %v5681 = vand.u32 %v5362, 4294901760
        %5682 = vmatpush1.msra.mxu0 %v5681
        %v5683 = vand.u32 %v5365, 4294901760
        %5684 = vmatprep.subr.mxu0 %v5683
        %v5685 = vand.u32 %v5364, 4294901760
        %5686 = vmatpush1.msra.mxu0 %v5685
        %v5687 = vand.u32 %v5367, 4294901760
        %5688 = vmatprep.subr.mxu0 %v5687
        %v5689 = vand.u32 %v5366, 4294901760
        %5690 = vmatpush1.msra.mxu0 %v5689
        %v5691 = vand.u32 %v5372, 4294901760
        %5692 = vmatprep.subr.mxu0 %v5691
        %v5693 = vand.u32 %v5369, 4294901760
        %5694 = vmatpush1.msra.mxu0 %v5693
        %5695 = vmatprep.subr.mxu0 0.0
        %5696 = vmatpush1.msra.mxu0 0.0
        %5697 = vmatprep.subr.mxu0 0.0
        %5698 = vmatpush1.msra.mxu0 0.0
        %5699 = vmatprep.subr.mxu0 0.0
        %5700 = vmatpush1.msra.mxu0 0.0
        %5701 = vmatprep.subr.mxu0 0.0
        %5702 = vmatpush1.msra.mxu0 0.0
        %5703 = vmatprep.subr.mxu0 0.0
        %5704 = vmatpush1.msra.mxu0 0.0
        %5705 = vmatprep.subr.mxu0 0.0
        %5706 = vmatpush1.msra.mxu0 0.0
        %5707 = vmatprep.subr.mxu0 0.0
        %5708 = vmatpush1.msra.mxu0 0.0
        %5709 = vmatprep.subr.mxu0 0.0
        %5710 = vmatpush1.msra.mxu0 0.0
        %5711 = vmatprep.subr.mxu0 0.0
        %5712 = vmatpush1.msra.mxu0 0.0
        %5713 = vmatprep.subr.mxu0 0.0
        %5714 = vmatpush1.msra.mxu0 0.0
        %5715 = vmatprep.subr.mxu0 0.0
        %5716 = vmatpush1.msra.mxu0 0.0
        %5717 = vmatprep.subr.mxu0 0.0
        %5718 = vmatpush1.msra.mxu0 0.0
        %5719 = vmatprep.subr.mxu0 0.0
        %5720 = vmatpush1.msra.mxu0 0.0
        %5721 = vmatprep.subr.mxu0 0.0
        %5722 = vmatpush1.msra.mxu0 0.0
        %5723 = vmatprep.subr.mxu0 0.0
        %5724 = vmatpush1.msra.mxu0 0.0
        %5725 = vmatprep.subr.mxu0 0.0
        %5726 = vmatpush1.msra.mxu0 0.0
        %5727 = vmatprep.subr.mxu0 0.0
        %5728 = vmatpush1.msra.mxu0 0.0
        %5729 = vmatprep.subr.mxu0 0.0
        %5730 = vmatpush1.msra.mxu0 0.0
        %5731 = vmatprep.subr.mxu0 0.0
        %5732 = vmatpush1.msra.mxu0 0.0
        %5733 = vmatprep.subr.mxu0 0.0
        %5734 = vmatpush1.msra.mxu0 0.0
        %5735 = vmatprep.subr.mxu0 0.0
        %5736 = vmatpush1.msra.mxu0 0.0
        %5737 = vmatprep.subr.mxu0 0.0
        %5738 = vmatpush1.msra.mxu0 0.0
        %5739 = vmatprep.subr.mxu0 0.0
        %5740 = vmatpush1.msra.mxu0 0.0
        %5741 = vmatprep.subr.mxu0 0.0
        %5742 = vmatpush1.msra.mxu0 0.0
        %5743 = vmatprep.subr.mxu0 0.0
        %5744 = vmatpush1.msra.mxu0 0.0
        %5745 = vmatprep.subr.mxu0 0.0
        %5746 = vmatpush1.msra.mxu0 0.0
        %5747 = vmatprep.subr.mxu0 0.0
        %5748 = vmatpush1.msra.mxu0 0.0
        %5749 = vmatprep.mubr.f32.mxu0 0.0
        %v5750 = vand.u32 %v1174, 4294901760
        %v5751 = vsub.f32 %v1174, %v5750
        %v5752 = vand.u32 %v5751, 4294901760
        %5753 = vmatmul.mubr.f32.gmra.mrb[0].mxu0 %v5752
        %v5754 = vpop.f32.mrb[0].mxu0
        %v5755 = vadd.f32 %v5671, %v5754
        %v5756 = vpop.f32.mrb[0].mxu0
        %v5757 = vadd.f32 %v5673, %v5756
        %5758 = vdwg.mxu0
        %v5759 = vand.u32 %v5361, 4294901760
        %v5760 = vsub.f32 %v5361, %v5759
        %v5761 = vand.u32 %v5760, 4294901760
        %5762 = vmatprep.subr.mxu0 %v5761
        %v5763 = vand.u32 %v5360, 4294901760
        %v5764 = vsub.f32 %v5360, %v5763
        %v5765 = vand.u32 %v5764, 4294901760
        %5766 = vmatpush1.msra.mxu0 %v5765
        %v5767 = vand.u32 %v5363, 4294901760
        %v5768 = vsub.f32 %v5363, %v5767
        %v5769 = vand.u32 %v5768, 4294901760
        %5770 = vmatprep.subr.mxu0 %v5769
        %v5771 = vand.u32 %v5362, 4294901760
        %v5772 = vsub.f32 %v5362, %v5771
        %v5773 = vand.u32 %v5772, 4294901760
        %5774 = vmatpush1.msra.mxu0 %v5773
        %v5775 = vand.u32 %v5365, 4294901760
        %v5776 = vsub.f32 %v5365, %v5775
        %v5777 = vand.u32 %v5776, 4294901760
        %5778 = vmatprep.subr.mxu0 %v5777
        %v5779 = vand.u32 %v5364, 4294901760
        %v5780 = vsub.f32 %v5364, %v5779
        %v5781 = vand.u32 %v5780, 4294901760
        %5782 = vmatpush1.msra.mxu0 %v5781
        %v5783 = vand.u32 %v5367, 4294901760
        %v5784 = vsub.f32 %v5367, %v5783
        %v5785 = vand.u32 %v5784, 4294901760
        %5786 = vmatprep.subr.mxu0 %v5785
        %v5787 = vand.u32 %v5366, 4294901760
        %v5788 = vsub.f32 %v5366, %v5787
        %v5789 = vand.u32 %v5788, 4294901760
        %5790 = vmatpush1.msra.mxu0 %v5789
        %v5791 = vand.u32 %v5372, 4294901760
        %v5792 = vsub.f32 %v5372, %v5791
        %v5793 = vand.u32 %v5792, 4294901760
        %5794 = vmatprep.subr.mxu0 %v5793
        %v5795 = vand.u32 %v5369, 4294901760
        %v5796 = vsub.f32 %v5369, %v5795
        %v5797 = vand.u32 %v5796, 4294901760
        %5798 = vmatpush1.msra.mxu0 %v5797
        %5799 = vmatprep.subr.mxu0 0.0
        %5800 = vmatpush1.msra.mxu0 0.0
        %5801 = vmatprep.subr.mxu0 0.0
        %5802 = vmatpush1.msra.mxu0 0.0
        %5803 = vmatprep.subr.mxu0 0.0
        %5804 = vmatpush1.msra.mxu0 0.0
        %5805 = vmatprep.subr.mxu0 0.0
        %5806 = vmatpush1.msra.mxu0 0.0
        %5807 = vmatprep.subr.mxu0 0.0
        %5808 = vmatpush1.msra.mxu0 0.0
        %5809 = vmatprep.subr.mxu0 0.0
        %5810 = vmatpush1.msra.mxu0 0.0
        %5811 = vmatprep.subr.mxu0 0.0
        %5812 = vmatpush1.msra.mxu0 0.0
        %5813 = vmatprep.subr.mxu0 0.0
        %5814 = vmatpush1.msra.mxu0 0.0
        %5815 = vmatprep.subr.mxu0 0.0
        %5816 = vmatpush1.msra.mxu0 0.0
        %5817 = vmatprep.subr.mxu0 0.0
        %5818 = vmatpush1.msra.mxu0 0.0
        %5819 = vmatprep.subr.mxu0 0.0
        %5820 = vmatpush1.msra.mxu0 0.0
        %5821 = vmatprep.subr.mxu0 0.0
        %5822 = vmatpush1.msra.mxu0 0.0
        %5823 = vmatprep.subr.mxu0 0.0
        %5824 = vmatpush1.msra.mxu0 0.0
        %5825 = vmatprep.subr.mxu0 0.0
        %5826 = vmatpush1.msra.mxu0 0.0
        %5827 = vmatprep.subr.mxu0 0.0
        %5828 = vmatpush1.msra.mxu0 0.0
        %5829 = vmatprep.subr.mxu0 0.0
        %5830 = vmatpush1.msra.mxu0 0.0
        %5831 = vmatprep.subr.mxu0 0.0
        %5832 = vmatpush1.msra.mxu0 0.0
        %5833 = vmatprep.subr.mxu0 0.0
        %5834 = vmatpush1.msra.mxu0 0.0
        %5835 = vmatprep.subr.mxu0 0.0
        %5836 = vmatpush1.msra.mxu0 0.0
        %5837 = vmatprep.subr.mxu0 0.0
        %5838 = vmatpush1.msra.mxu0 0.0
        %5839 = vmatprep.subr.mxu0 0.0
        %5840 = vmatpush1.msra.mxu0 0.0
        %5841 = vmatprep.subr.mxu0 0.0
        %5842 = vmatpush1.msra.mxu0 0.0
        %5843 = vmatprep.subr.mxu0 0.0
        %5844 = vmatpush1.msra.mxu0 0.0
        %5845 = vmatprep.subr.mxu0 0.0
        %5846 = vmatpush1.msra.mxu0 0.0
        %5847 = vmatprep.subr.mxu0 0.0
        %5848 = vmatpush1.msra.mxu0 0.0
        %5849 = vmatprep.subr.mxu0 0.0
        %5850 = vmatpush1.msra.mxu0 0.0
        %5851 = vmatprep.subr.mxu0 0.0
        %5852 = vmatpush1.msra.mxu0 0.0
        %5853 = vmatprep.mubr.f32.mxu0 0.0
        %v5854 = vand.u32 %v1174, 4294901760
        %5855 = vmatmul.mubr.f32.gmra.mrb[0].mxu0 %v5854
        %v5856 = vpop.f32.mrb[0].mxu0
        %v5857 = vadd.f32 %v5755, %v5856
        %v5858 = vpop.f32.mrb[0].mxu0
        %v5859 = vadd.f32 %v5757, %v5858
        %5860 = vdwg.mxu0
        %v5861 = vand.u32 %v5361, 4294901760
        %5862 = vmatprep.subr.mxu0 %v5861
        %v5863 = vand.u32 %v5360, 4294901760
        %5864 = vmatpush1.msra.mxu0 %v5863
        %v5865 = vand.u32 %v5363, 4294901760
        %5866 = vmatprep.subr.mxu0 %v5865
        %v5867 = vand.u32 %v5362, 4294901760
        %5868 = vmatpush1.msra.mxu0 %v5867
        %v5869 = vand.u32 %v5365, 4294901760
        %5870 = vmatprep.subr.mxu0 %v5869
        %v5871 = vand.u32 %v5364, 4294901760
        %5872 = vmatpush1.msra.mxu0 %v5871
        %v5873 = vand.u32 %v5367, 4294901760
        %5874 = vmatprep.subr.mxu0 %v5873
        %v5875 = vand.u32 %v5366, 4294901760
        %5876 = vmatpush1.msra.mxu0 %v5875
        %v5877 = vand.u32 %v5372, 4294901760
        %5878 = vmatprep.subr.mxu0 %v5877
        %v5879 = vand.u32 %v5369, 4294901760
        %5880 = vmatpush1.msra.mxu0 %v5879
        %5881 = vmatprep.subr.mxu0 0.0
        %5882 = vmatpush1.msra.mxu0 0.0
        %5883 = vmatprep.subr.mxu0 0.0
        %5884 = vmatpush1.msra.mxu0 0.0
        %5885 = vmatprep.subr.mxu0 0.0
        %5886 = vmatpush1.msra.mxu0 0.0
        %5887 = vmatprep.subr.mxu0 0.0
        %5888 = vmatpush1.msra.mxu0 0.0
        %5889 = vmatprep.subr.mxu0 0.0
        %5890 = vmatpush1.msra.mxu0 0.0
        %5891 = vmatprep.subr.mxu0 0.0
        %5892 = vmatpush1.msra.mxu0 0.0
        %5893 = vmatprep.subr.mxu0 0.0
        %5894 = vmatpush1.msra.mxu0 0.0
        %5895 = vmatprep.subr.mxu0 0.0
        %5896 = vmatpush1.msra.mxu0 0.0
        %5897 = vmatprep.subr.mxu0 0.0
        %5898 = vmatpush1.msra.mxu0 0.0
        %5899 = vmatprep.subr.mxu0 0.0
        %5900 = vmatpush1.msra.mxu0 0.0
        %5901 = vmatprep.subr.mxu0 0.0
        %5902 = vmatpush1.msra.mxu0 0.0
        %5903 = vmatprep.subr.mxu0 0.0
        %5904 = vmatpush1.msra.mxu0 0.0
        %5905 = vmatprep.subr.mxu0 0.0
        %5906 = vmatpush1.msra.mxu0 0.0
        %5907 = vmatprep.subr.mxu0 0.0
        %5908 = vmatpush1.msra.mxu0 0.0
        %5909 = vmatprep.subr.mxu0 0.0
        %5910 = vmatpush1.msra.mxu0 0.0
        %5911 = vmatprep.subr.mxu0 0.0
        %5912 = vmatpush1.msra.mxu0 0.0
        %5913 = vmatprep.subr.mxu0 0.0
        %5914 = vmatpush1.msra.mxu0 0.0
        %5915 = vmatprep.subr.mxu0 0.0
        %5916 = vmatpush1.msra.mxu0 0.0
        %5917 = vmatprep.subr.mxu0 0.0
        %5918 = vmatpush1.msra.mxu0 0.0
        %5919 = vmatprep.subr.mxu0 0.0
        %5920 = vmatpush1.msra.mxu0 0.0
        %5921 = vmatprep.subr.mxu0 0.0
        %5922 = vmatpush1.msra.mxu0 0.0
        %5923 = vmatprep.subr.mxu0 0.0
        %5924 = vmatpush1.msra.mxu0 0.0
        %5925 = vmatprep.subr.mxu0 0.0
        %5926 = vmatpush1.msra.mxu0 0.0
        %5927 = vmatprep.subr.mxu0 0.0
        %5928 = vmatpush1.msra.mxu0 0.0
        %5929 = vmatprep.subr.mxu0 0.0
        %5930 = vmatpush1.msra.mxu0 0.0
        %5931 = vmatprep.subr.mxu0 0.0
        %5932 = vmatpush1.msra.mxu0 0.0
        %5933 = vmatprep.subr.mxu0 0.0
        %5934 = vmatpush1.msra.mxu0 0.0
        %5935 = vmatprep.mubr.f32.mxu0 0.0
        %v5936 = vand.u32 %v1174, 4294901760
        %5937 = vmatmul.mubr.f32.gmra.mrb[0].mxu0 %v5936
        %v5938 = vpop.f32.mrb[0].mxu0
        %v5939 = vadd.f32 %v5857, %v5938
        %v5940 = vpop.f32.mrb[0].mxu0
        %v5941 = vadd.f32 %v5859, %v5940
        %5942 = vdwg.mxu0
        %v5943 = vsel %vm442, %v5939, 0.0
        %v5944 = vsel %vm442, %v5941, 0.0
        %v5945 = vadd.f32 %v5943, %v5944
        %5946 = vadd.xlane.f32.xlu0 %v5945
        %v5947 = vpop.xlane.xlu0 %5946
        %v5948 = vmul.f32 %v5947, %v1042
        %v5949 = vsub.f32 %v5939, %v5948
        %v5950 = vsub.f32 %v5941, %v5948
        %v5951 = vmul.f32 %v5949, %v5949
        %v5952 = vmul.f32 %v5950, %v5950
        %v5953 = vsel %vm442, %v5951, 0.0
        %v5954 = vsel %vm442, %v5952, 0.0
        %v5955 = vadd.f32 %v5953, %v5954
        %5956 = vadd.xlane.f32.xlu0 %v5955
        %v5957 = vpop.xlane.xlu0 %5956
        %v5958 = vmul.f32 %v5957, %v1042
        %v5959 = vadd.f32 %v5958, 1e-05
        %v5960 = vrsqrt.pop %v5959
        %v5961 = vmul.f32 %v5949, %v5960
        %v5962 = vmul.f32 %v5950, %v5960
        %v5963 = vadd.f32 %v5961, %v4557
        %v5964 = vadd.f32 %v5962, %v4558
        %v5965 = vmax.f32 %v5963, 0.0
        %v5966 = vmax.f32 %v5964, 0.0
        %5969 = vrot.lane.b32.xlu0 %v5965, 17
        %v5970 = vpop.permute.xlu0 %5969
        %5971 = vrot.lane.b32.xlu0 %v5966, 17
        %v5972 = vpop.permute.xlu0 %5971
        %v5973 = vsel %vm333, %v5970, %v5972
        %v5976 = vsel %vm333, 0.0, %v5970
        %v5977 = vsel %vm340, %v5976, 0.0
        %v5978 = vsel %vm341, %v5973, 0.0
        %5979 = vrot.lane.b32.xlu0 %v5965, 16
        %v5980 = vpop.permute.xlu0 %5979
        %5981 = vrot.lane.b32.xlu0 %v5966, 16
        %v5982 = vpop.permute.xlu0 %5981
        %v5983 = vsel %vm348, %v5980, %v5982
        %v5985 = vsel %vm348, 0.0, %v5980
        %5986 = vrot.lane.b32.xlu0 %v5965, 15
        %v5987 = vpop.permute.xlu0 %5986
        %5988 = vrot.lane.b32.xlu0 %v5966, 15
        %v5989 = vpop.permute.xlu0 %5988
        %v5990 = vsel %vm356, %v5987, %v5989
        %v5993 = vsel %vm356, 0.0, %v5987
        %v5994 = vsel %vm363, %v5993, 0.0
        %v5995 = vsel %vm364, %v5990, 0.0
        %5996 = vrot.lane.b32.xlu0 %v5965, 1
        %v5997 = vpop.permute.xlu0 %5996
        %5998 = vrot.lane.b32.xlu0 %v5966, 1
        %v5999 = vpop.permute.xlu0 %5998
        %v6000 = vsel %vm371, %v5997, %v5999
        %v6003 = vsel %vm371, 0.0, %v5997
        %v6004 = vsel %vm340, %v6003, 0.0
        %v6005 = vsel %vm341, %v6000, 0.0
        %6006 = vrot.lane.b32.xlu0 %v5965, 127
        %v6007 = vpop.permute.xlu0 %6006
        %6008 = vrot.lane.b32.xlu0 %v5966, 127
        %v6009 = vpop.permute.xlu0 %6008
        %v6010 = vsel %vm382, %v6007, %v6009
        %v6013 = vsel %vm382, %v6009, 0.0
        %v6014 = vsel %vm363, %v6010, 0.0
        %v6015 = vsel %vm364, %v6013, 0.0
        %6016 = vrot.lane.b32.xlu0 %v5965, 113
        %v6017 = vpop.permute.xlu0 %6016
        %6018 = vrot.lane.b32.xlu0 %v5966, 113
        %v6019 = vpop.permute.xlu0 %6018
        %v6020 = vsel %vm393, %v6017, %v6019
        %v6023 = vsel %vm393, %v6019, 0.0
        %v6024 = vsel %vm340, %v6020, 0.0
        %v6025 = vsel %vm341, %v6023, 0.0
        %6026 = vrot.lane.b32.xlu0 %v5965, 112
        %v6027 = vpop.permute.xlu0 %6026
        %6028 = vrot.lane.b32.xlu0 %v5966, 112
        %v6029 = vpop.permute.xlu0 %6028
        %v6030 = vsel %vm404, %v6027, %v6029
        %v6032 = vsel %vm404, %v6029, 0.0
        %6033 = vrot.lane.b32.xlu0 %v5965, 111
        %v6034 = vpop.permute.xlu0 %6033
        %6035 = vrot.lane.b32.xlu0 %v5966, 111
        %v6036 = vpop.permute.xlu0 %6035
        %v6037 = vsel %vm412, %v6034, %v6036
        %v6040 = vsel %vm412, %v6036, 0.0
        %v6041 = vsel %vm363, %v6037, 0.0
        %v6042 = vsel %vm364, %v6040, 0.0
        %v6044 = vrot.slane %v5985, 4
        %v6045 = vrot.slane %v5983, 4
        %v6050 = vrot.slane %v6004, 4
        %v6051 = vrot.slane %v6005, 4
        %v6056 = vrot.slane %v6014, 4
        %v6057 = vrot.slane %v6015, 4
        %v6061 = vrot.slane %v6030, 4
        %v6062 = vrot.slane %v6032, 4
        %v6065 = vsel %vm442, %v5977, %v6044
        %v6066 = vsel %vm442, %v5978, %v6045
        %v6067 = vsel %vm442, %v5994, %v6050
        %v6068 = vsel %vm442, %v5995, %v6051
        %v6069 = vsel %vm442, %v5965, %v6056
        %v6070 = vsel %vm442, %v5966, %v6057
        %v6071 = vsel %vm442, %v6024, %v6061
        %v6072 = vsel %vm442, %v6025, %v6062
        %v6074 = vsel %vm442, %v6041, 0
        %v6077 = vsel %vm442, %v6042, 0
        %v6079 = vand.u32 %v6066, 4294901760
        %6080 = vmatprep.subr.mxu0 %v6079
        %v6081 = vand.u32 %v6065, 4294901760
        %6082 = vmatpush1.msra.mxu0 %v6081
        %v6083 = vand.u32 %v6068, 4294901760
        %6084 = vmatprep.subr.mxu0 %v6083
        %v6085 = vand.u32 %v6067, 4294901760
        %6086 = vmatpush1.msra.mxu0 %v6085
        %v6087 = vand.u32 %v6070, 4294901760
        %6088 = vmatprep.subr.mxu0 %v6087
        %v6089 = vand.u32 %v6069, 4294901760
        %6090 = vmatpush1.msra.mxu0 %v6089
        %v6091 = vand.u32 %v6072, 4294901760
        %6092 = vmatprep.subr.mxu0 %v6091
        %v6093 = vand.u32 %v6071, 4294901760
        %6094 = vmatpush1.msra.mxu0 %v6093
        %v6095 = vand.u32 %v6077, 4294901760
        %6096 = vmatprep.subr.mxu0 %v6095
        %v6097 = vand.u32 %v6074, 4294901760
        %6098 = vmatpush1.msra.mxu0 %v6097
        %6099 = vmatprep.subr.mxu0 0.0
        %6100 = vmatpush1.msra.mxu0 0.0
        %6101 = vmatprep.subr.mxu0 0.0
        %6102 = vmatpush1.msra.mxu0 0.0
        %6103 = vmatprep.subr.mxu0 0.0
        %6104 = vmatpush1.msra.mxu0 0.0
        %6105 = vmatprep.subr.mxu0 0.0
        %6106 = vmatpush1.msra.mxu0 0.0
        %6107 = vmatprep.subr.mxu0 0.0
        %6108 = vmatpush1.msra.mxu0 0.0
        %6109 = vmatprep.subr.mxu0 0.0
        %6110 = vmatpush1.msra.mxu0 0.0
        %6111 = vmatprep.subr.mxu0 0.0
        %6112 = vmatpush1.msra.mxu0 0.0
        %6113 = vmatprep.subr.mxu0 0.0
        %6114 = vmatpush1.msra.mxu0 0.0
        %6115 = vmatprep.subr.mxu0 0.0
        %6116 = vmatpush1.msra.mxu0 0.0
        %6117 = vmatprep.subr.mxu0 0.0
        %6118 = vmatpush1.msra.mxu0 0.0
        %6119 = vmatprep.subr.mxu0 0.0
        %6120 = vmatpush1.msra.mxu0 0.0
        %6121 = vmatprep.subr.mxu0 0.0
        %6122 = vmatpush1.msra.mxu0 0.0
        %6123 = vmatprep.subr.mxu0 0.0
        %6124 = vmatpush1.msra.mxu0 0.0
        %6125 = vmatprep.subr.mxu0 0.0
        %6126 = vmatpush1.msra.mxu0 0.0
        %6127 = vmatprep.subr.mxu0 0.0
        %6128 = vmatpush1.msra.mxu0 0.0
        %6129 = vmatprep.subr.mxu0 0.0
        %6130 = vmatpush1.msra.mxu0 0.0
        %6131 = vmatprep.subr.mxu0 0.0
        %6132 = vmatpush1.msra.mxu0 0.0
        %6133 = vmatprep.subr.mxu0 0.0
        %6134 = vmatpush1.msra.mxu0 0.0
        %6135 = vmatprep.subr.mxu0 0.0
        %6136 = vmatpush1.msra.mxu0 0.0
        %6137 = vmatprep.subr.mxu0 0.0
        %6138 = vmatpush1.msra.mxu0 0.0
        %6139 = vmatprep.subr.mxu0 0.0
        %6140 = vmatpush1.msra.mxu0 0.0
        %6141 = vmatprep.subr.mxu0 0.0
        %6142 = vmatpush1.msra.mxu0 0.0
        %6143 = vmatprep.subr.mxu0 0.0
        %6144 = vmatpush1.msra.mxu0 0.0
        %6145 = vmatprep.subr.mxu0 0.0
        %6146 = vmatpush1.msra.mxu0 0.0
        %6147 = vmatprep.subr.mxu0 0.0
        %6148 = vmatpush1.msra.mxu0 0.0
        %6149 = vmatprep.subr.mxu0 0.0
        %6150 = vmatpush1.msra.mxu0 0.0
        %6151 = vmatprep.subr.mxu0 0.0
        %6152 = vmatpush1.msra.mxu0 0.0
        %6153 = vmatprep.mubr.f32.mxu0 0.0
        %v6154 = vand.u32 %v1889, 4294901760
        %v6155 = vsub.f32 %v1889, %v6154
        %v6156 = vand.u32 %v6155, 4294901760
        %v6157 = vsub.f32 %v6155, %v6156
        %v6158 = vand.u32 %v6157, 4294901760
        %6159 = vmatmul.mubr.f32.gmra.mrb[0].mxu0 %v6158
        %v6160 = vpop.f32.mrb[0].mxu0
        %v6161 = vadd.f32 %v1886, %v6160
        %v6162 = vpop.f32.mrb[0].mxu0
        %v6163 = vadd.f32 %v1886, %v6162
        %6164 = vdwg.mxu0
        %v6165 = vand.u32 %v6066, 4294901760
        %v6166 = vsub.f32 %v6066, %v6165
        %v6167 = vand.u32 %v6166, 4294901760
        %v6168 = vsub.f32 %v6166, %v6167
        %v6169 = vand.u32 %v6168, 4294901760
        %6170 = vmatprep.subr.mxu0 %v6169
        %v6171 = vand.u32 %v6065, 4294901760
        %v6172 = vsub.f32 %v6065, %v6171
        %v6173 = vand.u32 %v6172, 4294901760
        %v6174 = vsub.f32 %v6172, %v6173
        %v6175 = vand.u32 %v6174, 4294901760
        %6176 = vmatpush1.msra.mxu0 %v6175
        %v6177 = vand.u32 %v6068, 4294901760
        %v6178 = vsub.f32 %v6068, %v6177
        %v6179 = vand.u32 %v6178, 4294901760
        %v6180 = vsub.f32 %v6178, %v6179
        %v6181 = vand.u32 %v6180, 4294901760
        %6182 = vmatprep.subr.mxu0 %v6181
        %v6183 = vand.u32 %v6067, 4294901760
        %v6184 = vsub.f32 %v6067, %v6183
        %v6185 = vand.u32 %v6184, 4294901760
        %v6186 = vsub.f32 %v6184, %v6185
        %v6187 = vand.u32 %v6186, 4294901760
        %6188 = vmatpush1.msra.mxu0 %v6187
        %v6189 = vand.u32 %v6070, 4294901760
        %v6190 = vsub.f32 %v6070, %v6189
        %v6191 = vand.u32 %v6190, 4294901760
        %v6192 = vsub.f32 %v6190, %v6191
        %v6193 = vand.u32 %v6192, 4294901760
        %6194 = vmatprep.subr.mxu0 %v6193
        %v6195 = vand.u32 %v6069, 4294901760
        %v6196 = vsub.f32 %v6069, %v6195
        %v6197 = vand.u32 %v6196, 4294901760
        %v6198 = vsub.f32 %v6196, %v6197
        %v6199 = vand.u32 %v6198, 4294901760
        %6200 = vmatpush1.msra.mxu0 %v6199
        %v6201 = vand.u32 %v6072, 4294901760
        %v6202 = vsub.f32 %v6072, %v6201
        %v6203 = vand.u32 %v6202, 4294901760
        %v6204 = vsub.f32 %v6202, %v6203
        %v6205 = vand.u32 %v6204, 4294901760
        %6206 = vmatprep.subr.mxu0 %v6205
        %v6207 = vand.u32 %v6071, 4294901760
        %v6208 = vsub.f32 %v6071, %v6207
        %v6209 = vand.u32 %v6208, 4294901760
        %v6210 = vsub.f32 %v6208, %v6209
        %v6211 = vand.u32 %v6210, 4294901760
        %6212 = vmatpush1.msra.mxu0 %v6211
        %v6213 = vand.u32 %v6077, 4294901760
        %v6214 = vsub.f32 %v6077, %v6213
        %v6215 = vand.u32 %v6214, 4294901760
        %v6216 = vsub.f32 %v6214, %v6215
        %v6217 = vand.u32 %v6216, 4294901760
        %6218 = vmatprep.subr.mxu0 %v6217
        %v6219 = vand.u32 %v6074, 4294901760
        %v6220 = vsub.f32 %v6074, %v6219
        %v6221 = vand.u32 %v6220, 4294901760
        %v6222 = vsub.f32 %v6220, %v6221
        %v6223 = vand.u32 %v6222, 4294901760
        %6224 = vmatpush1.msra.mxu0 %v6223
        %6225 = vmatprep.subr.mxu0 0.0
        %6226 = vmatpush1.msra.mxu0 0.0
        %6227 = vmatprep.subr.mxu0 0.0
        %6228 = vmatpush1.msra.mxu0 0.0
        %6229 = vmatprep.subr.mxu0 0.0
        %6230 = vmatpush1.msra.mxu0 0.0
        %6231 = vmatprep.subr.mxu0 0.0
        %6232 = vmatpush1.msra.mxu0 0.0
        %6233 = vmatprep.subr.mxu0 0.0
        %6234 = vmatpush1.msra.mxu0 0.0
        %6235 = vmatprep.subr.mxu0 0.0
        %6236 = vmatpush1.msra.mxu0 0.0
        %6237 = vmatprep.subr.mxu0 0.0
        %6238 = vmatpush1.msra.mxu0 0.0
        %6239 = vmatprep.subr.mxu0 0.0
        %6240 = vmatpush1.msra.mxu0 0.0
        %6241 = vmatprep.subr.mxu0 0.0
        %6242 = vmatpush1.msra.mxu0 0.0
        %6243 = vmatprep.subr.mxu0 0.0
        %6244 = vmatpush1.msra.mxu0 0.0
        %6245 = vmatprep.subr.mxu0 0.0
        %6246 = vmatpush1.msra.mxu0 0.0
        %6247 = vmatprep.subr.mxu0 0.0
        %6248 = vmatpush1.msra.mxu0 0.0
        %6249 = vmatprep.subr.mxu0 0.0
        %6250 = vmatpush1.msra.mxu0 0.0
        %6251 = vmatprep.subr.mxu0 0.0
        %6252 = vmatpush1.msra.mxu0 0.0
        %6253 = vmatprep.subr.mxu0 0.0
        %6254 = vmatpush1.msra.mxu0 0.0
        %6255 = vmatprep.subr.mxu0 0.0
        %6256 = vmatpush1.msra.mxu0 0.0
        %6257 = vmatprep.subr.mxu0 0.0
        %6258 = vmatpush1.msra.mxu0 0.0
        %6259 = vmatprep.subr.mxu0 0.0
        %6260 = vmatpush1.msra.mxu0 0.0
        %6261 = vmatprep.subr.mxu0 0.0
        %6262 = vmatpush1.msra.mxu0 0.0
        %6263 = vmatprep.subr.mxu0 0.0
        %6264 = vmatpush1.msra.mxu0 0.0
        %6265 = vmatprep.subr.mxu0 0.0
        %6266 = vmatpush1.msra.mxu0 0.0
        %6267 = vmatprep.subr.mxu0 0.0
        %6268 = vmatpush1.msra.mxu0 0.0
        %6269 = vmatprep.subr.mxu0 0.0
        %6270 = vmatpush1.msra.mxu0 0.0
        %6271 = vmatprep.subr.mxu0 0.0
        %6272 = vmatpush1.msra.mxu0 0.0
        %6273 = vmatprep.subr.mxu0 0.0
        %6274 = vmatpush1.msra.mxu0 0.0
        %6275 = vmatprep.subr.mxu0 0.0
        %6276 = vmatpush1.msra.mxu0 0.0
        %6277 = vmatprep.subr.mxu0 0.0
        %6278 = vmatpush1.msra.mxu0 0.0
        %6279 = vmatprep.mubr.f32.mxu0 0.0
        %v6280 = vand.u32 %v1889, 4294901760
        %6281 = vmatmul.mubr.f32.gmra.mrb[0].mxu0 %v6280
        %v6282 = vpop.f32.mrb[0].mxu0
        %v6283 = vadd.f32 %v6161, %v6282
        %v6284 = vpop.f32.mrb[0].mxu0
        %v6285 = vadd.f32 %v6163, %v6284
        %6286 = vdwg.mxu0
        %v6287 = vand.u32 %v6066, 4294901760
        %v6288 = vsub.f32 %v6066, %v6287
        %6289 = vmatprep.subr.mxu0 %v6288
        %v6290 = vand.u32 %v6065, 4294901760
        %v6291 = vsub.f32 %v6065, %v6290
        %6292 = vmatpush1.msra.mxu0 %v6291
        %v6293 = vand.u32 %v6068, 4294901760
        %v6294 = vsub.f32 %v6068, %v6293
        %6295 = vmatprep.subr.mxu0 %v6294
        %v6296 = vand.u32 %v6067, 4294901760
        %v6297 = vsub.f32 %v6067, %v6296
        %6298 = vmatpush1.msra.mxu0 %v6297
        %v6299 = vand.u32 %v6070, 4294901760
        %v6300 = vsub.f32 %v6070, %v6299
        %6301 = vmatprep.subr.mxu0 %v6300
        %v6302 = vand.u32 %v6069, 4294901760
        %v6303 = vsub.f32 %v6069, %v6302
        %6304 = vmatpush1.msra.mxu0 %v6303
        %v6305 = vand.u32 %v6072, 4294901760
        %v6306 = vsub.f32 %v6072, %v6305
        %6307 = vmatprep.subr.mxu0 %v6306
        %v6308 = vand.u32 %v6071, 4294901760
        %v6309 = vsub.f32 %v6071, %v6308
        %6310 = vmatpush1.msra.mxu0 %v6309
        %v6311 = vand.u32 %v6077, 4294901760
        %v6312 = vsub.f32 %v6077, %v6311
        %6313 = vmatprep.subr.mxu0 %v6312
        %v6314 = vand.u32 %v6074, 4294901760
        %v6315 = vsub.f32 %v6074, %v6314
        %6316 = vmatpush1.msra.mxu0 %v6315
        %6317 = vmatprep.subr.mxu0 0.0
        %6318 = vmatpush1.msra.mxu0 0.0
        %6319 = vmatprep.subr.mxu0 0.0
        %6320 = vmatpush1.msra.mxu0 0.0
        %6321 = vmatprep.subr.mxu0 0.0
        %6322 = vmatpush1.msra.mxu0 0.0
        %6323 = vmatprep.subr.mxu0 0.0
        %6324 = vmatpush1.msra.mxu0 0.0
        %6325 = vmatprep.subr.mxu0 0.0
        %6326 = vmatpush1.msra.mxu0 0.0
        %6327 = vmatprep.subr.mxu0 0.0
        %6328 = vmatpush1.msra.mxu0 0.0
        %6329 = vmatprep.subr.mxu0 0.0
        %6330 = vmatpush1.msra.mxu0 0.0
        %6331 = vmatprep.subr.mxu0 0.0
        %6332 = vmatpush1.msra.mxu0 0.0
        %6333 = vmatprep.subr.mxu0 0.0
        %6334 = vmatpush1.msra.mxu0 0.0
        %6335 = vmatprep.subr.mxu0 0.0
        %6336 = vmatpush1.msra.mxu0 0.0
        %6337 = vmatprep.subr.mxu0 0.0
        %6338 = vmatpush1.msra.mxu0 0.0
        %6339 = vmatprep.subr.mxu0 0.0
        %6340 = vmatpush1.msra.mxu0 0.0
        %6341 = vmatprep.subr.mxu0 0.0
        %6342 = vmatpush1.msra.mxu0 0.0
        %6343 = vmatprep.subr.mxu0 0.0
        %6344 = vmatpush1.msra.mxu0 0.0
        %6345 = vmatprep.subr.mxu0 0.0
        %6346 = vmatpush1.msra.mxu0 0.0
        %6347 = vmatprep.subr.mxu0 0.0
        %6348 = vmatpush1.msra.mxu0 0.0
        %6349 = vmatprep.subr.mxu0 0.0
        %6350 = vmatpush1.msra.mxu0 0.0
        %6351 = vmatprep.subr.mxu0 0.0
        %6352 = vmatpush1.msra.mxu0 0.0
        %6353 = vmatprep.subr.mxu0 0.0
        %6354 = vmatpush1.msra.mxu0 0.0
        %6355 = vmatprep.subr.mxu0 0.0
        %6356 = vmatpush1.msra.mxu0 0.0
        %6357 = vmatprep.subr.mxu0 0.0
        %6358 = vmatpush1.msra.mxu0 0.0
        %6359 = vmatprep.subr.mxu0 0.0
        %6360 = vmatpush1.msra.mxu0 0.0
        %6361 = vmatprep.subr.mxu0 0.0
        %6362 = vmatpush1.msra.mxu0 0.0
        %6363 = vmatprep.subr.mxu0 0.0
        %6364 = vmatpush1.msra.mxu0 0.0
        %6365 = vmatprep.subr.mxu0 0.0
        %6366 = vmatpush1.msra.mxu0 0.0
        %6367 = vmatprep.subr.mxu0 0.0
        %6368 = vmatpush1.msra.mxu0 0.0
        %6369 = vmatprep.subr.mxu0 0.0
        %6370 = vmatpush1.msra.mxu0 0.0
        %6371 = vmatprep.mubr.f32.mxu0 0.0
        %v6372 = vand.u32 %v1889, 4294901760
        %v6373 = vsub.f32 %v1889, %v6372
        %6374 = vmatmul.mubr.f32.gmra.mrb[0].mxu0 %v6373
        %v6375 = vpop.f32.mrb[0].mxu0
        %v6376 = vadd.f32 %v6283, %v6375
        %v6377 = vpop.f32.mrb[0].mxu0
        %v6378 = vadd.f32 %v6285, %v6377
        %6379 = vdwg.mxu0
        %v6380 = vand.u32 %v6066, 4294901760
        %6381 = vmatprep.subr.mxu0 %v6380
        %v6382 = vand.u32 %v6065, 4294901760
        %6383 = vmatpush1.msra.mxu0 %v6382
        %v6384 = vand.u32 %v6068, 4294901760
        %6385 = vmatprep.subr.mxu0 %v6384
        %v6386 = vand.u32 %v6067, 4294901760
        %6387 = vmatpush1.msra.mxu0 %v6386
        %v6388 = vand.u32 %v6070, 4294901760
        %6389 = vmatprep.subr.mxu0 %v6388
        %v6390 = vand.u32 %v6069, 4294901760
        %6391 = vmatpush1.msra.mxu0 %v6390
        %v6392 = vand.u32 %v6072, 4294901760
        %6393 = vmatprep.subr.mxu0 %v6392
        %v6394 = vand.u32 %v6071, 4294901760
        %6395 = vmatpush1.msra.mxu0 %v6394
        %v6396 = vand.u32 %v6077, 4294901760
        %6397 = vmatprep.subr.mxu0 %v6396
        %v6398 = vand.u32 %v6074, 4294901760
        %6399 = vmatpush1.msra.mxu0 %v6398
        %6400 = vmatprep.subr.mxu0 0.0
        %6401 = vmatpush1.msra.mxu0 0.0
        %6402 = vmatprep.subr.mxu0 0.0
        %6403 = vmatpush1.msra.mxu0 0.0
        %6404 = vmatprep.subr.mxu0 0.0
        %6405 = vmatpush1.msra.mxu0 0.0
        %6406 = vmatprep.subr.mxu0 0.0
        %6407 = vmatpush1.msra.mxu0 0.0
        %6408 = vmatprep.subr.mxu0 0.0
        %6409 = vmatpush1.msra.mxu0 0.0
        %6410 = vmatprep.subr.mxu0 0.0
        %6411 = vmatpush1.msra.mxu0 0.0
        %6412 = vmatprep.subr.mxu0 0.0
        %6413 = vmatpush1.msra.mxu0 0.0
        %6414 = vmatprep.subr.mxu0 0.0
        %6415 = vmatpush1.msra.mxu0 0.0
        %6416 = vmatprep.subr.mxu0 0.0
        %6417 = vmatpush1.msra.mxu0 0.0
        %6418 = vmatprep.subr.mxu0 0.0
        %6419 = vmatpush1.msra.mxu0 0.0
        %6420 = vmatprep.subr.mxu0 0.0
        %6421 = vmatpush1.msra.mxu0 0.0
        %6422 = vmatprep.subr.mxu0 0.0
        %6423 = vmatpush1.msra.mxu0 0.0
        %6424 = vmatprep.subr.mxu0 0.0
        %6425 = vmatpush1.msra.mxu0 0.0
        %6426 = vmatprep.subr.mxu0 0.0
        %6427 = vmatpush1.msra.mxu0 0.0
        %6428 = vmatprep.subr.mxu0 0.0
        %6429 = vmatpush1.msra.mxu0 0.0
        %6430 = vmatprep.subr.mxu0 0.0
        %6431 = vmatpush1.msra.mxu0 0.0
        %6432 = vmatprep.subr.mxu0 0.0
        %6433 = vmatpush1.msra.mxu0 0.0
        %6434 = vmatprep.subr.mxu0 0.0
        %6435 = vmatpush1.msra.mxu0 0.0
        %6436 = vmatprep.subr.mxu0 0.0
        %6437 = vmatpush1.msra.mxu0 0.0
        %6438 = vmatprep.subr.mxu0 0.0
        %6439 = vmatpush1.msra.mxu0 0.0
        %6440 = vmatprep.subr.mxu0 0.0
        %6441 = vmatpush1.msra.mxu0 0.0
        %6442 = vmatprep.subr.mxu0 0.0
        %6443 = vmatpush1.msra.mxu0 0.0
        %6444 = vmatprep.subr.mxu0 0.0
        %6445 = vmatpush1.msra.mxu0 0.0
        %6446 = vmatprep.subr.mxu0 0.0
        %6447 = vmatpush1.msra.mxu0 0.0
        %6448 = vmatprep.subr.mxu0 0.0
        %6449 = vmatpush1.msra.mxu0 0.0
        %6450 = vmatprep.subr.mxu0 0.0
        %6451 = vmatpush1.msra.mxu0 0.0
        %6452 = vmatprep.subr.mxu0 0.0
        %6453 = vmatpush1.msra.mxu0 0.0
        %6454 = vmatprep.mubr.f32.mxu0 0.0
        %v6455 = vand.u32 %v1889, 4294901760
        %v6456 = vsub.f32 %v1889, %v6455
        %v6457 = vand.u32 %v6456, 4294901760
        %6458 = vmatmul.mubr.f32.gmra.mrb[0].mxu0 %v6457
        %v6459 = vpop.f32.mrb[0].mxu0
        %v6460 = vadd.f32 %v6376, %v6459
        %v6461 = vpop.f32.mrb[0].mxu0
        %v6462 = vadd.f32 %v6378, %v6461
        %6463 = vdwg.mxu0
        %v6464 = vand.u32 %v6066, 4294901760
        %v6465 = vsub.f32 %v6066, %v6464
        %v6466 = vand.u32 %v6465, 4294901760
        %6467 = vmatprep.subr.mxu0 %v6466
        %v6468 = vand.u32 %v6065, 4294901760
        %v6469 = vsub.f32 %v6065, %v6468
        %v6470 = vand.u32 %v6469, 4294901760
        %6471 = vmatpush1.msra.mxu0 %v6470
        %v6472 = vand.u32 %v6068, 4294901760
        %v6473 = vsub.f32 %v6068, %v6472
        %v6474 = vand.u32 %v6473, 4294901760
        %6475 = vmatprep.subr.mxu0 %v6474
        %v6476 = vand.u32 %v6067, 4294901760
        %v6477 = vsub.f32 %v6067, %v6476
        %v6478 = vand.u32 %v6477, 4294901760
        %6479 = vmatpush1.msra.mxu0 %v6478
        %v6480 = vand.u32 %v6070, 4294901760
        %v6481 = vsub.f32 %v6070, %v6480
        %v6482 = vand.u32 %v6481, 4294901760
        %6483 = vmatprep.subr.mxu0 %v6482
        %v6484 = vand.u32 %v6069, 4294901760
        %v6485 = vsub.f32 %v6069, %v6484
        %v6486 = vand.u32 %v6485, 4294901760
        %6487 = vmatpush1.msra.mxu0 %v6486
        %v6488 = vand.u32 %v6072, 4294901760
        %v6489 = vsub.f32 %v6072, %v6488
        %v6490 = vand.u32 %v6489, 4294901760
        %6491 = vmatprep.subr.mxu0 %v6490
        %v6492 = vand.u32 %v6071, 4294901760
        %v6493 = vsub.f32 %v6071, %v6492
        %v6494 = vand.u32 %v6493, 4294901760
        %6495 = vmatpush1.msra.mxu0 %v6494
        %v6496 = vand.u32 %v6077, 4294901760
        %v6497 = vsub.f32 %v6077, %v6496
        %v6498 = vand.u32 %v6497, 4294901760
        %6499 = vmatprep.subr.mxu0 %v6498
        %v6500 = vand.u32 %v6074, 4294901760
        %v6501 = vsub.f32 %v6074, %v6500
        %v6502 = vand.u32 %v6501, 4294901760
        %6503 = vmatpush1.msra.mxu0 %v6502
        %6504 = vmatprep.subr.mxu0 0.0
        %6505 = vmatpush1.msra.mxu0 0.0
        %6506 = vmatprep.subr.mxu0 0.0
        %6507 = vmatpush1.msra.mxu0 0.0
        %6508 = vmatprep.subr.mxu0 0.0
        %6509 = vmatpush1.msra.mxu0 0.0
        %6510 = vmatprep.subr.mxu0 0.0
        %6511 = vmatpush1.msra.mxu0 0.0
        %6512 = vmatprep.subr.mxu0 0.0
        %6513 = vmatpush1.msra.mxu0 0.0
        %6514 = vmatprep.subr.mxu0 0.0
        %6515 = vmatpush1.msra.mxu0 0.0
        %6516 = vmatprep.subr.mxu0 0.0
        %6517 = vmatpush1.msra.mxu0 0.0
        %6518 = vmatprep.subr.mxu0 0.0
        %6519 = vmatpush1.msra.mxu0 0.0
        %6520 = vmatprep.subr.mxu0 0.0
        %6521 = vmatpush1.msra.mxu0 0.0
        %6522 = vmatprep.subr.mxu0 0.0
        %6523 = vmatpush1.msra.mxu0 0.0
        %6524 = vmatprep.subr.mxu0 0.0
        %6525 = vmatpush1.msra.mxu0 0.0
        %6526 = vmatprep.subr.mxu0 0.0
        %6527 = vmatpush1.msra.mxu0 0.0
        %6528 = vmatprep.subr.mxu0 0.0
        %6529 = vmatpush1.msra.mxu0 0.0
        %6530 = vmatprep.subr.mxu0 0.0
        %6531 = vmatpush1.msra.mxu0 0.0
        %6532 = vmatprep.subr.mxu0 0.0
        %6533 = vmatpush1.msra.mxu0 0.0
        %6534 = vmatprep.subr.mxu0 0.0
        %6535 = vmatpush1.msra.mxu0 0.0
        %6536 = vmatprep.subr.mxu0 0.0
        %6537 = vmatpush1.msra.mxu0 0.0
        %6538 = vmatprep.subr.mxu0 0.0
        %6539 = vmatpush1.msra.mxu0 0.0
        %6540 = vmatprep.subr.mxu0 0.0
        %6541 = vmatpush1.msra.mxu0 0.0
        %6542 = vmatprep.subr.mxu0 0.0
        %6543 = vmatpush1.msra.mxu0 0.0
        %6544 = vmatprep.subr.mxu0 0.0
        %6545 = vmatpush1.msra.mxu0 0.0
        %6546 = vmatprep.subr.mxu0 0.0
        %6547 = vmatpush1.msra.mxu0 0.0
        %6548 = vmatprep.subr.mxu0 0.0
        %6549 = vmatpush1.msra.mxu0 0.0
        %6550 = vmatprep.subr.mxu0 0.0
        %6551 = vmatpush1.msra.mxu0 0.0
        %6552 = vmatprep.subr.mxu0 0.0
        %6553 = vmatpush1.msra.mxu0 0.0
        %6554 = vmatprep.subr.mxu0 0.0
        %6555 = vmatpush1.msra.mxu0 0.0
        %6556 = vmatprep.subr.mxu0 0.0
        %6557 = vmatpush1.msra.mxu0 0.0
        %6558 = vmatprep.mubr.f32.mxu0 0.0
        %v6559 = vand.u32 %v1889, 4294901760
        %6560 = vmatmul.mubr.f32.gmra.mrb[0].mxu0 %v6559
        %v6561 = vpop.f32.mrb[0].mxu0
        %v6562 = vadd.f32 %v6460, %v6561
        %v6563 = vpop.f32.mrb[0].mxu0
        %v6564 = vadd.f32 %v6462, %v6563
        %6565 = vdwg.mxu0
        %v6566 = vand.u32 %v6066, 4294901760
        %6567 = vmatprep.subr.mxu0 %v6566
        %v6568 = vand.u32 %v6065, 4294901760
        %6569 = vmatpush1.msra.mxu0 %v6568
        %v6570 = vand.u32 %v6068, 4294901760
        %6571 = vmatprep.subr.mxu0 %v6570
        %v6572 = vand.u32 %v6067, 4294901760
        %6573 = vmatpush1.msra.mxu0 %v6572
        %v6574 = vand.u32 %v6070, 4294901760
        %6575 = vmatprep.subr.mxu0 %v6574
        %v6576 = vand.u32 %v6069, 4294901760
        %6577 = vmatpush1.msra.mxu0 %v6576
        %v6578 = vand.u32 %v6072, 4294901760
        %6579 = vmatprep.subr.mxu0 %v6578
        %v6580 = vand.u32 %v6071, 4294901760
        %6581 = vmatpush1.msra.mxu0 %v6580
        %v6582 = vand.u32 %v6077, 4294901760
        %6583 = vmatprep.subr.mxu0 %v6582
        %v6584 = vand.u32 %v6074, 4294901760
        %6585 = vmatpush1.msra.mxu0 %v6584
        %6586 = vmatprep.subr.mxu0 0.0
        %6587 = vmatpush1.msra.mxu0 0.0
        %6588 = vmatprep.subr.mxu0 0.0
        %6589 = vmatpush1.msra.mxu0 0.0
        %6590 = vmatprep.subr.mxu0 0.0
        %6591 = vmatpush1.msra.mxu0 0.0
        %6592 = vmatprep.subr.mxu0 0.0
        %6593 = vmatpush1.msra.mxu0 0.0
        %6594 = vmatprep.subr.mxu0 0.0
        %6595 = vmatpush1.msra.mxu0 0.0
        %6596 = vmatprep.subr.mxu0 0.0
        %6597 = vmatpush1.msra.mxu0 0.0
        %6598 = vmatprep.subr.mxu0 0.0
        %6599 = vmatpush1.msra.mxu0 0.0
        %6600 = vmatprep.subr.mxu0 0.0
        %6601 = vmatpush1.msra.mxu0 0.0
        %6602 = vmatprep.subr.mxu0 0.0
        %6603 = vmatpush1.msra.mxu0 0.0
        %6604 = vmatprep.subr.mxu0 0.0
        %6605 = vmatpush1.msra.mxu0 0.0
        %6606 = vmatprep.subr.mxu0 0.0
        %6607 = vmatpush1.msra.mxu0 0.0
        %6608 = vmatprep.subr.mxu0 0.0
        %6609 = vmatpush1.msra.mxu0 0.0
        %6610 = vmatprep.subr.mxu0 0.0
        %6611 = vmatpush1.msra.mxu0 0.0
        %6612 = vmatprep.subr.mxu0 0.0
        %6613 = vmatpush1.msra.mxu0 0.0
        %6614 = vmatprep.subr.mxu0 0.0
        %6615 = vmatpush1.msra.mxu0 0.0
        %6616 = vmatprep.subr.mxu0 0.0
        %6617 = vmatpush1.msra.mxu0 0.0
        %6618 = vmatprep.subr.mxu0 0.0
        %6619 = vmatpush1.msra.mxu0 0.0
        %6620 = vmatprep.subr.mxu0 0.0
        %6621 = vmatpush1.msra.mxu0 0.0
        %6622 = vmatprep.subr.mxu0 0.0
        %6623 = vmatpush1.msra.mxu0 0.0
        %6624 = vmatprep.subr.mxu0 0.0
        %6625 = vmatpush1.msra.mxu0 0.0
        %6626 = vmatprep.subr.mxu0 0.0
        %6627 = vmatpush1.msra.mxu0 0.0
        %6628 = vmatprep.subr.mxu0 0.0
        %6629 = vmatpush1.msra.mxu0 0.0
        %6630 = vmatprep.subr.mxu0 0.0
        %6631 = vmatpush1.msra.mxu0 0.0
        %6632 = vmatprep.subr.mxu0 0.0
        %6633 = vmatpush1.msra.mxu0 0.0
        %6634 = vmatprep.subr.mxu0 0.0
        %6635 = vmatpush1.msra.mxu0 0.0
        %6636 = vmatprep.subr.mxu0 0.0
        %6637 = vmatpush1.msra.mxu0 0.0
        %6638 = vmatprep.subr.mxu0 0.0
        %6639 = vmatpush1.msra.mxu0 0.0
        %6640 = vmatprep.mubr.f32.mxu0 0.0
        %v6641 = vand.u32 %v1889, 4294901760
        %6642 = vmatmul.mubr.f32.gmra.mrb[0].mxu0 %v6641
        %v6643 = vpop.f32.mrb[0].mxu0
        %v6644 = vadd.f32 %v6562, %v6643
        %v6645 = vpop.f32.mrb[0].mxu0
        %v6646 = vadd.f32 %v6564, %v6645
        %6647 = vdwg.mxu0
        %v6648 = vadd.f32 %v6644, %v4557
        %v6649 = vadd.f32 %v6646, %v4558
        %6652 = vrot.lane.b32.xlu0 %v6648, 17
        %v6653 = vpop.permute.xlu0 %6652
        %6654 = vrot.lane.b32.xlu0 %v6649, 17
        %v6655 = vpop.permute.xlu0 %6654
        %v6656 = vsel %vm333, %v6653, %v6655
        %v6659 = vsel %vm333, 0.0, %v6653
        %v6660 = vsel %vm340, %v6659, 0.0
        %v6661 = vsel %vm341, %v6656, 0.0
        %6662 = vrot.lane.b32.xlu0 %v6648, 16
        %v6663 = vpop.permute.xlu0 %6662
        %6664 = vrot.lane.b32.xlu0 %v6649, 16
        %v6665 = vpop.permute.xlu0 %6664
        %v6666 = vsel %vm348, %v6663, %v6665
        %v6668 = vsel %vm348, 0.0, %v6663
        %6669 = vrot.lane.b32.xlu0 %v6648, 15
        %v6670 = vpop.permute.xlu0 %6669
        %6671 = vrot.lane.b32.xlu0 %v6649, 15
        %v6672 = vpop.permute.xlu0 %6671
        %v6673 = vsel %vm356, %v6670, %v6672
        %v6676 = vsel %vm356, 0.0, %v6670
        %v6677 = vsel %vm363, %v6676, 0.0
        %v6678 = vsel %vm364, %v6673, 0.0
        %6679 = vrot.lane.b32.xlu0 %v6648, 1
        %v6680 = vpop.permute.xlu0 %6679
        %6681 = vrot.lane.b32.xlu0 %v6649, 1
        %v6682 = vpop.permute.xlu0 %6681
        %v6683 = vsel %vm371, %v6680, %v6682
        %v6686 = vsel %vm371, 0.0, %v6680
        %v6687 = vsel %vm340, %v6686, 0.0
        %v6688 = vsel %vm341, %v6683, 0.0
        %6689 = vrot.lane.b32.xlu0 %v6648, 127
        %v6690 = vpop.permute.xlu0 %6689
        %6691 = vrot.lane.b32.xlu0 %v6649, 127
        %v6692 = vpop.permute.xlu0 %6691
        %v6693 = vsel %vm382, %v6690, %v6692
        %v6696 = vsel %vm382, %v6692, 0.0
        %v6697 = vsel %vm363, %v6693, 0.0
        %v6698 = vsel %vm364, %v6696, 0.0
        %6699 = vrot.lane.b32.xlu0 %v6648, 113
        %v6700 = vpop.permute.xlu0 %6699
        %6701 = vrot.lane.b32.xlu0 %v6649, 113
        %v6702 = vpop.permute.xlu0 %6701
        %v6703 = vsel %vm393, %v6700, %v6702
        %v6706 = vsel %vm393, %v6702, 0.0
        %v6707 = vsel %vm340, %v6703, 0.0
        %v6708 = vsel %vm341, %v6706, 0.0
        %6709 = vrot.lane.b32.xlu0 %v6648, 112
        %v6710 = vpop.permute.xlu0 %6709
        %6711 = vrot.lane.b32.xlu0 %v6649, 112
        %v6712 = vpop.permute.xlu0 %6711
        %v6713 = vsel %vm404, %v6710, %v6712
        %v6715 = vsel %vm404, %v6712, 0.0
        %6716 = vrot.lane.b32.xlu0 %v6648, 111
        %v6717 = vpop.permute.xlu0 %6716
        %6718 = vrot.lane.b32.xlu0 %v6649, 111
        %v6719 = vpop.permute.xlu0 %6718
        %v6720 = vsel %vm412, %v6717, %v6719
        %v6723 = vsel %vm412, %v6719, 0.0
        %v6724 = vsel %vm363, %v6720, 0.0
        %v6725 = vsel %vm364, %v6723, 0.0
        %v6727 = vrot.slane %v6668, 4
        %v6728 = vrot.slane %v6666, 4
        %v6733 = vrot.slane %v6687, 4
        %v6734 = vrot.slane %v6688, 4
        %v6739 = vrot.slane %v6697, 4
        %v6740 = vrot.slane %v6698, 4
        %v6744 = vrot.slane %v6713, 4
        %v6745 = vrot.slane %v6715, 4
        %v6748 = vsel %vm442, %v6660, %v6727
        %v6749 = vsel %vm442, %v6661, %v6728
        %v6750 = vsel %vm442, %v6677, %v6733
        %v6751 = vsel %vm442, %v6678, %v6734
        %v6752 = vsel %vm442, %v6648, %v6739
        %v6753 = vsel %vm442, %v6649, %v6740
        %v6754 = vsel %vm442, %v6707, %v6744
        %v6755 = vsel %vm442, %v6708, %v6745
        %v6757 = vsel %vm442, %v6724, 0
        %v6760 = vsel %vm442, %v6725, 0
        %v6762 = vand.u32 %v6749, 4294901760
        %6763 = vmatprep.subr.mxu0 %v6762
        %v6764 = vand.u32 %v6748, 4294901760
        %6765 = vmatpush1.msra.mxu0 %v6764
        %v6766 = vand.u32 %v6751, 4294901760
        %6767 = vmatprep.subr.mxu0 %v6766
        %v6768 = vand.u32 %v6750, 4294901760
        %6769 = vmatpush1.msra.mxu0 %v6768
        %v6770 = vand.u32 %v6753, 4294901760
        %6771 = vmatprep.subr.mxu0 %v6770
        %v6772 = vand.u32 %v6752, 4294901760
        %6773 = vmatpush1.msra.mxu0 %v6772
        %v6774 = vand.u32 %v6755, 4294901760
        %6775 = vmatprep.subr.mxu0 %v6774
        %v6776 = vand.u32 %v6754, 4294901760
        %6777 = vmatpush1.msra.mxu0 %v6776
        %v6778 = vand.u32 %v6760, 4294901760
        %6779 = vmatprep.subr.mxu0 %v6778
        %v6780 = vand.u32 %v6757, 4294901760
        %6781 = vmatpush1.msra.mxu0 %v6780
        %6782 = vmatprep.subr.mxu0 0.0
        %6783 = vmatpush1.msra.mxu0 0.0
        %6784 = vmatprep.subr.mxu0 0.0
        %6785 = vmatpush1.msra.mxu0 0.0
        %6786 = vmatprep.subr.mxu0 0.0
        %6787 = vmatpush1.msra.mxu0 0.0
        %6788 = vmatprep.subr.mxu0 0.0
        %6789 = vmatpush1.msra.mxu0 0.0
        %6790 = vmatprep.subr.mxu0 0.0
        %6791 = vmatpush1.msra.mxu0 0.0
        %6792 = vmatprep.subr.mxu0 0.0
        %6793 = vmatpush1.msra.mxu0 0.0
        %6794 = vmatprep.subr.mxu0 0.0
        %6795 = vmatpush1.msra.mxu0 0.0
        %6796 = vmatprep.subr.mxu0 0.0
        %6797 = vmatpush1.msra.mxu0 0.0
        %6798 = vmatprep.subr.mxu0 0.0
        %6799 = vmatpush1.msra.mxu0 0.0
        %6800 = vmatprep.subr.mxu0 0.0
        %6801 = vmatpush1.msra.mxu0 0.0
        %6802 = vmatprep.subr.mxu0 0.0
        %6803 = vmatpush1.msra.mxu0 0.0
        %6804 = vmatprep.subr.mxu0 0.0
        %6805 = vmatpush1.msra.mxu0 0.0
        %6806 = vmatprep.subr.mxu0 0.0
        %6807 = vmatpush1.msra.mxu0 0.0
        %6808 = vmatprep.subr.mxu0 0.0
        %6809 = vmatpush1.msra.mxu0 0.0
        %6810 = vmatprep.subr.mxu0 0.0
        %6811 = vmatpush1.msra.mxu0 0.0
        %6812 = vmatprep.subr.mxu0 0.0
        %6813 = vmatpush1.msra.mxu0 0.0
        %6814 = vmatprep.subr.mxu0 0.0
        %6815 = vmatpush1.msra.mxu0 0.0
        %6816 = vmatprep.subr.mxu0 0.0
        %6817 = vmatpush1.msra.mxu0 0.0
        %6818 = vmatprep.subr.mxu0 0.0
        %6819 = vmatpush1.msra.mxu0 0.0
        %6820 = vmatprep.subr.mxu0 0.0
        %6821 = vmatpush1.msra.mxu0 0.0
        %6822 = vmatprep.subr.mxu0 0.0
        %6823 = vmatpush1.msra.mxu0 0.0
        %6824 = vmatprep.subr.mxu0 0.0
        %6825 = vmatpush1.msra.mxu0 0.0
        %6826 = vmatprep.subr.mxu0 0.0
        %6827 = vmatpush1.msra.mxu0 0.0
        %6828 = vmatprep.subr.mxu0 0.0
        %6829 = vmatpush1.msra.mxu0 0.0
        %6830 = vmatprep.subr.mxu0 0.0
        %6831 = vmatpush1.msra.mxu0 0.0
        %6832 = vmatprep.subr.mxu0 0.0
        %6833 = vmatpush1.msra.mxu0 0.0
        %6834 = vmatprep.subr.mxu0 0.0
        %6835 = vmatpush1.msra.mxu0 0.0
        %6836 = vmatprep.mubr.f32.mxu0 0.0
        %v6837 = vand.u32 %v460, 4294901760
        %v6838 = vsub.f32 %v460, %v6837
        %v6839 = vand.u32 %v6838, 4294901760
        %v6840 = vsub.f32 %v6838, %v6839
        %v6841 = vand.u32 %v6840, 4294901760
        %6842 = vmatmul.mubr.f32.gmra.mrb[0].mxu0 %v6841
        %v6843 = vpop.f32.mrb[0].mxu0
        %v6844 = vadd.f32 %v456, %v6843
        %v6845 = vpop.f32.mrb[0].mxu0
        %v6846 = vadd.f32 %v456, %v6845
        %6847 = vdwg.mxu0
        %v6848 = vand.u32 %v6749, 4294901760
        %v6849 = vsub.f32 %v6749, %v6848
        %v6850 = vand.u32 %v6849, 4294901760
        %v6851 = vsub.f32 %v6849, %v6850
        %v6852 = vand.u32 %v6851, 4294901760
        %6853 = vmatprep.subr.mxu0 %v6852
        %v6854 = vand.u32 %v6748, 4294901760
        %v6855 = vsub.f32 %v6748, %v6854
        %v6856 = vand.u32 %v6855, 4294901760
        %v6857 = vsub.f32 %v6855, %v6856
        %v6858 = vand.u32 %v6857, 4294901760
        %6859 = vmatpush1.msra.mxu0 %v6858
        %v6860 = vand.u32 %v6751, 4294901760
        %v6861 = vsub.f32 %v6751, %v6860
        %v6862 = vand.u32 %v6861, 4294901760
        %v6863 = vsub.f32 %v6861, %v6862
        %v6864 = vand.u32 %v6863, 4294901760
        %6865 = vmatprep.subr.mxu0 %v6864
        %v6866 = vand.u32 %v6750, 4294901760
        %v6867 = vsub.f32 %v6750, %v6866
        %v6868 = vand.u32 %v6867, 4294901760
        %v6869 = vsub.f32 %v6867, %v6868
        %v6870 = vand.u32 %v6869, 4294901760
        %6871 = vmatpush1.msra.mxu0 %v6870
        %v6872 = vand.u32 %v6753, 4294901760
        %v6873 = vsub.f32 %v6753, %v6872
        %v6874 = vand.u32 %v6873, 4294901760
        %v6875 = vsub.f32 %v6873, %v6874
        %v6876 = vand.u32 %v6875, 4294901760
        %6877 = vmatprep.subr.mxu0 %v6876
        %v6878 = vand.u32 %v6752, 4294901760
        %v6879 = vsub.f32 %v6752, %v6878
        %v6880 = vand.u32 %v6879, 4294901760
        %v6881 = vsub.f32 %v6879, %v6880
        %v6882 = vand.u32 %v6881, 4294901760
        %6883 = vmatpush1.msra.mxu0 %v6882
        %v6884 = vand.u32 %v6755, 4294901760
        %v6885 = vsub.f32 %v6755, %v6884
        %v6886 = vand.u32 %v6885, 4294901760
        %v6887 = vsub.f32 %v6885, %v6886
        %v6888 = vand.u32 %v6887, 4294901760
        %6889 = vmatprep.subr.mxu0 %v6888
        %v6890 = vand.u32 %v6754, 4294901760
        %v6891 = vsub.f32 %v6754, %v6890
        %v6892 = vand.u32 %v6891, 4294901760
        %v6893 = vsub.f32 %v6891, %v6892
        %v6894 = vand.u32 %v6893, 4294901760
        %6895 = vmatpush1.msra.mxu0 %v6894
        %v6896 = vand.u32 %v6760, 4294901760
        %v6897 = vsub.f32 %v6760, %v6896
        %v6898 = vand.u32 %v6897, 4294901760
        %v6899 = vsub.f32 %v6897, %v6898
        %v6900 = vand.u32 %v6899, 4294901760
        %6901 = vmatprep.subr.mxu0 %v6900
        %v6902 = vand.u32 %v6757, 4294901760
        %v6903 = vsub.f32 %v6757, %v6902
        %v6904 = vand.u32 %v6903, 4294901760
        %v6905 = vsub.f32 %v6903, %v6904
        %v6906 = vand.u32 %v6905, 4294901760
        %6907 = vmatpush1.msra.mxu0 %v6906
        %6908 = vmatprep.subr.mxu0 0.0
        %6909 = vmatpush1.msra.mxu0 0.0
        %6910 = vmatprep.subr.mxu0 0.0
        %6911 = vmatpush1.msra.mxu0 0.0
        %6912 = vmatprep.subr.mxu0 0.0
        %6913 = vmatpush1.msra.mxu0 0.0
        %6914 = vmatprep.subr.mxu0 0.0
        %6915 = vmatpush1.msra.mxu0 0.0
        %6916 = vmatprep.subr.mxu0 0.0
        %6917 = vmatpush1.msra.mxu0 0.0
        %6918 = vmatprep.subr.mxu0 0.0
        %6919 = vmatpush1.msra.mxu0 0.0
        %6920 = vmatprep.subr.mxu0 0.0
        %6921 = vmatpush1.msra.mxu0 0.0
        %6922 = vmatprep.subr.mxu0 0.0
        %6923 = vmatpush1.msra.mxu0 0.0
        %6924 = vmatprep.subr.mxu0 0.0
        %6925 = vmatpush1.msra.mxu0 0.0
        %6926 = vmatprep.subr.mxu0 0.0
        %6927 = vmatpush1.msra.mxu0 0.0
        %6928 = vmatprep.subr.mxu0 0.0
        %6929 = vmatpush1.msra.mxu0 0.0
        %6930 = vmatprep.subr.mxu0 0.0
        %6931 = vmatpush1.msra.mxu0 0.0
        %6932 = vmatprep.subr.mxu0 0.0
        %6933 = vmatpush1.msra.mxu0 0.0
        %6934 = vmatprep.subr.mxu0 0.0
        %6935 = vmatpush1.msra.mxu0 0.0
        %6936 = vmatprep.subr.mxu0 0.0
        %6937 = vmatpush1.msra.mxu0 0.0
        %6938 = vmatprep.subr.mxu0 0.0
        %6939 = vmatpush1.msra.mxu0 0.0
        %6940 = vmatprep.subr.mxu0 0.0
        %6941 = vmatpush1.msra.mxu0 0.0
        %6942 = vmatprep.subr.mxu0 0.0
        %6943 = vmatpush1.msra.mxu0 0.0
        %6944 = vmatprep.subr.mxu0 0.0
        %6945 = vmatpush1.msra.mxu0 0.0
        %6946 = vmatprep.subr.mxu0 0.0
        %6947 = vmatpush1.msra.mxu0 0.0
        %6948 = vmatprep.subr.mxu0 0.0
        %6949 = vmatpush1.msra.mxu0 0.0
        %6950 = vmatprep.subr.mxu0 0.0
        %6951 = vmatpush1.msra.mxu0 0.0
        %6952 = vmatprep.subr.mxu0 0.0
        %6953 = vmatpush1.msra.mxu0 0.0
        %6954 = vmatprep.subr.mxu0 0.0
        %6955 = vmatpush1.msra.mxu0 0.0
        %6956 = vmatprep.subr.mxu0 0.0
        %6957 = vmatpush1.msra.mxu0 0.0
        %6958 = vmatprep.subr.mxu0 0.0
        %6959 = vmatpush1.msra.mxu0 0.0
        %6960 = vmatprep.subr.mxu0 0.0
        %6961 = vmatpush1.msra.mxu0 0.0
        %6962 = vmatprep.mubr.f32.mxu0 0.0
        %v6963 = vand.u32 %v460, 4294901760
        %6964 = vmatmul.mubr.f32.gmra.mrb[0].mxu0 %v6963
        %v6965 = vpop.f32.mrb[0].mxu0
        %v6966 = vadd.f32 %v6844, %v6965
        %v6967 = vpop.f32.mrb[0].mxu0
        %v6968 = vadd.f32 %v6846, %v6967
        %6969 = vdwg.mxu0
        %v6970 = vand.u32 %v6749, 4294901760
        %v6971 = vsub.f32 %v6749, %v6970
        %6972 = vmatprep.subr.mxu0 %v6971
        %v6973 = vand.u32 %v6748, 4294901760
        %v6974 = vsub.f32 %v6748, %v6973
        %6975 = vmatpush1.msra.mxu0 %v6974
        %v6976 = vand.u32 %v6751, 4294901760
        %v6977 = vsub.f32 %v6751, %v6976
        %6978 = vmatprep.subr.mxu0 %v6977
        %v6979 = vand.u32 %v6750, 4294901760
        %v6980 = vsub.f32 %v6750, %v6979
        %6981 = vmatpush1.msra.mxu0 %v6980
        %v6982 = vand.u32 %v6753, 4294901760
        %v6983 = vsub.f32 %v6753, %v6982
        %6984 = vmatprep.subr.mxu0 %v6983
        %v6985 = vand.u32 %v6752, 4294901760
        %v6986 = vsub.f32 %v6752, %v6985
        %6987 = vmatpush1.msra.mxu0 %v6986
        %v6988 = vand.u32 %v6755, 4294901760
        %v6989 = vsub.f32 %v6755, %v6988
        %6990 = vmatprep.subr.mxu0 %v6989
        %v6991 = vand.u32 %v6754, 4294901760
        %v6992 = vsub.f32 %v6754, %v6991
        %6993 = vmatpush1.msra.mxu0 %v6992
        %v6994 = vand.u32 %v6760, 4294901760
        %v6995 = vsub.f32 %v6760, %v6994
        %6996 = vmatprep.subr.mxu0 %v6995
        %v6997 = vand.u32 %v6757, 4294901760
        %v6998 = vsub.f32 %v6757, %v6997
        %6999 = vmatpush1.msra.mxu0 %v6998
        %7000 = vmatprep.subr.mxu0 0.0
        %7001 = vmatpush1.msra.mxu0 0.0
        %7002 = vmatprep.subr.mxu0 0.0
        %7003 = vmatpush1.msra.mxu0 0.0
        %7004 = vmatprep.subr.mxu0 0.0
        %7005 = vmatpush1.msra.mxu0 0.0
        %7006 = vmatprep.subr.mxu0 0.0
        %7007 = vmatpush1.msra.mxu0 0.0
        %7008 = vmatprep.subr.mxu0 0.0
        %7009 = vmatpush1.msra.mxu0 0.0
        %7010 = vmatprep.subr.mxu0 0.0
        %7011 = vmatpush1.msra.mxu0 0.0
        %7012 = vmatprep.subr.mxu0 0.0
        %7013 = vmatpush1.msra.mxu0 0.0
        %7014 = vmatprep.subr.mxu0 0.0
        %7015 = vmatpush1.msra.mxu0 0.0
        %7016 = vmatprep.subr.mxu0 0.0
        %7017 = vmatpush1.msra.mxu0 0.0
        %7018 = vmatprep.subr.mxu0 0.0
        %7019 = vmatpush1.msra.mxu0 0.0
        %7020 = vmatprep.subr.mxu0 0.0
        %7021 = vmatpush1.msra.mxu0 0.0
        %7022 = vmatprep.subr.mxu0 0.0
        %7023 = vmatpush1.msra.mxu0 0.0
        %7024 = vmatprep.subr.mxu0 0.0
        %7025 = vmatpush1.msra.mxu0 0.0
        %7026 = vmatprep.subr.mxu0 0.0
        %7027 = vmatpush1.msra.mxu0 0.0
        %7028 = vmatprep.subr.mxu0 0.0
        %7029 = vmatpush1.msra.mxu0 0.0
        %7030 = vmatprep.subr.mxu0 0.0
        %7031 = vmatpush1.msra.mxu0 0.0
        %7032 = vmatprep.subr.mxu0 0.0
        %7033 = vmatpush1.msra.mxu0 0.0
        %7034 = vmatprep.subr.mxu0 0.0
        %7035 = vmatpush1.msra.mxu0 0.0
        %7036 = vmatprep.subr.mxu0 0.0
        %7037 = vmatpush1.msra.mxu0 0.0
        %7038 = vmatprep.subr.mxu0 0.0
        %7039 = vmatpush1.msra.mxu0 0.0
        %7040 = vmatprep.subr.mxu0 0.0
        %7041 = vmatpush1.msra.mxu0 0.0
        %7042 = vmatprep.subr.mxu0 0.0
        %7043 = vmatpush1.msra.mxu0 0.0
        %7044 = vmatprep.subr.mxu0 0.0
        %7045 = vmatpush1.msra.mxu0 0.0
        %7046 = vmatprep.subr.mxu0 0.0
        %7047 = vmatpush1.msra.mxu0 0.0
        %7048 = vmatprep.subr.mxu0 0.0
        %7049 = vmatpush1.msra.mxu0 0.0
        %7050 = vmatprep.subr.mxu0 0.0
        %7051 = vmatpush1.msra.mxu0 0.0
        %7052 = vmatprep.subr.mxu0 0.0
        %7053 = vmatpush1.msra.mxu0 0.0
        %7054 = vmatprep.mubr.f32.mxu0 0.0
        %v7055 = vand.u32 %v460, 4294901760
        %v7056 = vsub.f32 %v460, %v7055
        %7057 = vmatmul.mubr.f32.gmra.mrb[0].mxu0 %v7056
        %v7058 = vpop.f32.mrb[0].mxu0
        %v7059 = vadd.f32 %v6966, %v7058
        %v7060 = vpop.f32.mrb[0].mxu0
        %v7061 = vadd.f32 %v6968, %v7060
        %7062 = vdwg.mxu0
        %v7063 = vand.u32 %v6749, 4294901760
        %7064 = vmatprep.subr.mxu0 %v7063
        %v7065 = vand.u32 %v6748, 4294901760
        %7066 = vmatpush1.msra.mxu0 %v7065
        %v7067 = vand.u32 %v6751, 4294901760
        %7068 = vmatprep.subr.mxu0 %v7067
        %v7069 = vand.u32 %v6750, 4294901760
        %7070 = vmatpush1.msra.mxu0 %v7069
        %v7071 = vand.u32 %v6753, 4294901760
        %7072 = vmatprep.subr.mxu0 %v7071
        %v7073 = vand.u32 %v6752, 4294901760
        %7074 = vmatpush1.msra.mxu0 %v7073
        %v7075 = vand.u32 %v6755, 4294901760
        %7076 = vmatprep.subr.mxu0 %v7075
        %v7077 = vand.u32 %v6754, 4294901760
        %7078 = vmatpush1.msra.mxu0 %v7077
        %v7079 = vand.u32 %v6760, 4294901760
        %7080 = vmatprep.subr.mxu0 %v7079
        %v7081 = vand.u32 %v6757, 4294901760
        %7082 = vmatpush1.msra.mxu0 %v7081
        %7083 = vmatprep.subr.mxu0 0.0
        %7084 = vmatpush1.msra.mxu0 0.0
        %7085 = vmatprep.subr.mxu0 0.0
        %7086 = vmatpush1.msra.mxu0 0.0
        %7087 = vmatprep.subr.mxu0 0.0
        %7088 = vmatpush1.msra.mxu0 0.0
        %7089 = vmatprep.subr.mxu0 0.0
        %7090 = vmatpush1.msra.mxu0 0.0
        %7091 = vmatprep.subr.mxu0 0.0
        %7092 = vmatpush1.msra.mxu0 0.0
        %7093 = vmatprep.subr.mxu0 0.0
        %7094 = vmatpush1.msra.mxu0 0.0
        %7095 = vmatprep.subr.mxu0 0.0
        %7096 = vmatpush1.msra.mxu0 0.0
        %7097 = vmatprep.subr.mxu0 0.0
        %7098 = vmatpush1.msra.mxu0 0.0
        %7099 = vmatprep.subr.mxu0 0.0
        %7100 = vmatpush1.msra.mxu0 0.0
        %7101 = vmatprep.subr.mxu0 0.0
        %7102 = vmatpush1.msra.mxu0 0.0
        %7103 = vmatprep.subr.mxu0 0.0
        %7104 = vmatpush1.msra.mxu0 0.0
        %7105 = vmatprep.subr.mxu0 0.0
        %7106 = vmatpush1.msra.mxu0 0.0
        %7107 = vmatprep.subr.mxu0 0.0
        %7108 = vmatpush1.msra.mxu0 0.0
        %7109 = vmatprep.subr.mxu0 0.0
        %7110 = vmatpush1.msra.mxu0 0.0
        %7111 = vmatprep.subr.mxu0 0.0
        %7112 = vmatpush1.msra.mxu0 0.0
        %7113 = vmatprep.subr.mxu0 0.0
        %7114 = vmatpush1.msra.mxu0 0.0
        %7115 = vmatprep.subr.mxu0 0.0
        %7116 = vmatpush1.msra.mxu0 0.0
        %7117 = vmatprep.subr.mxu0 0.0
        %7118 = vmatpush1.msra.mxu0 0.0
        %7119 = vmatprep.subr.mxu0 0.0
        %7120 = vmatpush1.msra.mxu0 0.0
        %7121 = vmatprep.subr.mxu0 0.0
        %7122 = vmatpush1.msra.mxu0 0.0
        %7123 = vmatprep.subr.mxu0 0.0
        %7124 = vmatpush1.msra.mxu0 0.0
        %7125 = vmatprep.subr.mxu0 0.0
        %7126 = vmatpush1.msra.mxu0 0.0
        %7127 = vmatprep.subr.mxu0 0.0
        %7128 = vmatpush1.msra.mxu0 0.0
        %7129 = vmatprep.subr.mxu0 0.0
        %7130 = vmatpush1.msra.mxu0 0.0
        %7131 = vmatprep.subr.mxu0 0.0
        %7132 = vmatpush1.msra.mxu0 0.0
        %7133 = vmatprep.subr.mxu0 0.0
        %7134 = vmatpush1.msra.mxu0 0.0
        %7135 = vmatprep.subr.mxu0 0.0
        %7136 = vmatpush1.msra.mxu0 0.0
        %7137 = vmatprep.mubr.f32.mxu0 0.0
        %v7138 = vand.u32 %v460, 4294901760
        %v7139 = vsub.f32 %v460, %v7138
        %v7140 = vand.u32 %v7139, 4294901760
        %7141 = vmatmul.mubr.f32.gmra.mrb[0].mxu0 %v7140
        %v7142 = vpop.f32.mrb[0].mxu0
        %v7143 = vadd.f32 %v7059, %v7142
        %v7144 = vpop.f32.mrb[0].mxu0
        %v7145 = vadd.f32 %v7061, %v7144
        %7146 = vdwg.mxu0
        %v7147 = vand.u32 %v6749, 4294901760
        %v7148 = vsub.f32 %v6749, %v7147
        %v7149 = vand.u32 %v7148, 4294901760
        %7150 = vmatprep.subr.mxu0 %v7149
        %v7151 = vand.u32 %v6748, 4294901760
        %v7152 = vsub.f32 %v6748, %v7151
        %v7153 = vand.u32 %v7152, 4294901760
        %7154 = vmatpush1.msra.mxu0 %v7153
        %v7155 = vand.u32 %v6751, 4294901760
        %v7156 = vsub.f32 %v6751, %v7155
        %v7157 = vand.u32 %v7156, 4294901760
        %7158 = vmatprep.subr.mxu0 %v7157
        %v7159 = vand.u32 %v6750, 4294901760
        %v7160 = vsub.f32 %v6750, %v7159
        %v7161 = vand.u32 %v7160, 4294901760
        %7162 = vmatpush1.msra.mxu0 %v7161
        %v7163 = vand.u32 %v6753, 4294901760
        %v7164 = vsub.f32 %v6753, %v7163
        %v7165 = vand.u32 %v7164, 4294901760
        %7166 = vmatprep.subr.mxu0 %v7165
        %v7167 = vand.u32 %v6752, 4294901760
        %v7168 = vsub.f32 %v6752, %v7167
        %v7169 = vand.u32 %v7168, 4294901760
        %7170 = vmatpush1.msra.mxu0 %v7169
        %v7171 = vand.u32 %v6755, 4294901760
        %v7172 = vsub.f32 %v6755, %v7171
        %v7173 = vand.u32 %v7172, 4294901760
        %7174 = vmatprep.subr.mxu0 %v7173
        %v7175 = vand.u32 %v6754, 4294901760
        %v7176 = vsub.f32 %v6754, %v7175
        %v7177 = vand.u32 %v7176, 4294901760
        %7178 = vmatpush1.msra.mxu0 %v7177
        %v7179 = vand.u32 %v6760, 4294901760
        %v7180 = vsub.f32 %v6760, %v7179
        %v7181 = vand.u32 %v7180, 4294901760
        %7182 = vmatprep.subr.mxu0 %v7181
        %v7183 = vand.u32 %v6757, 4294901760
        %v7184 = vsub.f32 %v6757, %v7183
        %v7185 = vand.u32 %v7184, 4294901760
        %7186 = vmatpush1.msra.mxu0 %v7185
        %7187 = vmatprep.subr.mxu0 0.0
        %7188 = vmatpush1.msra.mxu0 0.0
        %7189 = vmatprep.subr.mxu0 0.0
        %7190 = vmatpush1.msra.mxu0 0.0
        %7191 = vmatprep.subr.mxu0 0.0
        %7192 = vmatpush1.msra.mxu0 0.0
        %7193 = vmatprep.subr.mxu0 0.0
        %7194 = vmatpush1.msra.mxu0 0.0
        %7195 = vmatprep.subr.mxu0 0.0
        %7196 = vmatpush1.msra.mxu0 0.0
        %7197 = vmatprep.subr.mxu0 0.0
        %7198 = vmatpush1.msra.mxu0 0.0
        %7199 = vmatprep.subr.mxu0 0.0
        %7200 = vmatpush1.msra.mxu0 0.0
        %7201 = vmatprep.subr.mxu0 0.0
        %7202 = vmatpush1.msra.mxu0 0.0
        %7203 = vmatprep.subr.mxu0 0.0
        %7204 = vmatpush1.msra.mxu0 0.0
        %7205 = vmatprep.subr.mxu0 0.0
        %7206 = vmatpush1.msra.mxu0 0.0
        %7207 = vmatprep.subr.mxu0 0.0
        %7208 = vmatpush1.msra.mxu0 0.0
        %7209 = vmatprep.subr.mxu0 0.0
        %7210 = vmatpush1.msra.mxu0 0.0
        %7211 = vmatprep.subr.mxu0 0.0
        %7212 = vmatpush1.msra.mxu0 0.0
        %7213 = vmatprep.subr.mxu0 0.0
        %7214 = vmatpush1.msra.mxu0 0.0
        %7215 = vmatprep.subr.mxu0 0.0
        %7216 = vmatpush1.msra.mxu0 0.0
        %7217 = vmatprep.subr.mxu0 0.0
        %7218 = vmatpush1.msra.mxu0 0.0
        %7219 = vmatprep.subr.mxu0 0.0
        %7220 = vmatpush1.msra.mxu0 0.0
        %7221 = vmatprep.subr.mxu0 0.0
        %7222 = vmatpush1.msra.mxu0 0.0
        %7223 = vmatprep.subr.mxu0 0.0
        %7224 = vmatpush1.msra.mxu0 0.0
        %7225 = vmatprep.subr.mxu0 0.0
        %7226 = vmatpush1.msra.mxu0 0.0
        %7227 = vmatprep.subr.mxu0 0.0
        %7228 = vmatpush1.msra.mxu0 0.0
        %7229 = vmatprep.subr.mxu0 0.0
        %7230 = vmatpush1.msra.mxu0 0.0
        %7231 = vmatprep.subr.mxu0 0.0
        %7232 = vmatpush1.msra.mxu0 0.0
        %7233 = vmatprep.subr.mxu0 0.0
        %7234 = vmatpush1.msra.mxu0 0.0
        %7235 = vmatprep.subr.mxu0 0.0
        %7236 = vmatpush1.msra.mxu0 0.0
        %7237 = vmatprep.subr.mxu0 0.0
        %7238 = vmatpush1.msra.mxu0 0.0
        %7239 = vmatprep.subr.mxu0 0.0
        %7240 = vmatpush1.msra.mxu0 0.0
        %7241 = vmatprep.mubr.f32.mxu0 0.0
        %v7242 = vand.u32 %v460, 4294901760
        %7243 = vmatmul.mubr.f32.gmra.mrb[0].mxu0 %v7242
        %v7244 = vpop.f32.mrb[0].mxu0
        %v7245 = vadd.f32 %v7143, %v7244
        %v7246 = vpop.f32.mrb[0].mxu0
        %v7247 = vadd.f32 %v7145, %v7246
        %7248 = vdwg.mxu0
        %v7249 = vand.u32 %v6749, 4294901760
        %7250 = vmatprep.subr.mxu0 %v7249
        %v7251 = vand.u32 %v6748, 4294901760
        %7252 = vmatpush1.msra.mxu0 %v7251
        %v7253 = vand.u32 %v6751, 4294901760
        %7254 = vmatprep.subr.mxu0 %v7253
        %v7255 = vand.u32 %v6750, 4294901760
        %7256 = vmatpush1.msra.mxu0 %v7255
        %v7257 = vand.u32 %v6753, 4294901760
        %7258 = vmatprep.subr.mxu0 %v7257
        %v7259 = vand.u32 %v6752, 4294901760
        %7260 = vmatpush1.msra.mxu0 %v7259
        %v7261 = vand.u32 %v6755, 4294901760
        %7262 = vmatprep.subr.mxu0 %v7261
        %v7263 = vand.u32 %v6754, 4294901760
        %7264 = vmatpush1.msra.mxu0 %v7263
        %v7265 = vand.u32 %v6760, 4294901760
        %7266 = vmatprep.subr.mxu0 %v7265
        %v7267 = vand.u32 %v6757, 4294901760
        %7268 = vmatpush1.msra.mxu0 %v7267
        %7269 = vmatprep.subr.mxu0 0.0
        %7270 = vmatpush1.msra.mxu0 0.0
        %7271 = vmatprep.subr.mxu0 0.0
        %7272 = vmatpush1.msra.mxu0 0.0
        %7273 = vmatprep.subr.mxu0 0.0
        %7274 = vmatpush1.msra.mxu0 0.0
        %7275 = vmatprep.subr.mxu0 0.0
        %7276 = vmatpush1.msra.mxu0 0.0
        %7277 = vmatprep.subr.mxu0 0.0
        %7278 = vmatpush1.msra.mxu0 0.0
        %7279 = vmatprep.subr.mxu0 0.0
        %7280 = vmatpush1.msra.mxu0 0.0
        %7281 = vmatprep.subr.mxu0 0.0
        %7282 = vmatpush1.msra.mxu0 0.0
        %7283 = vmatprep.subr.mxu0 0.0
        %7284 = vmatpush1.msra.mxu0 0.0
        %7285 = vmatprep.subr.mxu0 0.0
        %7286 = vmatpush1.msra.mxu0 0.0
        %7287 = vmatprep.subr.mxu0 0.0
        %7288 = vmatpush1.msra.mxu0 0.0
        %7289 = vmatprep.subr.mxu0 0.0
        %7290 = vmatpush1.msra.mxu0 0.0
        %7291 = vmatprep.subr.mxu0 0.0
        %7292 = vmatpush1.msra.mxu0 0.0
        %7293 = vmatprep.subr.mxu0 0.0
        %7294 = vmatpush1.msra.mxu0 0.0
        %7295 = vmatprep.subr.mxu0 0.0
        %7296 = vmatpush1.msra.mxu0 0.0
        %7297 = vmatprep.subr.mxu0 0.0
        %7298 = vmatpush1.msra.mxu0 0.0
        %7299 = vmatprep.subr.mxu0 0.0
        %7300 = vmatpush1.msra.mxu0 0.0
        %7301 = vmatprep.subr.mxu0 0.0
        %7302 = vmatpush1.msra.mxu0 0.0
        %7303 = vmatprep.subr.mxu0 0.0
        %7304 = vmatpush1.msra.mxu0 0.0
        %7305 = vmatprep.subr.mxu0 0.0
        %7306 = vmatpush1.msra.mxu0 0.0
        %7307 = vmatprep.subr.mxu0 0.0
        %7308 = vmatpush1.msra.mxu0 0.0
        %7309 = vmatprep.subr.mxu0 0.0
        %7310 = vmatpush1.msra.mxu0 0.0
        %7311 = vmatprep.subr.mxu0 0.0
        %7312 = vmatpush1.msra.mxu0 0.0
        %7313 = vmatprep.subr.mxu0 0.0
        %7314 = vmatpush1.msra.mxu0 0.0
        %7315 = vmatprep.subr.mxu0 0.0
        %7316 = vmatpush1.msra.mxu0 0.0
        %7317 = vmatprep.subr.mxu0 0.0
        %7318 = vmatpush1.msra.mxu0 0.0
        %7319 = vmatprep.subr.mxu0 0.0
        %7320 = vmatpush1.msra.mxu0 0.0
        %7321 = vmatprep.subr.mxu0 0.0
        %7322 = vmatpush1.msra.mxu0 0.0
        %7323 = vmatprep.mubr.f32.mxu0 0.0
        %v7324 = vand.u32 %v460, 4294901760
        %7325 = vmatmul.mubr.f32.gmra.mrb[0].mxu0 %v7324
        %v7326 = vpop.f32.mrb[0].mxu0
        %v7327 = vadd.f32 %v7245, %v7326
        %v7328 = vpop.f32.mrb[0].mxu0
        %v7329 = vadd.f32 %v7247, %v7328
        %7330 = vdwg.mxu0
        %v7331 = vsel %vm442, %v7327, 0.0
        %v7332 = vsel %vm442, %v7329, 0.0
        %v7333 = vadd.f32 %v7331, %v7332
        %7334 = vadd.xlane.f32.xlu0 %v7333
        %v7335 = vpop.xlane.xlu0 %7334
        %v7336 = vmul.f32 %v7335, %v1042
        %v7337 = vsub.f32 %v7327, %v7336
        %v7338 = vsub.f32 %v7329, %v7336
        %v7339 = vmul.f32 %v7337, %v7337
        %v7340 = vmul.f32 %v7338, %v7338
        %v7341 = vsel %vm442, %v7339, 0.0
        %v7342 = vsel %vm442, %v7340, 0.0
        %v7343 = vadd.f32 %v7341, %v7342
        %7344 = vadd.xlane.f32.xlu0 %v7343
        %v7345 = vpop.xlane.xlu0 %7344
        %v7346 = vmul.f32 %v7345, %v1042
        %v7347 = vadd.f32 %v7346, 1e-05
        %v7348 = vrsqrt.pop %v7347
        %v7349 = vmul.f32 %v7337, %v7348
        %v7350 = vmul.f32 %v7338, %v7348
        %v7351 = vmax.f32 %v7349, 0.0
        %v7352 = vmax.f32 %v7350, 0.0
        %7355 = vrot.lane.b32.xlu0 %v7351, 17
        %v7356 = vpop.permute.xlu0 %7355
        %7357 = vrot.lane.b32.xlu0 %v7352, 17
        %v7358 = vpop.permute.xlu0 %7357
        %v7359 = vsel %vm333, %v7356, %v7358
        %v7362 = vsel %vm333, 0.0, %v7356
        %v7363 = vsel %vm340, %v7362, 0.0
        %v7364 = vsel %vm341, %v7359, 0.0
        %7365 = vrot.lane.b32.xlu0 %v7351, 16
        %v7366 = vpop.permute.xlu0 %7365
        %7367 = vrot.lane.b32.xlu0 %v7352, 16
        %v7368 = vpop.permute.xlu0 %7367
        %v7369 = vsel %vm348, %v7366, %v7368
        %v7371 = vsel %vm348, 0.0, %v7366
        %7372 = vrot.lane.b32.xlu0 %v7351, 15
        %v7373 = vpop.permute.xlu0 %7372
        %7374 = vrot.lane.b32.xlu0 %v7352, 15
        %v7375 = vpop.permute.xlu0 %7374
        %v7376 = vsel %vm356, %v7373, %v7375
        %v7379 = vsel %vm356, 0.0, %v7373
        %v7380 = vsel %vm363, %v7379, 0.0
        %v7381 = vsel %vm364, %v7376, 0.0
        %7382 = vrot.lane.b32.xlu0 %v7351, 1
        %v7383 = vpop.permute.xlu0 %7382
        %7384 = vrot.lane.b32.xlu0 %v7352, 1
        %v7385 = vpop.permute.xlu0 %7384
        %v7386 = vsel %vm371, %v7383, %v7385
        %v7389 = vsel %vm371, 0.0, %v7383
        %v7390 = vsel %vm340, %v7389, 0.0
        %v7391 = vsel %vm341, %v7386, 0.0
        %7392 = vrot.lane.b32.xlu0 %v7351, 127
        %v7393 = vpop.permute.xlu0 %7392
        %7394 = vrot.lane.b32.xlu0 %v7352, 127
        %v7395 = vpop.permute.xlu0 %7394
        %v7396 = vsel %vm382, %v7393, %v7395
        %v7399 = vsel %vm382, %v7395, 0.0
        %v7400 = vsel %vm363, %v7396, 0.0
        %v7401 = vsel %vm364, %v7399, 0.0
        %7402 = vrot.lane.b32.xlu0 %v7351, 113
        %v7403 = vpop.permute.xlu0 %7402
        %7404 = vrot.lane.b32.xlu0 %v7352, 113
        %v7405 = vpop.permute.xlu0 %7404
        %v7406 = vsel %vm393, %v7403, %v7405
        %v7409 = vsel %vm393, %v7405, 0.0
        %v7410 = vsel %vm340, %v7406, 0.0
        %v7411 = vsel %vm341, %v7409, 0.0
        %7412 = vrot.lane.b32.xlu0 %v7351, 112
        %v7413 = vpop.permute.xlu0 %7412
        %7414 = vrot.lane.b32.xlu0 %v7352, 112
        %v7415 = vpop.permute.xlu0 %7414
        %v7416 = vsel %vm404, %v7413, %v7415
        %v7418 = vsel %vm404, %v7415, 0.0
        %7419 = vrot.lane.b32.xlu0 %v7351, 111
        %v7420 = vpop.permute.xlu0 %7419
        %7421 = vrot.lane.b32.xlu0 %v7352, 111
        %v7422 = vpop.permute.xlu0 %7421
        %v7423 = vsel %vm412, %v7420, %v7422
        %v7426 = vsel %vm412, %v7422, 0.0
        %v7427 = vsel %vm363, %v7423, 0.0
        %v7428 = vsel %vm364, %v7426, 0.0
        %v7430 = vrot.slane %v7371, 4
        %v7431 = vrot.slane %v7369, 4
        %v7436 = vrot.slane %v7390, 4
        %v7437 = vrot.slane %v7391, 4
        %v7442 = vrot.slane %v7400, 4
        %v7443 = vrot.slane %v7401, 4
        %v7447 = vrot.slane %v7416, 4
        %v7448 = vrot.slane %v7418, 4
        %v7451 = vsel %vm442, %v7363, %v7430
        %v7452 = vsel %vm442, %v7364, %v7431
        %v7453 = vsel %vm442, %v7380, %v7436
        %v7454 = vsel %vm442, %v7381, %v7437
        %v7455 = vsel %vm442, %v7351, %v7442
        %v7456 = vsel %vm442, %v7352, %v7443
        %v7457 = vsel %vm442, %v7410, %v7447
        %v7458 = vsel %vm442, %v7411, %v7448
        %v7460 = vsel %vm442, %v7427, 0
        %v7463 = vsel %vm442, %v7428, 0
        %v7465 = vand.u32 %v7452, 4294901760
        %7466 = vmatprep.subr.mxu0 %v7465
        %v7467 = vand.u32 %v7451, 4294901760
        %7468 = vmatpush1.msra.mxu0 %v7467
        %v7469 = vand.u32 %v7454, 4294901760
        %7470 = vmatprep.subr.mxu0 %v7469
        %v7471 = vand.u32 %v7453, 4294901760
        %7472 = vmatpush1.msra.mxu0 %v7471
        %v7473 = vand.u32 %v7456, 4294901760
        %7474 = vmatprep.subr.mxu0 %v7473
        %v7475 = vand.u32 %v7455, 4294901760
        %7476 = vmatpush1.msra.mxu0 %v7475
        %v7477 = vand.u32 %v7458, 4294901760
        %7478 = vmatprep.subr.mxu0 %v7477
        %v7479 = vand.u32 %v7457, 4294901760
        %7480 = vmatpush1.msra.mxu0 %v7479
        %v7481 = vand.u32 %v7463, 4294901760
        %7482 = vmatprep.subr.mxu0 %v7481
        %v7483 = vand.u32 %v7460, 4294901760
        %7484 = vmatpush1.msra.mxu0 %v7483
        %7485 = vmatprep.subr.mxu0 0.0
        %7486 = vmatpush1.msra.mxu0 0.0
        %7487 = vmatprep.subr.mxu0 0.0
        %7488 = vmatpush1.msra.mxu0 0.0
        %7489 = vmatprep.subr.mxu0 0.0
        %7490 = vmatpush1.msra.mxu0 0.0
        %7491 = vmatprep.subr.mxu0 0.0
        %7492 = vmatpush1.msra.mxu0 0.0
        %7493 = vmatprep.subr.mxu0 0.0
        %7494 = vmatpush1.msra.mxu0 0.0
        %7495 = vmatprep.subr.mxu0 0.0
        %7496 = vmatpush1.msra.mxu0 0.0
        %7497 = vmatprep.subr.mxu0 0.0
        %7498 = vmatpush1.msra.mxu0 0.0
        %7499 = vmatprep.subr.mxu0 0.0
        %7500 = vmatpush1.msra.mxu0 0.0
        %7501 = vmatprep.subr.mxu0 0.0
        %7502 = vmatpush1.msra.mxu0 0.0
        %7503 = vmatprep.subr.mxu0 0.0
        %7504 = vmatpush1.msra.mxu0 0.0
        %7505 = vmatprep.subr.mxu0 0.0
        %7506 = vmatpush1.msra.mxu0 0.0
        %7507 = vmatprep.subr.mxu0 0.0
        %7508 = vmatpush1.msra.mxu0 0.0
        %7509 = vmatprep.subr.mxu0 0.0
        %7510 = vmatpush1.msra.mxu0 0.0
        %7511 = vmatprep.subr.mxu0 0.0
        %7512 = vmatpush1.msra.mxu0 0.0
        %7513 = vmatprep.subr.mxu0 0.0
        %7514 = vmatpush1.msra.mxu0 0.0
        %7515 = vmatprep.subr.mxu0 0.0
        %7516 = vmatpush1.msra.mxu0 0.0
        %7517 = vmatprep.subr.mxu0 0.0
        %7518 = vmatpush1.msra.mxu0 0.0
        %7519 = vmatprep.subr.mxu0 0.0
        %7520 = vmatpush1.msra.mxu0 0.0
        %7521 = vmatprep.subr.mxu0 0.0
        %7522 = vmatpush1.msra.mxu0 0.0
        %7523 = vmatprep.subr.mxu0 0.0
        %7524 = vmatpush1.msra.mxu0 0.0
        %7525 = vmatprep.subr.mxu0 0.0
        %7526 = vmatpush1.msra.mxu0 0.0
        %7527 = vmatprep.subr.mxu0 0.0
        %7528 = vmatpush1.msra.mxu0 0.0
        %7529 = vmatprep.subr.mxu0 0.0
        %7530 = vmatpush1.msra.mxu0 0.0
        %7531 = vmatprep.subr.mxu0 0.0
        %7532 = vmatpush1.msra.mxu0 0.0
        %7533 = vmatprep.subr.mxu0 0.0
        %7534 = vmatpush1.msra.mxu0 0.0
        %7535 = vmatprep.subr.mxu0 0.0
        %7536 = vmatpush1.msra.mxu0 0.0
        %7537 = vmatprep.subr.mxu0 0.0
        %7538 = vmatpush1.msra.mxu0 0.0
        %7539 = vmatprep.mubr.f32.mxu0 0.0
        %v7540 = vand.u32 %v1174, 4294901760
        %v7541 = vsub.f32 %v1174, %v7540
        %v7542 = vand.u32 %v7541, 4294901760
        %v7543 = vsub.f32 %v7541, %v7542
        %v7544 = vand.u32 %v7543, 4294901760
        %7545 = vmatmul.mubr.f32.gmra.mrb[0].mxu0 %v7544
        %v7546 = vpop.f32.mrb[0].mxu0
        %v7547 = vadd.f32 %v1171, %v7546
        %v7548 = vpop.f32.mrb[0].mxu0
        %v7549 = vadd.f32 %v1171, %v7548
        %7550 = vdwg.mxu0
        %v7551 = vand.u32 %v7452, 4294901760
        %v7552 = vsub.f32 %v7452, %v7551
        %v7553 = vand.u32 %v7552, 4294901760
        %v7554 = vsub.f32 %v7552, %v7553
        %v7555 = vand.u32 %v7554, 4294901760
        %7556 = vmatprep.subr.mxu0 %v7555
        %v7557 = vand.u32 %v7451, 4294901760
        %v7558 = vsub.f32 %v7451, %v7557
        %v7559 = vand.u32 %v7558, 4294901760
        %v7560 = vsub.f32 %v7558, %v7559
        %v7561 = vand.u32 %v7560, 4294901760
        %7562 = vmatpush1.msra.mxu0 %v7561
        %v7563 = vand.u32 %v7454, 4294901760
        %v7564 = vsub.f32 %v7454, %v7563
        %v7565 = vand.u32 %v7564, 4294901760
        %v7566 = vsub.f32 %v7564, %v7565
        %v7567 = vand.u32 %v7566, 4294901760
        %7568 = vmatprep.subr.mxu0 %v7567
        %v7569 = vand.u32 %v7453, 4294901760
        %v7570 = vsub.f32 %v7453, %v7569
        %v7571 = vand.u32 %v7570, 4294901760
        %v7572 = vsub.f32 %v7570, %v7571
        %v7573 = vand.u32 %v7572, 4294901760
        %7574 = vmatpush1.msra.mxu0 %v7573
        %v7575 = vand.u32 %v7456, 4294901760
        %v7576 = vsub.f32 %v7456, %v7575
        %v7577 = vand.u32 %v7576, 4294901760
        %v7578 = vsub.f32 %v7576, %v7577
        %v7579 = vand.u32 %v7578, 4294901760
        %7580 = vmatprep.subr.mxu0 %v7579
        %v7581 = vand.u32 %v7455, 4294901760
        %v7582 = vsub.f32 %v7455, %v7581
        %v7583 = vand.u32 %v7582, 4294901760
        %v7584 = vsub.f32 %v7582, %v7583
        %v7585 = vand.u32 %v7584, 4294901760
        %7586 = vmatpush1.msra.mxu0 %v7585
        %v7587 = vand.u32 %v7458, 4294901760
        %v7588 = vsub.f32 %v7458, %v7587
        %v7589 = vand.u32 %v7588, 4294901760
        %v7590 = vsub.f32 %v7588, %v7589
        %v7591 = vand.u32 %v7590, 4294901760
        %7592 = vmatprep.subr.mxu0 %v7591
        %v7593 = vand.u32 %v7457, 4294901760
        %v7594 = vsub.f32 %v7457, %v7593
        %v7595 = vand.u32 %v7594, 4294901760
        %v7596 = vsub.f32 %v7594, %v7595
        %v7597 = vand.u32 %v7596, 4294901760
        %7598 = vmatpush1.msra.mxu0 %v7597
        %v7599 = vand.u32 %v7463, 4294901760
        %v7600 = vsub.f32 %v7463, %v7599
        %v7601 = vand.u32 %v7600, 4294901760
        %v7602 = vsub.f32 %v7600, %v7601
        %v7603 = vand.u32 %v7602, 4294901760
        %7604 = vmatprep.subr.mxu0 %v7603
        %v7605 = vand.u32 %v7460, 4294901760
        %v7606 = vsub.f32 %v7460, %v7605
        %v7607 = vand.u32 %v7606, 4294901760
        %v7608 = vsub.f32 %v7606, %v7607
        %v7609 = vand.u32 %v7608, 4294901760
        %7610 = vmatpush1.msra.mxu0 %v7609
        %7611 = vmatprep.subr.mxu0 0.0
        %7612 = vmatpush1.msra.mxu0 0.0
        %7613 = vmatprep.subr.mxu0 0.0
        %7614 = vmatpush1.msra.mxu0 0.0
        %7615 = vmatprep.subr.mxu0 0.0
        %7616 = vmatpush1.msra.mxu0 0.0
        %7617 = vmatprep.subr.mxu0 0.0
        %7618 = vmatpush1.msra.mxu0 0.0
        %7619 = vmatprep.subr.mxu0 0.0
        %7620 = vmatpush1.msra.mxu0 0.0
        %7621 = vmatprep.subr.mxu0 0.0
        %7622 = vmatpush1.msra.mxu0 0.0
        %7623 = vmatprep.subr.mxu0 0.0
        %7624 = vmatpush1.msra.mxu0 0.0
        %7625 = vmatprep.subr.mxu0 0.0
        %7626 = vmatpush1.msra.mxu0 0.0
        %7627 = vmatprep.subr.mxu0 0.0
        %7628 = vmatpush1.msra.mxu0 0.0
        %7629 = vmatprep.subr.mxu0 0.0
        %7630 = vmatpush1.msra.mxu0 0.0
        %7631 = vmatprep.subr.mxu0 0.0
        %7632 = vmatpush1.msra.mxu0 0.0
        %7633 = vmatprep.subr.mxu0 0.0
        %7634 = vmatpush1.msra.mxu0 0.0
        %7635 = vmatprep.subr.mxu0 0.0
        %7636 = vmatpush1.msra.mxu0 0.0
        %7637 = vmatprep.subr.mxu0 0.0
        %7638 = vmatpush1.msra.mxu0 0.0
        %7639 = vmatprep.subr.mxu0 0.0
        %7640 = vmatpush1.msra.mxu0 0.0
        %7641 = vmatprep.subr.mxu0 0.0
        %7642 = vmatpush1.msra.mxu0 0.0
        %7643 = vmatprep.subr.mxu0 0.0
        %7644 = vmatpush1.msra.mxu0 0.0
        %7645 = vmatprep.subr.mxu0 0.0
        %7646 = vmatpush1.msra.mxu0 0.0
        %7647 = vmatprep.subr.mxu0 0.0
        %7648 = vmatpush1.msra.mxu0 0.0
        %7649 = vmatprep.subr.mxu0 0.0
        %7650 = vmatpush1.msra.mxu0 0.0
        %7651 = vmatprep.subr.mxu0 0.0
        %7652 = vmatpush1.msra.mxu0 0.0
        %7653 = vmatprep.subr.mxu0 0.0
        %7654 = vmatpush1.msra.mxu0 0.0
        %7655 = vmatprep.subr.mxu0 0.0
        %7656 = vmatpush1.msra.mxu0 0.0
        %7657 = vmatprep.subr.mxu0 0.0
        %7658 = vmatpush1.msra.mxu0 0.0
        %7659 = vmatprep.subr.mxu0 0.0
        %7660 = vmatpush1.msra.mxu0 0.0
        %7661 = vmatprep.subr.mxu0 0.0
        %7662 = vmatpush1.msra.mxu0 0.0
        %7663 = vmatprep.subr.mxu0 0.0
        %7664 = vmatpush1.msra.mxu0 0.0
        %7665 = vmatprep.mubr.f32.mxu0 0.0
        %v7666 = vand.u32 %v1174, 4294901760
        %7667 = vmatmul.mubr.f32.gmra.mrb[0].mxu0 %v7666
        %v7668 = vpop.f32.mrb[0].mxu0
        %v7669 = vadd.f32 %v7547, %v7668
        %v7670 = vpop.f32.mrb[0].mxu0
        %v7671 = vadd.f32 %v7549, %v7670
        %7672 = vdwg.mxu0
        %v7673 = vand.u32 %v7452, 4294901760
        %v7674 = vsub.f32 %v7452, %v7673
        %7675 = vmatprep.subr.mxu0 %v7674
        %v7676 = vand.u32 %v7451, 4294901760
        %v7677 = vsub.f32 %v7451, %v7676
        %7678 = vmatpush1.msra.mxu0 %v7677
        %v7679 = vand.u32 %v7454, 4294901760
        %v7680 = vsub.f32 %v7454, %v7679
        %7681 = vmatprep.subr.mxu0 %v7680
        %v7682 = vand.u32 %v7453, 4294901760
        %v7683 = vsub.f32 %v7453, %v7682
        %7684 = vmatpush1.msra.mxu0 %v7683
        %v7685 = vand.u32 %v7456, 4294901760
        %v7686 = vsub.f32 %v7456, %v7685
        %7687 = vmatprep.subr.mxu0 %v7686
        %v7688 = vand.u32 %v7455, 4294901760
        %v7689 = vsub.f32 %v7455, %v7688
        %7690 = vmatpush1.msra.mxu0 %v7689
        %v7691 = vand.u32 %v7458, 4294901760
        %v7692 = vsub.f32 %v7458, %v7691
        %7693 = vmatprep.subr.mxu0 %v7692
        %v7694 = vand.u32 %v7457, 4294901760
        %v7695 = vsub.f32 %v7457, %v7694
        %7696 = vmatpush1.msra.mxu0 %v7695
        %v7697 = vand.u32 %v7463, 4294901760
        %v7698 = vsub.f32 %v7463, %v7697
        %7699 = vmatprep.subr.mxu0 %v7698
        %v7700 = vand.u32 %v7460, 4294901760
        %v7701 = vsub.f32 %v7460, %v7700
        %7702 = vmatpush1.msra.mxu0 %v7701
        %7703 = vmatprep.subr.mxu0 0.0
        %7704 = vmatpush1.msra.mxu0 0.0
        %7705 = vmatprep.subr.mxu0 0.0
        %7706 = vmatpush1.msra.mxu0 0.0
        %7707 = vmatprep.subr.mxu0 0.0
        %7708 = vmatpush1.msra.mxu0 0.0
        %7709 = vmatprep.subr.mxu0 0.0
        %7710 = vmatpush1.msra.mxu0 0.0
        %7711 = vmatprep.subr.mxu0 0.0
        %7712 = vmatpush1.msra.mxu0 0.0
        %7713 = vmatprep.subr.mxu0 0.0
        %7714 = vmatpush1.msra.mxu0 0.0
        %7715 = vmatprep.subr.mxu0 0.0
        %7716 = vmatpush1.msra.mxu0 0.0
        %7717 = vmatprep.subr.mxu0 0.0
        %7718 = vmatpush1.msra.mxu0 0.0
        %7719 = vmatprep.subr.mxu0 0.0
        %7720 = vmatpush1.msra.mxu0 0.0
        %7721 = vmatprep.subr.mxu0 0.0
        %7722 = vmatpush1.msra.mxu0 0.0
        %7723 = vmatprep.subr.mxu0 0.0
        %7724 = vmatpush1.msra.mxu0 0.0
        %7725 = vmatprep.subr.mxu0 0.0
        %7726 = vmatpush1.msra.mxu0 0.0
        %7727 = vmatprep.subr.mxu0 0.0
        %7728 = vmatpush1.msra.mxu0 0.0
        %7729 = vmatprep.subr.mxu0 0.0
        %7730 = vmatpush1.msra.mxu0 0.0
        %7731 = vmatprep.subr.mxu0 0.0
        %7732 = vmatpush1.msra.mxu0 0.0
        %7733 = vmatprep.subr.mxu0 0.0
        %7734 = vmatpush1.msra.mxu0 0.0
        %7735 = vmatprep.subr.mxu0 0.0
        %7736 = vmatpush1.msra.mxu0 0.0
        %7737 = vmatprep.subr.mxu0 0.0
        %7738 = vmatpush1.msra.mxu0 0.0
        %7739 = vmatprep.subr.mxu0 0.0
        %7740 = vmatpush1.msra.mxu0 0.0
        %7741 = vmatprep.subr.mxu0 0.0
        %7742 = vmatpush1.msra.mxu0 0.0
        %7743 = vmatprep.subr.mxu0 0.0
        %7744 = vmatpush1.msra.mxu0 0.0
        %7745 = vmatprep.subr.mxu0 0.0
        %7746 = vmatpush1.msra.mxu0 0.0
        %7747 = vmatprep.subr.mxu0 0.0
        %7748 = vmatpush1.msra.mxu0 0.0
        %7749 = vmatprep.subr.mxu0 0.0
        %7750 = vmatpush1.msra.mxu0 0.0
        %7751 = vmatprep.subr.mxu0 0.0
        %7752 = vmatpush1.msra.mxu0 0.0
        %7753 = vmatprep.subr.mxu0 0.0
        %7754 = vmatpush1.msra.mxu0 0.0
        %7755 = vmatprep.subr.mxu0 0.0
        %7756 = vmatpush1.msra.mxu0 0.0
        %7757 = vmatprep.mubr.f32.mxu0 0.0
        %v7758 = vand.u32 %v1174, 4294901760
        %v7759 = vsub.f32 %v1174, %v7758
        %7760 = vmatmul.mubr.f32.gmra.mrb[0].mxu0 %v7759
        %v7761 = vpop.f32.mrb[0].mxu0
        %v7762 = vadd.f32 %v7669, %v7761
        %v7763 = vpop.f32.mrb[0].mxu0
        %v7764 = vadd.f32 %v7671, %v7763
        %7765 = vdwg.mxu0
        %v7766 = vand.u32 %v7452, 4294901760
        %7767 = vmatprep.subr.mxu0 %v7766
        %v7768 = vand.u32 %v7451, 4294901760
        %7769 = vmatpush1.msra.mxu0 %v7768
        %v7770 = vand.u32 %v7454, 4294901760
        %7771 = vmatprep.subr.mxu0 %v7770
        %v7772 = vand.u32 %v7453, 4294901760
        %7773 = vmatpush1.msra.mxu0 %v7772
        %v7774 = vand.u32 %v7456, 4294901760
        %7775 = vmatprep.subr.mxu0 %v7774
        %v7776 = vand.u32 %v7455, 4294901760
        %7777 = vmatpush1.msra.mxu0 %v7776
        %v7778 = vand.u32 %v7458, 4294901760
        %7779 = vmatprep.subr.mxu0 %v7778
        %v7780 = vand.u32 %v7457, 4294901760
        %7781 = vmatpush1.msra.mxu0 %v7780
        %v7782 = vand.u32 %v7463, 4294901760
        %7783 = vmatprep.subr.mxu0 %v7782
        %v7784 = vand.u32 %v7460, 4294901760
        %7785 = vmatpush1.msra.mxu0 %v7784
        %7786 = vmatprep.subr.mxu0 0.0
        %7787 = vmatpush1.msra.mxu0 0.0
        %7788 = vmatprep.subr.mxu0 0.0
        %7789 = vmatpush1.msra.mxu0 0.0
        %7790 = vmatprep.subr.mxu0 0.0
        %7791 = vmatpush1.msra.mxu0 0.0
        %7792 = vmatprep.subr.mxu0 0.0
        %7793 = vmatpush1.msra.mxu0 0.0
        %7794 = vmatprep.subr.mxu0 0.0
        %7795 = vmatpush1.msra.mxu0 0.0
        %7796 = vmatprep.subr.mxu0 0.0
        %7797 = vmatpush1.msra.mxu0 0.0
        %7798 = vmatprep.subr.mxu0 0.0
        %7799 = vmatpush1.msra.mxu0 0.0
        %7800 = vmatprep.subr.mxu0 0.0
        %7801 = vmatpush1.msra.mxu0 0.0
        %7802 = vmatprep.subr.mxu0 0.0
        %7803 = vmatpush1.msra.mxu0 0.0
        %7804 = vmatprep.subr.mxu0 0.0
        %7805 = vmatpush1.msra.mxu0 0.0
        %7806 = vmatprep.subr.mxu0 0.0
        %7807 = vmatpush1.msra.mxu0 0.0
        %7808 = vmatprep.subr.mxu0 0.0
        %7809 = vmatpush1.msra.mxu0 0.0
        %7810 = vmatprep.subr.mxu0 0.0
        %7811 = vmatpush1.msra.mxu0 0.0
        %7812 = vmatprep.subr.mxu0 0.0
        %7813 = vmatpush1.msra.mxu0 0.0
        %7814 = vmatprep.subr.mxu0 0.0
        %7815 = vmatpush1.msra.mxu0 0.0
        %7816 = vmatprep.subr.mxu0 0.0
        %7817 = vmatpush1.msra.mxu0 0.0
        %7818 = vmatprep.subr.mxu0 0.0
        %7819 = vmatpush1.msra.mxu0 0.0
        %7820 = vmatprep.subr.mxu0 0.0
        %7821 = vmatpush1.msra.mxu0 0.0
        %7822 = vmatprep.subr.mxu0 0.0
        %7823 = vmatpush1.msra.mxu0 0.0
        %7824 = vmatprep.subr.mxu0 0.0
        %7825 = vmatpush1.msra.mxu0 0.0
        %7826 = vmatprep.subr.mxu0 0.0
        %7827 = vmatpush1.msra.mxu0 0.0
        %7828 = vmatprep.subr.mxu0 0.0
        %7829 = vmatpush1.msra.mxu0 0.0
        %7830 = vmatprep.subr.mxu0 0.0
        %7831 = vmatpush1.msra.mxu0 0.0
        %7832 = vmatprep.subr.mxu0 0.0
        %7833 = vmatpush1.msra.mxu0 0.0
        %7834 = vmatprep.subr.mxu0 0.0
        %7835 = vmatpush1.msra.mxu0 0.0
        %7836 = vmatprep.subr.mxu0 0.0
        %7837 = vmatpush1.msra.mxu0 0.0
        %7838 = vmatprep.subr.mxu0 0.0
        %7839 = vmatpush1.msra.mxu0 0.0
        %7840 = vmatprep.mubr.f32.mxu0 0.0
        %v7841 = vand.u32 %v1174, 4294901760
        %v7842 = vsub.f32 %v1174, %v7841
        %v7843 = vand.u32 %v7842, 4294901760
        %7844 = vmatmul.mubr.f32.gmra.mrb[0].mxu0 %v7843
        %v7845 = vpop.f32.mrb[0].mxu0
        %v7846 = vadd.f32 %v7762, %v7845
        %v7847 = vpop.f32.mrb[0].mxu0
        %v7848 = vadd.f32 %v7764, %v7847
        %7849 = vdwg.mxu0
        %v7850 = vand.u32 %v7452, 4294901760
        %v7851 = vsub.f32 %v7452, %v7850
        %v7852 = vand.u32 %v7851, 4294901760
        %7853 = vmatprep.subr.mxu0 %v7852
        %v7854 = vand.u32 %v7451, 4294901760
        %v7855 = vsub.f32 %v7451, %v7854
        %v7856 = vand.u32 %v7855, 4294901760
        %7857 = vmatpush1.msra.mxu0 %v7856
        %v7858 = vand.u32 %v7454, 4294901760
        %v7859 = vsub.f32 %v7454, %v7858
        %v7860 = vand.u32 %v7859, 4294901760
        %7861 = vmatprep.subr.mxu0 %v7860
        %v7862 = vand.u32 %v7453, 4294901760
        %v7863 = vsub.f32 %v7453, %v7862
        %v7864 = vand.u32 %v7863, 4294901760
        %7865 = vmatpush1.msra.mxu0 %v7864
        %v7866 = vand.u32 %v7456, 4294901760
        %v7867 = vsub.f32 %v7456, %v7866
        %v7868 = vand.u32 %v7867, 4294901760
        %7869 = vmatprep.subr.mxu0 %v7868
        %v7870 = vand.u32 %v7455, 4294901760
        %v7871 = vsub.f32 %v7455, %v7870
        %v7872 = vand.u32 %v7871, 4294901760
        %7873 = vmatpush1.msra.mxu0 %v7872
        %v7874 = vand.u32 %v7458, 4294901760
        %v7875 = vsub.f32 %v7458, %v7874
        %v7876 = vand.u32 %v7875, 4294901760
        %7877 = vmatprep.subr.mxu0 %v7876
        %v7878 = vand.u32 %v7457, 4294901760
        %v7879 = vsub.f32 %v7457, %v7878
        %v7880 = vand.u32 %v7879, 4294901760
        %7881 = vmatpush1.msra.mxu0 %v7880
        %v7882 = vand.u32 %v7463, 4294901760
        %v7883 = vsub.f32 %v7463, %v7882
        %v7884 = vand.u32 %v7883, 4294901760
        %7885 = vmatprep.subr.mxu0 %v7884
        %v7886 = vand.u32 %v7460, 4294901760
        %v7887 = vsub.f32 %v7460, %v7886
        %v7888 = vand.u32 %v7887, 4294901760
        %7889 = vmatpush1.msra.mxu0 %v7888
        %7890 = vmatprep.subr.mxu0 0.0
        %7891 = vmatpush1.msra.mxu0 0.0
        %7892 = vmatprep.subr.mxu0 0.0
        %7893 = vmatpush1.msra.mxu0 0.0
        %7894 = vmatprep.subr.mxu0 0.0
        %7895 = vmatpush1.msra.mxu0 0.0
        %7896 = vmatprep.subr.mxu0 0.0
        %7897 = vmatpush1.msra.mxu0 0.0
        %7898 = vmatprep.subr.mxu0 0.0
        %7899 = vmatpush1.msra.mxu0 0.0
        %7900 = vmatprep.subr.mxu0 0.0
        %7901 = vmatpush1.msra.mxu0 0.0
        %7902 = vmatprep.subr.mxu0 0.0
        %7903 = vmatpush1.msra.mxu0 0.0
        %7904 = vmatprep.subr.mxu0 0.0
        %7905 = vmatpush1.msra.mxu0 0.0
        %7906 = vmatprep.subr.mxu0 0.0
        %7907 = vmatpush1.msra.mxu0 0.0
        %7908 = vmatprep.subr.mxu0 0.0
        %7909 = vmatpush1.msra.mxu0 0.0
        %7910 = vmatprep.subr.mxu0 0.0
        %7911 = vmatpush1.msra.mxu0 0.0
        %7912 = vmatprep.subr.mxu0 0.0
        %7913 = vmatpush1.msra.mxu0 0.0
        %7914 = vmatprep.subr.mxu0 0.0
        %7915 = vmatpush1.msra.mxu0 0.0
        %7916 = vmatprep.subr.mxu0 0.0
        %7917 = vmatpush1.msra.mxu0 0.0
        %7918 = vmatprep.subr.mxu0 0.0
        %7919 = vmatpush1.msra.mxu0 0.0
        %7920 = vmatprep.subr.mxu0 0.0
        %7921 = vmatpush1.msra.mxu0 0.0
        %7922 = vmatprep.subr.mxu0 0.0
        %7923 = vmatpush1.msra.mxu0 0.0
        %7924 = vmatprep.subr.mxu0 0.0
        %7925 = vmatpush1.msra.mxu0 0.0
        %7926 = vmatprep.subr.mxu0 0.0
        %7927 = vmatpush1.msra.mxu0 0.0
        %7928 = vmatprep.subr.mxu0 0.0
        %7929 = vmatpush1.msra.mxu0 0.0
        %7930 = vmatprep.subr.mxu0 0.0
        %7931 = vmatpush1.msra.mxu0 0.0
        %7932 = vmatprep.subr.mxu0 0.0
        %7933 = vmatpush1.msra.mxu0 0.0
        %7934 = vmatprep.subr.mxu0 0.0
        %7935 = vmatpush1.msra.mxu0 0.0
        %7936 = vmatprep.subr.mxu0 0.0
        %7937 = vmatpush1.msra.mxu0 0.0
        %7938 = vmatprep.subr.mxu0 0.0
        %7939 = vmatpush1.msra.mxu0 0.0
        %7940 = vmatprep.subr.mxu0 0.0
        %7941 = vmatpush1.msra.mxu0 0.0
        %7942 = vmatprep.subr.mxu0 0.0
        %7943 = vmatpush1.msra.mxu0 0.0
        %7944 = vmatprep.mubr.f32.mxu0 0.0
        %v7945 = vand.u32 %v1174, 4294901760
        %7946 = vmatmul.mubr.f32.gmra.mrb[0].mxu0 %v7945
        %v7947 = vpop.f32.mrb[0].mxu0
        %v7948 = vadd.f32 %v7846, %v7947
        %v7949 = vpop.f32.mrb[0].mxu0
        %v7950 = vadd.f32 %v7848, %v7949
        %7951 = vdwg.mxu0
        %v7952 = vand.u32 %v7452, 4294901760
        %7953 = vmatprep.subr.mxu0 %v7952
        %v7954 = vand.u32 %v7451, 4294901760
        %7955 = vmatpush1.msra.mxu0 %v7954
        %v7956 = vand.u32 %v7454, 4294901760
        %7957 = vmatprep.subr.mxu0 %v7956
        %v7958 = vand.u32 %v7453, 4294901760
        %7959 = vmatpush1.msra.mxu0 %v7958
        %v7960 = vand.u32 %v7456, 4294901760
        %7961 = vmatprep.subr.mxu0 %v7960
        %v7962 = vand.u32 %v7455, 4294901760
        %7963 = vmatpush1.msra.mxu0 %v7962
        %v7964 = vand.u32 %v7458, 4294901760
        %7965 = vmatprep.subr.mxu0 %v7964
        %v7966 = vand.u32 %v7457, 4294901760
        %7967 = vmatpush1.msra.mxu0 %v7966
        %v7968 = vand.u32 %v7463, 4294901760
        %7969 = vmatprep.subr.mxu0 %v7968
        %v7970 = vand.u32 %v7460, 4294901760
        %7971 = vmatpush1.msra.mxu0 %v7970
        %7972 = vmatprep.subr.mxu0 0.0
        %7973 = vmatpush1.msra.mxu0 0.0
        %7974 = vmatprep.subr.mxu0 0.0
        %7975 = vmatpush1.msra.mxu0 0.0
        %7976 = vmatprep.subr.mxu0 0.0
        %7977 = vmatpush1.msra.mxu0 0.0
        %7978 = vmatprep.subr.mxu0 0.0
        %7979 = vmatpush1.msra.mxu0 0.0
        %7980 = vmatprep.subr.mxu0 0.0
        %7981 = vmatpush1.msra.mxu0 0.0
        %7982 = vmatprep.subr.mxu0 0.0
        %7983 = vmatpush1.msra.mxu0 0.0
        %7984 = vmatprep.subr.mxu0 0.0
        %7985 = vmatpush1.msra.mxu0 0.0
        %7986 = vmatprep.subr.mxu0 0.0
        %7987 = vmatpush1.msra.mxu0 0.0
        %7988 = vmatprep.subr.mxu0 0.0
        %7989 = vmatpush1.msra.mxu0 0.0
        %7990 = vmatprep.subr.mxu0 0.0
        %7991 = vmatpush1.msra.mxu0 0.0
        %7992 = vmatprep.subr.mxu0 0.0
        %7993 = vmatpush1.msra.mxu0 0.0
        %7994 = vmatprep.subr.mxu0 0.0
        %7995 = vmatpush1.msra.mxu0 0.0
        %7996 = vmatprep.subr.mxu0 0.0
        %7997 = vmatpush1.msra.mxu0 0.0
        %7998 = vmatprep.subr.mxu0 0.0
        %7999 = vmatpush1.msra.mxu0 0.0
        %8000 = vmatprep.subr.mxu0 0.0
        %8001 = vmatpush1.msra.mxu0 0.0
        %8002 = vmatprep.subr.mxu0 0.0
        %8003 = vmatpush1.msra.mxu0 0.0
        %8004 = vmatprep.subr.mxu0 0.0
        %8005 = vmatpush1.msra.mxu0 0.0
        %8006 = vmatprep.subr.mxu0 0.0
        %8007 = vmatpush1.msra.mxu0 0.0
        %8008 = vmatprep.subr.mxu0 0.0
        %8009 = vmatpush1.msra.mxu0 0.0
        %8010 = vmatprep.subr.mxu0 0.0
        %8011 = vmatpush1.msra.mxu0 0.0
        %8012 = vmatprep.subr.mxu0 0.0
        %8013 = vmatpush1.msra.mxu0 0.0
        %8014 = vmatprep.subr.mxu0 0.0
        %8015 = vmatpush1.msra.mxu0 0.0
        %8016 = vmatprep.subr.mxu0 0.0
        %8017 = vmatpush1.msra.mxu0 0.0
        %8018 = vmatprep.subr.mxu0 0.0
        %8019 = vmatpush1.msra.mxu0 0.0
        %8020 = vmatprep.subr.mxu0 0.0
        %8021 = vmatpush1.msra.mxu0 0.0
        %8022 = vmatprep.subr.mxu0 0.0
        %8023 = vmatpush1.msra.mxu0 0.0
        %8024 = vmatprep.subr.mxu0 0.0
        %8025 = vmatpush1.msra.mxu0 0.0
        %8026 = vmatprep.mubr.f32.mxu0 0.0
        %v8027 = vand.u32 %v1174, 4294901760
        %8028 = vmatmul.mubr.f32.gmra.mrb[0].mxu0 %v8027
        %v8029 = vpop.f32.mrb[0].mxu0
        %v8030 = vadd.f32 %v7948, %v8029
        %v8031 = vpop.f32.mrb[0].mxu0
        %v8032 = vadd.f32 %v7950, %v8031
        %8033 = vdwg.mxu0
        %v8034 = vsel %vm442, %v8030, 0.0
        %v8035 = vsel %vm442, %v8032, 0.0
        %v8036 = vadd.f32 %v8034, %v8035
        %8037 = vadd.xlane.f32.xlu0 %v8036
        %v8038 = vpop.xlane.xlu0 %8037
        %v8039 = vmul.f32 %v8038, %v1042
        %v8040 = vsub.f32 %v8030, %v8039
        %v8041 = vsub.f32 %v8032, %v8039
        %v8042 = vmul.f32 %v8040, %v8040
        %v8043 = vmul.f32 %v8041, %v8041
        %v8044 = vsel %vm442, %v8042, 0.0
        %v8045 = vsel %vm442, %v8043, 0.0
        %v8046 = vadd.f32 %v8044, %v8045
        %8047 = vadd.xlane.f32.xlu0 %v8046
        %v8048 = vpop.xlane.xlu0 %8047
        %v8049 = vmul.f32 %v8048, %v1042
        %v8050 = vadd.f32 %v8049, 1e-05
        %v8051 = vrsqrt.pop %v8050
        %v8052 = vmul.f32 %v8040, %v8051
        %v8053 = vmul.f32 %v8041, %v8051
        %v8054 = vadd.f32 %v8052, %v6648
        %v8055 = vadd.f32 %v8053, %v6649
        %v8056 = vmax.f32 %v8054, 0.0
        %v8057 = vmax.f32 %v8055, 0.0
        %8060 = vrot.lane.b32.xlu0 %v8056, 17
        %v8061 = vpop.permute.xlu0 %8060
        %8062 = vrot.lane.b32.xlu0 %v8057, 17
        %v8063 = vpop.permute.xlu0 %8062
        %v8064 = vsel %vm333, %v8061, %v8063
        %v8067 = vsel %vm333, 0.0, %v8061
        %v8068 = vsel %vm340, %v8067, 0.0
        %v8069 = vsel %vm341, %v8064, 0.0
        %8070 = vrot.lane.b32.xlu0 %v8056, 16
        %v8071 = vpop.permute.xlu0 %8070
        %8072 = vrot.lane.b32.xlu0 %v8057, 16
        %v8073 = vpop.permute.xlu0 %8072
        %v8074 = vsel %vm348, %v8071, %v8073
        %v8076 = vsel %vm348, 0.0, %v8071
        %8077 = vrot.lane.b32.xlu0 %v8056, 15
        %v8078 = vpop.permute.xlu0 %8077
        %8079 = vrot.lane.b32.xlu0 %v8057, 15
        %v8080 = vpop.permute.xlu0 %8079
        %v8081 = vsel %vm356, %v8078, %v8080
        %v8084 = vsel %vm356, 0.0, %v8078
        %v8085 = vsel %vm363, %v8084, 0.0
        %v8086 = vsel %vm364, %v8081, 0.0
        %8087 = vrot.lane.b32.xlu0 %v8056, 1
        %v8088 = vpop.permute.xlu0 %8087
        %8089 = vrot.lane.b32.xlu0 %v8057, 1
        %v8090 = vpop.permute.xlu0 %8089
        %v8091 = vsel %vm371, %v8088, %v8090
        %v8094 = vsel %vm371, 0.0, %v8088
        %v8095 = vsel %vm340, %v8094, 0.0
        %v8096 = vsel %vm341, %v8091, 0.0
        %8097 = vrot.lane.b32.xlu0 %v8056, 127
        %v8098 = vpop.permute.xlu0 %8097
        %8099 = vrot.lane.b32.xlu0 %v8057, 127
        %v8100 = vpop.permute.xlu0 %8099
        %v8101 = vsel %vm382, %v8098, %v8100
        %v8104 = vsel %vm382, %v8100, 0.0
        %v8105 = vsel %vm363, %v8101, 0.0
        %v8106 = vsel %vm364, %v8104, 0.0
        %8107 = vrot.lane.b32.xlu0 %v8056, 113
        %v8108 = vpop.permute.xlu0 %8107
        %8109 = vrot.lane.b32.xlu0 %v8057, 113
        %v8110 = vpop.permute.xlu0 %8109
        %v8111 = vsel %vm393, %v8108, %v8110
        %v8114 = vsel %vm393, %v8110, 0.0
        %v8115 = vsel %vm340, %v8111, 0.0
        %v8116 = vsel %vm341, %v8114, 0.0
        %8117 = vrot.lane.b32.xlu0 %v8056, 112
        %v8118 = vpop.permute.xlu0 %8117
        %8119 = vrot.lane.b32.xlu0 %v8057, 112
        %v8120 = vpop.permute.xlu0 %8119
        %v8121 = vsel %vm404, %v8118, %v8120
        %v8123 = vsel %vm404, %v8120, 0.0
        %8124 = vrot.lane.b32.xlu0 %v8056, 111
        %v8125 = vpop.permute.xlu0 %8124
        %8126 = vrot.lane.b32.xlu0 %v8057, 111
        %v8127 = vpop.permute.xlu0 %8126
        %v8128 = vsel %vm412, %v8125, %v8127
        %v8131 = vsel %vm412, %v8127, 0.0
        %v8132 = vsel %vm363, %v8128, 0.0
        %v8133 = vsel %vm364, %v8131, 0.0
        %v8135 = vrot.slane %v8076, 4
        %v8136 = vrot.slane %v8074, 4
        %v8141 = vrot.slane %v8095, 4
        %v8142 = vrot.slane %v8096, 4
        %v8147 = vrot.slane %v8105, 4
        %v8148 = vrot.slane %v8106, 4
        %v8152 = vrot.slane %v8121, 4
        %v8153 = vrot.slane %v8123, 4
        %v8156 = vsel %vm442, %v8068, %v8135
        %v8157 = vsel %vm442, %v8069, %v8136
        %v8158 = vsel %vm442, %v8085, %v8141
        %v8159 = vsel %vm442, %v8086, %v8142
        %v8160 = vsel %vm442, %v8056, %v8147
        %v8161 = vsel %vm442, %v8057, %v8148
        %v8162 = vsel %vm442, %v8115, %v8152
        %v8163 = vsel %vm442, %v8116, %v8153
        %v8165 = vsel %vm442, %v8132, 0
        %v8168 = vsel %vm442, %v8133, 0
        %v8170 = vand.u32 %v8157, 4294901760
        %8171 = vmatprep.subr.mxu0 %v8170
        %v8172 = vand.u32 %v8156, 4294901760
        %8173 = vmatpush1.msra.mxu0 %v8172
        %v8174 = vand.u32 %v8159, 4294901760
        %8175 = vmatprep.subr.mxu0 %v8174
        %v8176 = vand.u32 %v8158, 4294901760
        %8177 = vmatpush1.msra.mxu0 %v8176
        %v8178 = vand.u32 %v8161, 4294901760
        %8179 = vmatprep.subr.mxu0 %v8178
        %v8180 = vand.u32 %v8160, 4294901760
        %8181 = vmatpush1.msra.mxu0 %v8180
        %v8182 = vand.u32 %v8163, 4294901760
        %8183 = vmatprep.subr.mxu0 %v8182
        %v8184 = vand.u32 %v8162, 4294901760
        %8185 = vmatpush1.msra.mxu0 %v8184
        %v8186 = vand.u32 %v8168, 4294901760
        %8187 = vmatprep.subr.mxu0 %v8186
        %v8188 = vand.u32 %v8165, 4294901760
        %8189 = vmatpush1.msra.mxu0 %v8188
        %8190 = vmatprep.subr.mxu0 0.0
        %8191 = vmatpush1.msra.mxu0 0.0
        %8192 = vmatprep.subr.mxu0 0.0
        %8193 = vmatpush1.msra.mxu0 0.0
        %8194 = vmatprep.subr.mxu0 0.0
        %8195 = vmatpush1.msra.mxu0 0.0
        %8196 = vmatprep.subr.mxu0 0.0
        %8197 = vmatpush1.msra.mxu0 0.0
        %8198 = vmatprep.subr.mxu0 0.0
        %8199 = vmatpush1.msra.mxu0 0.0
        %8200 = vmatprep.subr.mxu0 0.0
        %8201 = vmatpush1.msra.mxu0 0.0
        %8202 = vmatprep.subr.mxu0 0.0
        %8203 = vmatpush1.msra.mxu0 0.0
        %8204 = vmatprep.subr.mxu0 0.0
        %8205 = vmatpush1.msra.mxu0 0.0
        %8206 = vmatprep.subr.mxu0 0.0
        %8207 = vmatpush1.msra.mxu0 0.0
        %8208 = vmatprep.subr.mxu0 0.0
        %8209 = vmatpush1.msra.mxu0 0.0
        %8210 = vmatprep.subr.mxu0 0.0
        %8211 = vmatpush1.msra.mxu0 0.0
        %8212 = vmatprep.subr.mxu0 0.0
        %8213 = vmatpush1.msra.mxu0 0.0
        %8214 = vmatprep.subr.mxu0 0.0
        %8215 = vmatpush1.msra.mxu0 0.0
        %8216 = vmatprep.subr.mxu0 0.0
        %8217 = vmatpush1.msra.mxu0 0.0
        %8218 = vmatprep.subr.mxu0 0.0
        %8219 = vmatpush1.msra.mxu0 0.0
        %8220 = vmatprep.subr.mxu0 0.0
        %8221 = vmatpush1.msra.mxu0 0.0
        %8222 = vmatprep.subr.mxu0 0.0
        %8223 = vmatpush1.msra.mxu0 0.0
        %8224 = vmatprep.subr.mxu0 0.0
        %8225 = vmatpush1.msra.mxu0 0.0
        %8226 = vmatprep.subr.mxu0 0.0
        %8227 = vmatpush1.msra.mxu0 0.0
        %8228 = vmatprep.subr.mxu0 0.0
        %8229 = vmatpush1.msra.mxu0 0.0
        %8230 = vmatprep.subr.mxu0 0.0
        %8231 = vmatpush1.msra.mxu0 0.0
        %8232 = vmatprep.subr.mxu0 0.0
        %8233 = vmatpush1.msra.mxu0 0.0
        %8234 = vmatprep.subr.mxu0 0.0
        %8235 = vmatpush1.msra.mxu0 0.0
        %8236 = vmatprep.subr.mxu0 0.0
        %8237 = vmatpush1.msra.mxu0 0.0
        %8238 = vmatprep.subr.mxu0 0.0
        %8239 = vmatpush1.msra.mxu0 0.0
        %8240 = vmatprep.subr.mxu0 0.0
        %8241 = vmatpush1.msra.mxu0 0.0
        %8242 = vmatprep.subr.mxu0 0.0
        %8243 = vmatpush1.msra.mxu0 0.0
        %8244 = vmatprep.mubr.f32.mxu0 0.0
        %v8245 = vand.u32 %v1889, 4294901760
        %v8246 = vsub.f32 %v1889, %v8245
        %v8247 = vand.u32 %v8246, 4294901760
        %v8248 = vsub.f32 %v8246, %v8247
        %v8249 = vand.u32 %v8248, 4294901760
        %8250 = vmatmul.mubr.f32.gmra.mrb[0].mxu0 %v8249
        %v8251 = vpop.f32.mrb[0].mxu0
        %v8252 = vadd.f32 %v1886, %v8251
        %v8253 = vpop.f32.mrb[0].mxu0
        %v8254 = vadd.f32 %v1886, %v8253
        %8255 = vdwg.mxu0
        %v8256 = vand.u32 %v8157, 4294901760
        %v8257 = vsub.f32 %v8157, %v8256
        %v8258 = vand.u32 %v8257, 4294901760
        %v8259 = vsub.f32 %v8257, %v8258
        %v8260 = vand.u32 %v8259, 4294901760
        %8261 = vmatprep.subr.mxu0 %v8260
        %v8262 = vand.u32 %v8156, 4294901760
        %v8263 = vsub.f32 %v8156, %v8262
        %v8264 = vand.u32 %v8263, 4294901760
        %v8265 = vsub.f32 %v8263, %v8264
        %v8266 = vand.u32 %v8265, 4294901760
        %8267 = vmatpush1.msra.mxu0 %v8266
        %v8268 = vand.u32 %v8159, 4294901760
        %v8269 = vsub.f32 %v8159, %v8268
        %v8270 = vand.u32 %v8269, 4294901760
        %v8271 = vsub.f32 %v8269, %v8270
        %v8272 = vand.u32 %v8271, 4294901760
        %8273 = vmatprep.subr.mxu0 %v8272
        %v8274 = vand.u32 %v8158, 4294901760
        %v8275 = vsub.f32 %v8158, %v8274
        %v8276 = vand.u32 %v8275, 4294901760
        %v8277 = vsub.f32 %v8275, %v8276
        %v8278 = vand.u32 %v8277, 4294901760
        %8279 = vmatpush1.msra.mxu0 %v8278
        %v8280 = vand.u32 %v8161, 4294901760
        %v8281 = vsub.f32 %v8161, %v8280
        %v8282 = vand.u32 %v8281, 4294901760
        %v8283 = vsub.f32 %v8281, %v8282
        %v8284 = vand.u32 %v8283, 4294901760
        %8285 = vmatprep.subr.mxu0 %v8284
        %v8286 = vand.u32 %v8160, 4294901760
        %v8287 = vsub.f32 %v8160, %v8286
        %v8288 = vand.u32 %v8287, 4294901760
        %v8289 = vsub.f32 %v8287, %v8288
        %v8290 = vand.u32 %v8289, 4294901760
        %8291 = vmatpush1.msra.mxu0 %v8290
        %v8292 = vand.u32 %v8163, 4294901760
        %v8293 = vsub.f32 %v8163, %v8292
        %v8294 = vand.u32 %v8293, 4294901760
        %v8295 = vsub.f32 %v8293, %v8294
        %v8296 = vand.u32 %v8295, 4294901760
        %8297 = vmatprep.subr.mxu0 %v8296
        %v8298 = vand.u32 %v8162, 4294901760
        %v8299 = vsub.f32 %v8162, %v8298
        %v8300 = vand.u32 %v8299, 4294901760
        %v8301 = vsub.f32 %v8299, %v8300
        %v8302 = vand.u32 %v8301, 4294901760
        %8303 = vmatpush1.msra.mxu0 %v8302
        %v8304 = vand.u32 %v8168, 4294901760
        %v8305 = vsub.f32 %v8168, %v8304
        %v8306 = vand.u32 %v8305, 4294901760
        %v8307 = vsub.f32 %v8305, %v8306
        %v8308 = vand.u32 %v8307, 4294901760
        %8309 = vmatprep.subr.mxu0 %v8308
        %v8310 = vand.u32 %v8165, 4294901760
        %v8311 = vsub.f32 %v8165, %v8310
        %v8312 = vand.u32 %v8311, 4294901760
        %v8313 = vsub.f32 %v8311, %v8312
        %v8314 = vand.u32 %v8313, 4294901760
        %8315 = vmatpush1.msra.mxu0 %v8314
        %8316 = vmatprep.subr.mxu0 0.0
        %8317 = vmatpush1.msra.mxu0 0.0
        %8318 = vmatprep.subr.mxu0 0.0
        %8319 = vmatpush1.msra.mxu0 0.0
        %8320 = vmatprep.subr.mxu0 0.0
        %8321 = vmatpush1.msra.mxu0 0.0
        %8322 = vmatprep.subr.mxu0 0.0
        %8323 = vmatpush1.msra.mxu0 0.0
        %8324 = vmatprep.subr.mxu0 0.0
        %8325 = vmatpush1.msra.mxu0 0.0
        %8326 = vmatprep.subr.mxu0 0.0
        %8327 = vmatpush1.msra.mxu0 0.0
        %8328 = vmatprep.subr.mxu0 0.0
        %8329 = vmatpush1.msra.mxu0 0.0
        %8330 = vmatprep.subr.mxu0 0.0
        %8331 = vmatpush1.msra.mxu0 0.0
        %8332 = vmatprep.subr.mxu0 0.0
        %8333 = vmatpush1.msra.mxu0 0.0
        %8334 = vmatprep.subr.mxu0 0.0
        %8335 = vmatpush1.msra.mxu0 0.0
        %8336 = vmatprep.subr.mxu0 0.0
        %8337 = vmatpush1.msra.mxu0 0.0
        %8338 = vmatprep.subr.mxu0 0.0
        %8339 = vmatpush1.msra.mxu0 0.0
        %8340 = vmatprep.subr.mxu0 0.0
        %8341 = vmatpush1.msra.mxu0 0.0
        %8342 = vmatprep.subr.mxu0 0.0
        %8343 = vmatpush1.msra.mxu0 0.0
        %8344 = vmatprep.subr.mxu0 0.0
        %8345 = vmatpush1.msra.mxu0 0.0
        %8346 = vmatprep.subr.mxu0 0.0
        %8347 = vmatpush1.msra.mxu0 0.0
        %8348 = vmatprep.subr.mxu0 0.0
        %8349 = vmatpush1.msra.mxu0 0.0
        %8350 = vmatprep.subr.mxu0 0.0
        %8351 = vmatpush1.msra.mxu0 0.0
        %8352 = vmatprep.subr.mxu0 0.0
        %8353 = vmatpush1.msra.mxu0 0.0
        %8354 = vmatprep.subr.mxu0 0.0
        %8355 = vmatpush1.msra.mxu0 0.0
        %8356 = vmatprep.subr.mxu0 0.0
        %8357 = vmatpush1.msra.mxu0 0.0
        %8358 = vmatprep.subr.mxu0 0.0
        %8359 = vmatpush1.msra.mxu0 0.0
        %8360 = vmatprep.subr.mxu0 0.0
        %8361 = vmatpush1.msra.mxu0 0.0
        %8362 = vmatprep.subr.mxu0 0.0
        %8363 = vmatpush1.msra.mxu0 0.0
        %8364 = vmatprep.subr.mxu0 0.0
        %8365 = vmatpush1.msra.mxu0 0.0
        %8366 = vmatprep.subr.mxu0 0.0
        %8367 = vmatpush1.msra.mxu0 0.0
        %8368 = vmatprep.subr.mxu0 0.0
        %8369 = vmatpush1.msra.mxu0 0.0
        %8370 = vmatprep.mubr.f32.mxu0 0.0
        %v8371 = vand.u32 %v1889, 4294901760
        %8372 = vmatmul.mubr.f32.gmra.mrb[0].mxu0 %v8371
        %v8373 = vpop.f32.mrb[0].mxu0
        %v8374 = vadd.f32 %v8252, %v8373
        %v8375 = vpop.f32.mrb[0].mxu0
        %v8376 = vadd.f32 %v8254, %v8375
        %8377 = vdwg.mxu0
        %v8378 = vand.u32 %v8157, 4294901760
        %v8379 = vsub.f32 %v8157, %v8378
        %8380 = vmatprep.subr.mxu0 %v8379
        %v8381 = vand.u32 %v8156, 4294901760
        %v8382 = vsub.f32 %v8156, %v8381
        %8383 = vmatpush1.msra.mxu0 %v8382
        %v8384 = vand.u32 %v8159, 4294901760
        %v8385 = vsub.f32 %v8159, %v8384
        %8386 = vmatprep.subr.mxu0 %v8385
        %v8387 = vand.u32 %v8158, 4294901760
        %v8388 = vsub.f32 %v8158, %v8387
        %8389 = vmatpush1.msra.mxu0 %v8388
        %v8390 = vand.u32 %v8161, 4294901760
        %v8391 = vsub.f32 %v8161, %v8390
        %8392 = vmatprep.subr.mxu0 %v8391
        %v8393 = vand.u32 %v8160, 4294901760
        %v8394 = vsub.f32 %v8160, %v8393
        %8395 = vmatpush1.msra.mxu0 %v8394
        %v8396 = vand.u32 %v8163, 4294901760
        %v8397 = vsub.f32 %v8163, %v8396
        %8398 = vmatprep.subr.mxu0 %v8397
        %v8399 = vand.u32 %v8162, 4294901760
        %v8400 = vsub.f32 %v8162, %v8399
        %8401 = vmatpush1.msra.mxu0 %v8400
        %v8402 = vand.u32 %v8168, 4294901760
        %v8403 = vsub.f32 %v8168, %v8402
        %8404 = vmatprep.subr.mxu0 %v8403
        %v8405 = vand.u32 %v8165, 4294901760
        %v8406 = vsub.f32 %v8165, %v8405
        %8407 = vmatpush1.msra.mxu0 %v8406
        %8408 = vmatprep.subr.mxu0 0.0
        %8409 = vmatpush1.msra.mxu0 0.0
        %8410 = vmatprep.subr.mxu0 0.0
        %8411 = vmatpush1.msra.mxu0 0.0
        %8412 = vmatprep.subr.mxu0 0.0
        %8413 = vmatpush1.msra.mxu0 0.0
        %8414 = vmatprep.subr.mxu0 0.0
        %8415 = vmatpush1.msra.mxu0 0.0
        %8416 = vmatprep.subr.mxu0 0.0
        %8417 = vmatpush1.msra.mxu0 0.0
        %8418 = vmatprep.subr.mxu0 0.0
        %8419 = vmatpush1.msra.mxu0 0.0
        %8420 = vmatprep.subr.mxu0 0.0
        %8421 = vmatpush1.msra.mxu0 0.0
        %8422 = vmatprep.subr.mxu0 0.0
        %8423 = vmatpush1.msra.mxu0 0.0
        %8424 = vmatprep.subr.mxu0 0.0
        %8425 = vmatpush1.msra.mxu0 0.0
        %8426 = vmatprep.subr.mxu0 0.0
        %8427 = vmatpush1.msra.mxu0 0.0
        %8428 = vmatprep.subr.mxu0 0.0
        %8429 = vmatpush1.msra.mxu0 0.0
        %8430 = vmatprep.subr.mxu0 0.0
        %8431 = vmatpush1.msra.mxu0 0.0
        %8432 = vmatprep.subr.mxu0 0.0
        %8433 = vmatpush1.msra.mxu0 0.0
        %8434 = vmatprep.subr.mxu0 0.0
        %8435 = vmatpush1.msra.mxu0 0.0
        %8436 = vmatprep.subr.mxu0 0.0
        %8437 = vmatpush1.msra.mxu0 0.0
        %8438 = vmatprep.subr.mxu0 0.0
        %8439 = vmatpush1.msra.mxu0 0.0
        %8440 = vmatprep.subr.mxu0 0.0
        %8441 = vmatpush1.msra.mxu0 0.0
        %8442 = vmatprep.subr.mxu0 0.0
        %8443 = vmatpush1.msra.mxu0 0.0
        %8444 = vmatprep.subr.mxu0 0.0
        %8445 = vmatpush1.msra.mxu0 0.0
        %8446 = vmatprep.subr.mxu0 0.0
        %8447 = vmatpush1.msra.mxu0 0.0
        %8448 = vmatprep.subr.mxu0 0.0
        %8449 = vmatpush1.msra.mxu0 0.0
        %8450 = vmatprep.subr.mxu0 0.0
        %8451 = vmatpush1.msra.mxu0 0.0
        %8452 = vmatprep.subr.mxu0 0.0
        %8453 = vmatpush1.msra.mxu0 0.0
        %8454 = vmatprep.subr.mxu0 0.0
        %8455 = vmatpush1.msra.mxu0 0.0
        %8456 = vmatprep.subr.mxu0 0.0
        %8457 = vmatpush1.msra.mxu0 0.0
        %8458 = vmatprep.subr.mxu0 0.0
        %8459 = vmatpush1.msra.mxu0 0.0
        %8460 = vmatprep.subr.mxu0 0.0
        %8461 = vmatpush1.msra.mxu0 0.0
        %8462 = vmatprep.mubr.f32.mxu0 0.0
        %v8463 = vand.u32 %v1889, 4294901760
        %v8464 = vsub.f32 %v1889, %v8463
        %8465 = vmatmul.mubr.f32.gmra.mrb[0].mxu0 %v8464
        %v8466 = vpop.f32.mrb[0].mxu0
        %v8467 = vadd.f32 %v8374, %v8466
        %v8468 = vpop.f32.mrb[0].mxu0
        %v8469 = vadd.f32 %v8376, %v8468
        %8470 = vdwg.mxu0
        %v8471 = vand.u32 %v8157, 4294901760
        %8472 = vmatprep.subr.mxu0 %v8471
        %v8473 = vand.u32 %v8156, 4294901760
        %8474 = vmatpush1.msra.mxu0 %v8473
        %v8475 = vand.u32 %v8159, 4294901760
        %8476 = vmatprep.subr.mxu0 %v8475
        %v8477 = vand.u32 %v8158, 4294901760
        %8478 = vmatpush1.msra.mxu0 %v8477
        %v8479 = vand.u32 %v8161, 4294901760
        %8480 = vmatprep.subr.mxu0 %v8479
        %v8481 = vand.u32 %v8160, 4294901760
        %8482 = vmatpush1.msra.mxu0 %v8481
        %v8483 = vand.u32 %v8163, 4294901760
        %8484 = vmatprep.subr.mxu0 %v8483
        %v8485 = vand.u32 %v8162, 4294901760
        %8486 = vmatpush1.msra.mxu0 %v8485
        %v8487 = vand.u32 %v8168, 4294901760
        %8488 = vmatprep.subr.mxu0 %v8487
        %v8489 = vand.u32 %v8165, 4294901760
        %8490 = vmatpush1.msra.mxu0 %v8489
        %8491 = vmatprep.subr.mxu0 0.0
        %8492 = vmatpush1.msra.mxu0 0.0
        %8493 = vmatprep.subr.mxu0 0.0
        %8494 = vmatpush1.msra.mxu0 0.0
        %8495 = vmatprep.subr.mxu0 0.0
        %8496 = vmatpush1.msra.mxu0 0.0
        %8497 = vmatprep.subr.mxu0 0.0
        %8498 = vmatpush1.msra.mxu0 0.0
        %8499 = vmatprep.subr.mxu0 0.0
        %8500 = vmatpush1.msra.mxu0 0.0
        %8501 = vmatprep.subr.mxu0 0.0
        %8502 = vmatpush1.msra.mxu0 0.0
        %8503 = vmatprep.subr.mxu0 0.0
        %8504 = vmatpush1.msra.mxu0 0.0
        %8505 = vmatprep.subr.mxu0 0.0
        %8506 = vmatpush1.msra.mxu0 0.0
        %8507 = vmatprep.subr.mxu0 0.0
        %8508 = vmatpush1.msra.mxu0 0.0
        %8509 = vmatprep.subr.mxu0 0.0
        %8510 = vmatpush1.msra.mxu0 0.0
        %8511 = vmatprep.subr.mxu0 0.0
        %8512 = vmatpush1.msra.mxu0 0.0
        %8513 = vmatprep.subr.mxu0 0.0
        %8514 = vmatpush1.msra.mxu0 0.0
        %8515 = vmatprep.subr.mxu0 0.0
        %8516 = vmatpush1.msra.mxu0 0.0
        %8517 = vmatprep.subr.mxu0 0.0
        %8518 = vmatpush1.msra.mxu0 0.0
        %8519 = vmatprep.subr.mxu0 0.0
        %8520 = vmatpush1.msra.mxu0 0.0
        %8521 = vmatprep.subr.mxu0 0.0
        %8522 = vmatpush1.msra.mxu0 0.0
        %8523 = vmatprep.subr.mxu0 0.0
        %8524 = vmatpush1.msra.mxu0 0.0
        %8525 = vmatprep.subr.mxu0 0.0
        %8526 = vmatpush1.msra.mxu0 0.0
        %8527 = vmatprep.subr.mxu0 0.0
        %8528 = vmatpush1.msra.mxu0 0.0
        %8529 = vmatprep.subr.mxu0 0.0
        %8530 = vmatpush1.msra.mxu0 0.0
        %8531 = vmatprep.subr.mxu0 0.0
        %8532 = vmatpush1.msra.mxu0 0.0
        %8533 = vmatprep.subr.mxu0 0.0
        %8534 = vmatpush1.msra.mxu0 0.0
        %8535 = vmatprep.subr.mxu0 0.0
        %8536 = vmatpush1.msra.mxu0 0.0
        %8537 = vmatprep.subr.mxu0 0.0
        %8538 = vmatpush1.msra.mxu0 0.0
        %8539 = vmatprep.subr.mxu0 0.0
        %8540 = vmatpush1.msra.mxu0 0.0
        %8541 = vmatprep.subr.mxu0 0.0
        %8542 = vmatpush1.msra.mxu0 0.0
        %8543 = vmatprep.subr.mxu0 0.0
        %8544 = vmatpush1.msra.mxu0 0.0
        %8545 = vmatprep.mubr.f32.mxu0 0.0
        %v8546 = vand.u32 %v1889, 4294901760
        %v8547 = vsub.f32 %v1889, %v8546
        %v8548 = vand.u32 %v8547, 4294901760
        %8549 = vmatmul.mubr.f32.gmra.mrb[0].mxu0 %v8548
        %v8550 = vpop.f32.mrb[0].mxu0
        %v8551 = vadd.f32 %v8467, %v8550
        %v8552 = vpop.f32.mrb[0].mxu0
        %v8553 = vadd.f32 %v8469, %v8552
        %8554 = vdwg.mxu0
        %v8555 = vand.u32 %v8157, 4294901760
        %v8556 = vsub.f32 %v8157, %v8555
        %v8557 = vand.u32 %v8556, 4294901760
        %8558 = vmatprep.subr.mxu0 %v8557
        %v8559 = vand.u32 %v8156, 4294901760
        %v8560 = vsub.f32 %v8156, %v8559
        %v8561 = vand.u32 %v8560, 4294901760
        %8562 = vmatpush1.msra.mxu0 %v8561
        %v8563 = vand.u32 %v8159, 4294901760
        %v8564 = vsub.f32 %v8159, %v8563
        %v8565 = vand.u32 %v8564, 4294901760
        %8566 = vmatprep.subr.mxu0 %v8565
        %v8567 = vand.u32 %v8158, 4294901760
        %v8568 = vsub.f32 %v8158, %v8567
        %v8569 = vand.u32 %v8568, 4294901760
        %8570 = vmatpush1.msra.mxu0 %v8569
        %v8571 = vand.u32 %v8161, 4294901760
        %v8572 = vsub.f32 %v8161, %v8571
        %v8573 = vand.u32 %v8572, 4294901760
        %8574 = vmatprep.subr.mxu0 %v8573
        %v8575 = vand.u32 %v8160, 4294901760
        %v8576 = vsub.f32 %v8160, %v8575
        %v8577 = vand.u32 %v8576, 4294901760
        %8578 = vmatpush1.msra.mxu0 %v8577
        %v8579 = vand.u32 %v8163, 4294901760
        %v8580 = vsub.f32 %v8163, %v8579
        %v8581 = vand.u32 %v8580, 4294901760
        %8582 = vmatprep.subr.mxu0 %v8581
        %v8583 = vand.u32 %v8162, 4294901760
        %v8584 = vsub.f32 %v8162, %v8583
        %v8585 = vand.u32 %v8584, 4294901760
        %8586 = vmatpush1.msra.mxu0 %v8585
        %v8587 = vand.u32 %v8168, 4294901760
        %v8588 = vsub.f32 %v8168, %v8587
        %v8589 = vand.u32 %v8588, 4294901760
        %8590 = vmatprep.subr.mxu0 %v8589
        %v8591 = vand.u32 %v8165, 4294901760
        %v8592 = vsub.f32 %v8165, %v8591
        %v8593 = vand.u32 %v8592, 4294901760
        %8594 = vmatpush1.msra.mxu0 %v8593
        %8595 = vmatprep.subr.mxu0 0.0
        %8596 = vmatpush1.msra.mxu0 0.0
        %8597 = vmatprep.subr.mxu0 0.0
        %8598 = vmatpush1.msra.mxu0 0.0
        %8599 = vmatprep.subr.mxu0 0.0
        %8600 = vmatpush1.msra.mxu0 0.0
        %8601 = vmatprep.subr.mxu0 0.0
        %8602 = vmatpush1.msra.mxu0 0.0
        %8603 = vmatprep.subr.mxu0 0.0
        %8604 = vmatpush1.msra.mxu0 0.0
        %8605 = vmatprep.subr.mxu0 0.0
        %8606 = vmatpush1.msra.mxu0 0.0
        %8607 = vmatprep.subr.mxu0 0.0
        %8608 = vmatpush1.msra.mxu0 0.0
        %8609 = vmatprep.subr.mxu0 0.0
        %8610 = vmatpush1.msra.mxu0 0.0
        %8611 = vmatprep.subr.mxu0 0.0
        %8612 = vmatpush1.msra.mxu0 0.0
        %8613 = vmatprep.subr.mxu0 0.0
        %8614 = vmatpush1.msra.mxu0 0.0
        %8615 = vmatprep.subr.mxu0 0.0
        %8616 = vmatpush1.msra.mxu0 0.0
        %8617 = vmatprep.subr.mxu0 0.0
        %8618 = vmatpush1.msra.mxu0 0.0
        %8619 = vmatprep.subr.mxu0 0.0
        %8620 = vmatpush1.msra.mxu0 0.0
        %8621 = vmatprep.subr.mxu0 0.0
        %8622 = vmatpush1.msra.mxu0 0.0
        %8623 = vmatprep.subr.mxu0 0.0
        %8624 = vmatpush1.msra.mxu0 0.0
        %8625 = vmatprep.subr.mxu0 0.0
        %8626 = vmatpush1.msra.mxu0 0.0
        %8627 = vmatprep.subr.mxu0 0.0
        %8628 = vmatpush1.msra.mxu0 0.0
        %8629 = vmatprep.subr.mxu0 0.0
        %8630 = vmatpush1.msra.mxu0 0.0
        %8631 = vmatprep.subr.mxu0 0.0
        %8632 = vmatpush1.msra.mxu0 0.0
        %8633 = vmatprep.subr.mxu0 0.0
        %8634 = vmatpush1.msra.mxu0 0.0
        %8635 = vmatprep.subr.mxu0 0.0
        %8636 = vmatpush1.msra.mxu0 0.0
        %8637 = vmatprep.subr.mxu0 0.0
        %8638 = vmatpush1.msra.mxu0 0.0
        %8639 = vmatprep.subr.mxu0 0.0
        %8640 = vmatpush1.msra.mxu0 0.0
        %8641 = vmatprep.subr.mxu0 0.0
        %8642 = vmatpush1.msra.mxu0 0.0
        %8643 = vmatprep.subr.mxu0 0.0
        %8644 = vmatpush1.msra.mxu0 0.0
        %8645 = vmatprep.subr.mxu0 0.0
        %8646 = vmatpush1.msra.mxu0 0.0
        %8647 = vmatprep.subr.mxu0 0.0
        %8648 = vmatpush1.msra.mxu0 0.0
        %8649 = vmatprep.mubr.f32.mxu0 0.0
        %v8650 = vand.u32 %v1889, 4294901760
        %8651 = vmatmul.mubr.f32.gmra.mrb[0].mxu0 %v8650
        %v8652 = vpop.f32.mrb[0].mxu0
        %v8653 = vadd.f32 %v8551, %v8652
        %v8654 = vpop.f32.mrb[0].mxu0
        %v8655 = vadd.f32 %v8553, %v8654
        %8656 = vdwg.mxu0
        %v8657 = vand.u32 %v8157, 4294901760
        %8658 = vmatprep.subr.mxu0 %v8657
        %v8659 = vand.u32 %v8156, 4294901760
        %8660 = vmatpush1.msra.mxu0 %v8659
        %v8661 = vand.u32 %v8159, 4294901760
        %8662 = vmatprep.subr.mxu0 %v8661
        %v8663 = vand.u32 %v8158, 4294901760
        %8664 = vmatpush1.msra.mxu0 %v8663
        %v8665 = vand.u32 %v8161, 4294901760
        %8666 = vmatprep.subr.mxu0 %v8665
        %v8667 = vand.u32 %v8160, 4294901760
        %8668 = vmatpush1.msra.mxu0 %v8667
        %v8669 = vand.u32 %v8163, 4294901760
        %8670 = vmatprep.subr.mxu0 %v8669
        %v8671 = vand.u32 %v8162, 4294901760
        %8672 = vmatpush1.msra.mxu0 %v8671
        %v8673 = vand.u32 %v8168, 4294901760
        %8674 = vmatprep.subr.mxu0 %v8673
        %v8675 = vand.u32 %v8165, 4294901760
        %8676 = vmatpush1.msra.mxu0 %v8675
        %8677 = vmatprep.subr.mxu0 0.0
        %8678 = vmatpush1.msra.mxu0 0.0
        %8679 = vmatprep.subr.mxu0 0.0
        %8680 = vmatpush1.msra.mxu0 0.0
        %8681 = vmatprep.subr.mxu0 0.0
        %8682 = vmatpush1.msra.mxu0 0.0
        %8683 = vmatprep.subr.mxu0 0.0
        %8684 = vmatpush1.msra.mxu0 0.0
        %8685 = vmatprep.subr.mxu0 0.0
        %8686 = vmatpush1.msra.mxu0 0.0
        %8687 = vmatprep.subr.mxu0 0.0
        %8688 = vmatpush1.msra.mxu0 0.0
        %8689 = vmatprep.subr.mxu0 0.0
        %8690 = vmatpush1.msra.mxu0 0.0
        %8691 = vmatprep.subr.mxu0 0.0
        %8692 = vmatpush1.msra.mxu0 0.0
        %8693 = vmatprep.subr.mxu0 0.0
        %8694 = vmatpush1.msra.mxu0 0.0
        %8695 = vmatprep.subr.mxu0 0.0
        %8696 = vmatpush1.msra.mxu0 0.0
        %8697 = vmatprep.subr.mxu0 0.0
        %8698 = vmatpush1.msra.mxu0 0.0
        %8699 = vmatprep.subr.mxu0 0.0
        %8700 = vmatpush1.msra.mxu0 0.0
        %8701 = vmatprep.subr.mxu0 0.0
        %8702 = vmatpush1.msra.mxu0 0.0
        %8703 = vmatprep.subr.mxu0 0.0
        %8704 = vmatpush1.msra.mxu0 0.0
        %8705 = vmatprep.subr.mxu0 0.0
        %8706 = vmatpush1.msra.mxu0 0.0
        %8707 = vmatprep.subr.mxu0 0.0
        %8708 = vmatpush1.msra.mxu0 0.0
        %8709 = vmatprep.subr.mxu0 0.0
        %8710 = vmatpush1.msra.mxu0 0.0
        %8711 = vmatprep.subr.mxu0 0.0
        %8712 = vmatpush1.msra.mxu0 0.0
        %8713 = vmatprep.subr.mxu0 0.0
        %8714 = vmatpush1.msra.mxu0 0.0
        %8715 = vmatprep.subr.mxu0 0.0
        %8716 = vmatpush1.msra.mxu0 0.0
        %8717 = vmatprep.subr.mxu0 0.0
        %8718 = vmatpush1.msra.mxu0 0.0
        %8719 = vmatprep.subr.mxu0 0.0
        %8720 = vmatpush1.msra.mxu0 0.0
        %8721 = vmatprep.subr.mxu0 0.0
        %8722 = vmatpush1.msra.mxu0 0.0
        %8723 = vmatprep.subr.mxu0 0.0
        %8724 = vmatpush1.msra.mxu0 0.0
        %8725 = vmatprep.subr.mxu0 0.0
        %8726 = vmatpush1.msra.mxu0 0.0
        %8727 = vmatprep.subr.mxu0 0.0
        %8728 = vmatpush1.msra.mxu0 0.0
        %8729 = vmatprep.subr.mxu0 0.0
        %8730 = vmatpush1.msra.mxu0 0.0
        %8731 = vmatprep.mubr.f32.mxu0 0.0
        %v8732 = vand.u32 %v1889, 4294901760
        %8733 = vmatmul.mubr.f32.gmra.mrb[0].mxu0 %v8732
        %v8734 = vpop.f32.mrb[0].mxu0
        %v8735 = vadd.f32 %v8653, %v8734
        %v8736 = vpop.f32.mrb[0].mxu0
        %v8737 = vadd.f32 %v8655, %v8736
        %8738 = vdwg.mxu0
        %v8739 = vadd.f32 %v8735, %v6648
        %v8740 = vadd.f32 %v8737, %v6649
        %v8741 = vrot.slane %v4557, 4
        %v8742 = vrot.slane %v4558, 4
        %v8747 = vrot.slane %v8739, 4
        %v8748 = vrot.slane %v8740, 4
        %v8751 = vsel %vm442, %v2466, %v8741
        %v8752 = vsel %vm442, %v2467, %v8742
        %v8753 = vsel %vm442, %v6648, %v8747
        %v8754 = vsel %vm442, %v6649, %v8748
        %8755 = vst [vmem:[%s294] sm:$0xff] %v8751
        %8756 = vst [vmem:[%s294 + $0x8] sm:$0xff] %v8752
        %8757 = vst [vmem:[%s294 + $0x10] sm:$0xff] %v8753
        %8758 = vst [vmem:[%s294 + $0x18] sm:$0xff] %v8754
        %s8759 = sand.u32 %s184, 1
        %s8760 = scalar_lea.sflag [#allocation4], %s8759
        %s8761 = sand.u32 %s184, 1
        %s8762 = smul.addr %s8761, 32
        %s8763 = scalar_lea.vmem [#allocation5], %s8762
        // Predicated region
        $region53: #{tpu_custom_call.1} parent=47 // pred_check
          %p8764 = pneg %p194
        $region54: #{tpu_custom_call.1} parent=47 // pred_check_branch
          %8766 = sbr.rel (%p8764) target = $region56
        $region55: #{tpu_custom_call.1} parent=47 // pred_region
          %s8768 = ssub.s32 512, 512
          %8769 = vsyncadd %s8760, %s8768
          %s8770 = smul.addr %s24, 4
          %s8771 = smul.addr %s8770, 128
          %s8772 = scalar_lea.hbm %s7, %s8771
          %s8773 = sshll.u32 %s8763, 4
          %s8774 = int_to_ptr.vmem [resolvable:$true] %s8773
          %8779 = dma.vmem_to_hbm [thread:$0]  %s8774, 512, %s8772, %s8760, 256, 256, 16
        $region56: #{tpu_custom_call.1} parent=47 // pred_fallthru
          _
      $region48: #{tpu_custom_call.1} parent=5 // pred_fallthru
        _
      %p8780 = scmp.le.s32.totalorder 2, %s19
      // Predicated region
      $region57: #{tpu_custom_call.1} parent=5 // pred_check
        %p8781 = pneg %p8780
      $region58: #{tpu_custom_call.1} parent=5 // pred_check_branch
        %8783 = sbr.rel (%p8781) target = $region60
      $region59: #{tpu_custom_call.1} parent=5 // pred_region
        %s8784 = ssub.s32 %s19, 2
        // Predicated region
        $region61: #{tpu_custom_call.1} parent=59 // pred_check
          %p8785 = pneg %p200
        $region62: #{tpu_custom_call.1} parent=59 // pred_check_branch
          %8787 = sbr.rel (%p8785) target = $region64
        $region63: #{tpu_custom_call.1} parent=59 // pred_region
          %s8788 = sand.u32 %s185, 1
          %s8789 = scalar_lea.sflag [#allocation4], %s8788
          %s8790 = sand.u32 %s185, 1
          %s8791 = smul.addr %s8790, 32
          %s8792 = scalar_lea.vmem [#allocation5], %s8791
          %8793 = dma.done %s8789, 512
        $region64: #{tpu_custom_call.1} parent=59 // pred_fallthru
          _
      $region60: #{tpu_custom_call.1} parent=5 // pred_fallthru
        _
    $region6: #{tpu_custom_call.1} parent=1 // loop_footer
      %s23 = sadd.s32 1, %s19
    $region7: #{tpu_custom_call.1} parent=1 // loop_footer_branch
      %18 = sbr.rel target = $region3
    $region8: #{tpu_custom_call.1} parent=1 // loop_exit
      _
    %8794 = vsyncpa [#allocation3], 1
    %s8795 = scalar_lea.sflag [#allocation3], 1
    %8796 = vsyncpa %s8795, 1
    %8797 = vsyncpa [#allocation4], 1
    %s8798 = scalar_lea.sflag [#allocation4], 1
    %8799 = vsyncpa %s8798, 1

</llo_original>
